<compile_context>
chip_gen: v5e
topology: v5e:2x2
jax: 0.10.0
libtpu: 0.0.40
codegen_flags: <defaults>
</compile_context>

<pallas_src>
import functools
import math

import numpy as np
import jax
import jax.numpy as jnp
from jax.experimental import pallas as pl
from jax.experimental.pallas import tpu as pltpu

_SQRT1_2 = 0.7071067811865476
_MIB = 1024 * 1024
_TILE_M = 1024                   # token-axis tile for LN / linear kernels
_USE_TANH_GELU = False           # set True on v5e: tanh routes to EUP, erf is VALU-heavy

_vmem_cache = [None]


def _vmem_limit_bytes():
    """Generation-aware scoped-VMEM request (v7x has only 64 MiB physical per TC)."""
    if _vmem_cache[0] is None:
        lim = 32 * _MIB
        try:
            cap = pltpu.get_tpu_info().vmem_capacity_bytes
            lim = 28 * _MIB if cap <= 64 * _MIB else 48 * _MIB
        except Exception:
            lim = 32 * _MIB
        _vmem_cache[0] = lim
    return _vmem_cache[0]


def _cparams(n_grid_axes):
    return pltpu.CompilerParams(
        dimension_semantics=("parallel",) * n_grid_axes,
        vmem_limit_bytes=_vmem_limit_bytes(),
    )


def _gelu(x):
    if _USE_TANH_GELU:
        return jax.nn.gelu(x, approximate=True)
    # exact (erf-based) GELU, matches torch.nn.GELU default
    return 0.5 * x * (1.0 + jax.lax.erf(x * _SQRT1_2))


def _tile_m(M):
    """Token tile: big blocks (HBM-BW bound), but >=2 grid steps when M is moderate."""
    TM = min(M, _TILE_M)
    if TM == M and M >= 256:
        TM = ((M + 1) // 2 + 7) // 8 * 8
        if TM >= M:
            TM = M
    return TM


# ---------------------------------------------------------------------------
# General matmul kernel: out = [LN](x) @ W [+ b] [GELU] [* scale] [+ residual]
# ---------------------------------------------------------------------------
def _matmul_kernel(*refs, pre_ln, has_bias, has_residual, apply_gelu, scale, eps):
    it = iter(refs)
    x_ref = next(it)
    if pre_ln:
        lnw_ref = next(it)
        lnb_ref = next(it)
    w_ref = next(it)
    if has_bias:
        b_ref = next(it)
    if has_residual:
        res_ref = next(it)
    o_ref = next(it)

    x = x_ref[...]
    if pre_ln:
        xf = x.astype(jnp.float32)
        mean = jnp.mean(xf, axis=-1, keepdims=True)
        xc = xf - mean
        var = jnp.mean(xc * xc, axis=-1, keepdims=True)
        xn = xc * jax.lax.rsqrt(var + eps)
        x = (xn * lnw_ref[...].astype(jnp.float32)
             + lnb_ref[...].astype(jnp.float32)).astype(x_ref.dtype)

    acc = jnp.dot(x, w_ref[...], preferred_element_type=jnp.float32)
    if has_bias:
        acc = acc + b_ref[...].astype(jnp.float32)
    if apply_gelu:
        acc = _gelu(acc)
    if scale != 1.0:
        acc = acc * scale
    if has_residual:
        acc = acc + res_ref[...].astype(jnp.float32)
    o_ref[...] = acc.astype(o_ref.dtype)


def matmul(x2, w, *, bias=None, ln=None, residual=None, apply_gelu=False,
           scale=1.0, eps=1e-5):
    """x2: (M, Cin), w: (Cin, Cout). Optional fused LayerNorm on the input tile,
    bias, GELU, scalar scale and residual add (residual: (M, Cout))."""
    M, Cin = x2.shape
    Cout = w.shape[1]
    TM = _tile_m(M)

    args = [x2]
    in_specs = [pl.BlockSpec((TM, Cin), lambda i: (i, 0))]
    if ln is not None:
        lnw, lnb = ln
        args += [lnw.reshape(1, Cin), lnb.reshape(1, Cin)]
        in_specs += [pl.BlockSpec((1, Cin), lambda i: (0, 0)),
                     pl.BlockSpec((1, Cin), lambda i: (0, 0))]
    args.append(w)
    in_specs.append(pl.BlockSpec((Cin, Cout), lambda i: (0, 0)))
    if bias is not None:
        args.append(bias.reshape(1, Cout))
        in_specs.append(pl.BlockSpec((1, Cout), lambda i: (0, 0)))
    if residual is not None:
        args.append(residual)
        in_specs.append(pl.BlockSpec((TM, Cout), lambda i: (i, 0)))

    kernel = functools.partial(
        _matmul_kernel, pre_ln=ln is not None, has_bias=bias is not None,
        has_residual=residual is not None, apply_gelu=apply_gelu,
        scale=float(scale), eps=eps)
    return pl.pallas_call(
        kernel,
        out_shape=jax.ShapeDtypeStruct((M, Cout), x2.dtype),
        grid=(pl.cdiv(M, TM),),
        in_specs=in_specs,
        out_specs=pl.BlockSpec((TM, Cout), lambda i: (i, 0)),
        compiler_params=_cparams(1),
    )(*args)


# ---------------------------------------------------------------------------
# Fused attention front-end:
#   out = ( GELU( LN2( (pool_kxk(LN1(x))) @ sr_w + sr_b ) ) @ out_w ) * scale
# The kxk average pool is a constant 0/1 pooling matrix -> one MXU matmul, so the
# whole kernel is plain 2-D math (LN, matmuls).  One HBM read of the full-res tokens.
# ---------------------------------------------------------------------------
def _frontend_kernel(x_ref, pm_ref, nw_ref, nb_ref, srw_ref, srb_ref,
                     anw_ref, anb_ref, ow_ref, o_ref, *,
                     scale, eps, total_rows, block_rows):
    xf = x_ref[...].astype(jnp.float32)
    mean = jnp.mean(xf, axis=-1, keepdims=True)
    xc = xf - mean
    var = jnp.mean(xc * xc, axis=-1, keepdims=True)
    xn = xc * jax.lax.rsqrt(var + eps)
    xn = xn * nw_ref[...].astype(jnp.float32) + nb_ref[...].astype(jnp.float32)
    if total_rows % block_rows != 0:
        # zero out the padding rows of a partial block so the pooling matmul
        # never mixes garbage (possibly NaN) into valid pooled rows
        start = pl.program_id(0) * block_rows
        ridx = jax.lax.broadcasted_iota(jnp.int32, xn.shape, 0) + start
        xn = jnp.where(ridx < total_rows, xn, 0.0)

    # kxk average pool (1/k^2 baked into the pooling matrix)
    pooled = jnp.dot(pm_ref[...].astype(jnp.float32), xn,
                     preferred_element_type=jnp.float32)

    # sr (1x1 conv) -> LN -> GELU
    t = jnp.dot(pooled.astype(srw_ref.dtype), srw_ref[...],
                preferred_element_type=jnp.float32)
    t = t + srb_ref[...].astype(jnp.float32)
    mean = jnp.mean(t, axis=-1, keepdims=True)
    tc = t - mean
    var = jnp.mean(tc * tc, axis=-1, keepdims=True)
    t = tc * jax.lax.rsqrt(var + eps)
    t = t * anw_ref[...].astype(jnp.float32) + anb_ref[...].astype(jnp.float32)
    t = _gelu(t)

    out = jnp.dot(t.astype(ow_ref.dtype), ow_ref[...],
                  preferred_element_type=jnp.float32)
    if scale != 1.0:
        out = out * scale
    o_ref[...] = out.astype(o_ref.dtype)


def _pool_matrix(th, k, W, dtype):
    """Pooling matrix for k x k average pooling of `th` pooled rows of width W//k."""
    wq = W // k
    M = th * wq
    TB = th * k * W
    pm = np.zeros((M, TB), np.float32)
    inv = 1.0 / float(k * k)
    for m in range(M):
        t, wc = divmod(m, wq)
        base = t * k * W + k * wc
        for i in range(k):
            for j in range(k):
                pm[m, base + i * W + j] = inv
    return jnp.asarray(pm, dtype)


def _choose_th(total, wq, k, W, C, itemsize):
    """Pooled rows per block (alignment + VMEM caps + prefer >=2 grid steps)."""
    kW = k * W
    u1 = 8 // math.gcd(kW, 8)
    u2 = 8 // math.gcd(wq, 8)
    unit = (u1 * u2) // math.gcd(u1, u2)
    cap_in = 6 * _MIB            # input block bytes
    cap_pm = 4 * _MIB            # pooling-matrix bytes
    th_in = max(1, cap_in // max(1, kW * C * itemsize))
    th_pm = max(1, math.isqrt(max(1, cap_pm // max(1, wq * kW * itemsize))))
    th_rows = max(1, 512 // wq)
    th = min(total, th_in, th_pm, th_rows)
    th = max(unit, (th // unit) * unit)
    if th >= total:
        if total >= 2 * unit:     # >=2 grid steps: pipelining + v7x 2-TC sharding
            half = (total + 1) // 2
            th = min(total, ((half + unit - 1) // unit) * unit)
        else:
            th = total
    # TODO(synk): if even one `unit` block exceeds the caps (huge pool_ratio * W * C),
    #             row-split the pooling window instead of growing the block further.
    return min(th, total)


def fused_norm_pool_sr_act_linear(x, H, W, k, nw, nb, srw, srb, anw, anb, ow,
                                  *, scale=1.0, eps=1e-5):
    """x: (B, H*W, C) tokens -> (B*(H//k)*(W//k), Cout)."""
    B, N, C = x.shape
    assert N == H * W and H % k == 0 and W % k == 0
    Cout = ow.shape[1]
    hp, wq = H // k, W // k
    total = B * hp
    th = _choose_th(total, wq, k, W, C, x.dtype.itemsize)
    TB = th * k * W
    M = th * wq
    R = B * H * W
    Rout = B * hp * wq
    pm = _pool_matrix(th, k, W, x.dtype)
    x2 = x.reshape(R, C)

    kernel = functools.partial(_frontend_kernel, scale=float(scale), eps=eps,
                               total_rows=R, block_rows=TB)
    return pl.pallas_call(
        kernel,
        out_shape=jax.ShapeDtypeStruct((Rout, Cout), x.dtype),
        grid=(pl.cdiv(total, th),),
        in_specs=[
            pl.BlockSpec((TB, C), lambda i: (i, 0)),
            pl.BlockSpec((M, TB), lambda i: (0, 0)),
            pl.BlockSpec((1, C), lambda i: (0, 0)),
            pl.BlockSpec((1, C), lambda i: (0, 0)),
            pl.BlockSpec((C, C), lambda i: (0, 0)),
            pl.BlockSpec((1, C), lambda i: (0, 0)),
            pl.BlockSpec((1, C), lambda i: (0, 0)),
            pl.BlockSpec((1, C), lambda i: (0, 0)),
            pl.BlockSpec((C, Cout), lambda i: (0, 0)),
        ],
        out_specs=pl.BlockSpec((M, Cout), lambda i: (i, 0)),
        compiler_params=_cparams(1),
    )(x2, pm, nw.reshape(1, C), nb.reshape(1, C), srw, srb.reshape(1, C),
      anw.reshape(1, C), anb.reshape(1, C), ow)


# ---------------------------------------------------------------------------
# Cross-attention kernel: grid (B, q-tiles); per-head scores/softmax/PV, head-merge and
# output projection fused in-kernel.  Softmax scale is already folded into q.
# ---------------------------------------------------------------------------
def _attn_proj_kernel(q_ref, kv_ref, pw_ref, pb_ref, o_ref, *, num_heads):
    q = q_ref[0]              # (TQ, C1)
    kv = kv_ref[0]            # (Nk, 2*C1)   first C1 lanes = k, last C1 lanes = v
    C1 = q.shape[-1]
    d = C1 // num_heads
    outs = []
    for h in range(num_heads):
        qh = q[:, h * d:(h + 1) * d]
        kh = kv[:, h * d:(h + 1) * d]
        vh = kv[:, C1 + h * d: C1 + (h + 1) * d]
        # s = qh @ kh^T   (contract last dims; no explicit transpose materialized)
        s = jax.lax.dot_general(qh, kh, (((1,), (1,)), ((), ())),
                                preferred_element_type=jnp.float32)
        s = s - jnp.max(s, axis=-1, keepdims=True)
        p = jnp.exp(s)
        p = p * pl.reciprocal(jnp.sum(p, axis=-1, keepdims=True), approx=True)
        outs.append(jnp.dot(p.astype(vh.dtype), vh,
                            preferred_element_type=jnp.float32))
    o = jnp.concatenate(outs, axis=-1).astype(q.dtype)          # (TQ, C1) head-merged
    out = jnp.dot(o, pw_ref[...], preferred_element_type=jnp.float32)
    out = out + pb_ref[...].astype(jnp.float32)
    o_ref[0] = out.astype(o_ref.dtype)


def attention_proj(q, kv, proj_w, proj_b, num_heads):
    # q: (B, Nq, C1); kv: (B, Nk, 2*C1) -> (B, Nq, C1)
    B, Nq, C1 = q.shape
    Nk = kv.shape[1]
    TQ = min(Nq, 256)
    if TQ == Nq and Nq >= 16:
        TQ = ((Nq + 1) // 2 + 7) // 8 * 8
        if TQ >= Nq:
            TQ = Nq
    return pl.pallas_call(
        functools.partial(_attn_proj_kernel, num_heads=num_heads),
        out_shape=jax.ShapeDtypeStruct((B, Nq, C1), q.dtype),
        grid=(B, pl.cdiv(Nq, TQ)),
        in_specs=[
            pl.BlockSpec((1, TQ, C1), lambda b, i: (b, i, 0)),
            pl.BlockSpec((1, Nk, 2 * C1), lambda b, i: (b, 0, 0)),
            pl.BlockSpec((C1, C1), lambda b, i: (0, 0)),
            pl.BlockSpec((1, C1), lambda b, i: (0, 0)),
        ],
        out_specs=pl.BlockSpec((1, TQ, C1), lambda b, i: (b, i, 0)),
        compiler_params=_cparams(2),
    )(q, kv, proj_w, proj_b.reshape(1, C1))


# ---------------------------------------------------------------------------
# Depthwise 3x3 conv (+ fused GELU) kernel, NHWC, padding=1, stride=1.
# Channel-tiled grid (B, C/TC); 3 horizontal row sums, then only 2 vertical shifts.
# ---------------------------------------------------------------------------
def _dwconv_kernel(x_ref, w_ref, b_ref, o_ref, *, apply_gelu):
    v = x_ref[0].astype(jnp.float32)            # (H, W, TC)
    H, W, C = v.shape
    zcol = jnp.zeros((H, 1, C), jnp.float32)
    zrow = jnp.zeros((1, W, C), jnp.float32)
    left = jnp.concatenate([zcol, v[:, :-1, :]], axis=1)    # value at (y, x-1)
    right = jnp.concatenate([v[:, 1:, :], zcol], axis=1)    # value at (y, x+1)

    def hrow(i):
        w0 = w_ref[3 * i + 0, :].astype(jnp.float32)
        w1 = w_ref[3 * i + 1, :].astype(jnp.float32)
        w2 = w_ref[3 * i + 2, :].astype(jnp.float32)
        return left * w0 + v * w1 + right * w2

    hs0, hs1, hs2 = hrow(0), hrow(1), hrow(2)
    acc = hs1
    acc = acc + jnp.concatenate([zrow, hs0[:-1, :, :]], axis=0)   # in(y-1, .)
    acc = acc + jnp.concatenate([hs2[1:, :, :], zrow], axis=0)    # in(y+1, .)
    acc = acc + b_ref[...].astype(jnp.float32)
    if apply_gelu:
        acc = _gelu(acc)
    o_ref[0] = acc.astype(o_ref.dtype)


def dwconv3x3(x_nhwc, w9c, b, apply_gelu=False):
    B, H, W, C = x_nhwc.shape
    TC = 128 if C % 128 == 0 else C
    return pl.pallas_call(
        functools.partial(_dwconv_kernel, apply_gelu=apply_gelu),
        out_shape=jax.ShapeDtypeStruct((B, H, W, C), x_nhwc.dtype),
        grid=(B, C // TC),
        in_specs=[
            pl.BlockSpec((1, H, W, TC), lambda b, c: (b, 0, 0, c)),
            pl.BlockSpec((9, TC), lambda b, c: (0, c)),
            pl.BlockSpec((1, TC), lambda b, c: (0, c)),
        ],
        out_specs=pl.BlockSpec((1, H, W, TC), lambda b, c: (b, 0, 0, c)),
        compiler_params=_cparams(2),
    )(x_nhwc, w9c, b.reshape(1, C))


# ---------------------------------------------------------------------------
# Plain-XLA glue: exact 2x bilinear upsample (align_corners=False).
# ---------------------------------------------------------------------------
def upsample2x_bilinear_nhwc(v):
    B, h, w, C = v.shape
    prev = jnp.concatenate([v[:, :1], v[:, :-1]], axis=1)
    nxt = jnp.concatenate([v[:, 1:], v[:, -1:]], axis=1)
    even = 0.25 * prev + 0.75 * v
    odd = 0.75 * v + 0.25 * nxt
    v = jnp.stack([even, odd], axis=2).reshape(B, 2 * h, w, C)
    prev = jnp.concatenate([v[:, :, :1], v[:, :, :-1]], axis=2)
    nxt = jnp.concatenate([v[:, :, 1:], v[:, :, -1:]], axis=2)
    even = 0.25 * prev + 0.75 * v
    odd = 0.75 * v + 0.25 * nxt
    return jnp.stack([even, odd], axis=3).reshape(B, 2 * h, 2 * w, C)


# ---------------------------------------------------------------------------
# CrossAttention / Mlp / Block forward (orchestration)
# ---------------------------------------------------------------------------
def cross_attention(x, y, H2, W2, H1, W1, p, num_heads, pool_ratio):
    B, N1, C1 = x.shape
    head_dim = C1 // num_heads
    scale = head_dim ** -0.5
    hq, wq = H1 // 2, W1 // 2
    Nq = hq * wq
    pr = pool_ratio * 2
    Nk = (H2 // pr) * (W2 // pr)

    # query path: norm1 -> 2x2 avg pool -> sr1 -> LN -> GELU -> q (scale folded in)
    q = fused_norm_pool_sr_act_linear(
        x, H1, W1, 2, p['norm1_w'], p['norm1_b'], p['sr1_w'], p['sr1_b'],
        p['an1_w'], p['an1_b'], p['q_w'], scale=scale).reshape(B, Nq, C1)

    # key/value path: norm2 -> pool(pr) -> sr2 -> LN -> GELU -> kv
    kv = fused_norm_pool_sr_act_linear(
        y, H2, W2, pr, p['norm2_w'], p['norm2_b'], p['sr2_w'], p['sr2_b'],
        p['an2_w'], p['an2_b'], p['kv_w'], scale=1.0).reshape(B, Nk, 2 * C1)

    # attention + head-merge + output projection (one kernel)
    o = attention_proj(q, kv, p['proj_w'], p['proj_b'], num_heads)   # (B, Nq, C1)

    # 2x bilinear upsample back to full resolution (+ residual added by caller)
    o_img = upsample2x_bilinear_nhwc(o.reshape(B, hq, wq, C1))
    return o_img.reshape(B, N1, C1)


def mlp_block(x, H, W, p):
    """x + Mlp(norm3(x)); norm3 fused into fc1, residual fused into fc2."""
    B, N, C = x.shape
    x2 = x.reshape(B * N, C)
    h = matmul(x2, p['fc1_w'], bias=p['fc1_b'], ln=(p['norm3_w'], p['norm3_b']))
    hid = h.shape[-1]
    h = dwconv3x3(h.reshape(B, H, W, hid), p['dw_w'], p['dw_b'],
                  apply_gelu=True).reshape(B * N, hid)
    out = matmul(h, p['fc2_w'], bias=p['fc2_b'], residual=x2)
    return out.reshape(B, N, C)


def block_forward(x, y, H2, W2, H1, W1, p, num_heads, pool_ratio):
    # x = x + attn(norm1(x), norm2(y)); x = x + mlp(norm3(x))   (drop_path = identity)
    x = x + cross_attention(x, y, H2, W2, H1, W1, p, num_heads, pool_ratio)
    x = mlp_block(x, H1, W1, p)
    return x


# ---------------------------------------------------------------------------
# Deterministic parameter init (mirrors the module's _init_weights shapes/rules)
# ---------------------------------------------------------------------------
def init_params(key, dim1, dim2, mlp_ratio):
    hidden = int(dim1 * mlp_ratio)
    ks = jax.random.split(key, 8)

    def tn(k, shape, std=0.02):
        return (std * jax.random.truncated_normal(k, -2.0, 2.0, shape)).astype(jnp.float32)

    return {
        'norm1_w': jnp.ones((dim1,), jnp.float32), 'norm1_b': jnp.zeros((dim1,), jnp.float32),
        'norm2_w': jnp.ones((dim2,), jnp.float32), 'norm2_b': jnp.zeros((dim2,), jnp.float32),
        'norm3_w': jnp.ones((dim1,), jnp.float32), 'norm3_b': jnp.zeros((dim1,), jnp.float32),
        'an1_w': jnp.ones((dim1,), jnp.float32), 'an1_b': jnp.zeros((dim1,), jnp.float32),
        'an2_w': jnp.ones((dim2,), jnp.float32), 'an2_b': jnp.zeros((dim2,), jnp.float32),
        # Linears stored as (Cin, Cout); qkv_bias=False -> q/kv have no bias
        'q_w': tn(ks[0], (dim1, dim1)),
        'kv_w': tn(ks[1], (dim2, 2 * dim1)),
        'proj_w': tn(ks[2], (dim1, dim1)), 'proj_b': jnp.zeros((dim1,), jnp.float32),
        # 1x1 convs as linears
        'sr1_w': (math.sqrt(2.0 / dim1) * jax.random.normal(ks[3], (dim1, dim1))).astype(jnp.float32),
        'sr1_b': jnp.zeros((dim1,), jnp.float32),
        'sr2_w': (math.sqrt(2.0 / dim2) * jax.random.normal(ks[4], (dim2, dim2))).astype(jnp.float32),
        'sr2_b': jnp.zeros((dim2,), jnp.float32),
        # Mlp
        'fc1_w': tn(ks[5], (dim1, hidden)), 'fc1_b': jnp.zeros((hidden,), jnp.float32),
        'fc2_w': tn(ks[6], (hidden, dim1)), 'fc2_b': jnp.zeros((dim1,), jnp.float32),
        # depthwise 3x3 conv: (9, hidden) = (ky*3+kx, channel); fan_out = 9 for depthwise
        'dw_w': (math.sqrt(2.0 / 9.0) * jax.random.normal(ks[7], (9, hidden))).astype(jnp.float32),
        'dw_b': jnp.zeros((hidden,), jnp.float32),
    }


if __name__ == "__main__":
    B = 2
    dim1, dim2 = 32, 16
    num_heads = 4
    mlp_ratio = 4.0
    pool_ratio = 2           # Block default is 16; small value keeps spatial shapes tiny
    H1 = W1 = 16             # x has N1 = H1*W1 tokens of dim1
    H2 = W2 = 8              # y has N2 = H2*W2 tokens of dim2

    key = jax.random.PRNGKey(0)
    kx, ky, kp = jax.random.split(key, 3)
    x = jax.random.normal(kx, (B, H1 * W1, dim1), jnp.float32)
    y = jax.random.normal(ky, (B, H2 * W2, dim2), jnp.float32)
    params = init_params(kp, dim1, dim2, mlp_ratio)

    fwd = jax.jit(lambda xx, yy, pp: block_forward(
        xx, yy, H2, W2, H1, W1, pp, num_heads, pool_ratio))
    out = jax.block_until_ready(fwd(x, y, params))
    assert out.shape == (B, H1 * W1, dim1), out.shape
    assert bool(jnp.all(jnp.isfinite(out)))
    print("KERNEL_OK")
</pallas_src>

<mosaic_0001>
module attributes {stable_mosaic.version = 11 : i64} {
  func.func @_frontend_kernel(%arg0: i32, %arg1: memref<128x16xf32, #tpu.memory_space<vmem>>, %arg2: memref<8x128xf32, #tpu.memory_space<vmem>>, %arg3: memref<1x16xf32, #tpu.memory_space<vmem>>, %arg4: memref<1x16xf32, #tpu.memory_space<vmem>>, %arg5: memref<16x16xf32, #tpu.memory_space<vmem>>, %arg6: memref<1x16xf32, #tpu.memory_space<vmem>>, %arg7: memref<1x16xf32, #tpu.memory_space<vmem>>, %arg8: memref<1x16xf32, #tpu.memory_space<vmem>>, %arg9: memref<16x64xf32, #tpu.memory_space<vmem>>, %arg10: memref<8x64xf32, #tpu.memory_space<vmem>>) attributes {dimension_semantics = [#tpu.dimension_semantics<parallel>], iteration_bounds = array<i64: 1>, scalar_prefetch = 0 : i64, scratch_operands = 0 : i64, tpu.core_type = #tpu.core_type<tc>, window_params = [{transform_indices = @transform_0, window_bounds = array<i64: 128, 16>}, {pipeline_mode = #tpu.pipeline_mode<synchronous>, transform_indices = @transform_1, window_bounds = array<i64: 8, 128>}, {pipeline_mode = #tpu.pipeline_mode<synchronous>, transform_indices = @transform_2, window_bounds = array<i64: 1, 16>}, {pipeline_mode = #tpu.pipeline_mode<synchronous>, transform_indices = @transform_3, window_bounds = array<i64: 1, 16>}, {pipeline_mode = #tpu.pipeline_mode<synchronous>, transform_indices = @transform_4, window_bounds = array<i64: 16, 16>}, {pipeline_mode = #tpu.pipeline_mode<synchronous>, transform_indices = @transform_5, window_bounds = array<i64: 1, 16>}, {pipeline_mode = #tpu.pipeline_mode<synchronous>, transform_indices = @transform_6, window_bounds = array<i64: 1, 16>}, {pipeline_mode = #tpu.pipeline_mode<synchronous>, transform_indices = @transform_7, window_bounds = array<i64: 1, 16>}, {pipeline_mode = #tpu.pipeline_mode<synchronous>, transform_indices = @transform_8, window_bounds = array<i64: 16, 64>}, {transform_indices = @transform_9, window_bounds = array<i64: 8, 64>}]} {
    %c0 = arith.constant 0 : index
    %c0_0 = arith.constant 0 : index
    %0 = vector.load %arg1[%c0, %c0_0] : memref<128x16xf32, #tpu.memory_space<vmem>>, vector<128x16xf32>
    %cst = arith.constant dense<0.000000e+00> : vector<128xf32>
    %1 = vector.multi_reduction <add>, %0, %cst [1] : vector<128x16xf32> to vector<128xf32>
    %2 = vector.shape_cast %1 : vector<128xf32> to vector<128x1xf32>
    %cst_1 = arith.constant 1.600000e+01 : f32
    %3 = vector.broadcast %cst_1 : f32 to vector<128x1xf32>
    %4 = arith.divf %2, %3 : vector<128x1xf32>
    %5 = vector.broadcast %4 : vector<128x1xf32> to vector<128x16xf32>
    %6 = arith.subf %0, %5 : vector<128x16xf32>
    %7 = arith.mulf %6, %6 : vector<128x16xf32>
    %cst_2 = arith.constant dense<0.000000e+00> : vector<128xf32>
    %8 = vector.multi_reduction <add>, %7, %cst_2 [1] : vector<128x16xf32> to vector<128xf32>
    %9 = vector.shape_cast %8 : vector<128xf32> to vector<128x1xf32>
    %cst_3 = arith.constant 1.600000e+01 : f32
    %10 = vector.broadcast %cst_3 : f32 to vector<128x1xf32>
    %11 = arith.divf %9, %10 : vector<128x1xf32>
    %cst_4 = arith.constant 9.99999974E-6 : f32
    %12 = vector.broadcast %cst_4 : f32 to vector<128x1xf32>
    %13 = arith.addf %11, %12 : vector<128x1xf32>
    %14 = math.rsqrt %13 : vector<128x1xf32>
    %15 = vector.broadcast %14 : vector<128x1xf32> to vector<128x16xf32>
    %16 = arith.mulf %6, %15 : vector<128x16xf32>
    %c0_5 = arith.constant 0 : index
    %c0_6 = arith.constant 0 : index
    %17 = vector.load %arg3[%c0_5, %c0_6] : memref<1x16xf32, #tpu.memory_space<vmem>>, vector<1x16xf32>
    %18 = vector.broadcast %17 : vector<1x16xf32> to vector<128x16xf32>
    %19 = arith.mulf %16, %18 : vector<128x16xf32>
    %c0_7 = arith.constant 0 : index
    %c0_8 = arith.constant 0 : index
    %20 = vector.load %arg4[%c0_7, %c0_8] : memref<1x16xf32, #tpu.memory_space<vmem>>, vector<1x16xf32>
    %21 = vector.broadcast %20 : vector<1x16xf32> to vector<128x16xf32>
    %22 = arith.addf %19, %21 : vector<128x16xf32>
    %c0_9 = arith.constant 0 : index
    %c0_10 = arith.constant 0 : index
    %23 = vector.load %arg2[%c0_9, %c0_10] : memref<8x128xf32, #tpu.memory_space<vmem>>, vector<8x128xf32>
    %cst_11 = arith.constant dense<0.000000e+00> : vector<8x16xf32>
    %24 = tpu.matmul %23, %22, %cst_11 {dimension_numbers = #tpu.dot_dimension_numbers<[1], [0], [0], [1], [0, 0, 1, 1], [], []>} : vector<8x128xf32>, vector<128x16xf32>, vector<8x16xf32> -> vector<8x16xf32>
    %c0_12 = arith.constant 0 : index
    %c0_13 = arith.constant 0 : index
    %25 = vector.load %arg5[%c0_12, %c0_13] : memref<16x16xf32, #tpu.memory_space<vmem>>, vector<16x16xf32>
    %cst_14 = arith.constant dense<0.000000e+00> : vector<8x16xf32>
    %26 = tpu.matmul %24, %25, %cst_14 {dimension_numbers = #tpu.dot_dimension_numbers<[1], [0], [0], [1], [0, 0, 1, 1], [], []>} : vector<8x16xf32>, vector<16x16xf32>, vector<8x16xf32> -> vector<8x16xf32>
    %c0_15 = arith.constant 0 : index
    %c0_16 = arith.constant 0 : index
    %27 = vector.load %arg6[%c0_15, %c0_16] : memref<1x16xf32, #tpu.memory_space<vmem>>, vector<1x16xf32>
    %28 = vector.broadcast %27 : vector<1x16xf32> to vector<8x16xf32>
    %29 = arith.addf %26, %28 : vector<8x16xf32>
    %cst_17 = arith.constant dense<0.000000e+00> : vector<8xf32>
    %30 = vector.multi_reduction <add>, %29, %cst_17 [1] : vector<8x16xf32> to vector<8xf32>
    %31 = vector.shape_cast %30 : vector<8xf32> to vector<8x1xf32>
    %cst_18 = arith.constant 1.600000e+01 : f32
    %32 = vector.broadcast %cst_18 : f32 to vector<8x1xf32>
    %33 = arith.divf %31, %32 : vector<8x1xf32>
    %34 = vector.broadcast %33 : vector<8x1xf32> to vector<8x16xf32>
    %35 = arith.subf %29, %34 : vector<8x16xf32>
    %36 = arith.mulf %35, %35 : vector<8x16xf32>
    %cst_19 = arith.constant dense<0.000000e+00> : vector<8xf32>
    %37 = vector.multi_reduction <add>, %36, %cst_19 [1] : vector<8x16xf32> to vector<8xf32>
    %38 = vector.shape_cast %37 : vector<8xf32> to vector<8x1xf32>
    %cst_20 = arith.constant 1.600000e+01 : f32
    %39 = vector.broadcast %cst_20 : f32 to vector<8x1xf32>
    %40 = arith.divf %38, %39 : vector<8x1xf32>
    %cst_21 = arith.constant 9.99999974E-6 : f32
    %41 = vector.broadcast %cst_21 : f32 to vector<8x1xf32>
    %42 = arith.addf %40, %41 : vector<8x1xf32>
    %43 = math.rsqrt %42 : vector<8x1xf32>
    %44 = vector.broadcast %43 : vector<8x1xf32> to vector<8x16xf32>
    %45 = arith.mulf %35, %44 : vector<8x16xf32>
    %c0_22 = arith.constant 0 : index
    %c0_23 = arith.constant 0 : index
    %46 = vector.load %arg7[%c0_22, %c0_23] : memref<1x16xf32, #tpu.memory_space<vmem>>, vector<1x16xf32>
    %47 = vector.broadcast %46 : vector<1x16xf32> to vector<8x16xf32>
    %48 = arith.mulf %45, %47 : vector<8x16xf32>
    %c0_24 = arith.constant 0 : index
    %c0_25 = arith.constant 0 : index
    %49 = vector.load %arg8[%c0_24, %c0_25] : memref<1x16xf32, #tpu.memory_space<vmem>>, vector<1x16xf32>
    %50 = vector.broadcast %49 : vector<1x16xf32> to vector<8x16xf32>
    %51 = arith.addf %48, %50 : vector<8x16xf32>
    %cst_26 = arith.constant 5.000000e-01 : f32
    %52 = vector.broadcast %cst_26 : f32 to vector<8x16xf32>
    %53 = arith.mulf %52, %51 : vector<8x16xf32>
    %cst_27 = arith.constant 0.707106769 : f32
    %54 = vector.broadcast %cst_27 : f32 to vector<8x16xf32>
    %55 = arith.mulf %51, %54 : vector<8x16xf32>
    %56 = math.erf %55 : vector<8x16xf32>
    %cst_28 = arith.constant 1.000000e+00 : f32
    %57 = vector.broadcast %cst_28 : f32 to vector<8x16xf32>
    %58 = arith.addf %57, %56 : vector<8x16xf32>
    %59 = arith.mulf %53, %58 : vector<8x16xf32>
    %c0_29 = arith.constant 0 : index
    %c0_30 = arith.constant 0 : index
    %60 = vector.load %arg9[%c0_29, %c0_30] : memref<16x64xf32, #tpu.memory_space<vmem>>, vector<16x64xf32>
    %cst_31 = arith.constant dense<0.000000e+00> : vector<8x64xf32>
    %61 = tpu.matmul %59, %60, %cst_31 {dimension_numbers = #tpu.dot_dimension_numbers<[1], [0], [0], [1], [0, 0, 1, 1], [], []>} : vector<8x16xf32>, vector<16x64xf32>, vector<8x64xf32> -> vector<8x64xf32>
    %c0_32 = arith.constant 0 : index
    %c0_33 = arith.constant 0 : index
    %62 = vector.load %arg10[%c0_32, %c0_33] : memref<8x64xf32, #tpu.memory_space<vmem>>, vector<8x64xf32>
    tpu.vector_store %arg10[%c0_32, %c0_33], %61 {strides = array<i32>} : memref<8x64xf32, #tpu.memory_space<vmem>>, vector<8x64xf32>,
    return
  }
  func.func @transform_0(%arg0: i32) -> (i32, i32) {
    %c0_i32 = arith.constant 0 : i32
    %c0_i32_0 = arith.constant 0 : i32
    return %arg0, %c0_i32 : i32, i32
  }
  func.func @transform_1(%arg0: i32) -> (i32, i32) {
    %c0_i32 = arith.constant 0 : i32
    %c0_i32_0 = arith.constant 0 : i32
    %c0_i32_1 = arith.constant 0 : i32
    return %c0_i32, %c0_i32_0 : i32, i32
  }
  func.func @transform_2(%arg0: i32) -> (i32, i32) {
    %c0_i32 = arith.constant 0 : i32
    %c0_i32_0 = arith.constant 0 : i32
    %c0_i32_1 = arith.constant 0 : i32
    return %c0_i32, %c0_i32_0 : i32, i32
  }
  func.func @transform_3(%arg0: i32) -> (i32, i32) {
    %c0_i32 = arith.constant 0 : i32
    %c0_i32_0 = arith.constant 0 : i32
    %c0_i32_1 = arith.constant 0 : i32
    return %c0_i32, %c0_i32_0 : i32, i32
  }
  func.func @transform_4(%arg0: i32) -> (i32, i32) {
    %c0_i32 = arith.constant 0 : i32
    %c0_i32_0 = arith.constant 0 : i32
    %c0_i32_1 = arith.constant 0 : i32
    return %c0_i32, %c0_i32_0 : i32, i32
  }
  func.func @transform_5(%arg0: i32) -> (i32, i32) {
    %c0_i32 = arith.constant 0 : i32
    %c0_i32_0 = arith.constant 0 : i32
    %c0_i32_1 = arith.constant 0 : i32
    return %c0_i32, %c0_i32_0 : i32, i32
  }
  func.func @transform_6(%arg0: i32) -> (i32, i32) {
    %c0_i32 = arith.constant 0 : i32
    %c0_i32_0 = arith.constant 0 : i32
    %c0_i32_1 = arith.constant 0 : i32
    return %c0_i32, %c0_i32_0 : i32, i32
  }
  func.func @transform_7(%arg0: i32) -> (i32, i32) {
    %c0_i32 = arith.constant 0 : i32
    %c0_i32_0 = arith.constant 0 : i32
    %c0_i32_1 = arith.constant 0 : i32
    return %c0_i32, %c0_i32_0 : i32, i32
  }
  func.func @transform_8(%arg0: i32) -> (i32, i32) {
    %c0_i32 = arith.constant 0 : i32
    %c0_i32_0 = arith.constant 0 : i32
    %c0_i32_1 = arith.constant 0 : i32
    return %c0_i32, %c0_i32_0 : i32, i32
  }
  func.func @transform_9(%arg0: i32) -> (i32, i32) {
    %c0_i32 = arith.constant 0 : i32
    %c0_i32_0 = arith.constant 0 : i32
    return %arg0, %c0_i32 : i32, i32
  }
}

module attributes {stable_mosaic.version = 11 : i64} {
  func.func @_frontend_kernel(%arg0: i32, %arg1: memref<256x32xf32, #tpu.memory_space<vmem>>, %arg2: memref<64x256xf32, #tpu.memory_space<vmem>>, %arg3: memref<1x32xf32, #tpu.memory_space<vmem>>, %arg4: memref<1x32xf32, #tpu.memory_space<vmem>>, %arg5: memref<32x32xf32, #tpu.memory_space<vmem>>, %arg6: memref<1x32xf32, #tpu.memory_space<vmem>>, %arg7: memref<1x32xf32, #tpu.memory_space<vmem>>, %arg8: memref<1x32xf32, #tpu.memory_space<vmem>>, %arg9: memref<32x32xf32, #tpu.memory_space<vmem>>, %arg10: memref<64x32xf32, #tpu.memory_space<vmem>>) attributes {dimension_semantics = [#tpu.dimension_semantics<parallel>], iteration_bounds = array<i64: 2>, scalar_prefetch = 0 : i64, scratch_operands = 0 : i64, tpu.core_type = #tpu.core_type<tc>, window_params = [{transform_indices = @transform_0, window_bounds = array<i64: 256, 32>}, {pipeline_mode = #tpu.pipeline_mode<synchronous>, transform_indices = @transform_1, window_bounds = array<i64: 64, 256>}, {pipeline_mode = #tpu.pipeline_mode<synchronous>, transform_indices = @transform_2, window_bounds = array<i64: 1, 32>}, {pipeline_mode = #tpu.pipeline_mode<synchronous>, transform_indices = @transform_3, window_bounds = array<i64: 1, 32>}, {pipeline_mode = #tpu.pipeline_mode<synchronous>, transform_indices = @transform_4, window_bounds = array<i64: 32, 32>}, {pipeline_mode = #tpu.pipeline_mode<synchronous>, transform_indices = @transform_5, window_bounds = array<i64: 1, 32>}, {pipeline_mode = #tpu.pipeline_mode<synchronous>, transform_indices = @transform_6, window_bounds = array<i64: 1, 32>}, {pipeline_mode = #tpu.pipeline_mode<synchronous>, transform_indices = @transform_7, window_bounds = array<i64: 1, 32>}, {pipeline_mode = #tpu.pipeline_mode<synchronous>, transform_indices = @transform_8, window_bounds = array<i64: 32, 32>}, {transform_indices = @transform_9, window_bounds = array<i64: 64, 32>}]} {
    %c0 = arith.constant 0 : index
    %c0_0 = arith.constant 0 : index
    %0 = vector.load %arg1[%c0, %c0_0] : memref<256x32xf32, #tpu.memory_space<vmem>>, vector<256x32xf32>
    %cst = arith.constant dense<0.000000e+00> : vector<256xf32>
    %1 = vector.multi_reduction <add>, %0, %cst [1] : vector<256x32xf32> to vector<256xf32>
    %2 = vector.shape_cast %1 : vector<256xf32> to vector<256x1xf32>
    %cst_1 = arith.constant 3.200000e+01 : f32
    %3 = vector.broadcast %cst_1 : f32 to vector<256x1xf32>
    %4 = arith.divf %2, %3 : vector<256x1xf32>
    %5 = vector.broadcast %4 : vector<256x1xf32> to vector<256x32xf32>
    %6 = arith.subf %0, %5 : vector<256x32xf32>
    %7 = arith.mulf %6, %6 : vector<256x32xf32>
    %cst_2 = arith.constant dense<0.000000e+00> : vector<256xf32>
    %8 = vector.multi_reduction <add>, %7, %cst_2 [1] : vector<256x32xf32> to vector<256xf32>
    %9 = vector.shape_cast %8 : vector<256xf32> to vector<256x1xf32>
    %cst_3 = arith.constant 3.200000e+01 : f32
    %10 = vector.broadcast %cst_3 : f32 to vector<256x1xf32>
    %11 = arith.divf %9, %10 : vector<256x1xf32>
    %cst_4 = arith.constant 9.99999974E-6 : f32
    %12 = vector.broadcast %cst_4 : f32 to vector<256x1xf32>
    %13 = arith.addf %11, %12 : vector<256x1xf32>
    %14 = math.rsqrt %13 : vector<256x1xf32>
    %15 = vector.broadcast %14 : vector<256x1xf32> to vector<256x32xf32>
    %16 = arith.mulf %6, %15 : vector<256x32xf32>
    %c0_5 = arith.constant 0 : index
    %c0_6 = arith.constant 0 : index
    %17 = vector.load %arg3[%c0_5, %c0_6] : memref<1x32xf32, #tpu.memory_space<vmem>>, vector<1x32xf32>
    %18 = vector.broadcast %17 : vector<1x32xf32> to vector<256x32xf32>
    %19 = arith.mulf %16, %18 : vector<256x32xf32>
    %c0_7 = arith.constant 0 : index
    %c0_8 = arith.constant 0 : index
    %20 = vector.load %arg4[%c0_7, %c0_8] : memref<1x32xf32, #tpu.memory_space<vmem>>, vector<1x32xf32>
    %21 = vector.broadcast %20 : vector<1x32xf32> to vector<256x32xf32>
    %22 = arith.addf %19, %21 : vector<256x32xf32>
    %c0_9 = arith.constant 0 : index
    %c0_10 = arith.constant 0 : index
    %23 = vector.load %arg2[%c0_9, %c0_10] : memref<64x256xf32, #tpu.memory_space<vmem>>, vector<64x256xf32>
    %cst_11 = arith.constant dense<0.000000e+00> : vector<64x32xf32>
    %24 = tpu.matmul %23, %22, %cst_11 {dimension_numbers = #tpu.dot_dimension_numbers<[1], [0], [0], [1], [0, 0, 1, 1], [], []>} : vector<64x256xf32>, vector<256x32xf32>, vector<64x32xf32> -> vector<64x32xf32>
    %c0_12 = arith.constant 0 : index
    %c0_13 = arith.constant 0 : index
    %25 = vector.load %arg5[%c0_12, %c0_13] : memref<32x32xf32, #tpu.memory_space<vmem>>, vector<32x32xf32>
    %cst_14 = arith.constant dense<0.000000e+00> : vector<64x32xf32>
    %26 = tpu.matmul %24, %25, %cst_14 {dimension_numbers = #tpu.dot_dimension_numbers<[1], [0], [0], [1], [0, 0, 1, 1], [], []>} : vector<64x32xf32>, vector<32x32xf32>, vector<64x32xf32> -> vector<64x32xf32>
    %c0_15 = arith.constant 0 : index
    %c0_16 = arith.constant 0 : index
    %27 = vector.load %arg6[%c0_15, %c0_16] : memref<1x32xf32, #tpu.memory_space<vmem>>, vector<1x32xf32>
    %28 = vector.broadcast %27 : vector<1x32xf32> to vector<64x32xf32>
    %29 = arith.addf %26, %28 : vector<64x32xf32>
    %cst_17 = arith.constant dense<0.000000e+00> : vector<64xf32>
    %30 = vector.multi_reduction <add>, %29, %cst_17 [1] : vector<64x32xf32> to vector<64xf32>
    %31 = vector.shape_cast %30 : vector<64xf32> to vector<64x1xf32>
    %cst_18 = arith.constant 3.200000e+01 : f32
    %32 = vector.broadcast %cst_18 : f32 to vector<64x1xf32>
    %33 = arith.divf %31, %32 : vector<64x1xf32>
    %34 = vector.broadcast %33 : vector<64x1xf32> to vector<64x32xf32>
    %35 = arith.subf %29, %34 : vector<64x32xf32>
    %36 = arith.mulf %35, %35 : vector<64x32xf32>
    %cst_19 = arith.constant dense<0.000000e+00> : vector<64xf32>
    %37 = vector.multi_reduction <add>, %36, %cst_19 [1] : vector<64x32xf32> to vector<64xf32>
    %38 = vector.shape_cast %37 : vector<64xf32> to vector<64x1xf32>
    %cst_20 = arith.constant 3.200000e+01 : f32
    %39 = vector.broadcast %cst_20 : f32 to vector<64x1xf32>
    %40 = arith.divf %38, %39 : vector<64x1xf32>
    %cst_21 = arith.constant 9.99999974E-6 : f32
    %41 = vector.broadcast %cst_21 : f32 to vector<64x1xf32>
    %42 = arith.addf %40, %41 : vector<64x1xf32>
    %43 = math.rsqrt %42 : vector<64x1xf32>
    %44 = vector.broadcast %43 : vector<64x1xf32> to vector<64x32xf32>
    %45 = arith.mulf %35, %44 : vector<64x32xf32>
    %c0_22 = arith.constant 0 : index
    %c0_23 = arith.constant 0 : index
    %46 = vector.load %arg7[%c0_22, %c0_23] : memref<1x32xf32, #tpu.memory_space<vmem>>, vector<1x32xf32>
    %47 = vector.broadcast %46 : vector<1x32xf32> to vector<64x32xf32>
    %48 = arith.mulf %45, %47 : vector<64x32xf32>
    %c0_24 = arith.constant 0 : index
    %c0_25 = arith.constant 0 : index
    %49 = vector.load %arg8[%c0_24, %c0_25] : memref<1x32xf32, #tpu.memory_space<vmem>>, vector<1x32xf32>
    %50 = vector.broadcast %49 : vector<1x32xf32> to vector<64x32xf32>
    %51 = arith.addf %48, %50 : vector<64x32xf32>
    %cst_26 = arith.constant 5.000000e-01 : f32
    %52 = vector.broadcast %cst_26 : f32 to vector<64x32xf32>
    %53 = arith.mulf %52, %51 : vector<64x32xf32>
    %cst_27 = arith.constant 0.707106769 : f32
    %54 = vector.broadcast %cst_27 : f32 to vector<64x32xf32>
    %55 = arith.mulf %51, %54 : vector<64x32xf32>
    %56 = math.erf %55 : vector<64x32xf32>
    %cst_28 = arith.constant 1.000000e+00 : f32
    %57 = vector.broadcast %cst_28 : f32 to vector<64x32xf32>
    %58 = arith.addf %57, %56 : vector<64x32xf32>
    %59 = arith.mulf %53, %58 : vector<64x32xf32>
    %c0_29 = arith.constant 0 : index
    %c0_30 = arith.constant 0 : index
    %60 = vector.load %arg9[%c0_29, %c0_30] : memref<32x32xf32, #tpu.memory_space<vmem>>, vector<32x32xf32>
    %cst_31 = arith.constant dense<0.000000e+00> : vector<64x32xf32>
    %61 = tpu.matmul %59, %60, %cst_31 {dimension_numbers = #tpu.dot_dimension_numbers<[1], [0], [0], [1], [0, 0, 1, 1], [], []>} : vector<64x32xf32>, vector<32x32xf32>, vector<64x32xf32> -> vector<64x32xf32>
    %cst_32 = arith.constant 0.353553385 : f32
    %62 = vector.broadcast %cst_32 : f32 to vector<64x32xf32>
    %63 = arith.mulf %61, %62 : vector<64x32xf32>
    %c0_33 = arith.constant 0 : index
    %c0_34 = arith.constant 0 : index
    %64 = vector.load %arg10[%c0_33, %c0_34] : memref<64x32xf32, #tpu.memory_space<vmem>>, vector<64x32xf32>
    tpu.vector_store %arg10[%c0_33, %c0_34], %63 {strides = array<i32>} : memref<64x32xf32, #tpu.memory_space<vmem>>, vector<64x32xf32>,
    return
  }
  func.func @transform_0(%arg0: i32) -> (i32, i32) {
    %c0_i32 = arith.constant 0 : i32
    %c0_i32_0 = arith.constant 0 : i32
    return %arg0, %c0_i32 : i32, i32
  }
  func.func @transform_1(%arg0: i32) -> (i32, i32) {
    %c0_i32 = arith.constant 0 : i32
    %c0_i32_0 = arith.constant 0 : i32
    %c0_i32_1 = arith.constant 0 : i32
    return %c0_i32, %c0_i32_0 : i32, i32
  }
  func.func @transform_2(%arg0: i32) -> (i32, i32) {
    %c0_i32 = arith.constant 0 : i32
    %c0_i32_0 = arith.constant 0 : i32
    %c0_i32_1 = arith.constant 0 : i32
    return %c0_i32, %c0_i32_0 : i32, i32
  }
  func.func @transform_3(%arg0: i32) -> (i32, i32) {
    %c0_i32 = arith.constant 0 : i32
    %c0_i32_0 = arith.constant 0 : i32
    %c0_i32_1 = arith.constant 0 : i32
    return %c0_i32, %c0_i32_0 : i32, i32
  }
  func.func @transform_4(%arg0: i32) -> (i32, i32) {
    %c0_i32 = arith.constant 0 : i32
    %c0_i32_0 = arith.constant 0 : i32
    %c0_i32_1 = arith.constant 0 : i32
    return %c0_i32, %c0_i32_0 : i32, i32
  }
  func.func @transform_5(%arg0: i32) -> (i32, i32) {
    %c0_i32 = arith.constant 0 : i32
    %c0_i32_0 = arith.constant 0 : i32
    %c0_i32_1 = arith.constant 0 : i32
    return %c0_i32, %c0_i32_0 : i32, i32
  }
  func.func @transform_6(%arg0: i32) -> (i32, i32) {
    %c0_i32 = arith.constant 0 : i32
    %c0_i32_0 = arith.constant 0 : i32
    %c0_i32_1 = arith.constant 0 : i32
    return %c0_i32, %c0_i32_0 : i32, i32
  }
  func.func @transform_7(%arg0: i32) -> (i32, i32) {
    %c0_i32 = arith.constant 0 : i32
    %c0_i32_0 = arith.constant 0 : i32
    %c0_i32_1 = arith.constant 0 : i32
    return %c0_i32, %c0_i32_0 : i32, i32
  }
  func.func @transform_8(%arg0: i32) -> (i32, i32) {
    %c0_i32 = arith.constant 0 : i32
    %c0_i32_0 = arith.constant 0 : i32
    %c0_i32_1 = arith.constant 0 : i32
    return %c0_i32, %c0_i32_0 : i32, i32
  }
  func.func @transform_9(%arg0: i32) -> (i32, i32) {
    %c0_i32 = arith.constant 0 : i32
    %c0_i32_0 = arith.constant 0 : i32
    return %arg0, %c0_i32 : i32, i32
  }
}

module attributes {stable_mosaic.version = 11 : i64} {
  func.func @_attn_proj_kernel(%arg0: i32, %arg1: i32, %arg2: memref<1x32x32xf32, #tpu.memory_space<vmem>>, %arg3: memref<1x4x64xf32, #tpu.memory_space<vmem>>, %arg4: memref<32x32xf32, #tpu.memory_space<vmem>>, %arg5: memref<1x32xf32, #tpu.memory_space<vmem>>, %arg6: memref<1x32x32xf32, #tpu.memory_space<vmem>>) attributes {dimension_semantics = [#tpu.dimension_semantics<parallel>, #tpu.dimension_semantics<parallel>], iteration_bounds = array<i64: 2, 2>, scalar_prefetch = 0 : i64, scratch_operands = 0 : i64, tpu.core_type = #tpu.core_type<tc>, window_params = [{transform_indices = @transform_0, window_bounds = array<i64: 1, 32, 32>}, {transform_indices = @transform_1, window_bounds = array<i64: 1, 4, 64>}, {pipeline_mode = #tpu.pipeline_mode<synchronous>, transform_indices = @transform_2, window_bounds = array<i64: 32, 32>}, {pipeline_mode = #tpu.pipeline_mode<synchronous>, transform_indices = @transform_3, window_bounds = array<i64: 1, 32>}, {transform_indices = @transform_4, window_bounds = array<i64: 1, 32, 32>}]} {
    %c0 = arith.constant 0 : index
    %c0_0 = arith.constant 0 : index
    %c0_1 = arith.constant 0 : index
    %0 = vector.load %arg2[%c0, %c0_0, %c0_1] : memref<1x32x32xf32, #tpu.memory_space<vmem>>, vector<1x32x32xf32>
    %1 = vector.shape_cast %0 : vector<1x32x32xf32> to vector<32x32xf32>
    %c0_2 = arith.constant 0 : index
    %c0_3 = arith.constant 0 : index
    %c0_4 = arith.constant 0 : index
    %2 = vector.load %arg3[%c0_2, %c0_3, %c0_4] : memref<1x4x64xf32, #tpu.memory_space<vmem>>, vector<1x4x64xf32>
    %3 = vector.shape_cast %2 : vector<1x4x64xf32> to vector<4x64xf32>
    %4 = vector.extract_strided_slice %1 {offsets = [0, 0], sizes = [32, 8], strides = [1, 1]} : vector<32x32xf32> to vector<32x8xf32>
    %5 = vector.extract_strided_slice %3 {offsets = [0, 0], sizes = [4, 8], strides = [1, 1]} : vector<4x64xf32> to vector<4x8xf32>
    %6 = vector.extract_strided_slice %3 {offsets = [0, 32], sizes = [4, 8], strides = [1, 1]} : vector<4x64xf32> to vector<4x8xf32>
    %cst = arith.constant dense<0.000000e+00> : vector<32x4xf32>
    %7 = tpu.matmul %4, %5, %cst {dimension_numbers = #tpu.dot_dimension_numbers<[1], [1], [0], [0], [0, 0, 1, 0], [], []>} : vector<32x8xf32>, vector<4x8xf32>, vector<32x4xf32> -> vector<32x4xf32>
    %cst_5 = arith.constant dense<0xFF800000> : vector<32xf32>
    %8 = vector.multi_reduction <maximumf>, %7, %cst_5 [1] : vector<32x4xf32> to vector<32xf32>
    %9 = vector.shape_cast %8 : vector<32xf32> to vector<32x1xf32>
    %10 = vector.broadcast %9 : vector<32x1xf32> to vector<32x4xf32>
    %11 = arith.subf %7, %10 : vector<32x4xf32>
    %12 = math.exp %11 : vector<32x4xf32>
    %cst_6 = arith.constant dense<0.000000e+00> : vector<32xf32>
    %13 = vector.multi_reduction <add>, %12, %cst_6 [1] : vector<32x4xf32> to vector<32xf32>
    %14 = vector.shape_cast %13 : vector<32xf32> to vector<32x1xf32>
    %15 = tpu.reciprocal %14 {approx = true} : vector<32x1xf32> -> vector<32x1xf32>
    %16 = vector.broadcast %15 : vector<32x1xf32> to vector<32x4xf32>
    %17 = arith.mulf %12, %16 : vector<32x4xf32>
    %cst_7 = arith.constant dense<0.000000e+00> : vector<32x8xf32>
    %18 = tpu.matmul %17, %6, %cst_7 {dimension_numbers = #tpu.dot_dimension_numbers<[1], [0], [0], [1], [0, 0, 1, 1], [], []>} : vector<32x4xf32>, vector<4x8xf32>, vector<32x8xf32> -> vector<32x8xf32>
    %19 = vector.extract_strided_slice %1 {offsets = [0, 8], sizes = [32, 8], strides = [1, 1]} : vector<32x32xf32> to vector<32x8xf32>
    %20 = vector.extract_strided_slice %3 {offsets = [0, 8], sizes = [4, 8], strides = [1, 1]} : vector<4x64xf32> to vector<4x8xf32>
    %21 = vector.extract_strided_slice %3 {offsets = [0, 40], sizes = [4, 8], strides = [1, 1]} : vector<4x64xf32> to vector<4x8xf32>
    %cst_8 = arith.constant dense<0.000000e+00> : vector<32x4xf32>
    %22 = tpu.matmul %19, %20, %cst_8 {dimension_numbers = #tpu.dot_dimension_numbers<[1], [1], [0], [0], [0, 0, 1, 0], [], []>} : vector<32x8xf32>, vector<4x8xf32>, vector<32x4xf32> -> vector<32x4xf32>
    %cst_9 = arith.constant dense<0xFF800000> : vector<32xf32>
    %23 = vector.multi_reduction <maximumf>, %22, %cst_9 [1] : vector<32x4xf32> to vector<32xf32>
    %24 = vector.shape_cast %23 : vector<32xf32> to vector<32x1xf32>
    %25 = vector.broadcast %24 : vector<32x1xf32> to vector<32x4xf32>
    %26 = arith.subf %22, %25 : vector<32x4xf32>
    %27 = math.exp %26 : vector<32x4xf32>
    %cst_10 = arith.constant dense<0.000000e+00> : vector<32xf32>
    %28 = vector.multi_reduction <add>, %27, %cst_10 [1] : vector<32x4xf32> to vector<32xf32>
    %29 = vector.shape_cast %28 : vector<32xf32> to vector<32x1xf32>
    %30 = tpu.reciprocal %29 {approx = true} : vector<32x1xf32> -> vector<32x1xf32>
    %31 = vector.broadcast %30 : vector<32x1xf32> to vector<32x4xf32>
    %32 = arith.mulf %27, %31 : vector<32x4xf32>
    %cst_11 = arith.constant dense<0.000000e+00> : vector<32x8xf32>
    %33 = tpu.matmul %32, %21, %cst_11 {dimension_numbers = #tpu.dot_dimension_numbers<[1], [0], [0], [1], [0, 0, 1, 1], [], []>} : vector<32x4xf32>, vector<4x8xf32>, vector<32x8xf32> -> vector<32x8xf32>
    %34 = vector.extract_strided_slice %1 {offsets = [0, 16], sizes = [32, 8], strides = [1, 1]} : vector<32x32xf32> to vector<32x8xf32>
    %35 = vector.extract_strided_slice %3 {offsets = [0, 16], sizes = [4, 8], strides = [1, 1]} : vector<4x64xf32> to vector<4x8xf32>
    %36 = vector.extract_strided_slice %3 {offsets = [0, 48], sizes = [4, 8], strides = [1, 1]} : vector<4x64xf32> to vector<4x8xf32>
    %cst_12 = arith.constant dense<0.000000e+00> : vector<32x4xf32>
    %37 = tpu.matmul %34, %35, %cst_12 {dimension_numbers = #tpu.dot_dimension_numbers<[1], [1], [0], [0], [0, 0, 1, 0], [], []>} : vector<32x8xf32>, vector<4x8xf32>, vector<32x4xf32> -> vector<32x4xf32>
    %cst_13 = arith.constant dense<0xFF800000> : vector<32xf32>
    %38 = vector.multi_reduction <maximumf>, %37, %cst_13 [1] : vector<32x4xf32> to vector<32xf32>
    %39 = vector.shape_cast %38 : vector<32xf32> to vector<32x1xf32>
    %40 = vector.broadcast %39 : vector<32x1xf32> to vector<32x4xf32>
    %41 = arith.subf %37, %40 : vector<32x4xf32>
    %42 = math.exp %41 : vector<32x4xf32>
    %cst_14 = arith.constant dense<0.000000e+00> : vector<32xf32>
    %43 = vector.multi_reduction <add>, %42, %cst_14 [1] : vector<32x4xf32> to vector<32xf32>
    %44 = vector.shape_cast %43 : vector<32xf32> to vector<32x1xf32>
    %45 = tpu.reciprocal %44 {approx = true} : vector<32x1xf32> -> vector<32x1xf32>
    %46 = vector.broadcast %45 : vector<32x1xf32> to vector<32x4xf32>
    %47 = arith.mulf %42, %46 : vector<32x4xf32>
    %cst_15 = arith.constant dense<0.000000e+00> : vector<32x8xf32>
    %48 = tpu.matmul %47, %36, %cst_15 {dimension_numbers = #tpu.dot_dimension_numbers<[1], [0], [0], [1], [0, 0, 1, 1], [], []>} : vector<32x4xf32>, vector<4x8xf32>, vector<32x8xf32> -> vector<32x8xf32>
    %49 = vector.extract_strided_slice %1 {offsets = [0, 24], sizes = [32, 8], strides = [1, 1]} : vector<32x32xf32> to vector<32x8xf32>
    %50 = vector.extract_strided_slice %3 {offsets = [0, 24], sizes = [4, 8], strides = [1, 1]} : vector<4x64xf32> to vector<4x8xf32>
    %51 = vector.extract_strided_slice %3 {offsets = [0, 56], sizes = [4, 8], strides = [1, 1]} : vector<4x64xf32> to vector<4x8xf32>
    %cst_16 = arith.constant dense<0.000000e+00> : vector<32x4xf32>
    %52 = tpu.matmul %49, %50, %cst_16 {dimension_numbers = #tpu.dot_dimension_numbers<[1], [1], [0], [0], [0, 0, 1, 0], [], []>} : vector<32x8xf32>, vector<4x8xf32>, vector<32x4xf32> -> vector<32x4xf32>
    %cst_17 = arith.constant dense<0xFF800000> : vector<32xf32>
    %53 = vector.multi_reduction <maximumf>, %52, %cst_17 [1] : vector<32x4xf32> to vector<32xf32>
    %54 = vector.shape_cast %53 : vector<32xf32> to vector<32x1xf32>
    %55 = vector.broadcast %54 : vector<32x1xf32> to vector<32x4xf32>
    %56 = arith.subf %52, %55 : vector<32x4xf32>
    %57 = math.exp %56 : vector<32x4xf32>
    %cst_18 = arith.constant dense<0.000000e+00> : vector<32xf32>
    %58 = vector.multi_reduction <add>, %57, %cst_18 [1] : vector<32x4xf32> to vector<32xf32>
    %59 = vector.shape_cast %58 : vector<32xf32> to vector<32x1xf32>
    %60 = tpu.reciprocal %59 {approx = true} : vector<32x1xf32> -> vector<32x1xf32>
    %61 = vector.broadcast %60 : vector<32x1xf32> to vector<32x4xf32>
    %62 = arith.mulf %57, %61 : vector<32x4xf32>
    %cst_19 = arith.constant dense<0.000000e+00> : vector<32x8xf32>
    %63 = tpu.matmul %62, %51, %cst_19 {dimension_numbers = #tpu.dot_dimension_numbers<[1], [0], [0], [1], [0, 0, 1, 1], [], []>} : vector<32x4xf32>, vector<4x8xf32>, vector<32x8xf32> -> vector<32x8xf32>
    %64 = tpu.concatenate %18, %33, %48, %63 in 1 : vector<32x8xf32>, vector<32x8xf32>, vector<32x8xf32>, vector<32x8xf32> -> vector<32x32xf32>
    %c0_20 = arith.constant 0 : index
    %c0_21 = arith.constant 0 : index
    %65 = vector.load %arg4[%c0_20, %c0_21] : memref<32x32xf32, #tpu.memory_space<vmem>>, vector<32x32xf32>
    %cst_22 = arith.constant dense<0.000000e+00> : vector<32x32xf32>
    %66 = tpu.matmul %64, %65, %cst_22 {dimension_numbers = #tpu.dot_dimension_numbers<[1], [0], [0], [1], [0, 0, 1, 1], [], []>} : vector<32x32xf32>, vector<32x32xf32>, vector<32x32xf32> -> vector<32x32xf32>
    %c0_23 = arith.constant 0 : index
    %c0_24 = arith.constant 0 : index
    %67 = vector.load %arg5[%c0_23, %c0_24] : memref<1x32xf32, #tpu.memory_space<vmem>>, vector<1x32xf32>
    %68 = vector.broadcast %67 : vector<1x32xf32> to vector<32x32xf32>
    %69 = arith.addf %66, %68 : vector<32x32xf32>
    %c0_25 = arith.constant 0 : index
    %c0_26 = arith.constant 0 : index
    %c0_27 = arith.constant 0 : index
    %70 = vector.load %arg6[%c0_25, %c0_26, %c0_27] : memref<1x32x32xf32, #tpu.memory_space<vmem>>, vector<1x32x32xf32>
    %71 = vector.shape_cast %70 : vector<1x32x32xf32> to vector<32x32xf32>
    %72 = vector.shape_cast %69 : vector<32x32xf32> to vector<1x32x32xf32>
    tpu.vector_store %arg6[%c0_25, %c0_26, %c0_27], %72 {strides = array<i32>} : memref<1x32x32xf32, #tpu.memory_space<vmem>>, vector<1x32x32xf32>,
    return
  }
  func.func @transform_0(%arg0: i32, %arg1: i32) -> (i32, i32, i32) {
    %c0_i32 = arith.constant 0 : i32
    %c0_i32_0 = arith.constant 0 : i32
    return %arg0, %arg1, %c0_i32 : i32, i32, i32
  }
  func.func @transform_1(%arg0: i32, %arg1: i32) -> (i32, i32, i32) {
    %c0_i32 = arith.constant 0 : i32
    %c0_i32_0 = arith.constant 0 : i32
    %c0_i32_1 = arith.constant 0 : i32
    return %arg0, %c0_i32, %c0_i32_0 : i32, i32, i32
  }
  func.func @transform_2(%arg0: i32, %arg1: i32) -> (i32, i32) {
    %c0_i32 = arith.constant 0 : i32
    %c0_i32_0 = arith.constant 0 : i32
    %c0_i32_1 = arith.constant 0 : i32
    return %c0_i32, %c0_i32_0 : i32, i32
  }
  func.func @transform_3(%arg0: i32, %arg1: i32) -> (i32, i32) {
    %c0_i32 = arith.constant 0 : i32
    %c0_i32_0 = arith.constant 0 : i32
    %c0_i32_1 = arith.constant 0 : i32
    return %c0_i32, %c0_i32_0 : i32, i32
  }
  func.func @transform_4(%arg0: i32, %arg1: i32) -> (i32, i32, i32) {
    %c0_i32 = arith.constant 0 : i32
    %c0_i32_0 = arith.constant 0 : i32
    return %arg0, %arg1, %c0_i32 : i32, i32, i32
  }
}

module attributes {stable_mosaic.version = 11 : i64} {
  func.func @_dwconv_kernel(%arg0: i32, %arg1: i32, %arg2: memref<1x16x16x128xf32, #tpu.memory_space<vmem>>, %arg3: memref<9x128xf32, #tpu.memory_space<vmem>>, %arg4: memref<1x128xf32, #tpu.memory_space<vmem>>, %arg5: memref<1x16x16x128xf32, #tpu.memory_space<vmem>>) attributes {dimension_semantics = [#tpu.dimension_semantics<parallel>, #tpu.dimension_semantics<parallel>], iteration_bounds = array<i64: 2, 1>, scalar_prefetch = 0 : i64, scratch_operands = 0 : i64, tpu.core_type = #tpu.core_type<tc>, window_params = [{transform_indices = @transform_0, window_bounds = array<i64: 1, 16, 16, 128>}, {transform_indices = @transform_1, window_bounds = array<i64: 9, 128>}, {transform_indices = @transform_2, window_bounds = array<i64: 1, 128>}, {transform_indices = @transform_3, window_bounds = array<i64: 1, 16, 16, 128>}]} {
    %c0 = arith.constant 0 : index
    %c0_0 = arith.constant 0 : index
    %c0_1 = arith.constant 0 : index
    %c0_2 = arith.constant 0 : index
    %0 = vector.load %arg2[%c0, %c0_0, %c0_1, %c0_2] : memref<1x16x16x128xf32, #tpu.memory_space<vmem>>, vector<1x16x16x128xf32>
    %1 = vector.shape_cast %0 : vector<1x16x16x128xf32> to vector<16x16x128xf32>
    %cst = arith.constant 0.000000e+00 : f32
    %2 = vector.broadcast %cst : f32 to vector<16x1x128xf32>
    %cst_3 = arith.constant 0.000000e+00 : f32
    %3 = vector.broadcast %cst_3 : f32 to vector<1x16x128xf32>
    %4 = vector.extract_strided_slice %1 {offsets = [0, 0, 0], sizes = [16, 15, 128], strides = [1, 1, 1]} : vector<16x16x128xf32> to vector<16x15x128xf32>
    %5 = tpu.concatenate %2, %4 in 1 : vector<16x1x128xf32>, vector<16x15x128xf32> -> vector<16x16x128xf32>
    %6 = vector.extract_strided_slice %1 {offsets = [0, 1, 0], sizes = [16, 15, 128], strides = [1, 1, 1]} : vector<16x16x128xf32> to vector<16x15x128xf32>
    %7 = tpu.concatenate %6, %2 in 1 : vector<16x15x128xf32>, vector<16x1x128xf32> -> vector<16x16x128xf32>
    %c0_4 = arith.constant 0 : index
    %c0_5 = arith.constant 0 : index
    %8 = vector.load %arg3[%c0_4, %c0_5] : memref<9x128xf32, #tpu.memory_space<vmem>>, vector<1x128xf32>
    %9 = vector.shape_cast %8 : vector<1x128xf32> to vector<128xf32>
    %c1 = arith.constant 1 : index
    %c0_6 = arith.constant 0 : index
    %10 = vector.load %arg3[%c1, %c0_6] : memref<9x128xf32, #tpu.memory_space<vmem>>, vector<1x128xf32>
    %11 = vector.shape_cast %10 : vector<1x128xf32> to vector<128xf32>
    %c2 = arith.constant 2 : index
    %c0_7 = arith.constant 0 : index
    %12 = vector.load %arg3[%c2, %c0_7] : memref<9x128xf32, #tpu.memory_space<vmem>>, vector<1x128xf32>
    %13 = vector.shape_cast %12 : vector<1x128xf32> to vector<128xf32>
    %14 = vector.shape_cast %9 : vector<128xf32> to vector<1x1x128xf32>
    %15 = vector.broadcast %14 : vector<1x1x128xf32> to vector<16x16x128xf32>
    %16 = arith.mulf %5, %15 : vector<16x16x128xf32>
    %17 = vector.shape_cast %11 : vector<128xf32> to vector<1x1x128xf32>
    %18 = vector.broadcast %17 : vector<1x1x128xf32> to vector<16x16x128xf32>
    %19 = arith.mulf %1, %18 : vector<16x16x128xf32>
    %20 = arith.addf %16, %19 : vector<16x16x128xf32>
    %21 = vector.shape_cast %13 : vector<128xf32> to vector<1x1x128xf32>
    %22 = vector.broadcast %21 : vector<1x1x128xf32> to vector<16x16x128xf32>
    %23 = arith.mulf %7, %22 : vector<16x16x128xf32>
    %24 = arith.addf %20, %23 : vector<16x16x128xf32>
    %c3 = arith.constant 3 : index
    %c0_8 = arith.constant 0 : index
    %25 = vector.load %arg3[%c3, %c0_8] : memref<9x128xf32, #tpu.memory_space<vmem>>, vector<1x128xf32>
    %26 = vector.shape_cast %25 : vector<1x128xf32> to vector<128xf32>
    %c4 = arith.constant 4 : index
    %c0_9 = arith.constant 0 : index
    %27 = vector.load %arg3[%c4, %c0_9] : memref<9x128xf32, #tpu.memory_space<vmem>>, vector<1x128xf32>
    %28 = vector.shape_cast %27 : vector<1x128xf32> to vector<128xf32>
    %c5 = arith.constant 5 : index
    %c0_10 = arith.constant 0 : index
    %29 = vector.load %arg3[%c5, %c0_10] : memref<9x128xf32, #tpu.memory_space<vmem>>, vector<1x128xf32>
    %30 = vector.shape_cast %29 : vector<1x128xf32> to vector<128xf32>
    %31 = vector.shape_cast %26 : vector<128xf32> to vector<1x1x128xf32>
    %32 = vector.broadcast %31 : vector<1x1x128xf32> to vector<16x16x128xf32>
    %33 = arith.mulf %5, %32 : vector<16x16x128xf32>
    %34 = vector.shape_cast %28 : vector<128xf32> to vector<1x1x128xf32>
    %35 = vector.broadcast %34 : vector<1x1x128xf32> to vector<16x16x128xf32>
    %36 = arith.mulf %1, %35 : vector<16x16x128xf32>
    %37 = arith.addf %33, %36 : vector<16x16x128xf32>
    %38 = vector.shape_cast %30 : vector<128xf32> to vector<1x1x128xf32>
    %39 = vector.broadcast %38 : vector<1x1x128xf32> to vector<16x16x128xf32>
    %40 = arith.mulf %7, %39 : vector<16x16x128xf32>
    %41 = arith.addf %37, %40 : vector<16x16x128xf32>
    %c6 = arith.constant 6 : index
    %c0_11 = arith.constant 0 : index
    %42 = vector.load %arg3[%c6, %c0_11] : memref<9x128xf32, #tpu.memory_space<vmem>>, vector<1x128xf32>
    %43 = vector.shape_cast %42 : vector<1x128xf32> to vector<128xf32>
    %c7 = arith.constant 7 : index
    %c0_12 = arith.constant 0 : index
    %44 = vector.load %arg3[%c7, %c0_12] : memref<9x128xf32, #tpu.memory_space<vmem>>, vector<1x128xf32>
    %45 = vector.shape_cast %44 : vector<1x128xf32> to vector<128xf32>
    %c8 = arith.constant 8 : index
    %c0_13 = arith.constant 0 : index
    %46 = vector.load %arg3[%c8, %c0_13] : memref<9x128xf32, #tpu.memory_space<vmem>>, vector<1x128xf32>
    %47 = vector.shape_cast %46 : vector<1x128xf32> to vector<128xf32>
    %48 = vector.shape_cast %43 : vector<128xf32> to vector<1x1x128xf32>
    %49 = vector.broadcast %48 : vector<1x1x128xf32> to vector<16x16x128xf32>
    %50 = arith.mulf %5, %49 : vector<16x16x128xf32>
    %51 = vector.shape_cast %45 : vector<128xf32> to vector<1x1x128xf32>
    %52 = vector.broadcast %51 : vector<1x1x128xf32> to vector<16x16x128xf32>
    %53 = arith.mulf %1, %52 : vector<16x16x128xf32>
    %54 = arith.addf %50, %53 : vector<16x16x128xf32>
    %55 = vector.shape_cast %47 : vector<128xf32> to vector<1x1x128xf32>
    %56 = vector.broadcast %55 : vector<1x1x128xf32> to vector<16x16x128xf32>
    %57 = arith.mulf %7, %56 : vector<16x16x128xf32>
    %58 = arith.addf %54, %57 : vector<16x16x128xf32>
    %59 = vector.extract_strided_slice %24 {offsets = [0, 0, 0], sizes = [15, 16, 128], strides = [1, 1, 1]} : vector<16x16x128xf32> to vector<15x16x128xf32>
    %60 = tpu.concatenate %3, %59 in 0 : vector<1x16x128xf32>, vector<15x16x128xf32> -> vector<16x16x128xf32>
    %61 = arith.addf %41, %60 : vector<16x16x128xf32>
    %62 = vector.extract_strided_slice %58 {offsets = [1, 0, 0], sizes = [15, 16, 128], strides = [1, 1, 1]} : vector<16x16x128xf32> to vector<15x16x128xf32>
    %63 = tpu.concatenate %62, %3 in 0 : vector<15x16x128xf32>, vector<1x16x128xf32> -> vector<16x16x128xf32>
    %64 = arith.addf %61, %63 : vector<16x16x128xf32>
    %c0_14 = arith.constant 0 : index
    %c0_15 = arith.constant 0 : index
    %65 = vector.load %arg4[%c0_14, %c0_15] : memref<1x128xf32, #tpu.memory_space<vmem>>, vector<1x128xf32>
    %66 = vector.shape_cast %65 : vector<1x128xf32> to vector<1x1x128xf32>
    %67 = vector.broadcast %66 : vector<1x1x128xf32> to vector<16x16x128xf32>
    %68 = arith.addf %64, %67 : vector<16x16x128xf32>
    %cst_16 = arith.constant 5.000000e-01 : f32
    %69 = vector.broadcast %cst_16 : f32 to vector<16x16x128xf32>
    %70 = arith.mulf %69, %68 : vector<16x16x128xf32>
    %cst_17 = arith.constant 0.707106769 : f32
    %71 = vector.broadcast %cst_17 : f32 to vector<16x16x128xf32>
    %72 = arith.mulf %68, %71 : vector<16x16x128xf32>
    %73 = math.erf %72 : vector<16x16x128xf32>
    %cst_18 = arith.constant 1.000000e+00 : f32
    %74 = vector.broadcast %cst_18 : f32 to vector<16x16x128xf32>
    %75 = arith.addf %74, %73 : vector<16x16x128xf32>
    %76 = arith.mulf %70, %75 : vector<16x16x128xf32>
    %c0_19 = arith.constant 0 : index
    %c0_20 = arith.constant 0 : index
    %c0_21 = arith.constant 0 : index
    %c0_22 = arith.constant 0 : index
    %77 = vector.load %arg5[%c0_19, %c0_20, %c0_21, %c0_22] : memref<1x16x16x128xf32, #tpu.memory_space<vmem>>, vector<1x16x16x128xf32>
    %78 = vector.shape_cast %77 : vector<1x16x16x128xf32> to vector<16x16x128xf32>
    %79 = vector.shape_cast %76 : vector<16x16x128xf32> to vector<1x16x16x128xf32>
    tpu.vector_store %arg5[%c0_19, %c0_20, %c0_21, %c0_22], %79 {strides = array<i32>} : memref<1x16x16x128xf32, #tpu.memory_space<vmem>>, vector<1x16x16x128xf32>,
    return
  }
  func.func @transform_0(%arg0: i32, %arg1: i32) -> (i32, i32, i32, i32) {
    %c0_i32 = arith.constant 0 : i32
    %c0_i32_0 = arith.constant 0 : i32
    %c0_i32_1 = arith.constant 0 : i32
    return %arg0, %c0_i32, %c0_i32_0, %arg1 : i32, i32, i32, i32
  }
  func.func @transform_1(%arg0: i32, %arg1: i32) -> (i32, i32) {
    %c0_i32 = arith.constant 0 : i32
    %c0_i32_0 = arith.constant 0 : i32
    return %c0_i32, %arg1 : i32, i32
  }
  func.func @transform_2(%arg0: i32, %arg1: i32) -> (i32, i32) {
    %c0_i32 = arith.constant 0 : i32
    %c0_i32_0 = arith.constant 0 : i32
    return %c0_i32, %arg1 : i32, i32
  }
  func.func @transform_3(%arg0: i32, %arg1: i32) -> (i32, i32, i32, i32) {
    %c0_i32 = arith.constant 0 : i32
    %c0_i32_0 = arith.constant 0 : i32
    %c0_i32_1 = arith.constant 0 : i32
    return %arg0, %c0_i32, %c0_i32_0, %arg1 : i32, i32, i32, i32
  }
}

module attributes {stable_mosaic.version = 11 : i64} {
  func.func @_matmul_kernel(%arg0: i32, %arg1: memref<256x32xf32, #tpu.memory_space<vmem>>, %arg2: memref<1x32xf32, #tpu.memory_space<vmem>>, %arg3: memref<1x32xf32, #tpu.memory_space<vmem>>, %arg4: memref<32x128xf32, #tpu.memory_space<vmem>>, %arg5: memref<1x128xf32, #tpu.memory_space<vmem>>, %arg6: memref<256x128xf32, #tpu.memory_space<vmem>>) attributes {dimension_semantics = [#tpu.dimension_semantics<parallel>], iteration_bounds = array<i64: 2>, scalar_prefetch = 0 : i64, scratch_operands = 0 : i64, tpu.core_type = #tpu.core_type<tc>, window_params = [{transform_indices = @transform_0, window_bounds = array<i64: 256, 32>}, {pipeline_mode = #tpu.pipeline_mode<synchronous>, transform_indices = @transform_1, window_bounds = array<i64: 1, 32>}, {pipeline_mode = #tpu.pipeline_mode<synchronous>, transform_indices = @transform_2, window_bounds = array<i64: 1, 32>}, {pipeline_mode = #tpu.pipeline_mode<synchronous>, transform_indices = @transform_3, window_bounds = array<i64: 32, 128>}, {pipeline_mode = #tpu.pipeline_mode<synchronous>, transform_indices = @transform_4, window_bounds = array<i64: 1, 128>}, {transform_indices = @transform_5, window_bounds = array<i64: 256, 128>}]} {
    %c0 = arith.constant 0 : index
    %c0_0 = arith.constant 0 : index
    %0 = vector.load %arg1[%c0, %c0_0] : memref<256x32xf32, #tpu.memory_space<vmem>>, vector<256x32xf32>
    %cst = arith.constant dense<0.000000e+00> : vector<256xf32>
    %1 = vector.multi_reduction <add>, %0, %cst [1] : vector<256x32xf32> to vector<256xf32>
    %2 = vector.shape_cast %1 : vector<256xf32> to vector<256x1xf32>
    %cst_1 = arith.constant 3.200000e+01 : f32
    %3 = vector.broadcast %cst_1 : f32 to vector<256x1xf32>
    %4 = arith.divf %2, %3 : vector<256x1xf32>
    %5 = vector.broadcast %4 : vector<256x1xf32> to vector<256x32xf32>
    %6 = arith.subf %0, %5 : vector<256x32xf32>
    %7 = arith.mulf %6, %6 : vector<256x32xf32>
    %cst_2 = arith.constant dense<0.000000e+00> : vector<256xf32>
    %8 = vector.multi_reduction <add>, %7, %cst_2 [1] : vector<256x32xf32> to vector<256xf32>
    %9 = vector.shape_cast %8 : vector<256xf32> to vector<256x1xf32>
    %cst_3 = arith.constant 3.200000e+01 : f32
    %10 = vector.broadcast %cst_3 : f32 to vector<256x1xf32>
    %11 = arith.divf %9, %10 : vector<256x1xf32>
    %cst_4 = arith.constant 9.99999974E-6 : f32
    %12 = vector.broadcast %cst_4 : f32 to vector<256x1xf32>
    %13 = arith.addf %11, %12 : vector<256x1xf32>
    %14 = math.rsqrt %13 : vector<256x1xf32>
    %15 = vector.broadcast %14 : vector<256x1xf32> to vector<256x32xf32>
    %16 = arith.mulf %6, %15 : vector<256x32xf32>
    %c0_5 = arith.constant 0 : index
    %c0_6 = arith.constant 0 : index
    %17 = vector.load %arg2[%c0_5, %c0_6] : memref<1x32xf32, #tpu.memory_space<vmem>>, vector<1x32xf32>
    %18 = vector.broadcast %17 : vector<1x32xf32> to vector<256x32xf32>
    %19 = arith.mulf %16, %18 : vector<256x32xf32>
    %c0_7 = arith.constant 0 : index
    %c0_8 = arith.constant 0 : index
    %20 = vector.load %arg3[%c0_7, %c0_8] : memref<1x32xf32, #tpu.memory_space<vmem>>, vector<1x32xf32>
    %21 = vector.broadcast %20 : vector<1x32xf32> to vector<256x32xf32>
    %22 = arith.addf %19, %21 : vector<256x32xf32>
    %c0_9 = arith.constant 0 : index
    %c0_10 = arith.constant 0 : index
    %23 = vector.load %arg4[%c0_9, %c0_10] : memref<32x128xf32, #tpu.memory_space<vmem>>, vector<32x128xf32>
    %cst_11 = arith.constant dense<0.000000e+00> : vector<256x128xf32>
    %24 = tpu.matmul %22, %23, %cst_11 {dimension_numbers = #tpu.dot_dimension_numbers<[1], [0], [0], [1], [0, 0, 1, 1], [], []>} : vector<256x32xf32>, vector<32x128xf32>, vector<256x128xf32> -> vector<256x128xf32>
    %c0_12 = arith.constant 0 : index
    %c0_13 = arith.constant 0 : index
    %25 = vector.load %arg5[%c0_12, %c0_13] : memref<1x128xf32, #tpu.memory_space<vmem>>, vector<1x128xf32>
    %26 = vector.broadcast %25 : vector<1x128xf32> to vector<256x128xf32>
    %27 = arith.addf %24, %26 : vector<256x128xf32>
    %c0_14 = arith.constant 0 : index
    %c0_15 = arith.constant 0 : index
    %28 = vector.load %arg6[%c0_14, %c0_15] : memref<256x128xf32, #tpu.memory_space<vmem>>, vector<256x128xf32>
    tpu.vector_store %arg6[%c0_14, %c0_15], %27 {strides = array<i32>} : memref<256x128xf32, #tpu.memory_space<vmem>>, vector<256x128xf32>,
    return
  }
  func.func @transform_0(%arg0: i32) -> (i32, i32) {
    %c0_i32 = arith.constant 0 : i32
    %c0_i32_0 = arith.constant 0 : i32
    return %arg0, %c0_i32 : i32, i32
  }
  func.func @transform_1(%arg0: i32) -> (i32, i32) {
    %c0_i32 = arith.constant 0 : i32
    %c0_i32_0 = arith.constant 0 : i32
    %c0_i32_1 = arith.constant 0 : i32
    return %c0_i32, %c0_i32_0 : i32, i32
  }
  func.func @transform_2(%arg0: i32) -> (i32, i32) {
    %c0_i32 = arith.constant 0 : i32
    %c0_i32_0 = arith.constant 0 : i32
    %c0_i32_1 = arith.constant 0 : i32
    return %c0_i32, %c0_i32_0 : i32, i32
  }
  func.func @transform_3(%arg0: i32) -> (i32, i32) {
    %c0_i32 = arith.constant 0 : i32
    %c0_i32_0 = arith.constant 0 : i32
    %c0_i32_1 = arith.constant 0 : i32
    return %c0_i32, %c0_i32_0 : i32, i32
  }
  func.func @transform_4(%arg0: i32) -> (i32, i32) {
    %c0_i32 = arith.constant 0 : i32
    %c0_i32_0 = arith.constant 0 : i32
    %c0_i32_1 = arith.constant 0 : i32
    return %c0_i32, %c0_i32_0 : i32, i32
  }
  func.func @transform_5(%arg0: i32) -> (i32, i32) {
    %c0_i32 = arith.constant 0 : i32
    %c0_i32_0 = arith.constant 0 : i32
    return %arg0, %c0_i32 : i32, i32
  }
}

module attributes {stable_mosaic.version = 11 : i64} {
  func.func @_matmul_kernel(%arg0: i32, %arg1: memref<256x128xf32, #tpu.memory_space<vmem>>, %arg2: memref<128x32xf32, #tpu.memory_space<vmem>>, %arg3: memref<1x32xf32, #tpu.memory_space<vmem>>, %arg4: memref<256x32xf32, #tpu.memory_space<vmem>>, %arg5: memref<256x32xf32, #tpu.memory_space<vmem>>) attributes {dimension_semantics = [#tpu.dimension_semantics<parallel>], iteration_bounds = array<i64: 2>, scalar_prefetch = 0 : i64, scratch_operands = 0 : i64, tpu.core_type = #tpu.core_type<tc>, window_params = [{transform_indices = @transform_0, window_bounds = array<i64: 256, 128>}, {pipeline_mode = #tpu.pipeline_mode<synchronous>, transform_indices = @transform_1, window_bounds = array<i64: 128, 32>}, {pipeline_mode = #tpu.pipeline_mode<synchronous>, transform_indices = @transform_2, window_bounds = array<i64: 1, 32>}, {transform_indices = @transform_3, window_bounds = array<i64: 256, 32>}, {transform_indices = @transform_4, window_bounds = array<i64: 256, 32>}]} {
    %c0 = arith.constant 0 : index
    %c0_0 = arith.constant 0 : index
    %0 = vector.load %arg1[%c0, %c0_0] : memref<256x128xf32, #tpu.memory_space<vmem>>, vector<256x128xf32>
    %c0_1 = arith.constant 0 : index
    %c0_2 = arith.constant 0 : index
    %1 = vector.load %arg2[%c0_1, %c0_2] : memref<128x32xf32, #tpu.memory_space<vmem>>, vector<128x32xf32>
    %cst = arith.constant dense<0.000000e+00> : vector<256x32xf32>
    %2 = tpu.matmul %0, %1, %cst {dimension_numbers = #tpu.dot_dimension_numbers<[1], [0], [0], [1], [0, 0, 1, 1], [], []>} : vector<256x128xf32>, vector<128x32xf32>, vector<256x32xf32> -> vector<256x32xf32>
    %c0_3 = arith.constant 0 : index
    %c0_4 = arith.constant 0 : index
    %3 = vector.load %arg3[%c0_3, %c0_4] : memref<1x32xf32, #tpu.memory_space<vmem>>, vector<1x32xf32>
    %4 = vector.broadcast %3 : vector<1x32xf32> to vector<256x32xf32>
    %5 = arith.addf %2, %4 : vector<256x32xf32>
    %c0_5 = arith.constant 0 : index
    %c0_6 = arith.constant 0 : index
    %6 = vector.load %arg4[%c0_5, %c0_6] : memref<256x32xf32, #tpu.memory_space<vmem>>, vector<256x32xf32>
    %7 = arith.addf %5, %6 : vector<256x32xf32>
    %c0_7 = arith.constant 0 : index
    %c0_8 = arith.constant 0 : index
    %8 = vector.load %arg5[%c0_7, %c0_8] : memref<256x32xf32, #tpu.memory_space<vmem>>, vector<256x32xf32>
    tpu.vector_store %arg5[%c0_7, %c0_8], %7 {strides = array<i32>} : memref<256x32xf32, #tpu.memory_space<vmem>>, vector<256x32xf32>,
    return
  }
  func.func @transform_0(%arg0: i32) -> (i32, i32) {
    %c0_i32 = arith.constant 0 : i32
    %c0_i32_0 = arith.constant 0 : i32
    return %arg0, %c0_i32 : i32, i32
  }
  func.func @transform_1(%arg0: i32) -> (i32, i32) {
    %c0_i32 = arith.constant 0 : i32
    %c0_i32_0 = arith.constant 0 : i32
    %c0_i32_1 = arith.constant 0 : i32
    return %c0_i32, %c0_i32_0 : i32, i32
  }
  func.func @transform_2(%arg0: i32) -> (i32, i32) {
    %c0_i32 = arith.constant 0 : i32
    %c0_i32_0 = arith.constant 0 : i32
    %c0_i32_1 = arith.constant 0 : i32
    return %c0_i32, %c0_i32_0 : i32, i32
  }
  func.func @transform_3(%arg0: i32) -> (i32, i32) {
    %c0_i32 = arith.constant 0 : i32
    %c0_i32_0 = arith.constant 0 : i32
    return %arg0, %c0_i32 : i32, i32
  }
  func.func @transform_4(%arg0: i32) -> (i32, i32) {
    %c0_i32 = arith.constant 0 : i32
    %c0_i32_0 = arith.constant 0 : i32
    return %arg0, %c0_i32 : i32, i32
  }
}

</mosaic_0001>

<llo_original>
// kernel: _lambda_.7
$region0: #{_lambda_.7}
  #allocation0 [shape = 'u32[]', space=smem, size = 0x4, offset = 0x4, fixed_abs, tag = 'smem constant byte address 0x4 - core index']
  #allocation1 [shape = 'u32[72,128]{1,0:T(1,128)}', space=vmem, size = 0x9000, scoped, tag = 'internal scratch']
  %s0 = inlined_call_operand.vmem [shape: f32[128,16], index: 0, kind: input, shape index: {}]
  %s1 = inlined_call_operand.vmem [shape: f32[8,128], index: 1, kind: input, shape index: {}]
  %s2 = inlined_call_operand.vmem [shape: f32[1,16], index: 2, kind: input, shape index: {}]
  %s3 = inlined_call_operand.vmem [shape: f32[1,16], index: 3, kind: input, shape index: {}]
  %s4 = inlined_call_operand.vmem [shape: f32[16,16], index: 4, kind: input, shape index: {}]
  %s5 = inlined_call_operand.vmem [shape: f32[1,16], index: 5, kind: input, shape index: {}]
  %s6 = inlined_call_operand.vmem [shape: f32[1,16], index: 6, kind: input, shape index: {}]
  %s7 = inlined_call_operand.vmem [shape: f32[1,16], index: 7, kind: input, shape index: {}]
  %s8 = inlined_call_operand.vmem [shape: f32[16,64], index: 8, kind: input, shape index: {}]
  %s9 = inlined_call_operand.vmem [shape: f32[8,64], index: 9, kind: output, shape index: {}]
  %s10 = sld [smem:[#allocation0]]
  $region46: #{_lambda_.7} parent=0
    _
  %s12 = ssub.s32 1, %s10
  %s13 = scalar_select 0, %s12, %s10
  // Predicated region
  $region2: #{_lambda_.7} parent=0 // pred_check
    _
  $region3: #{_lambda_.7} parent=0 // pred_check_branch
    %15 = sbr.rel (0) target = $region5
  $region4: #{_lambda_.7} parent=0 // pred_region
    _
  $region5: #{_lambda_.7} parent=0 // pred_fallthru
    _
  // Predicated region
  $region6: #{_lambda_.7} parent=0 // pred_check
    _
  $region7: #{_lambda_.7} parent=0 // pred_check_branch
    %17 = sbr.rel (0) target = $region9
  $region8: #{_lambda_.7} parent=0 // pred_region
    _
  $region9: #{_lambda_.7} parent=0 // pred_fallthru
    _
  // Predicated region
  $region10: #{_lambda_.7} parent=0 // pred_check
    _
  $region11: #{_lambda_.7} parent=0 // pred_check_branch
    %19 = sbr.rel (0) target = $region13
  $region12: #{_lambda_.7} parent=0 // pred_region
    _
  $region13: #{_lambda_.7} parent=0 // pred_fallthru
    _
  // Predicated region
  $region14: #{_lambda_.7} parent=0 // pred_check
    _
  $region15: #{_lambda_.7} parent=0 // pred_check_branch
    %21 = sbr.rel (0) target = $region17
  $region16: #{_lambda_.7} parent=0 // pred_region
    _
  $region17: #{_lambda_.7} parent=0 // pred_fallthru
    _
  // Predicated region
  $region18: #{_lambda_.7} parent=0 // pred_check
    _
  $region19: #{_lambda_.7} parent=0 // pred_check_branch
    %23 = sbr.rel (0) target = $region21
  $region20: #{_lambda_.7} parent=0 // pred_region
    _
  $region21: #{_lambda_.7} parent=0 // pred_fallthru
    _
  // Predicated region
  $region22: #{_lambda_.7} parent=0 // pred_check
    _
  $region23: #{_lambda_.7} parent=0 // pred_check_branch
    %25 = sbr.rel (0) target = $region25
  $region24: #{_lambda_.7} parent=0 // pred_region
    _
  $region25: #{_lambda_.7} parent=0 // pred_fallthru
    _
  // Predicated region
  $region26: #{_lambda_.7} parent=0 // pred_check
    _
  $region27: #{_lambda_.7} parent=0 // pred_check_branch
    %27 = sbr.rel (0) target = $region29
  $region28: #{_lambda_.7} parent=0 // pred_region
    _
  $region29: #{_lambda_.7} parent=0 // pred_fallthru
    _
  // Predicated region
  $region30: #{_lambda_.7} parent=0 // pred_check
    _
  $region31: #{_lambda_.7} parent=0 // pred_check_branch
    %29 = sbr.rel (0) target = $region33
  $region32: #{_lambda_.7} parent=0 // pred_region
    _
  $region33: #{_lambda_.7} parent=0 // pred_fallthru
    _
  // Predicated region
  $region34: #{_lambda_.7} parent=0 // pred_check
    _
  $region35: #{_lambda_.7} parent=0 // pred_check_branch
    %31 = sbr.rel (0) target = $region37
  $region36: #{_lambda_.7} parent=0 // pred_region
    _
  $region37: #{_lambda_.7} parent=0 // pred_fallthru
    _
  %v32 = vld [vmem:[%s0] sm:$0xff]
  %v33 = vld [vmem:[%s0 + $0x8] sm:$0xff]
  %v34 = vld [vmem:[%s0 + $0x10] sm:$0xff]
  %v35 = vld [vmem:[%s0 + $0x18] sm:$0xff]
  %v36 = vld [vmem:[%s0 + $0x20] sm:$0xff]
  %v37 = vld [vmem:[%s0 + $0x28] sm:$0xff]
  %v38 = vld [vmem:[%s0 + $0x30] sm:$0xff]
  %v39 = vld [vmem:[%s0 + $0x38] sm:$0xff]
  %v40 = vld [vmem:[%s0 + $0x40] sm:$0xff]
  %v41 = vld [vmem:[%s0 + $0x48] sm:$0xff]
  %v42 = vld [vmem:[%s0 + $0x50] sm:$0xff]
  %v43 = vld [vmem:[%s0 + $0x58] sm:$0xff]
  %v44 = vld [vmem:[%s0 + $0x60] sm:$0xff]
  %v45 = vld [vmem:[%s0 + $0x68] sm:$0xff]
  %v46 = vld [vmem:[%s0 + $0x70] sm:$0xff]
  %v47 = vld [vmem:[%s0 + $0x78] sm:$0xff]
  %vm48 = vcmask 130048
  %v49 = vsel %vm48, %v32, 0.0
  %50 = vadd.xlane.f32.xlu0 %v49
  %v51 = vpop.xlane.xlu0 %50
  %v52 = vsel %vm48, %v33, 0.0
  %53 = vadd.xlane.f32.xlu0 %v52
  %v54 = vpop.xlane.xlu0 %53
  %v55 = vsel %vm48, %v34, 0.0
  %56 = vadd.xlane.f32.xlu0 %v55
  %v57 = vpop.xlane.xlu0 %56
  %v58 = vsel %vm48, %v35, 0.0
  %59 = vadd.xlane.f32.xlu0 %v58
  %v60 = vpop.xlane.xlu0 %59
  %v61 = vsel %vm48, %v36, 0.0
  %62 = vadd.xlane.f32.xlu0 %v61
  %v63 = vpop.xlane.xlu0 %62
  %v64 = vsel %vm48, %v37, 0.0
  %65 = vadd.xlane.f32.xlu0 %v64
  %v66 = vpop.xlane.xlu0 %65
  %v67 = vsel %vm48, %v38, 0.0
  %68 = vadd.xlane.f32.xlu0 %v67
  %v69 = vpop.xlane.xlu0 %68
  %v70 = vsel %vm48, %v39, 0.0
  %71 = vadd.xlane.f32.xlu0 %v70
  %v72 = vpop.xlane.xlu0 %71
  %v73 = vsel %vm48, %v40, 0.0
  %74 = vadd.xlane.f32.xlu0 %v73
  %v75 = vpop.xlane.xlu0 %74
  %v76 = vsel %vm48, %v41, 0.0
  %77 = vadd.xlane.f32.xlu0 %v76
  %v78 = vpop.xlane.xlu0 %77
  %v79 = vsel %vm48, %v42, 0.0
  %80 = vadd.xlane.f32.xlu0 %v79
  %v81 = vpop.xlane.xlu0 %80
  %v82 = vsel %vm48, %v43, 0.0
  %83 = vadd.xlane.f32.xlu0 %v82
  %v84 = vpop.xlane.xlu0 %83
  %v85 = vsel %vm48, %v44, 0.0
  %86 = vadd.xlane.f32.xlu0 %v85
  %v87 = vpop.xlane.xlu0 %86
  %v88 = vsel %vm48, %v45, 0.0
  %89 = vadd.xlane.f32.xlu0 %v88
  %v90 = vpop.xlane.xlu0 %89
  %v91 = vsel %vm48, %v46, 0.0
  %92 = vadd.xlane.f32.xlu0 %v91
  %v93 = vpop.xlane.xlu0 %92
  %v94 = vsel %vm48, %v47, 0.0
  %95 = vadd.xlane.f32.xlu0 %v94
  %v96 = vpop.xlane.xlu0 %95
  %v97 = vrcp.pop 16.0
  %v98 = vmul.f32 16.0, %v97
  %v99 = vsub.f32 1.0, %v98
  %v100 = vmul.f32 %v97, %v99
  %v101 = vadd.f32 %v97, %v100
  %vm102 = vweird.f32 %v97
  %v103 = vsel %vm102, %v97, %v101
  %v104 = vmul.f32 %v51, %v103
  %v105 = vmul.f32 %v54, %v103
  %v106 = vmul.f32 %v57, %v103
  %v107 = vmul.f32 %v60, %v103
  %v108 = vmul.f32 %v63, %v103
  %v109 = vmul.f32 %v66, %v103
  %v110 = vmul.f32 %v69, %v103
  %v111 = vmul.f32 %v72, %v103
  %v112 = vmul.f32 %v75, %v103
  %v113 = vmul.f32 %v78, %v103
  %v114 = vmul.f32 %v81, %v103
  %v115 = vmul.f32 %v84, %v103
  %v116 = vmul.f32 %v87, %v103
  %v117 = vmul.f32 %v90, %v103
  %v118 = vmul.f32 %v93, %v103
  %v119 = vmul.f32 %v96, %v103
  %v120 = vsub.f32 %v32, %v104
  %v121 = vsub.f32 %v33, %v105
  %v122 = vsub.f32 %v34, %v106
  %v123 = vsub.f32 %v35, %v107
  %v124 = vsub.f32 %v36, %v108
  %v125 = vsub.f32 %v37, %v109
  %v126 = vsub.f32 %v38, %v110
  %v127 = vsub.f32 %v39, %v111
  %v128 = vsub.f32 %v40, %v112
  %v129 = vsub.f32 %v41, %v113
  %v130 = vsub.f32 %v42, %v114
  %v131 = vsub.f32 %v43, %v115
  %v132 = vsub.f32 %v44, %v116
  %v133 = vsub.f32 %v45, %v117
  %v134 = vsub.f32 %v46, %v118
  %v135 = vsub.f32 %v47, %v119
  %v136 = vmul.f32 %v120, %v120
  %v137 = vmul.f32 %v121, %v121
  %v138 = vmul.f32 %v122, %v122
  %v139 = vmul.f32 %v123, %v123
  %v140 = vmul.f32 %v124, %v124
  %v141 = vmul.f32 %v125, %v125
  %v142 = vmul.f32 %v126, %v126
  %v143 = vmul.f32 %v127, %v127
  %v144 = vmul.f32 %v128, %v128
  %v145 = vmul.f32 %v129, %v129
  %v146 = vmul.f32 %v130, %v130
  %v147 = vmul.f32 %v131, %v131
  %v148 = vmul.f32 %v132, %v132
  %v149 = vmul.f32 %v133, %v133
  %v150 = vmul.f32 %v134, %v134
  %v151 = vmul.f32 %v135, %v135
  %v152 = vsel %vm48, %v136, 0.0
  %153 = vadd.xlane.f32.xlu0 %v152
  %v154 = vpop.xlane.xlu0 %153
  %v155 = vsel %vm48, %v137, 0.0
  %156 = vadd.xlane.f32.xlu0 %v155
  %v157 = vpop.xlane.xlu0 %156
  %v158 = vsel %vm48, %v138, 0.0
  %159 = vadd.xlane.f32.xlu0 %v158
  %v160 = vpop.xlane.xlu0 %159
  %v161 = vsel %vm48, %v139, 0.0
  %162 = vadd.xlane.f32.xlu0 %v161
  %v163 = vpop.xlane.xlu0 %162
  %v164 = vsel %vm48, %v140, 0.0
  %165 = vadd.xlane.f32.xlu0 %v164
  %v166 = vpop.xlane.xlu0 %165
  %v167 = vsel %vm48, %v141, 0.0
  %168 = vadd.xlane.f32.xlu0 %v167
  %v169 = vpop.xlane.xlu0 %168
  %v170 = vsel %vm48, %v142, 0.0
  %171 = vadd.xlane.f32.xlu0 %v170
  %v172 = vpop.xlane.xlu0 %171
  %v173 = vsel %vm48, %v143, 0.0
  %174 = vadd.xlane.f32.xlu0 %v173
  %v175 = vpop.xlane.xlu0 %174
  %v176 = vsel %vm48, %v144, 0.0
  %177 = vadd.xlane.f32.xlu0 %v176
  %v178 = vpop.xlane.xlu0 %177
  %v179 = vsel %vm48, %v145, 0.0
  %180 = vadd.xlane.f32.xlu0 %v179
  %v181 = vpop.xlane.xlu0 %180
  %v182 = vsel %vm48, %v146, 0.0
  %183 = vadd.xlane.f32.xlu0 %v182
  %v184 = vpop.xlane.xlu0 %183
  %v185 = vsel %vm48, %v147, 0.0
  %186 = vadd.xlane.f32.xlu0 %v185
  %v187 = vpop.xlane.xlu0 %186
  %v188 = vsel %vm48, %v148, 0.0
  %189 = vadd.xlane.f32.xlu0 %v188
  %v190 = vpop.xlane.xlu0 %189
  %v191 = vsel %vm48, %v149, 0.0
  %192 = vadd.xlane.f32.xlu0 %v191
  %v193 = vpop.xlane.xlu0 %192
  %v194 = vsel %vm48, %v150, 0.0
  %195 = vadd.xlane.f32.xlu0 %v194
  %v196 = vpop.xlane.xlu0 %195
  %v197 = vsel %vm48, %v151, 0.0
  %198 = vadd.xlane.f32.xlu0 %v197
  %v199 = vpop.xlane.xlu0 %198
  %v200 = vmul.f32 %v154, %v103
  %v201 = vmul.f32 %v157, %v103
  %v202 = vmul.f32 %v160, %v103
  %v203 = vmul.f32 %v163, %v103
  %v204 = vmul.f32 %v166, %v103
  %v205 = vmul.f32 %v169, %v103
  %v206 = vmul.f32 %v172, %v103
  %v207 = vmul.f32 %v175, %v103
  %v208 = vmul.f32 %v178, %v103
  %v209 = vmul.f32 %v181, %v103
  %v210 = vmul.f32 %v184, %v103
  %v211 = vmul.f32 %v187, %v103
  %v212 = vmul.f32 %v190, %v103
  %v213 = vmul.f32 %v193, %v103
  %v214 = vmul.f32 %v196, %v103
  %v215 = vmul.f32 %v199, %v103
  %v216 = vadd.f32 %v200, 1e-05
  %v217 = vadd.f32 %v201, 1e-05
  %v218 = vadd.f32 %v202, 1e-05
  %v219 = vadd.f32 %v203, 1e-05
  %v220 = vadd.f32 %v204, 1e-05
  %v221 = vadd.f32 %v205, 1e-05
  %v222 = vadd.f32 %v206, 1e-05
  %v223 = vadd.f32 %v207, 1e-05
  %v224 = vadd.f32 %v208, 1e-05
  %v225 = vadd.f32 %v209, 1e-05
  %v226 = vadd.f32 %v210, 1e-05
  %v227 = vadd.f32 %v211, 1e-05
  %v228 = vadd.f32 %v212, 1e-05
  %v229 = vadd.f32 %v213, 1e-05
  %v230 = vadd.f32 %v214, 1e-05
  %v231 = vadd.f32 %v215, 1e-05
  %v232 = vrsqrt.pop %v216
  %v233 = vmul.f32 %v232, %v216
  %v234 = vmul.f32 %v233, %v232
  %v235 = vmul.f32 0.5, %v234
  %v236 = vsub.f32 1.5, %v235
  %v237 = vmul.f32 %v232, %v236
  %vm238 = vweird.f32 %v216
  %vm239 = vweird.f32 %v232
  %vm240 = vmor %vm238, %vm239
  %v241 = vsel %vm240, %v232, %v237
  %v242 = vrsqrt.pop %v217
  %v243 = vmul.f32 %v242, %v217
  %v244 = vmul.f32 %v243, %v242
  %v245 = vmul.f32 0.5, %v244
  %v246 = vsub.f32 1.5, %v245
  %v247 = vmul.f32 %v242, %v246
  %vm248 = vweird.f32 %v217
  %vm249 = vweird.f32 %v242
  %vm250 = vmor %vm248, %vm249
  %v251 = vsel %vm250, %v242, %v247
  %v252 = vrsqrt.pop %v218
  %v253 = vmul.f32 %v252, %v218
  %v254 = vmul.f32 %v253, %v252
  %v255 = vmul.f32 0.5, %v254
  %v256 = vsub.f32 1.5, %v255
  %v257 = vmul.f32 %v252, %v256
  %vm258 = vweird.f32 %v218
  %vm259 = vweird.f32 %v252
  %vm260 = vmor %vm258, %vm259
  %v261 = vsel %vm260, %v252, %v257
  %v262 = vrsqrt.pop %v219
  %v263 = vmul.f32 %v262, %v219
  %v264 = vmul.f32 %v263, %v262
  %v265 = vmul.f32 0.5, %v264
  %v266 = vsub.f32 1.5, %v265
  %v267 = vmul.f32 %v262, %v266
  %vm268 = vweird.f32 %v219
  %vm269 = vweird.f32 %v262
  %vm270 = vmor %vm268, %vm269
  %v271 = vsel %vm270, %v262, %v267
  %v272 = vrsqrt.pop %v220
  %v273 = vmul.f32 %v272, %v220
  %v274 = vmul.f32 %v273, %v272
  %v275 = vmul.f32 0.5, %v274
  %v276 = vsub.f32 1.5, %v275
  %v277 = vmul.f32 %v272, %v276
  %vm278 = vweird.f32 %v220
  %vm279 = vweird.f32 %v272
  %vm280 = vmor %vm278, %vm279
  %v281 = vsel %vm280, %v272, %v277
  %v282 = vrsqrt.pop %v221
  %v283 = vmul.f32 %v282, %v221
  %v284 = vmul.f32 %v283, %v282
  %v285 = vmul.f32 0.5, %v284
  %v286 = vsub.f32 1.5, %v285
  %v287 = vmul.f32 %v282, %v286
  %vm288 = vweird.f32 %v221
  %vm289 = vweird.f32 %v282
  %vm290 = vmor %vm288, %vm289
  %v291 = vsel %vm290, %v282, %v287
  %v292 = vrsqrt.pop %v222
  %v293 = vmul.f32 %v292, %v222
  %v294 = vmul.f32 %v293, %v292
  %v295 = vmul.f32 0.5, %v294
  %v296 = vsub.f32 1.5, %v295
  %v297 = vmul.f32 %v292, %v296
  %vm298 = vweird.f32 %v222
  %vm299 = vweird.f32 %v292
  %vm300 = vmor %vm298, %vm299
  %v301 = vsel %vm300, %v292, %v297
  %v302 = vrsqrt.pop %v223
  %v303 = vmul.f32 %v302, %v223
  %v304 = vmul.f32 %v303, %v302
  %v305 = vmul.f32 0.5, %v304
  %v306 = vsub.f32 1.5, %v305
  %v307 = vmul.f32 %v302, %v306
  %vm308 = vweird.f32 %v223
  %vm309 = vweird.f32 %v302
  %vm310 = vmor %vm308, %vm309
  %v311 = vsel %vm310, %v302, %v307
  %v312 = vrsqrt.pop %v224
  %v313 = vmul.f32 %v312, %v224
  %v314 = vmul.f32 %v313, %v312
  %v315 = vmul.f32 0.5, %v314
  %v316 = vsub.f32 1.5, %v315
  %v317 = vmul.f32 %v312, %v316
  %vm318 = vweird.f32 %v224
  %vm319 = vweird.f32 %v312
  %vm320 = vmor %vm318, %vm319
  %v321 = vsel %vm320, %v312, %v317
  %v322 = vrsqrt.pop %v225
  %v323 = vmul.f32 %v322, %v225
  %v324 = vmul.f32 %v323, %v322
  %v325 = vmul.f32 0.5, %v324
  %v326 = vsub.f32 1.5, %v325
  %v327 = vmul.f32 %v322, %v326
  %vm328 = vweird.f32 %v225
  %vm329 = vweird.f32 %v322
  %vm330 = vmor %vm328, %vm329
  %v331 = vsel %vm330, %v322, %v327
  %v332 = vrsqrt.pop %v226
  %v333 = vmul.f32 %v332, %v226
  %v334 = vmul.f32 %v333, %v332
  %v335 = vmul.f32 0.5, %v334
  %v336 = vsub.f32 1.5, %v335
  %v337 = vmul.f32 %v332, %v336
  %vm338 = vweird.f32 %v226
  %vm339 = vweird.f32 %v332
  %vm340 = vmor %vm338, %vm339
  %v341 = vsel %vm340, %v332, %v337
  %v342 = vrsqrt.pop %v227
  %v343 = vmul.f32 %v342, %v227
  %v344 = vmul.f32 %v343, %v342
  %v345 = vmul.f32 0.5, %v344
  %v346 = vsub.f32 1.5, %v345
  %v347 = vmul.f32 %v342, %v346
  %vm348 = vweird.f32 %v227
  %vm349 = vweird.f32 %v342
  %vm350 = vmor %vm348, %vm349
  %v351 = vsel %vm350, %v342, %v347
  %v352 = vrsqrt.pop %v228
  %v353 = vmul.f32 %v352, %v228
  %v354 = vmul.f32 %v353, %v352
  %v355 = vmul.f32 0.5, %v354
  %v356 = vsub.f32 1.5, %v355
  %v357 = vmul.f32 %v352, %v356
  %vm358 = vweird.f32 %v228
  %vm359 = vweird.f32 %v352
  %vm360 = vmor %vm358, %vm359
  %v361 = vsel %vm360, %v352, %v357
  %v362 = vrsqrt.pop %v229
  %v363 = vmul.f32 %v362, %v229
  %v364 = vmul.f32 %v363, %v362
  %v365 = vmul.f32 0.5, %v364
  %v366 = vsub.f32 1.5, %v365
  %v367 = vmul.f32 %v362, %v366
  %vm368 = vweird.f32 %v229
  %vm369 = vweird.f32 %v362
  %vm370 = vmor %vm368, %vm369
  %v371 = vsel %vm370, %v362, %v367
  %v372 = vrsqrt.pop %v230
  %v373 = vmul.f32 %v372, %v230
  %v374 = vmul.f32 %v373, %v372
  %v375 = vmul.f32 0.5, %v374
  %v376 = vsub.f32 1.5, %v375
  %v377 = vmul.f32 %v372, %v376
  %vm378 = vweird.f32 %v230
  %vm379 = vweird.f32 %v372
  %vm380 = vmor %vm378, %vm379
  %v381 = vsel %vm380, %v372, %v377
  %v382 = vrsqrt.pop %v231
  %v383 = vmul.f32 %v382, %v231
  %v384 = vmul.f32 %v383, %v382
  %v385 = vmul.f32 0.5, %v384
  %v386 = vsub.f32 1.5, %v385
  %v387 = vmul.f32 %v382, %v386
  %vm388 = vweird.f32 %v231
  %vm389 = vweird.f32 %v382
  %vm390 = vmor %vm388, %vm389
  %v391 = vsel %vm390, %v382, %v387
  %v392 = vmul.f32 %v120, %v241
  %v393 = vmul.f32 %v121, %v251
  %v394 = vmul.f32 %v122, %v261
  %v395 = vmul.f32 %v123, %v271
  %v396 = vmul.f32 %v124, %v281
  %v397 = vmul.f32 %v125, %v291
  %v398 = vmul.f32 %v126, %v301
  %v399 = vmul.f32 %v127, %v311
  %v400 = vmul.f32 %v128, %v321
  %v401 = vmul.f32 %v129, %v331
  %v402 = vmul.f32 %v130, %v341
  %v403 = vmul.f32 %v131, %v351
  %v404 = vmul.f32 %v132, %v361
  %v405 = vmul.f32 %v133, %v371
  %v406 = vmul.f32 %v134, %v381
  %v407 = vmul.f32 %v135, %v391
  %v408 = vld [vmem:[%s2] sm:$0x1]
  %v410 = vperm.slane %v408, 0
  %v412 = vmul.f32 %v392, %v410
  %v413 = vmul.f32 %v393, %v410
  %v414 = vmul.f32 %v394, %v410
  %v415 = vmul.f32 %v395, %v410
  %v416 = vmul.f32 %v396, %v410
  %v417 = vmul.f32 %v397, %v410
  %v418 = vmul.f32 %v398, %v410
  %v419 = vmul.f32 %v399, %v410
  %v420 = vmul.f32 %v400, %v410
  %v421 = vmul.f32 %v401, %v410
  %v422 = vmul.f32 %v402, %v410
  %v423 = vmul.f32 %v403, %v410
  %v424 = vmul.f32 %v404, %v410
  %v425 = vmul.f32 %v405, %v410
  %v426 = vmul.f32 %v406, %v410
  %v427 = vmul.f32 %v407, %v410
  %v428 = vld [vmem:[%s3] sm:$0x1]
  %v430 = vperm.slane %v428, 0
  %v432 = vadd.f32 %v412, %v430
  %v433 = vadd.f32 %v413, %v430
  %v434 = vadd.f32 %v414, %v430
  %v435 = vadd.f32 %v415, %v430
  %v436 = vadd.f32 %v416, %v430
  %v437 = vadd.f32 %v417, %v430
  %v438 = vadd.f32 %v418, %v430
  %v439 = vadd.f32 %v419, %v430
  %v440 = vadd.f32 %v420, %v430
  %v441 = vadd.f32 %v421, %v430
  %v442 = vadd.f32 %v422, %v430
  %v443 = vadd.f32 %v423, %v430
  %v444 = vadd.f32 %v424, %v430
  %v445 = vadd.f32 %v425, %v430
  %v446 = vadd.f32 %v426, %v430
  %v447 = vadd.f32 %v427, %v430
  %v448 = vld [vmem:[%s1] sm:$0xff]
  %449 = vmatpush.msra.mxu0 %v447
  %450 = vmatpush.msra.mxu0 %v446
  %451 = vmatpush.msra.mxu0 %v445
  %452 = vmatpush.msra.mxu0 %v444
  %453 = vmatpush.msra.mxu0 %v443
  %454 = vmatpush.msra.mxu0 %v442
  %455 = vmatpush.msra.mxu0 %v441
  %456 = vmatpush.msra.mxu0 %v440
  %457 = vmatpush.msra.mxu0 %v439
  %458 = vmatpush.msra.mxu0 %v438
  %459 = vmatpush.msra.mxu0 %v437
  %460 = vmatpush.msra.mxu0 %v436
  %461 = vmatpush.msra.mxu0 %v435
  %462 = vmatpush.msra.mxu0 %v434
  %463 = vmatpush.msra.mxu0 %v433
  %464 = vmatpush.msra.mxu0 %v432
  %465 = vmatmul.f32.gmra.mxu0 %v448
  %v466 = vpop.f32.mrf.mxu0
  %v467 = vadd.f32 0.0, %v466
  %468 = vdwg.mxu0
  %v469 = vld [vmem:[%s4] sm:$0xff]
  %v470 = vld [vmem:[%s4 + $0x8] sm:$0xff]
  %v471 = vld [vmem:[%s5] sm:$0x1]
  %v473 = vperm.slane %v471, 0
  %v476 = vsel %vm48, %v467, 0
  %478 = vmatpush.msra.mxu0 0.0
  %479 = vmatpush.msra.mxu0 0.0
  %480 = vmatpush.msra.mxu0 0.0
  %481 = vmatpush.msra.mxu0 0.0
  %482 = vmatpush.msra.mxu0 0.0
  %483 = vmatpush.msra.mxu0 0.0
  %484 = vmatpush.msra.mxu0 0.0
  %485 = vmatpush.msra.mxu0 0.0
  %486 = vmatpush.msra.mxu0 0.0
  %487 = vmatpush.msra.mxu0 0.0
  %488 = vmatpush.msra.mxu0 0.0
  %489 = vmatpush.msra.mxu0 0.0
  %490 = vmatpush.msra.mxu0 0.0
  %491 = vmatpush.msra.mxu0 0.0
  %492 = vmatpush.msra.mxu0 %v470
  %493 = vmatpush.msra.mxu0 %v469
  %494 = vmatmul.f32.gmra.mxu0 %v476
  %v495 = vpop.f32.mrf.mxu0
  %v496 = vadd.f32 %v473, %v495
  %497 = vdwg.mxu0
  %v498 = vsel %vm48, %v496, 0.0
  %499 = vadd.xlane.f32.xlu0 %v498
  %v500 = vpop.xlane.xlu0 %499
  %v501 = vmul.f32 %v500, %v103
  %v502 = vsub.f32 %v496, %v501
  %v503 = vmul.f32 %v502, %v502
  %v504 = vsel %vm48, %v503, 0.0
  %505 = vadd.xlane.f32.xlu0 %v504
  %v506 = vpop.xlane.xlu0 %505
  %v507 = vmul.f32 %v506, %v103
  %v508 = vadd.f32 %v507, 1e-05
  %v509 = vrsqrt.pop %v508
  %v510 = vmul.f32 %v509, %v508
  %v511 = vmul.f32 %v510, %v509
  %v512 = vmul.f32 0.5, %v511
  %v513 = vsub.f32 1.5, %v512
  %v514 = vmul.f32 %v509, %v513
  %vm515 = vweird.f32 %v508
  %vm516 = vweird.f32 %v509
  %vm517 = vmor %vm515, %vm516
  %v518 = vsel %vm517, %v509, %v514
  %v519 = vmul.f32 %v502, %v518
  %v520 = vld [vmem:[%s6] sm:$0x1]
  %v522 = vperm.slane %v520, 0
  %v524 = vmul.f32 %v519, %v522
  %v525 = vld [vmem:[%s7] sm:$0x1]
  %v527 = vperm.slane %v525, 0
  %v529 = vadd.f32 %v524, %v527
  %v530 = vmul.f32 %v529, 0.5
  %v531 = vmul.f32 %v529, 0.70710677
  %v532 = vmul.f32 %v531, %v531
  %v533 = vmin.f32 16.0, %v532
  %v534 = vmul.f32 %v533, 2.1237322e-06
  %v535 = vadd.f32 %v534, 0.00028619796
  %v536 = vmul.f32 %v533, %v535
  %v537 = vadd.f32 %v536, 0.0036580483
  %v538 = vmul.f32 %v533, %v537
  %v539 = vadd.f32 %v538, 0.05243302
  %v540 = vmul.f32 %v533, %v539
  %v541 = vadd.f32 %v540, 0.18741608
  %v542 = vmul.f32 %v533, %v541
  %v543 = vadd.f32 %v542, 1.1283791
  %v544 = vmul.f32 %v531, %v543
  %v545 = vmul.f32 %v533, 3.8918573e-05
  %v546 = vadd.f32 %v545, 0.001143296
  %v547 = vmul.f32 %v533, %v546
  %v548 = vadd.f32 %v547, 0.014752088
  %v549 = vmul.f32 %v533, %v548
  %v550 = vadd.f32 %v549, 0.112945676
  %v551 = vmul.f32 %v533, %v550
  %v552 = vadd.f32 %v551, 0.4994258
  %v553 = vmul.f32 %v533, %v552
  %v554 = vadd.f32 %v553, 1.0
  %v555 = vrcp.pop %v554
  %v556 = vmul.f32 %v554, %v555
  %v557 = vsub.f32 1.0, %v556
  %v558 = vmul.f32 %v555, %v557
  %v559 = vadd.f32 %v555, %v558
  %vm560 = vweird.f32 %v554
  %vm561 = vweird.f32 %v555
  %vm562 = vmor %vm560, %vm561
  %v563 = vsel %vm562, %v555, %v559
  %v564 = vand.u32 2147483647, %v554
  %vm565 = vcmp.eq.f32.partialorder %v564, 8.507059e+37
  %v566 = vand.u32 %v554, 2147483648
  %v567 = vor.u32 1.1754944e-38, %v566
  %v568 = vsel %vm565, %v567, %v563
  %v569 = vmul.f32 %v544, %v568
  %v570 = vmin.f32 %v569, 1.0
  %v571 = vmax.f32 %v570, -1.0
  %v572 = vadd.f32 %v571, 1.0
  %v573 = vmul.f32 %v530, %v572
  %v574 = vld [vmem:[%s8] sm:$0xff]
  %v575 = vld [vmem:[%s8 + $0x8] sm:$0xff]
  %v577 = vsel %vm48, %v573, 0
  %579 = vmatpush.msra.mxu0 0.0
  %580 = vmatpush.msra.mxu0 0.0
  %581 = vmatpush.msra.mxu0 0.0
  %582 = vmatpush.msra.mxu0 0.0
  %583 = vmatpush.msra.mxu0 0.0
  %584 = vmatpush.msra.mxu0 0.0
  %585 = vmatpush.msra.mxu0 0.0
  %586 = vmatpush.msra.mxu0 0.0
  %587 = vmatpush.msra.mxu0 0.0
  %588 = vmatpush.msra.mxu0 0.0
  %589 = vmatpush.msra.mxu0 0.0
  %590 = vmatpush.msra.mxu0 0.0
  %591 = vmatpush.msra.mxu0 0.0
  %592 = vmatpush.msra.mxu0 0.0
  %593 = vmatpush.msra.mxu0 %v575
  %594 = vmatpush.msra.mxu0 %v574
  %595 = vmatmul.f32.gmra.mxu0 %v577
  %v596 = vpop.f32.mrf.mxu0
  %v597 = vadd.f32 0.0, %v596
  %598 = vdwg.mxu0
  %vm599 = vcmask 523264
  %600 = vst.msk [vmem:[%s9] sm:$0xff] %vm599, %v597
  // Predicated region
  $region38: #{_lambda_.7} parent=0 // pred_check
    _
  $region39: #{_lambda_.7} parent=0 // pred_check_branch
    %602 = sbr.rel (0) target = $region41
  $region40: #{_lambda_.7} parent=0 // pred_region
    _
  $region41: #{_lambda_.7} parent=0 // pred_fallthru
    _
  // Predicated region
  $region42: #{_lambda_.7} parent=0 // pred_check
    _
  $region43: #{_lambda_.7} parent=0 // pred_check_branch
    %604 = sbr.rel (0) target = $region45
  $region44: #{_lambda_.7} parent=0 // pred_region
    _
  $region45: #{_lambda_.7} parent=0 // pred_fallthru
    _

// kernel: _lambda_.6
$region0: #{_lambda_.6}
  #allocation0 [shape = 'u32[]', space=smem, size = 0x4, offset = 0x4, fixed_abs, tag = 'smem constant byte address 0x4 - core index']
  #allocation1 [shape = 'u32[72,128]{1,0:T(1,128)}', space=vmem, size = 0x9000, scoped, tag = 'internal scratch']
  %s0 = inlined_call_operand.vmem [shape: f32[512,32], index: 0, kind: input, shape index: {}]
  %s1 = inlined_call_operand.vmem [shape: f32[64,256], index: 1, kind: input, shape index: {}]
  %s2 = inlined_call_operand.vmem [shape: f32[1,32], index: 2, kind: input, shape index: {}]
  %s3 = inlined_call_operand.vmem [shape: f32[1,32], index: 3, kind: input, shape index: {}]
  %s4 = inlined_call_operand.vmem [shape: f32[32,32], index: 4, kind: input, shape index: {}]
  %s5 = inlined_call_operand.vmem [shape: f32[1,32], index: 5, kind: input, shape index: {}]
  %s6 = inlined_call_operand.vmem [shape: f32[1,32], index: 6, kind: input, shape index: {}]
  %s7 = inlined_call_operand.vmem [shape: f32[1,32], index: 7, kind: input, shape index: {}]
  %s8 = inlined_call_operand.vmem [shape: f32[32,32], index: 8, kind: input, shape index: {}]
  %s9 = inlined_call_operand.vmem [shape: f32[128,32], index: 9, kind: output, shape index: {}]
  %s10 = sld [smem:[#allocation0]]
  $region69: #{_lambda_.6} parent=0
    _
  %s12 = ssub.s32 1, %s10
  %s13 = scalar_select 0, %s12, %s10
  loop: start=0, step=1, limit=4
  $region2: #{_lambda_.6} parent=0 // loop_pre_header
    _
  $region3: #{_lambda_.6} parent=0 // loop_header
    %s15 = sphi 0, %s19
    %p16 = scmp.ge.s32.totalorder %s15, 4
    %s25 = sphi 0, %s27
    %s28 = sphi 0, %s25
    %s29 = sphi 0, %s28
    %s45 = sphi 0, %s29
    %s49 = sphi 0, %s49
    %s51 = sphi 0, %s49
    %s52 = sphi 0, %s51
    %s66 = sphi 0, %s52
    %s70 = sphi 0, %s70
    %s72 = sphi 0, %s70
    %s73 = sphi 0, %s72
    %s87 = sphi 0, %s73
    %s91 = sphi 0, %s91
    %s93 = sphi 0, %s91
    %s94 = sphi 0, %s93
    %s108 = sphi 0, %s94
    %s112 = sphi 0, %s112
    %s114 = sphi 0, %s112
    %s115 = sphi 0, %s114
    %s129 = sphi 0, %s115
    %s133 = sphi 0, %s133
    %s135 = sphi 0, %s133
    %s136 = sphi 0, %s135
    %s150 = sphi 0, %s136
    %s154 = sphi 0, %s154
    %s156 = sphi 0, %s154
    %s157 = sphi 0, %s156
    %s171 = sphi 0, %s157
    %s175 = sphi 0, %s175
    %s177 = sphi 0, %s175
    %s178 = sphi 0, %s177
    %s192 = sphi 0, %s178
    %s196 = sphi 0, %s196
    %s198 = sphi 0, %s196
    %s199 = sphi 0, %s198
    %s213 = sphi 0, %s199
    %s219 = sphi 0, %s221
    %s222 = sphi 0, %s219
    %s223 = sphi 0, %s222
    %s239 = sphi 0, %s223
  $region4: #{_lambda_.6} parent=0 // loop_header_branch
    %18 = sbr.rel (%p16) target = $region8
  $region5: #{_lambda_.6} parent=0 // loop_body
    %s20 = ssub.s32 %s15, 1
    %s21 = ssub.s32 %s15, 2
    %s22 = sadd.s32 %s15, 1
    %s23 = ssub.s32 %s15, %s22
    %p24 = scmp.eq.s32.totalorder %s23, 0
    %s26 = sadd.s32 %s25, 1
    %s27 = scalar_select %p24, %s25, %s26
    %p30 = pneg %p24
    %p31 = scmp.eq.s32.totalorder %s15, 1
    %p32 = por %p30, %p31
    %p33 = scmp.ne.s32.totalorder %s25, %s28
    %p34 = scmp.eq.s32.totalorder %s15, 0
    %p35 = por %p33, %p34
    %p36 = scmp.ne.s32.totalorder %s25, %s28
    %p37 = scmp.eq.s32.totalorder %s20, 1
    %p38 = por %p36, %p37
    %p39 = scmp.ne.s32.totalorder %s28, %s29
    %p40 = scmp.eq.s32.totalorder %s20, 0
    %p41 = por %p39, %p40
    %p42 = scmp.ne.s32.totalorder %s28, %s29
    %p43 = scmp.eq.s32.totalorder %s21, 1
    %p44 = por %p42, %p43
    %p46 = scmp.ne.s32.totalorder %s29, %s45
    %p47 = scmp.eq.s32.totalorder %s21, 0
    %p48 = por %p46, %p47
    %s50 = sadd.s32 %s49, 1
    %p53 = scmp.eq.s32.totalorder %s15, 1
    %p54 = scmp.ne.s32.totalorder %s49, %s51
    %p55 = scmp.eq.s32.totalorder %s15, 0
    %p56 = por %p54, %p55
    %p57 = scmp.ne.s32.totalorder %s49, %s51
    %p58 = scmp.eq.s32.totalorder %s20, 1
    %p59 = por %p57, %p58
    %p60 = scmp.ne.s32.totalorder %s51, %s52
    %p61 = scmp.eq.s32.totalorder %s20, 0
    %p62 = por %p60, %p61
    %p63 = scmp.ne.s32.totalorder %s51, %s52
    %p64 = scmp.eq.s32.totalorder %s21, 1
    %p65 = por %p63, %p64
    %p67 = scmp.ne.s32.totalorder %s52, %s66
    %p68 = scmp.eq.s32.totalorder %s21, 0
    %p69 = por %p67, %p68
    %s71 = sadd.s32 %s70, 1
    %p74 = scmp.eq.s32.totalorder %s15, 1
    %p75 = scmp.ne.s32.totalorder %s70, %s72
    %p76 = scmp.eq.s32.totalorder %s15, 0
    %p77 = por %p75, %p76
    %p78 = scmp.ne.s32.totalorder %s70, %s72
    %p79 = scmp.eq.s32.totalorder %s20, 1
    %p80 = por %p78, %p79
    %p81 = scmp.ne.s32.totalorder %s72, %s73
    %p82 = scmp.eq.s32.totalorder %s20, 0
    %p83 = por %p81, %p82
    %p84 = scmp.ne.s32.totalorder %s72, %s73
    %p85 = scmp.eq.s32.totalorder %s21, 1
    %p86 = por %p84, %p85
    %p88 = scmp.ne.s32.totalorder %s73, %s87
    %p89 = scmp.eq.s32.totalorder %s21, 0
    %p90 = por %p88, %p89
    %s92 = sadd.s32 %s91, 1
    %p95 = scmp.eq.s32.totalorder %s15, 1
    %p96 = scmp.ne.s32.totalorder %s91, %s93
    %p97 = scmp.eq.s32.totalorder %s15, 0
    %p98 = por %p96, %p97
    %p99 = scmp.ne.s32.totalorder %s91, %s93
    %p100 = scmp.eq.s32.totalorder %s20, 1
    %p101 = por %p99, %p100
    %p102 = scmp.ne.s32.totalorder %s93, %s94
    %p103 = scmp.eq.s32.totalorder %s20, 0
    %p104 = por %p102, %p103
    %p105 = scmp.ne.s32.totalorder %s93, %s94
    %p106 = scmp.eq.s32.totalorder %s21, 1
    %p107 = por %p105, %p106
    %p109 = scmp.ne.s32.totalorder %s94, %s108
    %p110 = scmp.eq.s32.totalorder %s21, 0
    %p111 = por %p109, %p110
    %s113 = sadd.s32 %s112, 1
    %p116 = scmp.eq.s32.totalorder %s15, 1
    %p117 = scmp.ne.s32.totalorder %s112, %s114
    %p118 = scmp.eq.s32.totalorder %s15, 0
    %p119 = por %p117, %p118
    %p120 = scmp.ne.s32.totalorder %s112, %s114
    %p121 = scmp.eq.s32.totalorder %s20, 1
    %p122 = por %p120, %p121
    %p123 = scmp.ne.s32.totalorder %s114, %s115
    %p124 = scmp.eq.s32.totalorder %s20, 0
    %p125 = por %p123, %p124
    %p126 = scmp.ne.s32.totalorder %s114, %s115
    %p127 = scmp.eq.s32.totalorder %s21, 1
    %p128 = por %p126, %p127
    %p130 = scmp.ne.s32.totalorder %s115, %s129
    %p131 = scmp.eq.s32.totalorder %s21, 0
    %p132 = por %p130, %p131
    %s134 = sadd.s32 %s133, 1
    %p137 = scmp.eq.s32.totalorder %s15, 1
    %p138 = scmp.ne.s32.totalorder %s133, %s135
    %p139 = scmp.eq.s32.totalorder %s15, 0
    %p140 = por %p138, %p139
    %p141 = scmp.ne.s32.totalorder %s133, %s135
    %p142 = scmp.eq.s32.totalorder %s20, 1
    %p143 = por %p141, %p142
    %p144 = scmp.ne.s32.totalorder %s135, %s136
    %p145 = scmp.eq.s32.totalorder %s20, 0
    %p146 = por %p144, %p145
    %p147 = scmp.ne.s32.totalorder %s135, %s136
    %p148 = scmp.eq.s32.totalorder %s21, 1
    %p149 = por %p147, %p148
    %p151 = scmp.ne.s32.totalorder %s136, %s150
    %p152 = scmp.eq.s32.totalorder %s21, 0
    %p153 = por %p151, %p152
    %s155 = sadd.s32 %s154, 1
    %p158 = scmp.eq.s32.totalorder %s15, 1
    %p159 = scmp.ne.s32.totalorder %s154, %s156
    %p160 = scmp.eq.s32.totalorder %s15, 0
    %p161 = por %p159, %p160
    %p162 = scmp.ne.s32.totalorder %s154, %s156
    %p163 = scmp.eq.s32.totalorder %s20, 1
    %p164 = por %p162, %p163
    %p165 = scmp.ne.s32.totalorder %s156, %s157
    %p166 = scmp.eq.s32.totalorder %s20, 0
    %p167 = por %p165, %p166
    %p168 = scmp.ne.s32.totalorder %s156, %s157
    %p169 = scmp.eq.s32.totalorder %s21, 1
    %p170 = por %p168, %p169
    %p172 = scmp.ne.s32.totalorder %s157, %s171
    %p173 = scmp.eq.s32.totalorder %s21, 0
    %p174 = por %p172, %p173
    %s176 = sadd.s32 %s175, 1
    %p179 = scmp.eq.s32.totalorder %s15, 1
    %p180 = scmp.ne.s32.totalorder %s175, %s177
    %p181 = scmp.eq.s32.totalorder %s15, 0
    %p182 = por %p180, %p181
    %p183 = scmp.ne.s32.totalorder %s175, %s177
    %p184 = scmp.eq.s32.totalorder %s20, 1
    %p185 = por %p183, %p184
    %p186 = scmp.ne.s32.totalorder %s177, %s178
    %p187 = scmp.eq.s32.totalorder %s20, 0
    %p188 = por %p186, %p187
    %p189 = scmp.ne.s32.totalorder %s177, %s178
    %p190 = scmp.eq.s32.totalorder %s21, 1
    %p191 = por %p189, %p190
    %p193 = scmp.ne.s32.totalorder %s178, %s192
    %p194 = scmp.eq.s32.totalorder %s21, 0
    %p195 = por %p193, %p194
    %s197 = sadd.s32 %s196, 1
    %p200 = scmp.eq.s32.totalorder %s15, 1
    %p201 = scmp.ne.s32.totalorder %s196, %s198
    %p202 = scmp.eq.s32.totalorder %s15, 0
    %p203 = por %p201, %p202
    %p204 = scmp.ne.s32.totalorder %s196, %s198
    %p205 = scmp.eq.s32.totalorder %s20, 1
    %p206 = por %p204, %p205
    %p207 = scmp.ne.s32.totalorder %s198, %s199
    %p208 = scmp.eq.s32.totalorder %s20, 0
    %p209 = por %p207, %p208
    %p210 = scmp.ne.s32.totalorder %s198, %s199
    %p211 = scmp.eq.s32.totalorder %s21, 1
    %p212 = por %p210, %p211
    %p214 = scmp.ne.s32.totalorder %s199, %s213
    %p215 = scmp.eq.s32.totalorder %s21, 0
    %p216 = por %p214, %p215
    %s217 = ssub.s32 %s15, %s22
    %p218 = scmp.eq.s32.totalorder %s217, 0
    %s220 = sadd.s32 %s219, 1
    %s221 = scalar_select %p218, %s219, %s220
    %p224 = pneg %p218
    %p225 = scmp.eq.s32.totalorder %s15, 1
    %p226 = por %p224, %p225
    %p227 = scmp.ne.s32.totalorder %s219, %s222
    %p228 = scmp.eq.s32.totalorder %s15, 0
    %p229 = por %p227, %p228
    %p230 = scmp.ne.s32.totalorder %s219, %s222
    %p231 = scmp.eq.s32.totalorder %s20, 1
    %p232 = por %p230, %p231
    %p233 = scmp.ne.s32.totalorder %s222, %s223
    %p234 = scmp.eq.s32.totalorder %s20, 0
    %p235 = por %p233, %p234
    %p236 = scmp.ne.s32.totalorder %s222, %s223
    %p237 = scmp.eq.s32.totalorder %s21, 1
    %p238 = por %p236, %p237
    %p240 = scmp.ne.s32.totalorder %s223, %s239
    %p241 = scmp.eq.s32.totalorder %s21, 0
    %p242 = por %p240, %p241
    %p243 = scmp.le.s32.totalorder 1, %s15
    %p244 = scmp.lt.s32.totalorder %s15, 3
    %p245 = pnand %p243, %p244
    %p246 = pneg %p245
    // Predicated region
    $region9: #{_lambda_.6} parent=5 // pred_check
      _
    $region10: #{_lambda_.6} parent=5 // pred_check_branch
      %248 = sbr.rel (%p245) target = $region12
    $region11: #{_lambda_.6} parent=5 // pred_region
      %s249 = ssub.s32 %s15, 1
      // Predicated region
      $region13: #{_lambda_.6} parent=11 // pred_check
        %p250 = pneg %p62
      $region14: #{_lambda_.6} parent=11 // pred_check_branch
        %252 = sbr.rel (%p250) target = $region16
      $region15: #{_lambda_.6} parent=11 // pred_region
        _
      $region16: #{_lambda_.6} parent=11 // pred_fallthru
        _
      // Predicated region
      $region17: #{_lambda_.6} parent=11 // pred_check
        %p253 = pneg %p83
      $region18: #{_lambda_.6} parent=11 // pred_check_branch
        %255 = sbr.rel (%p253) target = $region20
      $region19: #{_lambda_.6} parent=11 // pred_region
        _
      $region20: #{_lambda_.6} parent=11 // pred_fallthru
        _
      // Predicated region
      $region21: #{_lambda_.6} parent=11 // pred_check
        %p256 = pneg %p104
      $region22: #{_lambda_.6} parent=11 // pred_check_branch
        %258 = sbr.rel (%p256) target = $region24
      $region23: #{_lambda_.6} parent=11 // pred_region
        _
      $region24: #{_lambda_.6} parent=11 // pred_fallthru
        _
      // Predicated region
      $region25: #{_lambda_.6} parent=11 // pred_check
        %p259 = pneg %p125
      $region26: #{_lambda_.6} parent=11 // pred_check_branch
        %261 = sbr.rel (%p259) target = $region28
      $region27: #{_lambda_.6} parent=11 // pred_region
        _
      $region28: #{_lambda_.6} parent=11 // pred_fallthru
        _
      // Predicated region
      $region29: #{_lambda_.6} parent=11 // pred_check
        %p262 = pneg %p146
      $region30: #{_lambda_.6} parent=11 // pred_check_branch
        %264 = sbr.rel (%p262) target = $region32
      $region31: #{_lambda_.6} parent=11 // pred_region
        _
      $region32: #{_lambda_.6} parent=11 // pred_fallthru
        _
      // Predicated region
      $region33: #{_lambda_.6} parent=11 // pred_check
        %p265 = pneg %p167
      $region34: #{_lambda_.6} parent=11 // pred_check_branch
        %267 = sbr.rel (%p265) target = $region36
      $region35: #{_lambda_.6} parent=11 // pred_region
        _
      $region36: #{_lambda_.6} parent=11 // pred_fallthru
        _
      // Predicated region
      $region37: #{_lambda_.6} parent=11 // pred_check
        %p268 = pneg %p188
      $region38: #{_lambda_.6} parent=11 // pred_check_branch
        %270 = sbr.rel (%p268) target = $region40
      $region39: #{_lambda_.6} parent=11 // pred_region
        _
      $region40: #{_lambda_.6} parent=11 // pred_fallthru
        _
      // Predicated region
      $region41: #{_lambda_.6} parent=11 // pred_check
        %p271 = pneg %p209
      $region42: #{_lambda_.6} parent=11 // pred_check_branch
        %273 = sbr.rel (%p271) target = $region44
      $region43: #{_lambda_.6} parent=11 // pred_region
        _
      $region44: #{_lambda_.6} parent=11 // pred_fallthru
        _
    $region12: #{_lambda_.6} parent=5 // pred_fallthru
      _
    %p274 = scmp.lt.s32.totalorder %s15, 2
    // Predicated region
    $region45: #{_lambda_.6} parent=5 // pred_check
      %p275 = pneg %p274
    $region46: #{_lambda_.6} parent=5 // pred_check_branch
      %277 = sbr.rel (%p275) target = $region48
    $region47: #{_lambda_.6} parent=5 // pred_region
      // Predicated region
      $region49: #{_lambda_.6} parent=47 // pred_check
        %p278 = pneg %p35
      $region50: #{_lambda_.6} parent=47 // pred_check_branch
        %280 = sbr.rel (%p278) target = $region52
      $region51: #{_lambda_.6} parent=47 // pred_region
        %s281 = smul.u32 32, %s15
        %p282 = scmp.lt.s32.totalorder %s281, 63
        %s283 = scalar_select %p282, %s281, 63
        %s284 = smul.addr %s283, 8
        %s285 = scalar_lea.vmem %s0, %s284
        %s286 = smul.u32 32, %s15
      $region52: #{_lambda_.6} parent=47 // pred_fallthru
        _
    $region48: #{_lambda_.6} parent=5 // pred_fallthru
      _
    %p287 = scmp.le.s32.totalorder 1, %s15
    %p288 = scmp.lt.s32.totalorder %s15, 3
    %p289 = pnand %p287, %p288
    %p290 = pneg %p289
    // Predicated region
    $region53: #{_lambda_.6} parent=5 // pred_check
      _
    $region54: #{_lambda_.6} parent=5 // pred_check_branch
      %292 = sbr.rel (%p289) target = $region56
    $region55: #{_lambda_.6} parent=5 // pred_region
      %s293 = ssub.s32 %s15, 1
      %s294 = smul.u32 32, %s20
      %p295 = scmp.lt.s32.totalorder %s294, 63
      %s296 = scalar_select %p295, %s294, 63
      %s297 = smul.addr %s296, 8
      %s298 = scalar_lea.vmem %s0, %s297
      %p299 = pneg %p41
      %p300 = pneg %p38
      %p301 = pneg %p62
      %p302 = pneg %p59
      %p303 = pneg %p83
      %p304 = pneg %p80
      %p305 = pneg %p104
      %p306 = pneg %p101
      %p307 = pneg %p125
      %p308 = pneg %p122
      %p309 = pneg %p146
      %p310 = pneg %p143
      %p311 = pneg %p167
      %p312 = pneg %p164
      %p313 = pneg %p188
      %p314 = pneg %p185
      %p315 = pneg %p209
      %p316 = pneg %p206
      %p317 = pneg %p235
      %p318 = pneg %p232
      %s319 = smul.u32 8, %s20
      %p320 = scmp.lt.s32.totalorder %s319, 15
      %s321 = scalar_select %p320, %s319, 15
      %s322 = smul.addr %s321, 8
      %s323 = scalar_lea.vmem %s9, %s322
      %s324 = smul.u32 32, %s20
      %p325 = scmp.lt.s32.totalorder %s324, 63
      %s326 = scalar_select %p325, %s324, 63
      %s327 = smul.addr %s326, 8
      %s328 = scalar_lea.vmem %s0, %s327
      %s329 = smul.u32 32, %s20
      %s330 = smul.u32 8, %s20
      %p331 = scmp.lt.s32.totalorder %s330, 15
      %s332 = scalar_select %p331, %s330, 15
      %s333 = smul.addr %s332, 8
      %s334 = scalar_lea.vmem %s9, %s333
      %s335 = smul.u32 8, %s20
      %v336 = vld [vmem:[%s328] sm:$0xff]
      %v337 = vld [vmem:[%s328 + $0x8] sm:$0xff]
      %v338 = vld [vmem:[%s328 + $0x10] sm:$0xff]
      %v339 = vld [vmem:[%s328 + $0x18] sm:$0xff]
      %v340 = vld [vmem:[%s328 + $0x20] sm:$0xff]
      %v341 = vld [vmem:[%s328 + $0x28] sm:$0xff]
      %v342 = vld [vmem:[%s328 + $0x30] sm:$0xff]
      %v343 = vld [vmem:[%s328 + $0x38] sm:$0xff]
      %v344 = vld [vmem:[%s328 + $0x40] sm:$0xff]
      %v345 = vld [vmem:[%s328 + $0x48] sm:$0xff]
      %v346 = vld [vmem:[%s328 + $0x50] sm:$0xff]
      %v347 = vld [vmem:[%s328 + $0x58] sm:$0xff]
      %v348 = vld [vmem:[%s328 + $0x60] sm:$0xff]
      %v349 = vld [vmem:[%s328 + $0x68] sm:$0xff]
      %v350 = vld [vmem:[%s328 + $0x70] sm:$0xff]
      %v351 = vld [vmem:[%s328 + $0x78] sm:$0xff]
      %v352 = vld [vmem:[%s328 + $0x80] sm:$0xff]
      %v353 = vld [vmem:[%s328 + $0x88] sm:$0xff]
      %v354 = vld [vmem:[%s328 + $0x90] sm:$0xff]
      %v355 = vld [vmem:[%s328 + $0x98] sm:$0xff]
      %v356 = vld [vmem:[%s328 + $0xa0] sm:$0xff]
      %v357 = vld [vmem:[%s328 + $0xa8] sm:$0xff]
      %v358 = vld [vmem:[%s328 + $0xb0] sm:$0xff]
      %v359 = vld [vmem:[%s328 + $0xb8] sm:$0xff]
      %v360 = vld [vmem:[%s328 + $0xc0] sm:$0xff]
      %v361 = vld [vmem:[%s328 + $0xc8] sm:$0xff]
      %v362 = vld [vmem:[%s328 + $0xd0] sm:$0xff]
      %v363 = vld [vmem:[%s328 + $0xd8] sm:$0xff]
      %v364 = vld [vmem:[%s328 + $0xe0] sm:$0xff]
      %v365 = vld [vmem:[%s328 + $0xe8] sm:$0xff]
      %v366 = vld [vmem:[%s328 + $0xf0] sm:$0xff]
      %v367 = vld [vmem:[%s328 + $0xf8] sm:$0xff]
      %vm368 = vcmask 261120
      %v369 = vsel %vm368, %v336, 0.0
      %370 = vadd.xlane.f32.xlu0 %v369
      %v371 = vpop.xlane.xlu0 %370
      %v372 = vsel %vm368, %v337, 0.0
      %373 = vadd.xlane.f32.xlu0 %v372
      %v374 = vpop.xlane.xlu0 %373
      %v375 = vsel %vm368, %v338, 0.0
      %376 = vadd.xlane.f32.xlu0 %v375
      %v377 = vpop.xlane.xlu0 %376
      %v378 = vsel %vm368, %v339, 0.0
      %379 = vadd.xlane.f32.xlu0 %v378
      %v380 = vpop.xlane.xlu0 %379
      %v381 = vsel %vm368, %v340, 0.0
      %382 = vadd.xlane.f32.xlu0 %v381
      %v383 = vpop.xlane.xlu0 %382
      %v384 = vsel %vm368, %v341, 0.0
      %385 = vadd.xlane.f32.xlu0 %v384
      %v386 = vpop.xlane.xlu0 %385
      %v387 = vsel %vm368, %v342, 0.0
      %388 = vadd.xlane.f32.xlu0 %v387
      %v389 = vpop.xlane.xlu0 %388
      %v390 = vsel %vm368, %v343, 0.0
      %391 = vadd.xlane.f32.xlu0 %v390
      %v392 = vpop.xlane.xlu0 %391
      %v393 = vsel %vm368, %v344, 0.0
      %394 = vadd.xlane.f32.xlu0 %v393
      %v395 = vpop.xlane.xlu0 %394
      %v396 = vsel %vm368, %v345, 0.0
      %397 = vadd.xlane.f32.xlu0 %v396
      %v398 = vpop.xlane.xlu0 %397
      %v399 = vsel %vm368, %v346, 0.0
      %400 = vadd.xlane.f32.xlu0 %v399
      %v401 = vpop.xlane.xlu0 %400
      %v402 = vsel %vm368, %v347, 0.0
      %403 = vadd.xlane.f32.xlu0 %v402
      %v404 = vpop.xlane.xlu0 %403
      %v405 = vsel %vm368, %v348, 0.0
      %406 = vadd.xlane.f32.xlu0 %v405
      %v407 = vpop.xlane.xlu0 %406
      %v408 = vsel %vm368, %v349, 0.0
      %409 = vadd.xlane.f32.xlu0 %v408
      %v410 = vpop.xlane.xlu0 %409
      %v411 = vsel %vm368, %v350, 0.0
      %412 = vadd.xlane.f32.xlu0 %v411
      %v413 = vpop.xlane.xlu0 %412
      %v414 = vsel %vm368, %v351, 0.0
      %415 = vadd.xlane.f32.xlu0 %v414
      %v416 = vpop.xlane.xlu0 %415
      %v417 = vsel %vm368, %v352, 0.0
      %418 = vadd.xlane.f32.xlu0 %v417
      %v419 = vpop.xlane.xlu0 %418
      %v420 = vsel %vm368, %v353, 0.0
      %421 = vadd.xlane.f32.xlu0 %v420
      %v422 = vpop.xlane.xlu0 %421
      %v423 = vsel %vm368, %v354, 0.0
      %424 = vadd.xlane.f32.xlu0 %v423
      %v425 = vpop.xlane.xlu0 %424
      %v426 = vsel %vm368, %v355, 0.0
      %427 = vadd.xlane.f32.xlu0 %v426
      %v428 = vpop.xlane.xlu0 %427
      %v429 = vsel %vm368, %v356, 0.0
      %430 = vadd.xlane.f32.xlu0 %v429
      %v431 = vpop.xlane.xlu0 %430
      %v432 = vsel %vm368, %v357, 0.0
      %433 = vadd.xlane.f32.xlu0 %v432
      %v434 = vpop.xlane.xlu0 %433
      %v435 = vsel %vm368, %v358, 0.0
      %436 = vadd.xlane.f32.xlu0 %v435
      %v437 = vpop.xlane.xlu0 %436
      %v438 = vsel %vm368, %v359, 0.0
      %439 = vadd.xlane.f32.xlu0 %v438
      %v440 = vpop.xlane.xlu0 %439
      %v441 = vsel %vm368, %v360, 0.0
      %442 = vadd.xlane.f32.xlu0 %v441
      %v443 = vpop.xlane.xlu0 %442
      %v444 = vsel %vm368, %v361, 0.0
      %445 = vadd.xlane.f32.xlu0 %v444
      %v446 = vpop.xlane.xlu0 %445
      %v447 = vsel %vm368, %v362, 0.0
      %448 = vadd.xlane.f32.xlu0 %v447
      %v449 = vpop.xlane.xlu0 %448
      %v450 = vsel %vm368, %v363, 0.0
      %451 = vadd.xlane.f32.xlu0 %v450
      %v452 = vpop.xlane.xlu0 %451
      %v453 = vsel %vm368, %v364, 0.0
      %454 = vadd.xlane.f32.xlu0 %v453
      %v455 = vpop.xlane.xlu0 %454
      %v456 = vsel %vm368, %v365, 0.0
      %457 = vadd.xlane.f32.xlu0 %v456
      %v458 = vpop.xlane.xlu0 %457
      %v459 = vsel %vm368, %v366, 0.0
      %460 = vadd.xlane.f32.xlu0 %v459
      %v461 = vpop.xlane.xlu0 %460
      %v462 = vsel %vm368, %v367, 0.0
      %463 = vadd.xlane.f32.xlu0 %v462
      %v464 = vpop.xlane.xlu0 %463
      %v465 = vrcp.pop 32.0
      %v466 = vmul.f32 32.0, %v465
      %v467 = vsub.f32 1.0, %v466
      %v468 = vmul.f32 %v465, %v467
      %v469 = vadd.f32 %v465, %v468
      %vm470 = vweird.f32 %v465
      %v471 = vsel %vm470, %v465, %v469
      %v472 = vmul.f32 %v371, %v471
      %v473 = vmul.f32 %v374, %v471
      %v474 = vmul.f32 %v377, %v471
      %v475 = vmul.f32 %v380, %v471
      %v476 = vmul.f32 %v383, %v471
      %v477 = vmul.f32 %v386, %v471
      %v478 = vmul.f32 %v389, %v471
      %v479 = vmul.f32 %v392, %v471
      %v480 = vmul.f32 %v395, %v471
      %v481 = vmul.f32 %v398, %v471
      %v482 = vmul.f32 %v401, %v471
      %v483 = vmul.f32 %v404, %v471
      %v484 = vmul.f32 %v407, %v471
      %v485 = vmul.f32 %v410, %v471
      %v486 = vmul.f32 %v413, %v471
      %v487 = vmul.f32 %v416, %v471
      %v488 = vmul.f32 %v419, %v471
      %v489 = vmul.f32 %v422, %v471
      %v490 = vmul.f32 %v425, %v471
      %v491 = vmul.f32 %v428, %v471
      %v492 = vmul.f32 %v431, %v471
      %v493 = vmul.f32 %v434, %v471
      %v494 = vmul.f32 %v437, %v471
      %v495 = vmul.f32 %v440, %v471
      %v496 = vmul.f32 %v443, %v471
      %v497 = vmul.f32 %v446, %v471
      %v498 = vmul.f32 %v449, %v471
      %v499 = vmul.f32 %v452, %v471
      %v500 = vmul.f32 %v455, %v471
      %v501 = vmul.f32 %v458, %v471
      %v502 = vmul.f32 %v461, %v471
      %v503 = vmul.f32 %v464, %v471
      %v504 = vsub.f32 %v336, %v472
      %v505 = vsub.f32 %v337, %v473
      %v506 = vsub.f32 %v338, %v474
      %v507 = vsub.f32 %v339, %v475
      %v508 = vsub.f32 %v340, %v476
      %v509 = vsub.f32 %v341, %v477
      %v510 = vsub.f32 %v342, %v478
      %v511 = vsub.f32 %v343, %v479
      %v512 = vsub.f32 %v344, %v480
      %v513 = vsub.f32 %v345, %v481
      %v514 = vsub.f32 %v346, %v482
      %v515 = vsub.f32 %v347, %v483
      %v516 = vsub.f32 %v348, %v484
      %v517 = vsub.f32 %v349, %v485
      %v518 = vsub.f32 %v350, %v486
      %v519 = vsub.f32 %v351, %v487
      %v520 = vsub.f32 %v352, %v488
      %v521 = vsub.f32 %v353, %v489
      %v522 = vsub.f32 %v354, %v490
      %v523 = vsub.f32 %v355, %v491
      %v524 = vsub.f32 %v356, %v492
      %v525 = vsub.f32 %v357, %v493
      %v526 = vsub.f32 %v358, %v494
      %v527 = vsub.f32 %v359, %v495
      %v528 = vsub.f32 %v360, %v496
      %v529 = vsub.f32 %v361, %v497
      %v530 = vsub.f32 %v362, %v498
      %v531 = vsub.f32 %v363, %v499
      %v532 = vsub.f32 %v364, %v500
      %v533 = vsub.f32 %v365, %v501
      %v534 = vsub.f32 %v366, %v502
      %v535 = vsub.f32 %v367, %v503
      %v536 = vmul.f32 %v504, %v504
      %v537 = vmul.f32 %v505, %v505
      %v538 = vmul.f32 %v506, %v506
      %v539 = vmul.f32 %v507, %v507
      %v540 = vmul.f32 %v508, %v508
      %v541 = vmul.f32 %v509, %v509
      %v542 = vmul.f32 %v510, %v510
      %v543 = vmul.f32 %v511, %v511
      %v544 = vmul.f32 %v512, %v512
      %v545 = vmul.f32 %v513, %v513
      %v546 = vmul.f32 %v514, %v514
      %v547 = vmul.f32 %v515, %v515
      %v548 = vmul.f32 %v516, %v516
      %v549 = vmul.f32 %v517, %v517
      %v550 = vmul.f32 %v518, %v518
      %v551 = vmul.f32 %v519, %v519
      %v552 = vmul.f32 %v520, %v520
      %v553 = vmul.f32 %v521, %v521
      %v554 = vmul.f32 %v522, %v522
      %v555 = vmul.f32 %v523, %v523
      %v556 = vmul.f32 %v524, %v524
      %v557 = vmul.f32 %v525, %v525
      %v558 = vmul.f32 %v526, %v526
      %v559 = vmul.f32 %v527, %v527
      %v560 = vmul.f32 %v528, %v528
      %v561 = vmul.f32 %v529, %v529
      %v562 = vmul.f32 %v530, %v530
      %v563 = vmul.f32 %v531, %v531
      %v564 = vmul.f32 %v532, %v532
      %v565 = vmul.f32 %v533, %v533
      %v566 = vmul.f32 %v534, %v534
      %v567 = vmul.f32 %v535, %v535
      %v568 = vsel %vm368, %v536, 0.0
      %569 = vadd.xlane.f32.xlu0 %v568
      %v570 = vpop.xlane.xlu0 %569
      %v571 = vsel %vm368, %v537, 0.0
      %572 = vadd.xlane.f32.xlu0 %v571
      %v573 = vpop.xlane.xlu0 %572
      %v574 = vsel %vm368, %v538, 0.0
      %575 = vadd.xlane.f32.xlu0 %v574
      %v576 = vpop.xlane.xlu0 %575
      %v577 = vsel %vm368, %v539, 0.0
      %578 = vadd.xlane.f32.xlu0 %v577
      %v579 = vpop.xlane.xlu0 %578
      %v580 = vsel %vm368, %v540, 0.0
      %581 = vadd.xlane.f32.xlu0 %v580
      %v582 = vpop.xlane.xlu0 %581
      %v583 = vsel %vm368, %v541, 0.0
      %584 = vadd.xlane.f32.xlu0 %v583
      %v585 = vpop.xlane.xlu0 %584
      %v586 = vsel %vm368, %v542, 0.0
      %587 = vadd.xlane.f32.xlu0 %v586
      %v588 = vpop.xlane.xlu0 %587
      %v589 = vsel %vm368, %v543, 0.0
      %590 = vadd.xlane.f32.xlu0 %v589
      %v591 = vpop.xlane.xlu0 %590
      %v592 = vsel %vm368, %v544, 0.0
      %593 = vadd.xlane.f32.xlu0 %v592
      %v594 = vpop.xlane.xlu0 %593
      %v595 = vsel %vm368, %v545, 0.0
      %596 = vadd.xlane.f32.xlu0 %v595
      %v597 = vpop.xlane.xlu0 %596
      %v598 = vsel %vm368, %v546, 0.0
      %599 = vadd.xlane.f32.xlu0 %v598
      %v600 = vpop.xlane.xlu0 %599
      %v601 = vsel %vm368, %v547, 0.0
      %602 = vadd.xlane.f32.xlu0 %v601
      %v603 = vpop.xlane.xlu0 %602
      %v604 = vsel %vm368, %v548, 0.0
      %605 = vadd.xlane.f32.xlu0 %v604
      %v606 = vpop.xlane.xlu0 %605
      %v607 = vsel %vm368, %v549, 0.0
      %608 = vadd.xlane.f32.xlu0 %v607
      %v609 = vpop.xlane.xlu0 %608
      %v610 = vsel %vm368, %v550, 0.0
      %611 = vadd.xlane.f32.xlu0 %v610
      %v612 = vpop.xlane.xlu0 %611
      %v613 = vsel %vm368, %v551, 0.0
      %614 = vadd.xlane.f32.xlu0 %v613
      %v615 = vpop.xlane.xlu0 %614
      %v616 = vsel %vm368, %v552, 0.0
      %617 = vadd.xlane.f32.xlu0 %v616
      %v618 = vpop.xlane.xlu0 %617
      %v619 = vsel %vm368, %v553, 0.0
      %620 = vadd.xlane.f32.xlu0 %v619
      %v621 = vpop.xlane.xlu0 %620
      %v622 = vsel %vm368, %v554, 0.0
      %623 = vadd.xlane.f32.xlu0 %v622
      %v624 = vpop.xlane.xlu0 %623
      %v625 = vsel %vm368, %v555, 0.0
      %626 = vadd.xlane.f32.xlu0 %v625
      %v627 = vpop.xlane.xlu0 %626
      %v628 = vsel %vm368, %v556, 0.0
      %629 = vadd.xlane.f32.xlu0 %v628
      %v630 = vpop.xlane.xlu0 %629
      %v631 = vsel %vm368, %v557, 0.0
      %632 = vadd.xlane.f32.xlu0 %v631
      %v633 = vpop.xlane.xlu0 %632
      %v634 = vsel %vm368, %v558, 0.0
      %635 = vadd.xlane.f32.xlu0 %v634
      %v636 = vpop.xlane.xlu0 %635
      %v637 = vsel %vm368, %v559, 0.0
      %638 = vadd.xlane.f32.xlu0 %v637
      %v639 = vpop.xlane.xlu0 %638
      %v640 = vsel %vm368, %v560, 0.0
      %641 = vadd.xlane.f32.xlu0 %v640
      %v642 = vpop.xlane.xlu0 %641
      %v643 = vsel %vm368, %v561, 0.0
      %644 = vadd.xlane.f32.xlu0 %v643
      %v645 = vpop.xlane.xlu0 %644
      %v646 = vsel %vm368, %v562, 0.0
      %647 = vadd.xlane.f32.xlu0 %v646
      %v648 = vpop.xlane.xlu0 %647
      %v649 = vsel %vm368, %v563, 0.0
      %650 = vadd.xlane.f32.xlu0 %v649
      %v651 = vpop.xlane.xlu0 %650
      %v652 = vsel %vm368, %v564, 0.0
      %653 = vadd.xlane.f32.xlu0 %v652
      %v654 = vpop.xlane.xlu0 %653
      %v655 = vsel %vm368, %v565, 0.0
      %656 = vadd.xlane.f32.xlu0 %v655
      %v657 = vpop.xlane.xlu0 %656
      %v658 = vsel %vm368, %v566, 0.0
      %659 = vadd.xlane.f32.xlu0 %v658
      %v660 = vpop.xlane.xlu0 %659
      %v661 = vsel %vm368, %v567, 0.0
      %662 = vadd.xlane.f32.xlu0 %v661
      %v663 = vpop.xlane.xlu0 %662
      %v664 = vmul.f32 %v570, %v471
      %v665 = vmul.f32 %v573, %v471
      %v666 = vmul.f32 %v576, %v471
      %v667 = vmul.f32 %v579, %v471
      %v668 = vmul.f32 %v582, %v471
      %v669 = vmul.f32 %v585, %v471
      %v670 = vmul.f32 %v588, %v471
      %v671 = vmul.f32 %v591, %v471
      %v672 = vmul.f32 %v594, %v471
      %v673 = vmul.f32 %v597, %v471
      %v674 = vmul.f32 %v600, %v471
      %v675 = vmul.f32 %v603, %v471
      %v676 = vmul.f32 %v606, %v471
      %v677 = vmul.f32 %v609, %v471
      %v678 = vmul.f32 %v612, %v471
      %v679 = vmul.f32 %v615, %v471
      %v680 = vmul.f32 %v618, %v471
      %v681 = vmul.f32 %v621, %v471
      %v682 = vmul.f32 %v624, %v471
      %v683 = vmul.f32 %v627, %v471
      %v684 = vmul.f32 %v630, %v471
      %v685 = vmul.f32 %v633, %v471
      %v686 = vmul.f32 %v636, %v471
      %v687 = vmul.f32 %v639, %v471
      %v688 = vmul.f32 %v642, %v471
      %v689 = vmul.f32 %v645, %v471
      %v690 = vmul.f32 %v648, %v471
      %v691 = vmul.f32 %v651, %v471
      %v692 = vmul.f32 %v654, %v471
      %v693 = vmul.f32 %v657, %v471
      %v694 = vmul.f32 %v660, %v471
      %v695 = vmul.f32 %v663, %v471
      %v696 = vadd.f32 %v664, 1e-05
      %v697 = vadd.f32 %v665, 1e-05
      %v698 = vadd.f32 %v666, 1e-05
      %v699 = vadd.f32 %v667, 1e-05
      %v700 = vadd.f32 %v668, 1e-05
      %v701 = vadd.f32 %v669, 1e-05
      %v702 = vadd.f32 %v670, 1e-05
      %v703 = vadd.f32 %v671, 1e-05
      %v704 = vadd.f32 %v672, 1e-05
      %v705 = vadd.f32 %v673, 1e-05
      %v706 = vadd.f32 %v674, 1e-05
      %v707 = vadd.f32 %v675, 1e-05
      %v708 = vadd.f32 %v676, 1e-05
      %v709 = vadd.f32 %v677, 1e-05
      %v710 = vadd.f32 %v678, 1e-05
      %v711 = vadd.f32 %v679, 1e-05
      %v712 = vadd.f32 %v680, 1e-05
      %v713 = vadd.f32 %v681, 1e-05
      %v714 = vadd.f32 %v682, 1e-05
      %v715 = vadd.f32 %v683, 1e-05
      %v716 = vadd.f32 %v684, 1e-05
      %v717 = vadd.f32 %v685, 1e-05
      %v718 = vadd.f32 %v686, 1e-05
      %v719 = vadd.f32 %v687, 1e-05
      %v720 = vadd.f32 %v688, 1e-05
      %v721 = vadd.f32 %v689, 1e-05
      %v722 = vadd.f32 %v690, 1e-05
      %v723 = vadd.f32 %v691, 1e-05
      %v724 = vadd.f32 %v692, 1e-05
      %v725 = vadd.f32 %v693, 1e-05
      %v726 = vadd.f32 %v694, 1e-05
      %v727 = vadd.f32 %v695, 1e-05
      %v728 = vrsqrt.pop %v696
      %v729 = vmul.f32 %v728, %v696
      %v730 = vmul.f32 %v729, %v728
      %v731 = vmul.f32 0.5, %v730
      %v732 = vsub.f32 1.5, %v731
      %v733 = vmul.f32 %v728, %v732
      %vm734 = vweird.f32 %v696
      %vm735 = vweird.f32 %v728
      %vm736 = vmor %vm734, %vm735
      %v737 = vsel %vm736, %v728, %v733
      %v738 = vrsqrt.pop %v697
      %v739 = vmul.f32 %v738, %v697
      %v740 = vmul.f32 %v739, %v738
      %v741 = vmul.f32 0.5, %v740
      %v742 = vsub.f32 1.5, %v741
      %v743 = vmul.f32 %v738, %v742
      %vm744 = vweird.f32 %v697
      %vm745 = vweird.f32 %v738
      %vm746 = vmor %vm744, %vm745
      %v747 = vsel %vm746, %v738, %v743
      %v748 = vrsqrt.pop %v698
      %v749 = vmul.f32 %v748, %v698
      %v750 = vmul.f32 %v749, %v748
      %v751 = vmul.f32 0.5, %v750
      %v752 = vsub.f32 1.5, %v751
      %v753 = vmul.f32 %v748, %v752
      %vm754 = vweird.f32 %v698
      %vm755 = vweird.f32 %v748
      %vm756 = vmor %vm754, %vm755
      %v757 = vsel %vm756, %v748, %v753
      %v758 = vrsqrt.pop %v699
      %v759 = vmul.f32 %v758, %v699
      %v760 = vmul.f32 %v759, %v758
      %v761 = vmul.f32 0.5, %v760
      %v762 = vsub.f32 1.5, %v761
      %v763 = vmul.f32 %v758, %v762
      %vm764 = vweird.f32 %v699
      %vm765 = vweird.f32 %v758
      %vm766 = vmor %vm764, %vm765
      %v767 = vsel %vm766, %v758, %v763
      %v768 = vrsqrt.pop %v700
      %v769 = vmul.f32 %v768, %v700
      %v770 = vmul.f32 %v769, %v768
      %v771 = vmul.f32 0.5, %v770
      %v772 = vsub.f32 1.5, %v771
      %v773 = vmul.f32 %v768, %v772
      %vm774 = vweird.f32 %v700
      %vm775 = vweird.f32 %v768
      %vm776 = vmor %vm774, %vm775
      %v777 = vsel %vm776, %v768, %v773
      %v778 = vrsqrt.pop %v701
      %v779 = vmul.f32 %v778, %v701
      %v780 = vmul.f32 %v779, %v778
      %v781 = vmul.f32 0.5, %v780
      %v782 = vsub.f32 1.5, %v781
      %v783 = vmul.f32 %v778, %v782
      %vm784 = vweird.f32 %v701
      %vm785 = vweird.f32 %v778
      %vm786 = vmor %vm784, %vm785
      %v787 = vsel %vm786, %v778, %v783
      %v788 = vrsqrt.pop %v702
      %v789 = vmul.f32 %v788, %v702
      %v790 = vmul.f32 %v789, %v788
      %v791 = vmul.f32 0.5, %v790
      %v792 = vsub.f32 1.5, %v791
      %v793 = vmul.f32 %v788, %v792
      %vm794 = vweird.f32 %v702
      %vm795 = vweird.f32 %v788
      %vm796 = vmor %vm794, %vm795
      %v797 = vsel %vm796, %v788, %v793
      %v798 = vrsqrt.pop %v703
      %v799 = vmul.f32 %v798, %v703
      %v800 = vmul.f32 %v799, %v798
      %v801 = vmul.f32 0.5, %v800
      %v802 = vsub.f32 1.5, %v801
      %v803 = vmul.f32 %v798, %v802
      %vm804 = vweird.f32 %v703
      %vm805 = vweird.f32 %v798
      %vm806 = vmor %vm804, %vm805
      %v807 = vsel %vm806, %v798, %v803
      %v808 = vrsqrt.pop %v704
      %v809 = vmul.f32 %v808, %v704
      %v810 = vmul.f32 %v809, %v808
      %v811 = vmul.f32 0.5, %v810
      %v812 = vsub.f32 1.5, %v811
      %v813 = vmul.f32 %v808, %v812
      %vm814 = vweird.f32 %v704
      %vm815 = vweird.f32 %v808
      %vm816 = vmor %vm814, %vm815
      %v817 = vsel %vm816, %v808, %v813
      %v818 = vrsqrt.pop %v705
      %v819 = vmul.f32 %v818, %v705
      %v820 = vmul.f32 %v819, %v818
      %v821 = vmul.f32 0.5, %v820
      %v822 = vsub.f32 1.5, %v821
      %v823 = vmul.f32 %v818, %v822
      %vm824 = vweird.f32 %v705
      %vm825 = vweird.f32 %v818
      %vm826 = vmor %vm824, %vm825
      %v827 = vsel %vm826, %v818, %v823
      %v828 = vrsqrt.pop %v706
      %v829 = vmul.f32 %v828, %v706
      %v830 = vmul.f32 %v829, %v828
      %v831 = vmul.f32 0.5, %v830
      %v832 = vsub.f32 1.5, %v831
      %v833 = vmul.f32 %v828, %v832
      %vm834 = vweird.f32 %v706
      %vm835 = vweird.f32 %v828
      %vm836 = vmor %vm834, %vm835
      %v837 = vsel %vm836, %v828, %v833
      %v838 = vrsqrt.pop %v707
      %v839 = vmul.f32 %v838, %v707
      %v840 = vmul.f32 %v839, %v838
      %v841 = vmul.f32 0.5, %v840
      %v842 = vsub.f32 1.5, %v841
      %v843 = vmul.f32 %v838, %v842
      %vm844 = vweird.f32 %v707
      %vm845 = vweird.f32 %v838
      %vm846 = vmor %vm844, %vm845
      %v847 = vsel %vm846, %v838, %v843
      %v848 = vrsqrt.pop %v708
      %v849 = vmul.f32 %v848, %v708
      %v850 = vmul.f32 %v849, %v848
      %v851 = vmul.f32 0.5, %v850
      %v852 = vsub.f32 1.5, %v851
      %v853 = vmul.f32 %v848, %v852
      %vm854 = vweird.f32 %v708
      %vm855 = vweird.f32 %v848
      %vm856 = vmor %vm854, %vm855
      %v857 = vsel %vm856, %v848, %v853
      %v858 = vrsqrt.pop %v709
      %v859 = vmul.f32 %v858, %v709
      %v860 = vmul.f32 %v859, %v858
      %v861 = vmul.f32 0.5, %v860
      %v862 = vsub.f32 1.5, %v861
      %v863 = vmul.f32 %v858, %v862
      %vm864 = vweird.f32 %v709
      %vm865 = vweird.f32 %v858
      %vm866 = vmor %vm864, %vm865
      %v867 = vsel %vm866, %v858, %v863
      %v868 = vrsqrt.pop %v710
      %v869 = vmul.f32 %v868, %v710
      %v870 = vmul.f32 %v869, %v868
      %v871 = vmul.f32 0.5, %v870
      %v872 = vsub.f32 1.5, %v871
      %v873 = vmul.f32 %v868, %v872
      %vm874 = vweird.f32 %v710
      %vm875 = vweird.f32 %v868
      %vm876 = vmor %vm874, %vm875
      %v877 = vsel %vm876, %v868, %v873
      %v878 = vrsqrt.pop %v711
      %v879 = vmul.f32 %v878, %v711
      %v880 = vmul.f32 %v879, %v878
      %v881 = vmul.f32 0.5, %v880
      %v882 = vsub.f32 1.5, %v881
      %v883 = vmul.f32 %v878, %v882
      %vm884 = vweird.f32 %v711
      %vm885 = vweird.f32 %v878
      %vm886 = vmor %vm884, %vm885
      %v887 = vsel %vm886, %v878, %v883
      %v888 = vrsqrt.pop %v712
      %v889 = vmul.f32 %v888, %v712
      %v890 = vmul.f32 %v889, %v888
      %v891 = vmul.f32 0.5, %v890
      %v892 = vsub.f32 1.5, %v891
      %v893 = vmul.f32 %v888, %v892
      %vm894 = vweird.f32 %v712
      %vm895 = vweird.f32 %v888
      %vm896 = vmor %vm894, %vm895
      %v897 = vsel %vm896, %v888, %v893
      %v898 = vrsqrt.pop %v713
      %v899 = vmul.f32 %v898, %v713
      %v900 = vmul.f32 %v899, %v898
      %v901 = vmul.f32 0.5, %v900
      %v902 = vsub.f32 1.5, %v901
      %v903 = vmul.f32 %v898, %v902
      %vm904 = vweird.f32 %v713
      %vm905 = vweird.f32 %v898
      %vm906 = vmor %vm904, %vm905
      %v907 = vsel %vm906, %v898, %v903
      %v908 = vrsqrt.pop %v714
      %v909 = vmul.f32 %v908, %v714
      %v910 = vmul.f32 %v909, %v908
      %v911 = vmul.f32 0.5, %v910
      %v912 = vsub.f32 1.5, %v911
      %v913 = vmul.f32 %v908, %v912
      %vm914 = vweird.f32 %v714
      %vm915 = vweird.f32 %v908
      %vm916 = vmor %vm914, %vm915
      %v917 = vsel %vm916, %v908, %v913
      %v918 = vrsqrt.pop %v715
      %v919 = vmul.f32 %v918, %v715
      %v920 = vmul.f32 %v919, %v918
      %v921 = vmul.f32 0.5, %v920
      %v922 = vsub.f32 1.5, %v921
      %v923 = vmul.f32 %v918, %v922
      %vm924 = vweird.f32 %v715
      %vm925 = vweird.f32 %v918
      %vm926 = vmor %vm924, %vm925
      %v927 = vsel %vm926, %v918, %v923
      %v928 = vrsqrt.pop %v716
      %v929 = vmul.f32 %v928, %v716
      %v930 = vmul.f32 %v929, %v928
      %v931 = vmul.f32 0.5, %v930
      %v932 = vsub.f32 1.5, %v931
      %v933 = vmul.f32 %v928, %v932
      %vm934 = vweird.f32 %v716
      %vm935 = vweird.f32 %v928
      %vm936 = vmor %vm934, %vm935
      %v937 = vsel %vm936, %v928, %v933
      %v938 = vrsqrt.pop %v717
      %v939 = vmul.f32 %v938, %v717
      %v940 = vmul.f32 %v939, %v938
      %v941 = vmul.f32 0.5, %v940
      %v942 = vsub.f32 1.5, %v941
      %v943 = vmul.f32 %v938, %v942
      %vm944 = vweird.f32 %v717
      %vm945 = vweird.f32 %v938
      %vm946 = vmor %vm944, %vm945
      %v947 = vsel %vm946, %v938, %v943
      %v948 = vrsqrt.pop %v718
      %v949 = vmul.f32 %v948, %v718
      %v950 = vmul.f32 %v949, %v948
      %v951 = vmul.f32 0.5, %v950
      %v952 = vsub.f32 1.5, %v951
      %v953 = vmul.f32 %v948, %v952
      %vm954 = vweird.f32 %v718
      %vm955 = vweird.f32 %v948
      %vm956 = vmor %vm954, %vm955
      %v957 = vsel %vm956, %v948, %v953
      %v958 = vrsqrt.pop %v719
      %v959 = vmul.f32 %v958, %v719
      %v960 = vmul.f32 %v959, %v958
      %v961 = vmul.f32 0.5, %v960
      %v962 = vsub.f32 1.5, %v961
      %v963 = vmul.f32 %v958, %v962
      %vm964 = vweird.f32 %v719
      %vm965 = vweird.f32 %v958
      %vm966 = vmor %vm964, %vm965
      %v967 = vsel %vm966, %v958, %v963
      %v968 = vrsqrt.pop %v720
      %v969 = vmul.f32 %v968, %v720
      %v970 = vmul.f32 %v969, %v968
      %v971 = vmul.f32 0.5, %v970
      %v972 = vsub.f32 1.5, %v971
      %v973 = vmul.f32 %v968, %v972
      %vm974 = vweird.f32 %v720
      %vm975 = vweird.f32 %v968
      %vm976 = vmor %vm974, %vm975
      %v977 = vsel %vm976, %v968, %v973
      %v978 = vrsqrt.pop %v721
      %v979 = vmul.f32 %v978, %v721
      %v980 = vmul.f32 %v979, %v978
      %v981 = vmul.f32 0.5, %v980
      %v982 = vsub.f32 1.5, %v981
      %v983 = vmul.f32 %v978, %v982
      %vm984 = vweird.f32 %v721
      %vm985 = vweird.f32 %v978
      %vm986 = vmor %vm984, %vm985
      %v987 = vsel %vm986, %v978, %v983
      %v988 = vrsqrt.pop %v722
      %v989 = vmul.f32 %v988, %v722
      %v990 = vmul.f32 %v989, %v988
      %v991 = vmul.f32 0.5, %v990
      %v992 = vsub.f32 1.5, %v991
      %v993 = vmul.f32 %v988, %v992
      %vm994 = vweird.f32 %v722
      %vm995 = vweird.f32 %v988
      %vm996 = vmor %vm994, %vm995
      %v997 = vsel %vm996, %v988, %v993
      %v998 = vrsqrt.pop %v723
      %v999 = vmul.f32 %v998, %v723
      %v1000 = vmul.f32 %v999, %v998
      %v1001 = vmul.f32 0.5, %v1000
      %v1002 = vsub.f32 1.5, %v1001
      %v1003 = vmul.f32 %v998, %v1002
      %vm1004 = vweird.f32 %v723
      %vm1005 = vweird.f32 %v998
      %vm1006 = vmor %vm1004, %vm1005
      %v1007 = vsel %vm1006, %v998, %v1003
      %v1008 = vrsqrt.pop %v724
      %v1009 = vmul.f32 %v1008, %v724
      %v1010 = vmul.f32 %v1009, %v1008
      %v1011 = vmul.f32 0.5, %v1010
      %v1012 = vsub.f32 1.5, %v1011
      %v1013 = vmul.f32 %v1008, %v1012
      %vm1014 = vweird.f32 %v724
      %vm1015 = vweird.f32 %v1008
      %vm1016 = vmor %vm1014, %vm1015
      %v1017 = vsel %vm1016, %v1008, %v1013
      %v1018 = vrsqrt.pop %v725
      %v1019 = vmul.f32 %v1018, %v725
      %v1020 = vmul.f32 %v1019, %v1018
      %v1021 = vmul.f32 0.5, %v1020
      %v1022 = vsub.f32 1.5, %v1021
      %v1023 = vmul.f32 %v1018, %v1022
      %vm1024 = vweird.f32 %v725
      %vm1025 = vweird.f32 %v1018
      %vm1026 = vmor %vm1024, %vm1025
      %v1027 = vsel %vm1026, %v1018, %v1023
      %v1028 = vrsqrt.pop %v726
      %v1029 = vmul.f32 %v1028, %v726
      %v1030 = vmul.f32 %v1029, %v1028
      %v1031 = vmul.f32 0.5, %v1030
      %v1032 = vsub.f32 1.5, %v1031
      %v1033 = vmul.f32 %v1028, %v1032
      %vm1034 = vweird.f32 %v726
      %vm1035 = vweird.f32 %v1028
      %vm1036 = vmor %vm1034, %vm1035
      %v1037 = vsel %vm1036, %v1028, %v1033
      %v1038 = vrsqrt.pop %v727
      %v1039 = vmul.f32 %v1038, %v727
      %v1040 = vmul.f32 %v1039, %v1038
      %v1041 = vmul.f32 0.5, %v1040
      %v1042 = vsub.f32 1.5, %v1041
      %v1043 = vmul.f32 %v1038, %v1042
      %vm1044 = vweird.f32 %v727
      %vm1045 = vweird.f32 %v1038
      %vm1046 = vmor %vm1044, %vm1045
      %v1047 = vsel %vm1046, %v1038, %v1043
      %v1048 = vmul.f32 %v504, %v737
      %v1049 = vmul.f32 %v505, %v747
      %v1050 = vmul.f32 %v506, %v757
      %v1051 = vmul.f32 %v507, %v767
      %v1052 = vmul.f32 %v508, %v777
      %v1053 = vmul.f32 %v509, %v787
      %v1054 = vmul.f32 %v510, %v797
      %v1055 = vmul.f32 %v511, %v807
      %v1056 = vmul.f32 %v512, %v817
      %v1057 = vmul.f32 %v513, %v827
      %v1058 = vmul.f32 %v514, %v837
      %v1059 = vmul.f32 %v515, %v847
      %v1060 = vmul.f32 %v516, %v857
      %v1061 = vmul.f32 %v517, %v867
      %v1062 = vmul.f32 %v518, %v877
      %v1063 = vmul.f32 %v519, %v887
      %v1064 = vmul.f32 %v520, %v897
      %v1065 = vmul.f32 %v521, %v907
      %v1066 = vmul.f32 %v522, %v917
      %v1067 = vmul.f32 %v523, %v927
      %v1068 = vmul.f32 %v524, %v937
      %v1069 = vmul.f32 %v525, %v947
      %v1070 = vmul.f32 %v526, %v957
      %v1071 = vmul.f32 %v527, %v967
      %v1072 = vmul.f32 %v528, %v977
      %v1073 = vmul.f32 %v529, %v987
      %v1074 = vmul.f32 %v530, %v997
      %v1075 = vmul.f32 %v531, %v1007
      %v1076 = vmul.f32 %v532, %v1017
      %v1077 = vmul.f32 %v533, %v1027
      %v1078 = vmul.f32 %v534, %v1037
      %v1079 = vmul.f32 %v535, %v1047
      %v1080 = vld [vmem:[%s2] sm:$0x1]
      %v1082 = vperm.slane %v1080, 0
      %v1084 = vmul.f32 %v1048, %v1082
      %v1085 = vmul.f32 %v1049, %v1082
      %v1086 = vmul.f32 %v1050, %v1082
      %v1087 = vmul.f32 %v1051, %v1082
      %v1088 = vmul.f32 %v1052, %v1082
      %v1089 = vmul.f32 %v1053, %v1082
      %v1090 = vmul.f32 %v1054, %v1082
      %v1091 = vmul.f32 %v1055, %v1082
      %v1092 = vmul.f32 %v1056, %v1082
      %v1093 = vmul.f32 %v1057, %v1082
      %v1094 = vmul.f32 %v1058, %v1082
      %v1095 = vmul.f32 %v1059, %v1082
      %v1096 = vmul.f32 %v1060, %v1082
      %v1097 = vmul.f32 %v1061, %v1082
      %v1098 = vmul.f32 %v1062, %v1082
      %v1099 = vmul.f32 %v1063, %v1082
      %v1100 = vmul.f32 %v1064, %v1082
      %v1101 = vmul.f32 %v1065, %v1082
      %v1102 = vmul.f32 %v1066, %v1082
      %v1103 = vmul.f32 %v1067, %v1082
      %v1104 = vmul.f32 %v1068, %v1082
      %v1105 = vmul.f32 %v1069, %v1082
      %v1106 = vmul.f32 %v1070, %v1082
      %v1107 = vmul.f32 %v1071, %v1082
      %v1108 = vmul.f32 %v1072, %v1082
      %v1109 = vmul.f32 %v1073, %v1082
      %v1110 = vmul.f32 %v1074, %v1082
      %v1111 = vmul.f32 %v1075, %v1082
      %v1112 = vmul.f32 %v1076, %v1082
      %v1113 = vmul.f32 %v1077, %v1082
      %v1114 = vmul.f32 %v1078, %v1082
      %v1115 = vmul.f32 %v1079, %v1082
      %v1116 = vld [vmem:[%s3] sm:$0x1]
      %v1118 = vperm.slane %v1116, 0
      %v1120 = vadd.f32 %v1084, %v1118
      %v1121 = vadd.f32 %v1085, %v1118
      %v1122 = vadd.f32 %v1086, %v1118
      %v1123 = vadd.f32 %v1087, %v1118
      %v1124 = vadd.f32 %v1088, %v1118
      %v1125 = vadd.f32 %v1089, %v1118
      %v1126 = vadd.f32 %v1090, %v1118
      %v1127 = vadd.f32 %v1091, %v1118
      %v1128 = vadd.f32 %v1092, %v1118
      %v1129 = vadd.f32 %v1093, %v1118
      %v1130 = vadd.f32 %v1094, %v1118
      %v1131 = vadd.f32 %v1095, %v1118
      %v1132 = vadd.f32 %v1096, %v1118
      %v1133 = vadd.f32 %v1097, %v1118
      %v1134 = vadd.f32 %v1098, %v1118
      %v1135 = vadd.f32 %v1099, %v1118
      %v1136 = vadd.f32 %v1100, %v1118
      %v1137 = vadd.f32 %v1101, %v1118
      %v1138 = vadd.f32 %v1102, %v1118
      %v1139 = vadd.f32 %v1103, %v1118
      %v1140 = vadd.f32 %v1104, %v1118
      %v1141 = vadd.f32 %v1105, %v1118
      %v1142 = vadd.f32 %v1106, %v1118
      %v1143 = vadd.f32 %v1107, %v1118
      %v1144 = vadd.f32 %v1108, %v1118
      %v1145 = vadd.f32 %v1109, %v1118
      %v1146 = vadd.f32 %v1110, %v1118
      %v1147 = vadd.f32 %v1111, %v1118
      %v1148 = vadd.f32 %v1112, %v1118
      %v1149 = vadd.f32 %v1113, %v1118
      %v1150 = vadd.f32 %v1114, %v1118
      %v1151 = vadd.f32 %v1115, %v1118
      %v1152 = vld [vmem:[%s1] sm:$0xff]
      %v1153 = vld [vmem:[%s1 + $0x8] sm:$0xff]
      %v1154 = vld [vmem:[%s1 + $0x10] sm:$0xff]
      %v1155 = vld [vmem:[%s1 + $0x18] sm:$0xff]
      %v1156 = vld [vmem:[%s1 + $0x20] sm:$0xff]
      %v1157 = vld [vmem:[%s1 + $0x28] sm:$0xff]
      %v1158 = vld [vmem:[%s1 + $0x30] sm:$0xff]
      %v1159 = vld [vmem:[%s1 + $0x38] sm:$0xff]
      %v1160 = vld [vmem:[%s1 + $0x40] sm:$0xff]
      %v1161 = vld [vmem:[%s1 + $0x48] sm:$0xff]
      %v1162 = vld [vmem:[%s1 + $0x50] sm:$0xff]
      %v1163 = vld [vmem:[%s1 + $0x58] sm:$0xff]
      %v1164 = vld [vmem:[%s1 + $0x60] sm:$0xff]
      %v1165 = vld [vmem:[%s1 + $0x68] sm:$0xff]
      %v1166 = vld [vmem:[%s1 + $0x70] sm:$0xff]
      %v1167 = vld [vmem:[%s1 + $0x78] sm:$0xff]
      %1168 = vmatpush.msra.mxu0 %v1135
      %1169 = vmatpush.msra.mxu0 %v1134
      %1170 = vmatpush.msra.mxu0 %v1133
      %1171 = vmatpush.msra.mxu0 %v1132
      %1172 = vmatpush.msra.mxu0 %v1131
      %1173 = vmatpush.msra.mxu0 %v1130
      %1174 = vmatpush.msra.mxu0 %v1129
      %1175 = vmatpush.msra.mxu0 %v1128
      %1176 = vmatpush.msra.mxu0 %v1127
      %1177 = vmatpush.msra.mxu0 %v1126
      %1178 = vmatpush.msra.mxu0 %v1125
      %1179 = vmatpush.msra.mxu0 %v1124
      %1180 = vmatpush.msra.mxu0 %v1123
      %1181 = vmatpush.msra.mxu0 %v1122
      %1182 = vmatpush.msra.mxu0 %v1121
      %1183 = vmatpush.msra.mxu0 %v1120
      %1184 = vmatmul.f32.gmra.mxu0 %v1152
      %v1185 = vpop.f32.mrf.mxu0
      %v1186 = vadd.f32 0.0, %v1185
      %1187 = vmatmul.f32.gmra.mxu0 %v1154
      %v1188 = vpop.f32.mrf.mxu0
      %v1189 = vadd.f32 0.0, %v1188
      %1190 = vmatmul.f32.gmra.mxu0 %v1156
      %v1191 = vpop.f32.mrf.mxu0
      %v1192 = vadd.f32 0.0, %v1191
      %1193 = vmatmul.f32.gmra.mxu0 %v1158
      %v1194 = vpop.f32.mrf.mxu0
      %v1195 = vadd.f32 0.0, %v1194
      %1196 = vmatmul.f32.gmra.mxu0 %v1160
      %v1197 = vpop.f32.mrf.mxu0
      %v1198 = vadd.f32 0.0, %v1197
      %1199 = vmatmul.f32.gmra.mxu0 %v1162
      %v1200 = vpop.f32.mrf.mxu0
      %v1201 = vadd.f32 0.0, %v1200
      %1202 = vmatmul.f32.gmra.mxu0 %v1164
      %v1203 = vpop.f32.mrf.mxu0
      %v1204 = vadd.f32 0.0, %v1203
      %1205 = vmatmul.f32.gmra.mxu0 %v1166
      %v1206 = vpop.f32.mrf.mxu0
      %v1207 = vadd.f32 0.0, %v1206
      %1208 = vdwg.mxu0
      %1209 = vmatpush.msra.mxu0 %v1151
      %1210 = vmatpush.msra.mxu0 %v1150
      %1211 = vmatpush.msra.mxu0 %v1149
      %1212 = vmatpush.msra.mxu0 %v1148
      %1213 = vmatpush.msra.mxu0 %v1147
      %1214 = vmatpush.msra.mxu0 %v1146
      %1215 = vmatpush.msra.mxu0 %v1145
      %1216 = vmatpush.msra.mxu0 %v1144
      %1217 = vmatpush.msra.mxu0 %v1143
      %1218 = vmatpush.msra.mxu0 %v1142
      %1219 = vmatpush.msra.mxu0 %v1141
      %1220 = vmatpush.msra.mxu0 %v1140
      %1221 = vmatpush.msra.mxu0 %v1139
      %1222 = vmatpush.msra.mxu0 %v1138
      %1223 = vmatpush.msra.mxu0 %v1137
      %1224 = vmatpush.msra.mxu0 %v1136
      %1225 = vmatmul.f32.gmra.mxu0 %v1153
      %v1226 = vpop.f32.mrf.mxu0
      %v1227 = vadd.f32 %v1186, %v1226
      %1228 = vmatmul.f32.gmra.mxu0 %v1155
      %v1229 = vpop.f32.mrf.mxu0
      %v1230 = vadd.f32 %v1189, %v1229
      %1231 = vmatmul.f32.gmra.mxu0 %v1157
      %v1232 = vpop.f32.mrf.mxu0
      %v1233 = vadd.f32 %v1192, %v1232
      %1234 = vmatmul.f32.gmra.mxu0 %v1159
      %v1235 = vpop.f32.mrf.mxu0
      %v1236 = vadd.f32 %v1195, %v1235
      %1237 = vmatmul.f32.gmra.mxu0 %v1161
      %v1238 = vpop.f32.mrf.mxu0
      %v1239 = vadd.f32 %v1198, %v1238
      %1240 = vmatmul.f32.gmra.mxu0 %v1163
      %v1241 = vpop.f32.mrf.mxu0
      %v1242 = vadd.f32 %v1201, %v1241
      %1243 = vmatmul.f32.gmra.mxu0 %v1165
      %v1244 = vpop.f32.mrf.mxu0
      %v1245 = vadd.f32 %v1204, %v1244
      %1246 = vmatmul.f32.gmra.mxu0 %v1167
      %v1247 = vpop.f32.mrf.mxu0
      %v1248 = vadd.f32 %v1207, %v1247
      %1249 = vdwg.mxu0
      %v1250 = vld [vmem:[%s4] sm:$0xff]
      %v1251 = vld [vmem:[%s4 + $0x8] sm:$0xff]
      %v1252 = vld [vmem:[%s4 + $0x10] sm:$0xff]
      %v1253 = vld [vmem:[%s4 + $0x18] sm:$0xff]
      %v1254 = vld [vmem:[%s5] sm:$0x1]
      %v1256 = vperm.slane %v1254, 0
      %v1259 = vsel %vm368, %v1227, 0
      %v1262 = vsel %vm368, %v1230, 0
      %v1265 = vsel %vm368, %v1233, 0
      %v1268 = vsel %vm368, %v1236, 0
      %v1271 = vsel %vm368, %v1239, 0
      %v1274 = vsel %vm368, %v1242, 0
      %v1277 = vsel %vm368, %v1245, 0
      %v1280 = vsel %vm368, %v1248, 0
      %1282 = vmatpush.msra.mxu0 0.0
      %1283 = vmatpush.msra.mxu0 0.0
      %1284 = vmatpush.msra.mxu0 0.0
      %1285 = vmatpush.msra.mxu0 0.0
      %1286 = vmatpush.msra.mxu0 0.0
      %1287 = vmatpush.msra.mxu0 0.0
      %1288 = vmatpush.msra.mxu0 0.0
      %1289 = vmatpush.msra.mxu0 0.0
      %1290 = vmatpush.msra.mxu0 0.0
      %1291 = vmatpush.msra.mxu0 0.0
      %1292 = vmatpush.msra.mxu0 0.0
      %1293 = vmatpush.msra.mxu0 0.0
      %1294 = vmatpush.msra.mxu0 %v1253
      %1295 = vmatpush.msra.mxu0 %v1252
      %1296 = vmatpush.msra.mxu0 %v1251
      %1297 = vmatpush.msra.mxu0 %v1250
      %1298 = vmatmul.f32.gmra.mxu0 %v1259
      %v1299 = vpop.f32.mrf.mxu0
      %v1300 = vadd.f32 %v1256, %v1299
      %1301 = vmatmul.f32.gmra.mxu0 %v1262
      %v1302 = vpop.f32.mrf.mxu0
      %v1303 = vadd.f32 %v1256, %v1302
      %1304 = vmatmul.f32.gmra.mxu0 %v1265
      %v1305 = vpop.f32.mrf.mxu0
      %v1306 = vadd.f32 %v1256, %v1305
      %1307 = vmatmul.f32.gmra.mxu0 %v1268
      %v1308 = vpop.f32.mrf.mxu0
      %v1309 = vadd.f32 %v1256, %v1308
      %1310 = vmatmul.f32.gmra.mxu0 %v1271
      %v1311 = vpop.f32.mrf.mxu0
      %v1312 = vadd.f32 %v1256, %v1311
      %1313 = vmatmul.f32.gmra.mxu0 %v1274
      %v1314 = vpop.f32.mrf.mxu0
      %v1315 = vadd.f32 %v1256, %v1314
      %1316 = vmatmul.f32.gmra.mxu0 %v1277
      %v1317 = vpop.f32.mrf.mxu0
      %v1318 = vadd.f32 %v1256, %v1317
      %1319 = vmatmul.f32.gmra.mxu0 %v1280
      %v1320 = vpop.f32.mrf.mxu0
      %v1321 = vadd.f32 %v1256, %v1320
      %1322 = vdwg.mxu0
      %v1323 = vsel %vm368, %v1300, 0.0
      %1324 = vadd.xlane.f32.xlu0 %v1323
      %v1325 = vpop.xlane.xlu0 %1324
      %v1326 = vsel %vm368, %v1303, 0.0
      %1327 = vadd.xlane.f32.xlu0 %v1326
      %v1328 = vpop.xlane.xlu0 %1327
      %v1329 = vsel %vm368, %v1306, 0.0
      %1330 = vadd.xlane.f32.xlu0 %v1329
      %v1331 = vpop.xlane.xlu0 %1330
      %v1332 = vsel %vm368, %v1309, 0.0
      %1333 = vadd.xlane.f32.xlu0 %v1332
      %v1334 = vpop.xlane.xlu0 %1333
      %v1335 = vsel %vm368, %v1312, 0.0
      %1336 = vadd.xlane.f32.xlu0 %v1335
      %v1337 = vpop.xlane.xlu0 %1336
      %v1338 = vsel %vm368, %v1315, 0.0
      %1339 = vadd.xlane.f32.xlu0 %v1338
      %v1340 = vpop.xlane.xlu0 %1339
      %v1341 = vsel %vm368, %v1318, 0.0
      %1342 = vadd.xlane.f32.xlu0 %v1341
      %v1343 = vpop.xlane.xlu0 %1342
      %v1344 = vsel %vm368, %v1321, 0.0
      %1345 = vadd.xlane.f32.xlu0 %v1344
      %v1346 = vpop.xlane.xlu0 %1345
      %v1347 = vmul.f32 %v1325, %v471
      %v1348 = vmul.f32 %v1328, %v471
      %v1349 = vmul.f32 %v1331, %v471
      %v1350 = vmul.f32 %v1334, %v471
      %v1351 = vmul.f32 %v1337, %v471
      %v1352 = vmul.f32 %v1340, %v471
      %v1353 = vmul.f32 %v1343, %v471
      %v1354 = vmul.f32 %v1346, %v471
      %v1355 = vsub.f32 %v1300, %v1347
      %v1356 = vsub.f32 %v1303, %v1348
      %v1357 = vsub.f32 %v1306, %v1349
      %v1358 = vsub.f32 %v1309, %v1350
      %v1359 = vsub.f32 %v1312, %v1351
      %v1360 = vsub.f32 %v1315, %v1352
      %v1361 = vsub.f32 %v1318, %v1353
      %v1362 = vsub.f32 %v1321, %v1354
      %v1363 = vmul.f32 %v1355, %v1355
      %v1364 = vmul.f32 %v1356, %v1356
      %v1365 = vmul.f32 %v1357, %v1357
      %v1366 = vmul.f32 %v1358, %v1358
      %v1367 = vmul.f32 %v1359, %v1359
      %v1368 = vmul.f32 %v1360, %v1360
      %v1369 = vmul.f32 %v1361, %v1361
      %v1370 = vmul.f32 %v1362, %v1362
      %v1371 = vsel %vm368, %v1363, 0.0
      %1372 = vadd.xlane.f32.xlu0 %v1371
      %v1373 = vpop.xlane.xlu0 %1372
      %v1374 = vsel %vm368, %v1364, 0.0
      %1375 = vadd.xlane.f32.xlu0 %v1374
      %v1376 = vpop.xlane.xlu0 %1375
      %v1377 = vsel %vm368, %v1365, 0.0
      %1378 = vadd.xlane.f32.xlu0 %v1377
      %v1379 = vpop.xlane.xlu0 %1378
      %v1380 = vsel %vm368, %v1366, 0.0
      %1381 = vadd.xlane.f32.xlu0 %v1380
      %v1382 = vpop.xlane.xlu0 %1381
      %v1383 = vsel %vm368, %v1367, 0.0
      %1384 = vadd.xlane.f32.xlu0 %v1383
      %v1385 = vpop.xlane.xlu0 %1384
      %v1386 = vsel %vm368, %v1368, 0.0
      %1387 = vadd.xlane.f32.xlu0 %v1386
      %v1388 = vpop.xlane.xlu0 %1387
      %v1389 = vsel %vm368, %v1369, 0.0
      %1390 = vadd.xlane.f32.xlu0 %v1389
      %v1391 = vpop.xlane.xlu0 %1390
      %v1392 = vsel %vm368, %v1370, 0.0
      %1393 = vadd.xlane.f32.xlu0 %v1392
      %v1394 = vpop.xlane.xlu0 %1393
      %v1395 = vmul.f32 %v1373, %v471
      %v1396 = vmul.f32 %v1376, %v471
      %v1397 = vmul.f32 %v1379, %v471
      %v1398 = vmul.f32 %v1382, %v471
      %v1399 = vmul.f32 %v1385, %v471
      %v1400 = vmul.f32 %v1388, %v471
      %v1401 = vmul.f32 %v1391, %v471
      %v1402 = vmul.f32 %v1394, %v471
      %v1403 = vadd.f32 %v1395, 1e-05
      %v1404 = vadd.f32 %v1396, 1e-05
      %v1405 = vadd.f32 %v1397, 1e-05
      %v1406 = vadd.f32 %v1398, 1e-05
      %v1407 = vadd.f32 %v1399, 1e-05
      %v1408 = vadd.f32 %v1400, 1e-05
      %v1409 = vadd.f32 %v1401, 1e-05
      %v1410 = vadd.f32 %v1402, 1e-05
      %v1411 = vrsqrt.pop %v1403
      %v1412 = vmul.f32 %v1411, %v1403
      %v1413 = vmul.f32 %v1412, %v1411
      %v1414 = vmul.f32 0.5, %v1413
      %v1415 = vsub.f32 1.5, %v1414
      %v1416 = vmul.f32 %v1411, %v1415
      %vm1417 = vweird.f32 %v1403
      %vm1418 = vweird.f32 %v1411
      %vm1419 = vmor %vm1417, %vm1418
      %v1420 = vsel %vm1419, %v1411, %v1416
      %v1421 = vrsqrt.pop %v1404
      %v1422 = vmul.f32 %v1421, %v1404
      %v1423 = vmul.f32 %v1422, %v1421
      %v1424 = vmul.f32 0.5, %v1423
      %v1425 = vsub.f32 1.5, %v1424
      %v1426 = vmul.f32 %v1421, %v1425
      %vm1427 = vweird.f32 %v1404
      %vm1428 = vweird.f32 %v1421
      %vm1429 = vmor %vm1427, %vm1428
      %v1430 = vsel %vm1429, %v1421, %v1426
      %v1431 = vrsqrt.pop %v1405
      %v1432 = vmul.f32 %v1431, %v1405
      %v1433 = vmul.f32 %v1432, %v1431
      %v1434 = vmul.f32 0.5, %v1433
      %v1435 = vsub.f32 1.5, %v1434
      %v1436 = vmul.f32 %v1431, %v1435
      %vm1437 = vweird.f32 %v1405
      %vm1438 = vweird.f32 %v1431
      %vm1439 = vmor %vm1437, %vm1438
      %v1440 = vsel %vm1439, %v1431, %v1436
      %v1441 = vrsqrt.pop %v1406
      %v1442 = vmul.f32 %v1441, %v1406
      %v1443 = vmul.f32 %v1442, %v1441
      %v1444 = vmul.f32 0.5, %v1443
      %v1445 = vsub.f32 1.5, %v1444
      %v1446 = vmul.f32 %v1441, %v1445
      %vm1447 = vweird.f32 %v1406
      %vm1448 = vweird.f32 %v1441
      %vm1449 = vmor %vm1447, %vm1448
      %v1450 = vsel %vm1449, %v1441, %v1446
      %v1451 = vrsqrt.pop %v1407
      %v1452 = vmul.f32 %v1451, %v1407
      %v1453 = vmul.f32 %v1452, %v1451
      %v1454 = vmul.f32 0.5, %v1453
      %v1455 = vsub.f32 1.5, %v1454
      %v1456 = vmul.f32 %v1451, %v1455
      %vm1457 = vweird.f32 %v1407
      %vm1458 = vweird.f32 %v1451
      %vm1459 = vmor %vm1457, %vm1458
      %v1460 = vsel %vm1459, %v1451, %v1456
      %v1461 = vrsqrt.pop %v1408
      %v1462 = vmul.f32 %v1461, %v1408
      %v1463 = vmul.f32 %v1462, %v1461
      %v1464 = vmul.f32 0.5, %v1463
      %v1465 = vsub.f32 1.5, %v1464
      %v1466 = vmul.f32 %v1461, %v1465
      %vm1467 = vweird.f32 %v1408
      %vm1468 = vweird.f32 %v1461
      %vm1469 = vmor %vm1467, %vm1468
      %v1470 = vsel %vm1469, %v1461, %v1466
      %v1471 = vrsqrt.pop %v1409
      %v1472 = vmul.f32 %v1471, %v1409
      %v1473 = vmul.f32 %v1472, %v1471
      %v1474 = vmul.f32 0.5, %v1473
      %v1475 = vsub.f32 1.5, %v1474
      %v1476 = vmul.f32 %v1471, %v1475
      %vm1477 = vweird.f32 %v1409
      %vm1478 = vweird.f32 %v1471
      %vm1479 = vmor %vm1477, %vm1478
      %v1480 = vsel %vm1479, %v1471, %v1476
      %v1481 = vrsqrt.pop %v1410
      %v1482 = vmul.f32 %v1481, %v1410
      %v1483 = vmul.f32 %v1482, %v1481
      %v1484 = vmul.f32 0.5, %v1483
      %v1485 = vsub.f32 1.5, %v1484
      %v1486 = vmul.f32 %v1481, %v1485
      %vm1487 = vweird.f32 %v1410
      %vm1488 = vweird.f32 %v1481
      %vm1489 = vmor %vm1487, %vm1488
      %v1490 = vsel %vm1489, %v1481, %v1486
      %v1491 = vmul.f32 %v1355, %v1420
      %v1492 = vmul.f32 %v1356, %v1430
      %v1493 = vmul.f32 %v1357, %v1440
      %v1494 = vmul.f32 %v1358, %v1450
      %v1495 = vmul.f32 %v1359, %v1460
      %v1496 = vmul.f32 %v1360, %v1470
      %v1497 = vmul.f32 %v1361, %v1480
      %v1498 = vmul.f32 %v1362, %v1490
      %v1499 = vld [vmem:[%s6] sm:$0x1]
      %v1501 = vperm.slane %v1499, 0
      %v1503 = vmul.f32 %v1491, %v1501
      %v1504 = vmul.f32 %v1492, %v1501
      %v1505 = vmul.f32 %v1493, %v1501
      %v1506 = vmul.f32 %v1494, %v1501
      %v1507 = vmul.f32 %v1495, %v1501
      %v1508 = vmul.f32 %v1496, %v1501
      %v1509 = vmul.f32 %v1497, %v1501
      %v1510 = vmul.f32 %v1498, %v1501
      %v1511 = vld [vmem:[%s7] sm:$0x1]
      %v1513 = vperm.slane %v1511, 0
      %v1515 = vadd.f32 %v1503, %v1513
      %v1516 = vadd.f32 %v1504, %v1513
      %v1517 = vadd.f32 %v1505, %v1513
      %v1518 = vadd.f32 %v1506, %v1513
      %v1519 = vadd.f32 %v1507, %v1513
      %v1520 = vadd.f32 %v1508, %v1513
      %v1521 = vadd.f32 %v1509, %v1513
      %v1522 = vadd.f32 %v1510, %v1513
      %v1523 = vmul.f32 %v1515, 0.5
      %v1524 = vmul.f32 %v1516, 0.5
      %v1525 = vmul.f32 %v1517, 0.5
      %v1526 = vmul.f32 %v1518, 0.5
      %v1527 = vmul.f32 %v1519, 0.5
      %v1528 = vmul.f32 %v1520, 0.5
      %v1529 = vmul.f32 %v1521, 0.5
      %v1530 = vmul.f32 %v1522, 0.5
      %v1531 = vmul.f32 %v1515, 0.70710677
      %v1532 = vmul.f32 %v1516, 0.70710677
      %v1533 = vmul.f32 %v1517, 0.70710677
      %v1534 = vmul.f32 %v1518, 0.70710677
      %v1535 = vmul.f32 %v1519, 0.70710677
      %v1536 = vmul.f32 %v1520, 0.70710677
      %v1537 = vmul.f32 %v1521, 0.70710677
      %v1538 = vmul.f32 %v1522, 0.70710677
      %v1539 = vmul.f32 %v1531, %v1531
      %v1540 = vmin.f32 16.0, %v1539
      %v1541 = vmul.f32 %v1540, 2.1237322e-06
      %v1542 = vadd.f32 %v1541, 0.00028619796
      %v1543 = vmul.f32 %v1540, %v1542
      %v1544 = vadd.f32 %v1543, 0.0036580483
      %v1545 = vmul.f32 %v1540, %v1544
      %v1546 = vadd.f32 %v1545, 0.05243302
      %v1547 = vmul.f32 %v1540, %v1546
      %v1548 = vadd.f32 %v1547, 0.18741608
      %v1549 = vmul.f32 %v1540, %v1548
      %v1550 = vadd.f32 %v1549, 1.1283791
      %v1551 = vmul.f32 %v1531, %v1550
      %v1552 = vmul.f32 %v1540, 3.8918573e-05
      %v1553 = vadd.f32 %v1552, 0.001143296
      %v1554 = vmul.f32 %v1540, %v1553
      %v1555 = vadd.f32 %v1554, 0.014752088
      %v1556 = vmul.f32 %v1540, %v1555
      %v1557 = vadd.f32 %v1556, 0.112945676
      %v1558 = vmul.f32 %v1540, %v1557
      %v1559 = vadd.f32 %v1558, 0.4994258
      %v1560 = vmul.f32 %v1540, %v1559
      %v1561 = vadd.f32 %v1560, 1.0
      %v1562 = vrcp.pop %v1561
      %v1563 = vmul.f32 %v1561, %v1562
      %v1564 = vsub.f32 1.0, %v1563
      %v1565 = vmul.f32 %v1562, %v1564
      %v1566 = vadd.f32 %v1562, %v1565
      %vm1567 = vweird.f32 %v1561
      %vm1568 = vweird.f32 %v1562
      %vm1569 = vmor %vm1567, %vm1568
      %v1570 = vsel %vm1569, %v1562, %v1566
      %v1571 = vand.u32 2147483647, %v1561
      %vm1572 = vcmp.eq.f32.partialorder %v1571, 8.507059e+37
      %v1573 = vand.u32 %v1561, 2147483648
      %v1574 = vor.u32 1.1754944e-38, %v1573
      %v1575 = vsel %vm1572, %v1574, %v1570
      %v1576 = vmul.f32 %v1551, %v1575
      %v1577 = vmin.f32 %v1576, 1.0
      %v1578 = vmax.f32 %v1577, -1.0
      %v1579 = vmul.f32 %v1532, %v1532
      %v1580 = vmin.f32 16.0, %v1579
      %v1581 = vmul.f32 %v1580, 2.1237322e-06
      %v1582 = vadd.f32 %v1581, 0.00028619796
      %v1583 = vmul.f32 %v1580, %v1582
      %v1584 = vadd.f32 %v1583, 0.0036580483
      %v1585 = vmul.f32 %v1580, %v1584
      %v1586 = vadd.f32 %v1585, 0.05243302
      %v1587 = vmul.f32 %v1580, %v1586
      %v1588 = vadd.f32 %v1587, 0.18741608
      %v1589 = vmul.f32 %v1580, %v1588
      %v1590 = vadd.f32 %v1589, 1.1283791
      %v1591 = vmul.f32 %v1532, %v1590
      %v1592 = vmul.f32 %v1580, 3.8918573e-05
      %v1593 = vadd.f32 %v1592, 0.001143296
      %v1594 = vmul.f32 %v1580, %v1593
      %v1595 = vadd.f32 %v1594, 0.014752088
      %v1596 = vmul.f32 %v1580, %v1595
      %v1597 = vadd.f32 %v1596, 0.112945676
      %v1598 = vmul.f32 %v1580, %v1597
      %v1599 = vadd.f32 %v1598, 0.4994258
      %v1600 = vmul.f32 %v1580, %v1599
      %v1601 = vadd.f32 %v1600, 1.0
      %v1602 = vrcp.pop %v1601
      %v1603 = vmul.f32 %v1601, %v1602
      %v1604 = vsub.f32 1.0, %v1603
      %v1605 = vmul.f32 %v1602, %v1604
      %v1606 = vadd.f32 %v1602, %v1605
      %vm1607 = vweird.f32 %v1601
      %vm1608 = vweird.f32 %v1602
      %vm1609 = vmor %vm1607, %vm1608
      %v1610 = vsel %vm1609, %v1602, %v1606
      %v1611 = vand.u32 2147483647, %v1601
      %vm1612 = vcmp.eq.f32.partialorder %v1611, 8.507059e+37
      %v1613 = vand.u32 %v1601, 2147483648
      %v1614 = vor.u32 1.1754944e-38, %v1613
      %v1615 = vsel %vm1612, %v1614, %v1610
      %v1616 = vmul.f32 %v1591, %v1615
      %v1617 = vmin.f32 %v1616, 1.0
      %v1618 = vmax.f32 %v1617, -1.0
      %v1619 = vmul.f32 %v1533, %v1533
      %v1620 = vmin.f32 16.0, %v1619
      %v1621 = vmul.f32 %v1620, 2.1237322e-06
      %v1622 = vadd.f32 %v1621, 0.00028619796
      %v1623 = vmul.f32 %v1620, %v1622
      %v1624 = vadd.f32 %v1623, 0.0036580483
      %v1625 = vmul.f32 %v1620, %v1624
      %v1626 = vadd.f32 %v1625, 0.05243302
      %v1627 = vmul.f32 %v1620, %v1626
      %v1628 = vadd.f32 %v1627, 0.18741608
      %v1629 = vmul.f32 %v1620, %v1628
      %v1630 = vadd.f32 %v1629, 1.1283791
      %v1631 = vmul.f32 %v1533, %v1630
      %v1632 = vmul.f32 %v1620, 3.8918573e-05
      %v1633 = vadd.f32 %v1632, 0.001143296
      %v1634 = vmul.f32 %v1620, %v1633
      %v1635 = vadd.f32 %v1634, 0.014752088
      %v1636 = vmul.f32 %v1620, %v1635
      %v1637 = vadd.f32 %v1636, 0.112945676
      %v1638 = vmul.f32 %v1620, %v1637
      %v1639 = vadd.f32 %v1638, 0.4994258
      %v1640 = vmul.f32 %v1620, %v1639
      %v1641 = vadd.f32 %v1640, 1.0
      %v1642 = vrcp.pop %v1641
      %v1643 = vmul.f32 %v1641, %v1642
      %v1644 = vsub.f32 1.0, %v1643
      %v1645 = vmul.f32 %v1642, %v1644
      %v1646 = vadd.f32 %v1642, %v1645
      %vm1647 = vweird.f32 %v1641
      %vm1648 = vweird.f32 %v1642
      %vm1649 = vmor %vm1647, %vm1648
      %v1650 = vsel %vm1649, %v1642, %v1646
      %v1651 = vand.u32 2147483647, %v1641
      %vm1652 = vcmp.eq.f32.partialorder %v1651, 8.507059e+37
      %v1653 = vand.u32 %v1641, 2147483648
      %v1654 = vor.u32 1.1754944e-38, %v1653
      %v1655 = vsel %vm1652, %v1654, %v1650
      %v1656 = vmul.f32 %v1631, %v1655
      %v1657 = vmin.f32 %v1656, 1.0
      %v1658 = vmax.f32 %v1657, -1.0
      %v1659 = vmul.f32 %v1534, %v1534
      %v1660 = vmin.f32 16.0, %v1659
      %v1661 = vmul.f32 %v1660, 2.1237322e-06
      %v1662 = vadd.f32 %v1661, 0.00028619796
      %v1663 = vmul.f32 %v1660, %v1662
      %v1664 = vadd.f32 %v1663, 0.0036580483
      %v1665 = vmul.f32 %v1660, %v1664
      %v1666 = vadd.f32 %v1665, 0.05243302
      %v1667 = vmul.f32 %v1660, %v1666
      %v1668 = vadd.f32 %v1667, 0.18741608
      %v1669 = vmul.f32 %v1660, %v1668
      %v1670 = vadd.f32 %v1669, 1.1283791
      %v1671 = vmul.f32 %v1534, %v1670
      %v1672 = vmul.f32 %v1660, 3.8918573e-05
      %v1673 = vadd.f32 %v1672, 0.001143296
      %v1674 = vmul.f32 %v1660, %v1673
      %v1675 = vadd.f32 %v1674, 0.014752088
      %v1676 = vmul.f32 %v1660, %v1675
      %v1677 = vadd.f32 %v1676, 0.112945676
      %v1678 = vmul.f32 %v1660, %v1677
      %v1679 = vadd.f32 %v1678, 0.4994258
      %v1680 = vmul.f32 %v1660, %v1679
      %v1681 = vadd.f32 %v1680, 1.0
      %v1682 = vrcp.pop %v1681
      %v1683 = vmul.f32 %v1681, %v1682
      %v1684 = vsub.f32 1.0, %v1683
      %v1685 = vmul.f32 %v1682, %v1684
      %v1686 = vadd.f32 %v1682, %v1685
      %vm1687 = vweird.f32 %v1681
      %vm1688 = vweird.f32 %v1682
      %vm1689 = vmor %vm1687, %vm1688
      %v1690 = vsel %vm1689, %v1682, %v1686
      %v1691 = vand.u32 2147483647, %v1681
      %vm1692 = vcmp.eq.f32.partialorder %v1691, 8.507059e+37
      %v1693 = vand.u32 %v1681, 2147483648
      %v1694 = vor.u32 1.1754944e-38, %v1693
      %v1695 = vsel %vm1692, %v1694, %v1690
      %v1696 = vmul.f32 %v1671, %v1695
      %v1697 = vmin.f32 %v1696, 1.0
      %v1698 = vmax.f32 %v1697, -1.0
      %v1699 = vmul.f32 %v1535, %v1535
      %v1700 = vmin.f32 16.0, %v1699
      %v1701 = vmul.f32 %v1700, 2.1237322e-06
      %v1702 = vadd.f32 %v1701, 0.00028619796
      %v1703 = vmul.f32 %v1700, %v1702
      %v1704 = vadd.f32 %v1703, 0.0036580483
      %v1705 = vmul.f32 %v1700, %v1704
      %v1706 = vadd.f32 %v1705, 0.05243302
      %v1707 = vmul.f32 %v1700, %v1706
      %v1708 = vadd.f32 %v1707, 0.18741608
      %v1709 = vmul.f32 %v1700, %v1708
      %v1710 = vadd.f32 %v1709, 1.1283791
      %v1711 = vmul.f32 %v1535, %v1710
      %v1712 = vmul.f32 %v1700, 3.8918573e-05
      %v1713 = vadd.f32 %v1712, 0.001143296
      %v1714 = vmul.f32 %v1700, %v1713
      %v1715 = vadd.f32 %v1714, 0.014752088
      %v1716 = vmul.f32 %v1700, %v1715
      %v1717 = vadd.f32 %v1716, 0.112945676
      %v1718 = vmul.f32 %v1700, %v1717
      %v1719 = vadd.f32 %v1718, 0.4994258
      %v1720 = vmul.f32 %v1700, %v1719
      %v1721 = vadd.f32 %v1720, 1.0
      %v1722 = vrcp.pop %v1721
      %v1723 = vmul.f32 %v1721, %v1722
      %v1724 = vsub.f32 1.0, %v1723
      %v1725 = vmul.f32 %v1722, %v1724
      %v1726 = vadd.f32 %v1722, %v1725
      %vm1727 = vweird.f32 %v1721
      %vm1728 = vweird.f32 %v1722
      %vm1729 = vmor %vm1727, %vm1728
      %v1730 = vsel %vm1729, %v1722, %v1726
      %v1731 = vand.u32 2147483647, %v1721
      %vm1732 = vcmp.eq.f32.partialorder %v1731, 8.507059e+37
      %v1733 = vand.u32 %v1721, 2147483648
      %v1734 = vor.u32 1.1754944e-38, %v1733
      %v1735 = vsel %vm1732, %v1734, %v1730
      %v1736 = vmul.f32 %v1711, %v1735
      %v1737 = vmin.f32 %v1736, 1.0
      %v1738 = vmax.f32 %v1737, -1.0
      %v1739 = vmul.f32 %v1536, %v1536
      %v1740 = vmin.f32 16.0, %v1739
      %v1741 = vmul.f32 %v1740, 2.1237322e-06
      %v1742 = vadd.f32 %v1741, 0.00028619796
      %v1743 = vmul.f32 %v1740, %v1742
      %v1744 = vadd.f32 %v1743, 0.0036580483
      %v1745 = vmul.f32 %v1740, %v1744
      %v1746 = vadd.f32 %v1745, 0.05243302
      %v1747 = vmul.f32 %v1740, %v1746
      %v1748 = vadd.f32 %v1747, 0.18741608
      %v1749 = vmul.f32 %v1740, %v1748
      %v1750 = vadd.f32 %v1749, 1.1283791
      %v1751 = vmul.f32 %v1536, %v1750
      %v1752 = vmul.f32 %v1740, 3.8918573e-05
      %v1753 = vadd.f32 %v1752, 0.001143296
      %v1754 = vmul.f32 %v1740, %v1753
      %v1755 = vadd.f32 %v1754, 0.014752088
      %v1756 = vmul.f32 %v1740, %v1755
      %v1757 = vadd.f32 %v1756, 0.112945676
      %v1758 = vmul.f32 %v1740, %v1757
      %v1759 = vadd.f32 %v1758, 0.4994258
      %v1760 = vmul.f32 %v1740, %v1759
      %v1761 = vadd.f32 %v1760, 1.0
      %v1762 = vrcp.pop %v1761
      %v1763 = vmul.f32 %v1761, %v1762
      %v1764 = vsub.f32 1.0, %v1763
      %v1765 = vmul.f32 %v1762, %v1764
      %v1766 = vadd.f32 %v1762, %v1765
      %vm1767 = vweird.f32 %v1761
      %vm1768 = vweird.f32 %v1762
      %vm1769 = vmor %vm1767, %vm1768
      %v1770 = vsel %vm1769, %v1762, %v1766
      %v1771 = vand.u32 2147483647, %v1761
      %vm1772 = vcmp.eq.f32.partialorder %v1771, 8.507059e+37
      %v1773 = vand.u32 %v1761, 2147483648
      %v1774 = vor.u32 1.1754944e-38, %v1773
      %v1775 = vsel %vm1772, %v1774, %v1770
      %v1776 = vmul.f32 %v1751, %v1775
      %v1777 = vmin.f32 %v1776, 1.0
      %v1778 = vmax.f32 %v1777, -1.0
      %v1779 = vmul.f32 %v1537, %v1537
      %v1780 = vmin.f32 16.0, %v1779
      %v1781 = vmul.f32 %v1780, 2.1237322e-06
      %v1782 = vadd.f32 %v1781, 0.00028619796
      %v1783 = vmul.f32 %v1780, %v1782
      %v1784 = vadd.f32 %v1783, 0.0036580483
      %v1785 = vmul.f32 %v1780, %v1784
      %v1786 = vadd.f32 %v1785, 0.05243302
      %v1787 = vmul.f32 %v1780, %v1786
      %v1788 = vadd.f32 %v1787, 0.18741608
      %v1789 = vmul.f32 %v1780, %v1788
      %v1790 = vadd.f32 %v1789, 1.1283791
      %v1791 = vmul.f32 %v1537, %v1790
      %v1792 = vmul.f32 %v1780, 3.8918573e-05
      %v1793 = vadd.f32 %v1792, 0.001143296
      %v1794 = vmul.f32 %v1780, %v1793
      %v1795 = vadd.f32 %v1794, 0.014752088
      %v1796 = vmul.f32 %v1780, %v1795
      %v1797 = vadd.f32 %v1796, 0.112945676
      %v1798 = vmul.f32 %v1780, %v1797
      %v1799 = vadd.f32 %v1798, 0.4994258
      %v1800 = vmul.f32 %v1780, %v1799
      %v1801 = vadd.f32 %v1800, 1.0
      %v1802 = vrcp.pop %v1801
      %v1803 = vmul.f32 %v1801, %v1802
      %v1804 = vsub.f32 1.0, %v1803
      %v1805 = vmul.f32 %v1802, %v1804
      %v1806 = vadd.f32 %v1802, %v1805
      %vm1807 = vweird.f32 %v1801
      %vm1808 = vweird.f32 %v1802
      %vm1809 = vmor %vm1807, %vm1808
      %v1810 = vsel %vm1809, %v1802, %v1806
      %v1811 = vand.u32 2147483647, %v1801
      %vm1812 = vcmp.eq.f32.partialorder %v1811, 8.507059e+37
      %v1813 = vand.u32 %v1801, 2147483648
      %v1814 = vor.u32 1.1754944e-38, %v1813
      %v1815 = vsel %vm1812, %v1814, %v1810
      %v1816 = vmul.f32 %v1791, %v1815
      %v1817 = vmin.f32 %v1816, 1.0
      %v1818 = vmax.f32 %v1817, -1.0
      %v1819 = vmul.f32 %v1538, %v1538
      %v1820 = vmin.f32 16.0, %v1819
      %v1821 = vmul.f32 %v1820, 2.1237322e-06
      %v1822 = vadd.f32 %v1821, 0.00028619796
      %v1823 = vmul.f32 %v1820, %v1822
      %v1824 = vadd.f32 %v1823, 0.0036580483
      %v1825 = vmul.f32 %v1820, %v1824
      %v1826 = vadd.f32 %v1825, 0.05243302
      %v1827 = vmul.f32 %v1820, %v1826
      %v1828 = vadd.f32 %v1827, 0.18741608
      %v1829 = vmul.f32 %v1820, %v1828
      %v1830 = vadd.f32 %v1829, 1.1283791
      %v1831 = vmul.f32 %v1538, %v1830
      %v1832 = vmul.f32 %v1820, 3.8918573e-05
      %v1833 = vadd.f32 %v1832, 0.001143296
      %v1834 = vmul.f32 %v1820, %v1833
      %v1835 = vadd.f32 %v1834, 0.014752088
      %v1836 = vmul.f32 %v1820, %v1835
      %v1837 = vadd.f32 %v1836, 0.112945676
      %v1838 = vmul.f32 %v1820, %v1837
      %v1839 = vadd.f32 %v1838, 0.4994258
      %v1840 = vmul.f32 %v1820, %v1839
      %v1841 = vadd.f32 %v1840, 1.0
      %v1842 = vrcp.pop %v1841
      %v1843 = vmul.f32 %v1841, %v1842
      %v1844 = vsub.f32 1.0, %v1843
      %v1845 = vmul.f32 %v1842, %v1844
      %v1846 = vadd.f32 %v1842, %v1845
      %vm1847 = vweird.f32 %v1841
      %vm1848 = vweird.f32 %v1842
      %vm1849 = vmor %vm1847, %vm1848
      %v1850 = vsel %vm1849, %v1842, %v1846
      %v1851 = vand.u32 2147483647, %v1841
      %vm1852 = vcmp.eq.f32.partialorder %v1851, 8.507059e+37
      %v1853 = vand.u32 %v1841, 2147483648
      %v1854 = vor.u32 1.1754944e-38, %v1853
      %v1855 = vsel %vm1852, %v1854, %v1850
      %v1856 = vmul.f32 %v1831, %v1855
      %v1857 = vmin.f32 %v1856, 1.0
      %v1858 = vmax.f32 %v1857, -1.0
      %v1859 = vadd.f32 %v1578, 1.0
      %v1860 = vadd.f32 %v1618, 1.0
      %v1861 = vadd.f32 %v1658, 1.0
      %v1862 = vadd.f32 %v1698, 1.0
      %v1863 = vadd.f32 %v1738, 1.0
      %v1864 = vadd.f32 %v1778, 1.0
      %v1865 = vadd.f32 %v1818, 1.0
      %v1866 = vadd.f32 %v1858, 1.0
      %v1867 = vmul.f32 %v1523, %v1859
      %v1868 = vmul.f32 %v1524, %v1860
      %v1869 = vmul.f32 %v1525, %v1861
      %v1870 = vmul.f32 %v1526, %v1862
      %v1871 = vmul.f32 %v1527, %v1863
      %v1872 = vmul.f32 %v1528, %v1864
      %v1873 = vmul.f32 %v1529, %v1865
      %v1874 = vmul.f32 %v1530, %v1866
      %v1875 = vld [vmem:[%s8] sm:$0xff]
      %v1876 = vld [vmem:[%s8 + $0x8] sm:$0xff]
      %v1877 = vld [vmem:[%s8 + $0x10] sm:$0xff]
      %v1878 = vld [vmem:[%s8 + $0x18] sm:$0xff]
      %v1880 = vsel %vm368, %v1867, 0
      %v1883 = vsel %vm368, %v1868, 0
      %v1886 = vsel %vm368, %v1869, 0
      %v1889 = vsel %vm368, %v1870, 0
      %v1892 = vsel %vm368, %v1871, 0
      %v1895 = vsel %vm368, %v1872, 0
      %v1898 = vsel %vm368, %v1873, 0
      %v1901 = vsel %vm368, %v1874, 0
      %1903 = vmatpush.msra.mxu0 0.0
      %1904 = vmatpush.msra.mxu0 0.0
      %1905 = vmatpush.msra.mxu0 0.0
      %1906 = vmatpush.msra.mxu0 0.0
      %1907 = vmatpush.msra.mxu0 0.0
      %1908 = vmatpush.msra.mxu0 0.0
      %1909 = vmatpush.msra.mxu0 0.0
      %1910 = vmatpush.msra.mxu0 0.0
      %1911 = vmatpush.msra.mxu0 0.0
      %1912 = vmatpush.msra.mxu0 0.0
      %1913 = vmatpush.msra.mxu0 0.0
      %1914 = vmatpush.msra.mxu0 0.0
      %1915 = vmatpush.msra.mxu0 %v1878
      %1916 = vmatpush.msra.mxu0 %v1877
      %1917 = vmatpush.msra.mxu0 %v1876
      %1918 = vmatpush.msra.mxu0 %v1875
      %1919 = vmatmul.f32.gmra.mxu0 %v1880
      %v1920 = vpop.f32.mrf.mxu0
      %v1921 = vadd.f32 0.0, %v1920
      %1922 = vmatmul.f32.gmra.mxu0 %v1883
      %v1923 = vpop.f32.mrf.mxu0
      %v1924 = vadd.f32 0.0, %v1923
      %1925 = vmatmul.f32.gmra.mxu0 %v1886
      %v1926 = vpop.f32.mrf.mxu0
      %v1927 = vadd.f32 0.0, %v1926
      %1928 = vmatmul.f32.gmra.mxu0 %v1889
      %v1929 = vpop.f32.mrf.mxu0
      %v1930 = vadd.f32 0.0, %v1929
      %1931 = vmatmul.f32.gmra.mxu0 %v1892
      %v1932 = vpop.f32.mrf.mxu0
      %v1933 = vadd.f32 0.0, %v1932
      %1934 = vmatmul.f32.gmra.mxu0 %v1895
      %v1935 = vpop.f32.mrf.mxu0
      %v1936 = vadd.f32 0.0, %v1935
      %1937 = vmatmul.f32.gmra.mxu0 %v1898
      %v1938 = vpop.f32.mrf.mxu0
      %v1939 = vadd.f32 0.0, %v1938
      %1940 = vmatmul.f32.gmra.mxu0 %v1901
      %v1941 = vpop.f32.mrf.mxu0
      %v1942 = vadd.f32 0.0, %v1941
      %1943 = vdwg.mxu0
      %v1944 = vmul.f32 %v1921, 0.35355338
      %v1945 = vmul.f32 %v1924, 0.35355338
      %v1946 = vmul.f32 %v1927, 0.35355338
      %v1947 = vmul.f32 %v1930, 0.35355338
      %v1948 = vmul.f32 %v1933, 0.35355338
      %v1949 = vmul.f32 %v1936, 0.35355338
      %v1950 = vmul.f32 %v1939, 0.35355338
      %v1951 = vmul.f32 %v1942, 0.35355338
      %1952 = vst.msk [vmem:[%s334] sm:$0xff] %vm368, %v1944
      %1953 = vst.msk [vmem:[%s334 + $0x8] sm:$0xff] %vm368, %v1945
      %1954 = vst.msk [vmem:[%s334 + $0x10] sm:$0xff] %vm368, %v1946
      %1955 = vst.msk [vmem:[%s334 + $0x18] sm:$0xff] %vm368, %v1947
      %1956 = vst.msk [vmem:[%s334 + $0x20] sm:$0xff] %vm368, %v1948
      %1957 = vst.msk [vmem:[%s334 + $0x28] sm:$0xff] %vm368, %v1949
      %1958 = vst.msk [vmem:[%s334 + $0x30] sm:$0xff] %vm368, %v1950
      %1959 = vst.msk [vmem:[%s334 + $0x38] sm:$0xff] %vm368, %v1951
      %s1960 = smul.u32 8, %s20
      %p1961 = scmp.lt.s32.totalorder %s1960, 15
      %s1962 = scalar_select %p1961, %s1960, 15
      %s1963 = smul.addr %s1962, 8
      %s1964 = scalar_lea.vmem %s9, %s1963
      // Predicated region
      $region57: #{_lambda_.6} parent=55 // pred_check
        %p1965 = pneg %p232
      $region58: #{_lambda_.6} parent=55 // pred_check_branch
        %1967 = sbr.rel (%p1965) target = $region60
      $region59: #{_lambda_.6} parent=55 // pred_region
        %s1968 = smul.u32 8, %s20
      $region60: #{_lambda_.6} parent=55 // pred_fallthru
        _
    $region56: #{_lambda_.6} parent=5 // pred_fallthru
      _
    %p1969 = scmp.le.s32.totalorder 2, %s15
    // Predicated region
    $region61: #{_lambda_.6} parent=5 // pred_check
      %p1970 = pneg %p1969
    $region62: #{_lambda_.6} parent=5 // pred_check_branch
      %1972 = sbr.rel (%p1970) target = $region64
    $region63: #{_lambda_.6} parent=5 // pred_region
      %s1973 = ssub.s32 %s15, 2
      // Predicated region
      $region65: #{_lambda_.6} parent=63 // pred_check
        %p1974 = pneg %p238
      $region66: #{_lambda_.6} parent=63 // pred_check_branch
        %1976 = sbr.rel (%p1974) target = $region68
      $region67: #{_lambda_.6} parent=63 // pred_region
        %s1977 = smul.u32 8, %s21
        %p1978 = scmp.lt.s32.totalorder %s1977, 15
        %s1979 = scalar_select %p1978, %s1977, 15
        %s1980 = smul.addr %s1979, 8
        %s1981 = scalar_lea.vmem %s9, %s1980
      $region68: #{_lambda_.6} parent=63 // pred_fallthru
        _
    $region64: #{_lambda_.6} parent=5 // pred_fallthru
      _
  $region6: #{_lambda_.6} parent=0 // loop_footer
    %s19 = sadd.s32 1, %s15
  $region7: #{_lambda_.6} parent=0 // loop_footer_branch
    %14 = sbr.rel target = $region3
  $region8: #{_lambda_.6} parent=0 // loop_exit
    _

// kernel: _lambda_.8
$region0: #{_lambda_.8}
  #allocation0 [shape = 'u32[]', space=smem, size = 0x4, offset = 0x4, fixed_abs, tag = 'smem constant byte address 0x4 - core index']
  #allocation1 [shape = 'u32[72,128]{1,0:T(1,128)}', space=vmem, size = 0x9000, scoped, tag = 'internal scratch']
  %s0 = inlined_call_operand.vmem [shape: f32[2,64,32], index: 0, kind: input, shape index: {}]
  %s1 = inlined_call_operand.vmem [shape: f32[2,4,64], index: 1, kind: input, shape index: {}]
  %s2 = inlined_call_operand.vmem [shape: f32[32,32], index: 2, kind: input, shape index: {}]
  %s3 = inlined_call_operand.vmem [shape: f32[1,32], index: 3, kind: input, shape index: {}]
  %s4 = inlined_call_operand.vmem [shape: f32[2,64,32], index: 4, kind: output, shape index: {}]
  %s5 = sld [smem:[#allocation0]]
  $region49: #{_lambda_.8} parent=0
    _
  %s7 = ssub.s32 1, %s5
  %s8 = scalar_select 0, %s7, %s5
  loop: start=0, step=1, limit=6
  $region2: #{_lambda_.8} parent=0 // loop_pre_header
    _
  $region3: #{_lambda_.8} parent=0 // loop_header
    %s10 = sphi 0, %s14
    %p11 = scmp.ge.s32.totalorder %s10, 6
    %s17 = sphi 0, %s29
    %s18 = sphi 0, %s25
    %s19 = sphi 0, %s17
    %s20 = sphi 0, %s18
    %s21 = sphi 0, %s19
    %s22 = sphi 0, %s20
    %s34 = sphi 0, %s36
    %s37 = sphi 0, %s34
    %s38 = sphi 0, %s37
    %s54 = sphi 0, %s38
    %s60 = sphi 0, %s62
    %s63 = sphi 0, %s60
    %s64 = sphi 0, %s63
    %s80 = sphi 0, %s64
    %s84 = sphi 0, %s84
    %s86 = sphi 0, %s84
    %s87 = sphi 0, %s86
    %s101 = sphi 0, %s87
    %s105 = sphi 0, %s105
    %s107 = sphi 0, %s105
    %s108 = sphi 0, %s107
    %s122 = sphi 0, %s108
    %s130 = sphi 0, %s132
    %s133 = sphi 0, %s130
    %s134 = sphi 0, %s133
    %s150 = sphi 0, %s134
  $region4: #{_lambda_.8} parent=0 // loop_header_branch
    %13 = sbr.rel (%p11) target = $region8
  $region5: #{_lambda_.8} parent=0 // loop_body
    %s15 = ssub.s32 %s10, 1
    %s16 = ssub.s32 %s10, 2
    %s23 = sadd.s32 1, %s18
    %p24 = scmp.ge.s32.totalorder %s23, 2
    %s25 = scalar_select %p24, 0, %s23
    %s26 = sadd.s32 1, %s17
    %s27 = scalar_select %p24, %s26, %s17
    %p28 = scmp.ge.s32.totalorder %s27, 2
    %s29 = scalar_select %p28, 0, %s27
    %s30 = ssub.s32 %s17, %s29
    %s31 = ssub.s32 %s18, %s25
    %s32 = sor.u32 %s30, %s31
    %p33 = scmp.eq.s32.totalorder %s32, 0
    %s35 = sadd.s32 %s34, 1
    %s36 = scalar_select %p33, %s34, %s35
    %p39 = pneg %p33
    %p40 = scmp.eq.s32.totalorder %s10, 3
    %p41 = por %p39, %p40
    %p42 = scmp.ne.s32.totalorder %s34, %s37
    %p43 = scmp.eq.s32.totalorder %s10, 0
    %p44 = por %p42, %p43
    %p45 = scmp.ne.s32.totalorder %s34, %s37
    %p46 = scmp.eq.s32.totalorder %s15, 3
    %p47 = por %p45, %p46
    %p48 = scmp.ne.s32.totalorder %s37, %s38
    %p49 = scmp.eq.s32.totalorder %s15, 0
    %p50 = por %p48, %p49
    %p51 = scmp.ne.s32.totalorder %s37, %s38
    %p52 = scmp.eq.s32.totalorder %s16, 3
    %p53 = por %p51, %p52
    %p55 = scmp.ne.s32.totalorder %s38, %s54
    %p56 = scmp.eq.s32.totalorder %s16, 0
    %p57 = por %p55, %p56
    %s58 = ssub.s32 %s17, %s29
    %p59 = scmp.eq.s32.totalorder %s58, 0
    %s61 = sadd.s32 %s60, 1
    %s62 = scalar_select %p59, %s60, %s61
    %p65 = pneg %p59
    %p66 = scmp.eq.s32.totalorder %s10, 3
    %p67 = por %p65, %p66
    %p68 = scmp.ne.s32.totalorder %s60, %s63
    %p69 = scmp.eq.s32.totalorder %s10, 0
    %p70 = por %p68, %p69
    %p71 = scmp.ne.s32.totalorder %s60, %s63
    %p72 = scmp.eq.s32.totalorder %s15, 3
    %p73 = por %p71, %p72
    %p74 = scmp.ne.s32.totalorder %s63, %s64
    %p75 = scmp.eq.s32.totalorder %s15, 0
    %p76 = por %p74, %p75
    %p77 = scmp.ne.s32.totalorder %s63, %s64
    %p78 = scmp.eq.s32.totalorder %s16, 3
    %p79 = por %p77, %p78
    %p81 = scmp.ne.s32.totalorder %s64, %s80
    %p82 = scmp.eq.s32.totalorder %s16, 0
    %p83 = por %p81, %p82
    %s85 = sadd.s32 %s84, 1
    %p88 = scmp.eq.s32.totalorder %s10, 3
    %p89 = scmp.ne.s32.totalorder %s84, %s86
    %p90 = scmp.eq.s32.totalorder %s10, 0
    %p91 = por %p89, %p90
    %p92 = scmp.ne.s32.totalorder %s84, %s86
    %p93 = scmp.eq.s32.totalorder %s15, 3
    %p94 = por %p92, %p93
    %p95 = scmp.ne.s32.totalorder %s86, %s87
    %p96 = scmp.eq.s32.totalorder %s15, 0
    %p97 = por %p95, %p96
    %p98 = scmp.ne.s32.totalorder %s86, %s87
    %p99 = scmp.eq.s32.totalorder %s16, 3
    %p100 = por %p98, %p99
    %p102 = scmp.ne.s32.totalorder %s87, %s101
    %p103 = scmp.eq.s32.totalorder %s16, 0
    %p104 = por %p102, %p103
    %s106 = sadd.s32 %s105, 1
    %p109 = scmp.eq.s32.totalorder %s10, 3
    %p110 = scmp.ne.s32.totalorder %s105, %s107
    %p111 = scmp.eq.s32.totalorder %s10, 0
    %p112 = por %p110, %p111
    %p113 = scmp.ne.s32.totalorder %s105, %s107
    %p114 = scmp.eq.s32.totalorder %s15, 3
    %p115 = por %p113, %p114
    %p116 = scmp.ne.s32.totalorder %s107, %s108
    %p117 = scmp.eq.s32.totalorder %s15, 0
    %p118 = por %p116, %p117
    %p119 = scmp.ne.s32.totalorder %s107, %s108
    %p120 = scmp.eq.s32.totalorder %s16, 3
    %p121 = por %p119, %p120
    %p123 = scmp.ne.s32.totalorder %s108, %s122
    %p124 = scmp.eq.s32.totalorder %s16, 0
    %p125 = por %p123, %p124
    %s126 = ssub.s32 %s17, %s29
    %s127 = ssub.s32 %s18, %s25
    %s128 = sor.u32 %s126, %s127
    %p129 = scmp.eq.s32.totalorder %s128, 0
    %s131 = sadd.s32 %s130, 1
    %s132 = scalar_select %p129, %s130, %s131
    %p135 = pneg %p129
    %p136 = scmp.eq.s32.totalorder %s10, 3
    %p137 = por %p135, %p136
    %p138 = scmp.ne.s32.totalorder %s130, %s133
    %p139 = scmp.eq.s32.totalorder %s10, 0
    %p140 = por %p138, %p139
    %p141 = scmp.ne.s32.totalorder %s130, %s133
    %p142 = scmp.eq.s32.totalorder %s15, 3
    %p143 = por %p141, %p142
    %p144 = scmp.ne.s32.totalorder %s133, %s134
    %p145 = scmp.eq.s32.totalorder %s15, 0
    %p146 = por %p144, %p145
    %p147 = scmp.ne.s32.totalorder %s133, %s134
    %p148 = scmp.eq.s32.totalorder %s16, 3
    %p149 = por %p147, %p148
    %p151 = scmp.ne.s32.totalorder %s134, %s150
    %p152 = scmp.eq.s32.totalorder %s16, 0
    %p153 = por %p151, %p152
    %p154 = scmp.le.s32.totalorder 1, %s10
    %p155 = scmp.lt.s32.totalorder %s10, 5
    %p156 = pnand %p154, %p155
    %p157 = pneg %p156
    // Predicated region
    $region9: #{_lambda_.8} parent=5 // pred_check
      _
    $region10: #{_lambda_.8} parent=5 // pred_check_branch
      %159 = sbr.rel (%p156) target = $region12
    $region11: #{_lambda_.8} parent=5 // pred_region
      %s160 = ssub.s32 %s10, 1
      // Predicated region
      $region13: #{_lambda_.8} parent=11 // pred_check
        %p161 = pneg %p97
      $region14: #{_lambda_.8} parent=11 // pred_check_branch
        %163 = sbr.rel (%p161) target = $region16
      $region15: #{_lambda_.8} parent=11 // pred_region
        _
      $region16: #{_lambda_.8} parent=11 // pred_fallthru
        _
      // Predicated region
      $region17: #{_lambda_.8} parent=11 // pred_check
        %p164 = pneg %p118
      $region18: #{_lambda_.8} parent=11 // pred_check_branch
        %166 = sbr.rel (%p164) target = $region20
      $region19: #{_lambda_.8} parent=11 // pred_region
        _
      $region20: #{_lambda_.8} parent=11 // pred_fallthru
        _
    $region12: #{_lambda_.8} parent=5 // pred_fallthru
      _
    %p167 = scmp.lt.s32.totalorder %s10, 4
    // Predicated region
    $region21: #{_lambda_.8} parent=5 // pred_check
      %p168 = pneg %p167
    $region22: #{_lambda_.8} parent=5 // pred_check_branch
      %170 = sbr.rel (%p168) target = $region24
    $region23: #{_lambda_.8} parent=5 // pred_region
      // Predicated region
      $region25: #{_lambda_.8} parent=23 // pred_check
        %p171 = pneg %p44
      $region26: #{_lambda_.8} parent=23 // pred_check_branch
        %173 = sbr.rel (%p171) target = $region28
      $region27: #{_lambda_.8} parent=23 // pred_region
        %s174 = smul.u32 4, %s18
        %p175 = scmp.lt.s32.totalorder %s17, 1
        %s176 = scalar_select %p175, %s17, 1
        %p177 = scmp.lt.s32.totalorder %s174, 7
        %s178 = scalar_select %p177, %s174, 7
        %s179 = smul.addr %s176, 8
        %s180 = sadd.s32 %s178, %s179
        %s181 = smul.addr %s180, 8
        %s182 = scalar_lea.vmem %s0, %s181
        %s183 = smul.u32 4, %s18
      $region28: #{_lambda_.8} parent=23 // pred_fallthru
        _
      // Predicated region
      $region29: #{_lambda_.8} parent=23 // pred_check
        %p184 = pneg %p70
      $region30: #{_lambda_.8} parent=23 // pred_check_branch
        %186 = sbr.rel (%p184) target = $region32
      $region31: #{_lambda_.8} parent=23 // pred_region
        %p187 = scmp.lt.s32.totalorder %s17, 1
        %s188 = scalar_select %p187, %s17, 1
        %s189 = smul.addr %s188, 4
        %s190 = scalar_lea.vmem %s1, %s189
      $region32: #{_lambda_.8} parent=23 // pred_fallthru
        _
    $region24: #{_lambda_.8} parent=5 // pred_fallthru
      _
    %p191 = scmp.le.s32.totalorder 1, %s10
    %p192 = scmp.lt.s32.totalorder %s10, 5
    %p193 = pnand %p191, %p192
    %p194 = pneg %p193
    // Predicated region
    $region33: #{_lambda_.8} parent=5 // pred_check
      _
    $region34: #{_lambda_.8} parent=5 // pred_check_branch
      %196 = sbr.rel (%p193) target = $region36
    $region35: #{_lambda_.8} parent=5 // pred_region
      %s197 = ssub.s32 %s10, 1
      %s198 = smul.u32 4, %s20
      %p199 = scmp.lt.s32.totalorder %s19, 1
      %s200 = scalar_select %p199, %s19, 1
      %p201 = scmp.lt.s32.totalorder %s198, 7
      %s202 = scalar_select %p201, %s198, 7
      %s203 = smul.addr %s200, 8
      %s204 = sadd.s32 %s202, %s203
      %s205 = smul.addr %s204, 8
      %s206 = scalar_lea.vmem %s0, %s205
      %p207 = pneg %p50
      %p208 = pneg %p47
      %p209 = scmp.lt.s32.totalorder %s19, 1
      %s210 = scalar_select %p209, %s19, 1
      %s211 = smul.addr %s210, 4
      %s212 = scalar_lea.vmem %s1, %s211
      %p213 = pneg %p76
      %p214 = pneg %p73
      %p215 = pneg %p97
      %p216 = pneg %p94
      %p217 = pneg %p118
      %p218 = pneg %p115
      %p219 = pneg %p146
      %p220 = pneg %p143
      %s221 = smul.u32 4, %s20
      %p222 = scmp.lt.s32.totalorder %s19, 1
      %s223 = scalar_select %p222, %s19, 1
      %p224 = scmp.lt.s32.totalorder %s221, 7
      %s225 = scalar_select %p224, %s221, 7
      %s226 = smul.addr %s223, 8
      %s227 = sadd.s32 %s225, %s226
      %s228 = smul.addr %s227, 8
      %s229 = scalar_lea.vmem %s4, %s228
      %s230 = smul.u32 4, %s20
      %p231 = scmp.lt.s32.totalorder %s19, 1
      %s232 = scalar_select %p231, %s19, 1
      %p233 = scmp.lt.s32.totalorder %s230, 7
      %s234 = scalar_select %p233, %s230, 7
      %s235 = smul.addr %s232, 8
      %s236 = sadd.s32 %s234, %s235
      %s237 = smul.addr %s236, 8
      %s238 = scalar_lea.vmem %s0, %s237
      %s239 = smul.u32 4, %s20
      %p240 = scmp.lt.s32.totalorder %s19, 1
      %s241 = scalar_select %p240, %s19, 1
      %s242 = smul.addr %s241, 4
      %s243 = scalar_lea.vmem %s1, %s242
      %s244 = smul.u32 4, %s20
      %p245 = scmp.lt.s32.totalorder %s19, 1
      %s246 = scalar_select %p245, %s19, 1
      %p247 = scmp.lt.s32.totalorder %s244, 7
      %s248 = scalar_select %p247, %s244, 7
      %s249 = smul.addr %s246, 8
      %s250 = sadd.s32 %s248, %s249
      %s251 = smul.addr %s250, 8
      %s252 = scalar_lea.vmem %s4, %s251
      %s253 = smul.u32 4, %s20
      %v254 = vld [vmem:[%s238] sm:$0xff]
      %v255 = vld [vmem:[%s238 + $0x8] sm:$0xff]
      %v256 = vld [vmem:[%s238 + $0x10] sm:$0xff]
      %v257 = vld [vmem:[%s238 + $0x18] sm:$0xff]
      %v258 = vld [vmem:[%s243] sm:$0xf]
      %vm259 = vcmask 64512
      %v261 = vsel %vm259, %v254, 0
      %v264 = vsel %vm259, %v255, 0
      %v267 = vsel %vm259, %v256, 0
      %v270 = vsel %vm259, %v257, 0
      %v273 = vsel %vm259, %v258, 0
      %275 = vmatpush.xpose.msra.mxu0 0.0
      %276 = vmatpush.xpose.msra.mxu0 0.0
      %277 = vmatpush.xpose.msra.mxu0 0.0
      %278 = vmatpush.xpose.msra.mxu0 0.0
      %279 = vmatpush.xpose.msra.mxu0 0.0
      %280 = vmatpush.xpose.msra.mxu0 0.0
      %281 = vmatpush.xpose.msra.mxu0 0.0
      %282 = vmatpush.xpose.msra.mxu0 0.0
      %283 = vmatpush.xpose.msra.mxu0 0.0
      %284 = vmatpush.xpose.msra.mxu0 0.0
      %285 = vmatpush.xpose.msra.mxu0 0.0
      %286 = vmatpush.xpose.msra.mxu0 0.0
      %287 = vmatpush.xpose.msra.mxu0 0.0
      %288 = vmatpush.xpose.msra.mxu0 0.0
      %289 = vmatpush.xpose.msra.mxu0 0.0
      %290 = vmatpush.xpose.msra.mxu0 %v273
      %291 = vmatmul.f32.gmra.mxu0 %v261
      %v292 = vpop.f32.mrf.mxu0
      %v293 = vadd.f32 0.0, %v292
      %294 = vmatmul.f32.gmra.mxu0 %v264
      %v295 = vpop.f32.mrf.mxu0
      %v296 = vadd.f32 0.0, %v295
      %297 = vmatmul.f32.gmra.mxu0 %v267
      %v298 = vpop.f32.mrf.mxu0
      %v299 = vadd.f32 0.0, %v298
      %300 = vmatmul.f32.gmra.mxu0 %v270
      %v301 = vpop.f32.mrf.mxu0
      %v302 = vadd.f32 0.0, %v301
      %303 = vdwg.mxu0
      %vm304 = vcmask 31744
      %v305 = vsel %vm304, %v293, -inf
      %306 = vmax.xlane.f32.xlu0 %v305
      %v307 = vpop.xlane.xlu0 %306
      %v308 = vsel %vm304, %v296, -inf
      %309 = vmax.xlane.f32.xlu0 %v308
      %v310 = vpop.xlane.xlu0 %309
      %v311 = vsel %vm304, %v299, -inf
      %312 = vmax.xlane.f32.xlu0 %v311
      %v313 = vpop.xlane.xlu0 %312
      %v314 = vsel %vm304, %v302, -inf
      %315 = vmax.xlane.f32.xlu0 %v314
      %v316 = vpop.xlane.xlu0 %315
      %v317 = vsub.f32 %v293, %v307
      %v318 = vsub.f32 %v296, %v310
      %v319 = vsub.f32 %v299, %v313
      %v320 = vsub.f32 %v302, %v316
      %v321 = vmul.f32 %v317, 1.442695
      %v322 = vpow.pop %v321
      %v323 = vmul.f32 %v318, 1.442695
      %v324 = vpow.pop %v323
      %v325 = vmul.f32 %v319, 1.442695
      %v326 = vpow.pop %v325
      %v327 = vmul.f32 %v320, 1.442695
      %v328 = vpow.pop %v327
      %v329 = vsel %vm304, %v322, 0.0
      %330 = vadd.xlane.f32.xlu0 %v329
      %v331 = vpop.xlane.xlu0 %330
      %v332 = vsel %vm304, %v324, 0.0
      %333 = vadd.xlane.f32.xlu0 %v332
      %v334 = vpop.xlane.xlu0 %333
      %v335 = vsel %vm304, %v326, 0.0
      %336 = vadd.xlane.f32.xlu0 %v335
      %v337 = vpop.xlane.xlu0 %336
      %v338 = vsel %vm304, %v328, 0.0
      %339 = vadd.xlane.f32.xlu0 %v338
      %v340 = vpop.xlane.xlu0 %339
      %v341 = vrcp.pop %v331
      %v342 = vrcp.pop %v334
      %v343 = vrcp.pop %v337
      %v344 = vrcp.pop %v340
      %v345 = vmul.f32 %v322, %v341
      %v346 = vmul.f32 %v324, %v342
      %v347 = vmul.f32 %v326, %v343
      %v348 = vmul.f32 %v328, %v344
      %349 = vrot.lane.b32.xlu0 %v258, 96
      %v350 = vpop.permute.xlu0 %349
      %v352 = vsel %vm304, %v345, 0
      %v355 = vsel %vm304, %v346, 0
      %v358 = vsel %vm304, %v347, 0
      %v361 = vsel %vm304, %v348, 0
      %vm363 = vcmask 1043456
      %v364 = vsel %vm363, %v350, 0
      %366 = vmatpush.msra.mxu0 0.0
      %367 = vmatpush.msra.mxu0 0.0
      %368 = vmatpush.msra.mxu0 0.0
      %369 = vmatpush.msra.mxu0 0.0
      %370 = vmatpush.msra.mxu0 0.0
      %371 = vmatpush.msra.mxu0 0.0
      %372 = vmatpush.msra.mxu0 0.0
      %373 = vmatpush.msra.mxu0 0.0
      %374 = vmatpush.msra.mxu0 0.0
      %375 = vmatpush.msra.mxu0 0.0
      %376 = vmatpush.msra.mxu0 0.0
      %377 = vmatpush.msra.mxu0 0.0
      %378 = vmatpush.msra.mxu0 0.0
      %379 = vmatpush.msra.mxu0 0.0
      %380 = vmatpush.msra.mxu0 0.0
      %381 = vmatpush.msra.mxu0 %v364
      %382 = vmatmul.f32.gmra.mxu0 %v352
      %v383 = vpop.f32.mrf.mxu0
      %v384 = vadd.f32 0.0, %v383
      %385 = vmatmul.f32.gmra.mxu0 %v355
      %v386 = vpop.f32.mrf.mxu0
      %v387 = vadd.f32 0.0, %v386
      %388 = vmatmul.f32.gmra.mxu0 %v358
      %v389 = vpop.f32.mrf.mxu0
      %v390 = vadd.f32 0.0, %v389
      %391 = vmatmul.f32.gmra.mxu0 %v361
      %v392 = vpop.f32.mrf.mxu0
      %v393 = vadd.f32 0.0, %v392
      %394 = vdwg.mxu0
      %395 = vrot.lane.b32.xlu0 %v254, 120
      %v396 = vpop.permute.xlu0 %395
      %397 = vrot.lane.b32.xlu0 %v255, 120
      %v398 = vpop.permute.xlu0 %397
      %399 = vrot.lane.b32.xlu0 %v256, 120
      %v400 = vpop.permute.xlu0 %399
      %401 = vrot.lane.b32.xlu0 %v257, 120
      %v402 = vpop.permute.xlu0 %401
      %403 = vrot.lane.b32.xlu0 %v258, 120
      %v404 = vpop.permute.xlu0 %403
      %v405 = vsel %vm259, %v396, 0
      %v407 = vsel %vm259, %v398, 0
      %v409 = vsel %vm259, %v400, 0
      %v411 = vsel %vm259, %v402, 0
      %v413 = vsel %vm259, %v404, 0
      %415 = vmatpush.xpose.msra.mxu0 0.0
      %416 = vmatpush.xpose.msra.mxu0 0.0
      %417 = vmatpush.xpose.msra.mxu0 0.0
      %418 = vmatpush.xpose.msra.mxu0 0.0
      %419 = vmatpush.xpose.msra.mxu0 0.0
      %420 = vmatpush.xpose.msra.mxu0 0.0
      %421 = vmatpush.xpose.msra.mxu0 0.0
      %422 = vmatpush.xpose.msra.mxu0 0.0
      %423 = vmatpush.xpose.msra.mxu0 0.0
      %424 = vmatpush.xpose.msra.mxu0 0.0
      %425 = vmatpush.xpose.msra.mxu0 0.0
      %426 = vmatpush.xpose.msra.mxu0 0.0
      %427 = vmatpush.xpose.msra.mxu0 0.0
      %428 = vmatpush.xpose.msra.mxu0 0.0
      %429 = vmatpush.xpose.msra.mxu0 0.0
      %430 = vmatpush.xpose.msra.mxu0 %v413
      %431 = vmatmul.f32.gmra.mxu0 %v405
      %v432 = vpop.f32.mrf.mxu0
      %v433 = vadd.f32 0.0, %v432
      %434 = vmatmul.f32.gmra.mxu0 %v407
      %v435 = vpop.f32.mrf.mxu0
      %v436 = vadd.f32 0.0, %v435
      %437 = vmatmul.f32.gmra.mxu0 %v409
      %v438 = vpop.f32.mrf.mxu0
      %v439 = vadd.f32 0.0, %v438
      %440 = vmatmul.f32.gmra.mxu0 %v411
      %v441 = vpop.f32.mrf.mxu0
      %v442 = vadd.f32 0.0, %v441
      %443 = vdwg.mxu0
      %v444 = vsel %vm304, %v433, -inf
      %445 = vmax.xlane.f32.xlu0 %v444
      %v446 = vpop.xlane.xlu0 %445
      %v447 = vsel %vm304, %v436, -inf
      %448 = vmax.xlane.f32.xlu0 %v447
      %v449 = vpop.xlane.xlu0 %448
      %v450 = vsel %vm304, %v439, -inf
      %451 = vmax.xlane.f32.xlu0 %v450
      %v452 = vpop.xlane.xlu0 %451
      %v453 = vsel %vm304, %v442, -inf
      %454 = vmax.xlane.f32.xlu0 %v453
      %v455 = vpop.xlane.xlu0 %454
      %v456 = vsub.f32 %v433, %v446
      %v457 = vsub.f32 %v436, %v449
      %v458 = vsub.f32 %v439, %v452
      %v459 = vsub.f32 %v442, %v455
      %v460 = vmul.f32 %v456, 1.442695
      %v461 = vpow.pop %v460
      %v462 = vmul.f32 %v457, 1.442695
      %v463 = vpow.pop %v462
      %v464 = vmul.f32 %v458, 1.442695
      %v465 = vpow.pop %v464
      %v466 = vmul.f32 %v459, 1.442695
      %v467 = vpow.pop %v466
      %v468 = vsel %vm304, %v461, 0.0
      %469 = vadd.xlane.f32.xlu0 %v468
      %v470 = vpop.xlane.xlu0 %469
      %v471 = vsel %vm304, %v463, 0.0
      %472 = vadd.xlane.f32.xlu0 %v471
      %v473 = vpop.xlane.xlu0 %472
      %v474 = vsel %vm304, %v465, 0.0
      %475 = vadd.xlane.f32.xlu0 %v474
      %v476 = vpop.xlane.xlu0 %475
      %v477 = vsel %vm304, %v467, 0.0
      %478 = vadd.xlane.f32.xlu0 %v477
      %v479 = vpop.xlane.xlu0 %478
      %v480 = vrcp.pop %v470
      %v481 = vrcp.pop %v473
      %v482 = vrcp.pop %v476
      %v483 = vrcp.pop %v479
      %v484 = vmul.f32 %v461, %v480
      %v485 = vmul.f32 %v463, %v481
      %v486 = vmul.f32 %v465, %v482
      %v487 = vmul.f32 %v467, %v483
      %488 = vrot.lane.b32.xlu0 %v258, 88
      %v489 = vpop.permute.xlu0 %488
      %v491 = vsel %vm304, %v484, 0
      %v494 = vsel %vm304, %v485, 0
      %v497 = vsel %vm304, %v486, 0
      %v500 = vsel %vm304, %v487, 0
      %v502 = vsel %vm363, %v489, 0
      %504 = vmatpush.msra.mxu0 0.0
      %505 = vmatpush.msra.mxu0 0.0
      %506 = vmatpush.msra.mxu0 0.0
      %507 = vmatpush.msra.mxu0 0.0
      %508 = vmatpush.msra.mxu0 0.0
      %509 = vmatpush.msra.mxu0 0.0
      %510 = vmatpush.msra.mxu0 0.0
      %511 = vmatpush.msra.mxu0 0.0
      %512 = vmatpush.msra.mxu0 0.0
      %513 = vmatpush.msra.mxu0 0.0
      %514 = vmatpush.msra.mxu0 0.0
      %515 = vmatpush.msra.mxu0 0.0
      %516 = vmatpush.msra.mxu0 0.0
      %517 = vmatpush.msra.mxu0 0.0
      %518 = vmatpush.msra.mxu0 0.0
      %519 = vmatpush.msra.mxu0 %v502
      %520 = vmatmul.f32.gmra.mxu0 %v491
      %v521 = vpop.f32.mrf.mxu0
      %v522 = vadd.f32 0.0, %v521
      %523 = vmatmul.f32.gmra.mxu0 %v494
      %v524 = vpop.f32.mrf.mxu0
      %v525 = vadd.f32 0.0, %v524
      %526 = vmatmul.f32.gmra.mxu0 %v497
      %v527 = vpop.f32.mrf.mxu0
      %v528 = vadd.f32 0.0, %v527
      %529 = vmatmul.f32.gmra.mxu0 %v500
      %v530 = vpop.f32.mrf.mxu0
      %v531 = vadd.f32 0.0, %v530
      %532 = vdwg.mxu0
      %533 = vrot.lane.b32.xlu0 %v254, 112
      %v534 = vpop.permute.xlu0 %533
      %535 = vrot.lane.b32.xlu0 %v255, 112
      %v536 = vpop.permute.xlu0 %535
      %537 = vrot.lane.b32.xlu0 %v256, 112
      %v538 = vpop.permute.xlu0 %537
      %539 = vrot.lane.b32.xlu0 %v257, 112
      %v540 = vpop.permute.xlu0 %539
      %541 = vrot.lane.b32.xlu0 %v258, 112
      %v542 = vpop.permute.xlu0 %541
      %v543 = vsel %vm259, %v534, 0
      %v545 = vsel %vm259, %v536, 0
      %v547 = vsel %vm259, %v538, 0
      %v549 = vsel %vm259, %v540, 0
      %v551 = vsel %vm259, %v542, 0
      %553 = vmatpush.xpose.msra.mxu0 0.0
      %554 = vmatpush.xpose.msra.mxu0 0.0
      %555 = vmatpush.xpose.msra.mxu0 0.0
      %556 = vmatpush.xpose.msra.mxu0 0.0
      %557 = vmatpush.xpose.msra.mxu0 0.0
      %558 = vmatpush.xpose.msra.mxu0 0.0
      %559 = vmatpush.xpose.msra.mxu0 0.0
      %560 = vmatpush.xpose.msra.mxu0 0.0
      %561 = vmatpush.xpose.msra.mxu0 0.0
      %562 = vmatpush.xpose.msra.mxu0 0.0
      %563 = vmatpush.xpose.msra.mxu0 0.0
      %564 = vmatpush.xpose.msra.mxu0 0.0
      %565 = vmatpush.xpose.msra.mxu0 0.0
      %566 = vmatpush.xpose.msra.mxu0 0.0
      %567 = vmatpush.xpose.msra.mxu0 0.0
      %568 = vmatpush.xpose.msra.mxu0 %v551
      %569 = vmatmul.f32.gmra.mxu0 %v543
      %v570 = vpop.f32.mrf.mxu0
      %v571 = vadd.f32 0.0, %v570
      %572 = vmatmul.f32.gmra.mxu0 %v545
      %v573 = vpop.f32.mrf.mxu0
      %v574 = vadd.f32 0.0, %v573
      %575 = vmatmul.f32.gmra.mxu0 %v547
      %v576 = vpop.f32.mrf.mxu0
      %v577 = vadd.f32 0.0, %v576
      %578 = vmatmul.f32.gmra.mxu0 %v549
      %v579 = vpop.f32.mrf.mxu0
      %v580 = vadd.f32 0.0, %v579
      %581 = vdwg.mxu0
      %v582 = vsel %vm304, %v571, -inf
      %583 = vmax.xlane.f32.xlu0 %v582
      %v584 = vpop.xlane.xlu0 %583
      %v585 = vsel %vm304, %v574, -inf
      %586 = vmax.xlane.f32.xlu0 %v585
      %v587 = vpop.xlane.xlu0 %586
      %v588 = vsel %vm304, %v577, -inf
      %589 = vmax.xlane.f32.xlu0 %v588
      %v590 = vpop.xlane.xlu0 %589
      %v591 = vsel %vm304, %v580, -inf
      %592 = vmax.xlane.f32.xlu0 %v591
      %v593 = vpop.xlane.xlu0 %592
      %v594 = vsub.f32 %v571, %v584
      %v595 = vsub.f32 %v574, %v587
      %v596 = vsub.f32 %v577, %v590
      %v597 = vsub.f32 %v580, %v593
      %v598 = vmul.f32 %v594, 1.442695
      %v599 = vpow.pop %v598
      %v600 = vmul.f32 %v595, 1.442695
      %v601 = vpow.pop %v600
      %v602 = vmul.f32 %v596, 1.442695
      %v603 = vpow.pop %v602
      %v604 = vmul.f32 %v597, 1.442695
      %v605 = vpow.pop %v604
      %v606 = vsel %vm304, %v599, 0.0
      %607 = vadd.xlane.f32.xlu0 %v606
      %v608 = vpop.xlane.xlu0 %607
      %v609 = vsel %vm304, %v601, 0.0
      %610 = vadd.xlane.f32.xlu0 %v609
      %v611 = vpop.xlane.xlu0 %610
      %v612 = vsel %vm304, %v603, 0.0
      %613 = vadd.xlane.f32.xlu0 %v612
      %v614 = vpop.xlane.xlu0 %613
      %v615 = vsel %vm304, %v605, 0.0
      %616 = vadd.xlane.f32.xlu0 %v615
      %v617 = vpop.xlane.xlu0 %616
      %v618 = vrcp.pop %v608
      %v619 = vrcp.pop %v611
      %v620 = vrcp.pop %v614
      %v621 = vrcp.pop %v617
      %v622 = vmul.f32 %v599, %v618
      %v623 = vmul.f32 %v601, %v619
      %v624 = vmul.f32 %v603, %v620
      %v625 = vmul.f32 %v605, %v621
      %626 = vrot.lane.b32.xlu0 %v258, 80
      %v627 = vpop.permute.xlu0 %626
      %v629 = vsel %vm304, %v622, 0
      %v632 = vsel %vm304, %v623, 0
      %v635 = vsel %vm304, %v624, 0
      %v638 = vsel %vm304, %v625, 0
      %v640 = vsel %vm363, %v627, 0
      %642 = vmatpush.msra.mxu0 0.0
      %643 = vmatpush.msra.mxu0 0.0
      %644 = vmatpush.msra.mxu0 0.0
      %645 = vmatpush.msra.mxu0 0.0
      %646 = vmatpush.msra.mxu0 0.0
      %647 = vmatpush.msra.mxu0 0.0
      %648 = vmatpush.msra.mxu0 0.0
      %649 = vmatpush.msra.mxu0 0.0
      %650 = vmatpush.msra.mxu0 0.0
      %651 = vmatpush.msra.mxu0 0.0
      %652 = vmatpush.msra.mxu0 0.0
      %653 = vmatpush.msra.mxu0 0.0
      %654 = vmatpush.msra.mxu0 0.0
      %655 = vmatpush.msra.mxu0 0.0
      %656 = vmatpush.msra.mxu0 0.0
      %657 = vmatpush.msra.mxu0 %v640
      %658 = vmatmul.f32.gmra.mxu0 %v629
      %v659 = vpop.f32.mrf.mxu0
      %v660 = vadd.f32 0.0, %v659
      %661 = vmatmul.f32.gmra.mxu0 %v632
      %v662 = vpop.f32.mrf.mxu0
      %v663 = vadd.f32 0.0, %v662
      %664 = vmatmul.f32.gmra.mxu0 %v635
      %v665 = vpop.f32.mrf.mxu0
      %v666 = vadd.f32 0.0, %v665
      %667 = vmatmul.f32.gmra.mxu0 %v638
      %v668 = vpop.f32.mrf.mxu0
      %v669 = vadd.f32 0.0, %v668
      %670 = vdwg.mxu0
      %671 = vrot.lane.b32.xlu0 %v254, 104
      %v672 = vpop.permute.xlu0 %671
      %673 = vrot.lane.b32.xlu0 %v255, 104
      %v674 = vpop.permute.xlu0 %673
      %675 = vrot.lane.b32.xlu0 %v256, 104
      %v676 = vpop.permute.xlu0 %675
      %677 = vrot.lane.b32.xlu0 %v257, 104
      %v678 = vpop.permute.xlu0 %677
      %679 = vrot.lane.b32.xlu0 %v258, 104
      %v680 = vpop.permute.xlu0 %679
      %v681 = vsel %vm259, %v672, 0
      %v683 = vsel %vm259, %v674, 0
      %v685 = vsel %vm259, %v676, 0
      %v687 = vsel %vm259, %v678, 0
      %v689 = vsel %vm259, %v680, 0
      %691 = vmatpush.xpose.msra.mxu0 0.0
      %692 = vmatpush.xpose.msra.mxu0 0.0
      %693 = vmatpush.xpose.msra.mxu0 0.0
      %694 = vmatpush.xpose.msra.mxu0 0.0
      %695 = vmatpush.xpose.msra.mxu0 0.0
      %696 = vmatpush.xpose.msra.mxu0 0.0
      %697 = vmatpush.xpose.msra.mxu0 0.0
      %698 = vmatpush.xpose.msra.mxu0 0.0
      %699 = vmatpush.xpose.msra.mxu0 0.0
      %700 = vmatpush.xpose.msra.mxu0 0.0
      %701 = vmatpush.xpose.msra.mxu0 0.0
      %702 = vmatpush.xpose.msra.mxu0 0.0
      %703 = vmatpush.xpose.msra.mxu0 0.0
      %704 = vmatpush.xpose.msra.mxu0 0.0
      %705 = vmatpush.xpose.msra.mxu0 0.0
      %706 = vmatpush.xpose.msra.mxu0 %v689
      %707 = vmatmul.f32.gmra.mxu0 %v681
      %v708 = vpop.f32.mrf.mxu0
      %v709 = vadd.f32 0.0, %v708
      %710 = vmatmul.f32.gmra.mxu0 %v683
      %v711 = vpop.f32.mrf.mxu0
      %v712 = vadd.f32 0.0, %v711
      %713 = vmatmul.f32.gmra.mxu0 %v685
      %v714 = vpop.f32.mrf.mxu0
      %v715 = vadd.f32 0.0, %v714
      %716 = vmatmul.f32.gmra.mxu0 %v687
      %v717 = vpop.f32.mrf.mxu0
      %v718 = vadd.f32 0.0, %v717
      %719 = vdwg.mxu0
      %v720 = vsel %vm304, %v709, -inf
      %721 = vmax.xlane.f32.xlu0 %v720
      %v722 = vpop.xlane.xlu0 %721
      %v723 = vsel %vm304, %v712, -inf
      %724 = vmax.xlane.f32.xlu0 %v723
      %v725 = vpop.xlane.xlu0 %724
      %v726 = vsel %vm304, %v715, -inf
      %727 = vmax.xlane.f32.xlu0 %v726
      %v728 = vpop.xlane.xlu0 %727
      %v729 = vsel %vm304, %v718, -inf
      %730 = vmax.xlane.f32.xlu0 %v729
      %v731 = vpop.xlane.xlu0 %730
      %v732 = vsub.f32 %v709, %v722
      %v733 = vsub.f32 %v712, %v725
      %v734 = vsub.f32 %v715, %v728
      %v735 = vsub.f32 %v718, %v731
      %v736 = vmul.f32 %v732, 1.442695
      %v737 = vpow.pop %v736
      %v738 = vmul.f32 %v733, 1.442695
      %v739 = vpow.pop %v738
      %v740 = vmul.f32 %v734, 1.442695
      %v741 = vpow.pop %v740
      %v742 = vmul.f32 %v735, 1.442695
      %v743 = vpow.pop %v742
      %v744 = vsel %vm304, %v737, 0.0
      %745 = vadd.xlane.f32.xlu0 %v744
      %v746 = vpop.xlane.xlu0 %745
      %v747 = vsel %vm304, %v739, 0.0
      %748 = vadd.xlane.f32.xlu0 %v747
      %v749 = vpop.xlane.xlu0 %748
      %v750 = vsel %vm304, %v741, 0.0
      %751 = vadd.xlane.f32.xlu0 %v750
      %v752 = vpop.xlane.xlu0 %751
      %v753 = vsel %vm304, %v743, 0.0
      %754 = vadd.xlane.f32.xlu0 %v753
      %v755 = vpop.xlane.xlu0 %754
      %v756 = vrcp.pop %v746
      %v757 = vrcp.pop %v749
      %v758 = vrcp.pop %v752
      %v759 = vrcp.pop %v755
      %v760 = vmul.f32 %v737, %v756
      %v761 = vmul.f32 %v739, %v757
      %v762 = vmul.f32 %v741, %v758
      %v763 = vmul.f32 %v743, %v759
      %764 = vrot.lane.b32.xlu0 %v258, 72
      %v765 = vpop.permute.xlu0 %764
      %v767 = vsel %vm304, %v760, 0
      %v770 = vsel %vm304, %v761, 0
      %v773 = vsel %vm304, %v762, 0
      %v776 = vsel %vm304, %v763, 0
      %v778 = vsel %vm363, %v765, 0
      %780 = vmatpush.msra.mxu0 0.0
      %781 = vmatpush.msra.mxu0 0.0
      %782 = vmatpush.msra.mxu0 0.0
      %783 = vmatpush.msra.mxu0 0.0
      %784 = vmatpush.msra.mxu0 0.0
      %785 = vmatpush.msra.mxu0 0.0
      %786 = vmatpush.msra.mxu0 0.0
      %787 = vmatpush.msra.mxu0 0.0
      %788 = vmatpush.msra.mxu0 0.0
      %789 = vmatpush.msra.mxu0 0.0
      %790 = vmatpush.msra.mxu0 0.0
      %791 = vmatpush.msra.mxu0 0.0
      %792 = vmatpush.msra.mxu0 0.0
      %793 = vmatpush.msra.mxu0 0.0
      %794 = vmatpush.msra.mxu0 0.0
      %795 = vmatpush.msra.mxu0 %v778
      %796 = vmatmul.f32.gmra.mxu0 %v767
      %v797 = vpop.f32.mrf.mxu0
      %v798 = vadd.f32 0.0, %v797
      %799 = vmatmul.f32.gmra.mxu0 %v770
      %v800 = vpop.f32.mrf.mxu0
      %v801 = vadd.f32 0.0, %v800
      %802 = vmatmul.f32.gmra.mxu0 %v773
      %v803 = vpop.f32.mrf.mxu0
      %v804 = vadd.f32 0.0, %v803
      %805 = vmatmul.f32.gmra.mxu0 %v776
      %v806 = vpop.f32.mrf.mxu0
      %v807 = vadd.f32 0.0, %v806
      %808 = vdwg.mxu0
      %813 = vrot.lane.b32.xlu0 %v522, 8
      %v814 = vpop.permute.xlu0 %813
      %815 = vrot.lane.b32.xlu0 %v525, 8
      %v816 = vpop.permute.xlu0 %815
      %817 = vrot.lane.b32.xlu0 %v528, 8
      %v818 = vpop.permute.xlu0 %817
      %819 = vrot.lane.b32.xlu0 %v531, 8
      %v820 = vpop.permute.xlu0 %819
      %829 = vrot.lane.b32.xlu0 %v660, 16
      %v830 = vpop.permute.xlu0 %829
      %831 = vrot.lane.b32.xlu0 %v663, 16
      %v832 = vpop.permute.xlu0 %831
      %833 = vrot.lane.b32.xlu0 %v666, 16
      %v834 = vpop.permute.xlu0 %833
      %835 = vrot.lane.b32.xlu0 %v669, 16
      %v836 = vpop.permute.xlu0 %835
      %845 = vrot.lane.b32.xlu0 %v798, 24
      %v846 = vpop.permute.xlu0 %845
      %847 = vrot.lane.b32.xlu0 %v801, 24
      %v848 = vpop.permute.xlu0 %847
      %849 = vrot.lane.b32.xlu0 %v804, 24
      %v850 = vpop.permute.xlu0 %849
      %851 = vrot.lane.b32.xlu0 %v807, 24
      %v852 = vpop.permute.xlu0 %851
      %v857 = vsel %vm259, %v384, %v814
      %v858 = vsel %vm259, %v387, %v816
      %v859 = vsel %vm259, %v390, %v818
      %v860 = vsel %vm259, %v393, %v820
      %vm861 = vcmask 130048
      %v862 = vsel %vm861, %v857, %v830
      %v863 = vsel %vm861, %v858, %v832
      %v864 = vsel %vm861, %v859, %v834
      %v865 = vsel %vm861, %v860, %v836
      %vm866 = vcmask 195584
      %v867 = vsel %vm866, %v862, %v846
      %v868 = vsel %vm866, %v863, %v848
      %v869 = vsel %vm866, %v864, %v850
      %v870 = vsel %vm866, %v865, %v852
      %v871 = vld [vmem:[%s2] sm:$0xff]
      %v872 = vld [vmem:[%s2 + $0x8] sm:$0xff]
      %v873 = vld [vmem:[%s2 + $0x10] sm:$0xff]
      %v874 = vld [vmem:[%s2 + $0x18] sm:$0xff]
      %v875 = vld [vmem:[%s3] sm:$0x1]
      %v877 = vperm.slane %v875, 0
      %vm879 = vcmask 261120
      %v881 = vsel %vm879, %v867, 0
      %v884 = vsel %vm879, %v868, 0
      %v887 = vsel %vm879, %v869, 0
      %v890 = vsel %vm879, %v870, 0
      %892 = vmatpush.msra.mxu0 0.0
      %893 = vmatpush.msra.mxu0 0.0
      %894 = vmatpush.msra.mxu0 0.0
      %895 = vmatpush.msra.mxu0 0.0
      %896 = vmatpush.msra.mxu0 0.0
      %897 = vmatpush.msra.mxu0 0.0
      %898 = vmatpush.msra.mxu0 0.0
      %899 = vmatpush.msra.mxu0 0.0
      %900 = vmatpush.msra.mxu0 0.0
      %901 = vmatpush.msra.mxu0 0.0
      %902 = vmatpush.msra.mxu0 0.0
      %903 = vmatpush.msra.mxu0 0.0
      %904 = vmatpush.msra.mxu0 %v874
      %905 = vmatpush.msra.mxu0 %v873
      %906 = vmatpush.msra.mxu0 %v872
      %907 = vmatpush.msra.mxu0 %v871
      %908 = vmatmul.f32.gmra.mxu0 %v881
      %v909 = vpop.f32.mrf.mxu0
      %v910 = vadd.f32 %v877, %v909
      %911 = vmatmul.f32.gmra.mxu0 %v884
      %v912 = vpop.f32.mrf.mxu0
      %v913 = vadd.f32 %v877, %v912
      %914 = vmatmul.f32.gmra.mxu0 %v887
      %v915 = vpop.f32.mrf.mxu0
      %v916 = vadd.f32 %v877, %v915
      %917 = vmatmul.f32.gmra.mxu0 %v890
      %v918 = vpop.f32.mrf.mxu0
      %v919 = vadd.f32 %v877, %v918
      %920 = vdwg.mxu0
      %921 = vst.msk [vmem:[%s252] sm:$0xff] %vm879, %v910
      %922 = vst.msk [vmem:[%s252 + $0x8] sm:$0xff] %vm879, %v913
      %923 = vst.msk [vmem:[%s252 + $0x10] sm:$0xff] %vm879, %v916
      %924 = vst.msk [vmem:[%s252 + $0x18] sm:$0xff] %vm879, %v919
      %s925 = smul.u32 4, %s20
      %p926 = scmp.lt.s32.totalorder %s19, 1
      %s927 = scalar_select %p926, %s19, 1
      %p928 = scmp.lt.s32.totalorder %s925, 7
      %s929 = scalar_select %p928, %s925, 7
      %s930 = smul.addr %s927, 8
      %s931 = sadd.s32 %s929, %s930
      %s932 = smul.addr %s931, 8
      %s933 = scalar_lea.vmem %s4, %s932
      // Predicated region
      $region37: #{_lambda_.8} parent=35 // pred_check
        %p934 = pneg %p143
      $region38: #{_lambda_.8} parent=35 // pred_check_branch
        %936 = sbr.rel (%p934) target = $region40
      $region39: #{_lambda_.8} parent=35 // pred_region
        %s937 = smul.u32 4, %s20
      $region40: #{_lambda_.8} parent=35 // pred_fallthru
        _
    $region36: #{_lambda_.8} parent=5 // pred_fallthru
      _
    %p938 = scmp.le.s32.totalorder 2, %s10
    // Predicated region
    $region41: #{_lambda_.8} parent=5 // pred_check
      %p939 = pneg %p938
    $region42: #{_lambda_.8} parent=5 // pred_check_branch
      %941 = sbr.rel (%p939) target = $region44
    $region43: #{_lambda_.8} parent=5 // pred_region
      %s942 = ssub.s32 %s10, 2
      // Predicated region
      $region45: #{_lambda_.8} parent=43 // pred_check
        %p943 = pneg %p149
      $region46: #{_lambda_.8} parent=43 // pred_check_branch
        %945 = sbr.rel (%p943) target = $region48
      $region47: #{_lambda_.8} parent=43 // pred_region
        %s946 = smul.u32 4, %s22
        %p947 = scmp.lt.s32.totalorder %s21, 1
        %s948 = scalar_select %p947, %s21, 1
        %p949 = scmp.lt.s32.totalorder %s946, 7
        %s950 = scalar_select %p949, %s946, 7
        %s951 = smul.addr %s948, 8
        %s952 = sadd.s32 %s950, %s951
        %s953 = smul.addr %s952, 8
        %s954 = scalar_lea.vmem %s4, %s953
      $region48: #{_lambda_.8} parent=43 // pred_fallthru
        _
    $region44: #{_lambda_.8} parent=5 // pred_fallthru
      _
  $region6: #{_lambda_.8} parent=0 // loop_footer
    %s14 = sadd.s32 1, %s10
  $region7: #{_lambda_.8} parent=0 // loop_footer_branch
    %9 = sbr.rel target = $region3
  $region8: #{_lambda_.8} parent=0 // loop_exit
    _

// kernel: _lambda_.9
$region0: #{_lambda_.9}
  #allocation0 [shape = 'u32[]', space=smem, size = 0x4, offset = 0x4, fixed_abs, tag = 'smem constant byte address 0x4 - core index']
  #allocation1 [shape = 'u32[72,128]{1,0:T(1,128)}', space=vmem, size = 0x9000, scoped, tag = 'internal scratch']
  %s0 = inlined_call_operand.vmem [shape: f32[512,32], index: 0, kind: input, shape index: {}]
  %s1 = inlined_call_operand.vmem [shape: f32[1,32], index: 1, kind: input, shape index: {}]
  %s2 = inlined_call_operand.vmem [shape: f32[1,32], index: 2, kind: input, shape index: {}]
  %s3 = inlined_call_operand.vmem [shape: f32[32,128], index: 3, kind: input, shape index: {}]
  %s4 = inlined_call_operand.vmem [shape: f32[1,128], index: 4, kind: input, shape index: {}]
  %s5 = inlined_call_operand.vmem [shape: f32[512,128], index: 5, kind: output, shape index: {}]
  %s6 = sld [smem:[#allocation0]]
  $region53: #{_lambda_.9} parent=0
    _
  %s8 = ssub.s32 1, %s6
  %s9 = scalar_select 0, %s8, %s6
  loop: start=0, step=1, limit=4
  $region2: #{_lambda_.9} parent=0 // loop_pre_header
    _
  $region3: #{_lambda_.9} parent=0 // loop_header
    %s11 = sphi 0, %s15
    %p12 = scmp.ge.s32.totalorder %s11, 4
    %s21 = sphi 0, %s23
    %s24 = sphi 0, %s21
    %s25 = sphi 0, %s24
    %s41 = sphi 0, %s25
    %s45 = sphi 0, %s45
    %s47 = sphi 0, %s45
    %s48 = sphi 0, %s47
    %s62 = sphi 0, %s48
    %s66 = sphi 0, %s66
    %s68 = sphi 0, %s66
    %s69 = sphi 0, %s68
    %s83 = sphi 0, %s69
    %s87 = sphi 0, %s87
    %s89 = sphi 0, %s87
    %s90 = sphi 0, %s89
    %s104 = sphi 0, %s90
    %s108 = sphi 0, %s108
    %s110 = sphi 0, %s108
    %s111 = sphi 0, %s110
    %s125 = sphi 0, %s111
    %s131 = sphi 0, %s133
    %s134 = sphi 0, %s131
    %s135 = sphi 0, %s134
    %s151 = sphi 0, %s135
  $region4: #{_lambda_.9} parent=0 // loop_header_branch
    %14 = sbr.rel (%p12) target = $region8
  $region5: #{_lambda_.9} parent=0 // loop_body
    %s16 = ssub.s32 %s11, 1
    %s17 = ssub.s32 %s11, 2
    %s18 = sadd.s32 %s11, 1
    %s19 = ssub.s32 %s11, %s18
    %p20 = scmp.eq.s32.totalorder %s19, 0
    %s22 = sadd.s32 %s21, 1
    %s23 = scalar_select %p20, %s21, %s22
    %p26 = pneg %p20
    %p27 = scmp.eq.s32.totalorder %s11, 1
    %p28 = por %p26, %p27
    %p29 = scmp.ne.s32.totalorder %s21, %s24
    %p30 = scmp.eq.s32.totalorder %s11, 0
    %p31 = por %p29, %p30
    %p32 = scmp.ne.s32.totalorder %s21, %s24
    %p33 = scmp.eq.s32.totalorder %s16, 1
    %p34 = por %p32, %p33
    %p35 = scmp.ne.s32.totalorder %s24, %s25
    %p36 = scmp.eq.s32.totalorder %s16, 0
    %p37 = por %p35, %p36
    %p38 = scmp.ne.s32.totalorder %s24, %s25
    %p39 = scmp.eq.s32.totalorder %s17, 1
    %p40 = por %p38, %p39
    %p42 = scmp.ne.s32.totalorder %s25, %s41
    %p43 = scmp.eq.s32.totalorder %s17, 0
    %p44 = por %p42, %p43
    %s46 = sadd.s32 %s45, 1
    %p49 = scmp.eq.s32.totalorder %s11, 1
    %p50 = scmp.ne.s32.totalorder %s45, %s47
    %p51 = scmp.eq.s32.totalorder %s11, 0
    %p52 = por %p50, %p51
    %p53 = scmp.ne.s32.totalorder %s45, %s47
    %p54 = scmp.eq.s32.totalorder %s16, 1
    %p55 = por %p53, %p54
    %p56 = scmp.ne.s32.totalorder %s47, %s48
    %p57 = scmp.eq.s32.totalorder %s16, 0
    %p58 = por %p56, %p57
    %p59 = scmp.ne.s32.totalorder %s47, %s48
    %p60 = scmp.eq.s32.totalorder %s17, 1
    %p61 = por %p59, %p60
    %p63 = scmp.ne.s32.totalorder %s48, %s62
    %p64 = scmp.eq.s32.totalorder %s17, 0
    %p65 = por %p63, %p64
    %s67 = sadd.s32 %s66, 1
    %p70 = scmp.eq.s32.totalorder %s11, 1
    %p71 = scmp.ne.s32.totalorder %s66, %s68
    %p72 = scmp.eq.s32.totalorder %s11, 0
    %p73 = por %p71, %p72
    %p74 = scmp.ne.s32.totalorder %s66, %s68
    %p75 = scmp.eq.s32.totalorder %s16, 1
    %p76 = por %p74, %p75
    %p77 = scmp.ne.s32.totalorder %s68, %s69
    %p78 = scmp.eq.s32.totalorder %s16, 0
    %p79 = por %p77, %p78
    %p80 = scmp.ne.s32.totalorder %s68, %s69
    %p81 = scmp.eq.s32.totalorder %s17, 1
    %p82 = por %p80, %p81
    %p84 = scmp.ne.s32.totalorder %s69, %s83
    %p85 = scmp.eq.s32.totalorder %s17, 0
    %p86 = por %p84, %p85
    %s88 = sadd.s32 %s87, 1
    %p91 = scmp.eq.s32.totalorder %s11, 1
    %p92 = scmp.ne.s32.totalorder %s87, %s89
    %p93 = scmp.eq.s32.totalorder %s11, 0
    %p94 = por %p92, %p93
    %p95 = scmp.ne.s32.totalorder %s87, %s89
    %p96 = scmp.eq.s32.totalorder %s16, 1
    %p97 = por %p95, %p96
    %p98 = scmp.ne.s32.totalorder %s89, %s90
    %p99 = scmp.eq.s32.totalorder %s16, 0
    %p100 = por %p98, %p99
    %p101 = scmp.ne.s32.totalorder %s89, %s90
    %p102 = scmp.eq.s32.totalorder %s17, 1
    %p103 = por %p101, %p102
    %p105 = scmp.ne.s32.totalorder %s90, %s104
    %p106 = scmp.eq.s32.totalorder %s17, 0
    %p107 = por %p105, %p106
    %s109 = sadd.s32 %s108, 1
    %p112 = scmp.eq.s32.totalorder %s11, 1
    %p113 = scmp.ne.s32.totalorder %s108, %s110
    %p114 = scmp.eq.s32.totalorder %s11, 0
    %p115 = por %p113, %p114
    %p116 = scmp.ne.s32.totalorder %s108, %s110
    %p117 = scmp.eq.s32.totalorder %s16, 1
    %p118 = por %p116, %p117
    %p119 = scmp.ne.s32.totalorder %s110, %s111
    %p120 = scmp.eq.s32.totalorder %s16, 0
    %p121 = por %p119, %p120
    %p122 = scmp.ne.s32.totalorder %s110, %s111
    %p123 = scmp.eq.s32.totalorder %s17, 1
    %p124 = por %p122, %p123
    %p126 = scmp.ne.s32.totalorder %s111, %s125
    %p127 = scmp.eq.s32.totalorder %s17, 0
    %p128 = por %p126, %p127
    %s129 = ssub.s32 %s11, %s18
    %p130 = scmp.eq.s32.totalorder %s129, 0
    %s132 = sadd.s32 %s131, 1
    %s133 = scalar_select %p130, %s131, %s132
    %p136 = pneg %p130
    %p137 = scmp.eq.s32.totalorder %s11, 1
    %p138 = por %p136, %p137
    %p139 = scmp.ne.s32.totalorder %s131, %s134
    %p140 = scmp.eq.s32.totalorder %s11, 0
    %p141 = por %p139, %p140
    %p142 = scmp.ne.s32.totalorder %s131, %s134
    %p143 = scmp.eq.s32.totalorder %s16, 1
    %p144 = por %p142, %p143
    %p145 = scmp.ne.s32.totalorder %s134, %s135
    %p146 = scmp.eq.s32.totalorder %s16, 0
    %p147 = por %p145, %p146
    %p148 = scmp.ne.s32.totalorder %s134, %s135
    %p149 = scmp.eq.s32.totalorder %s17, 1
    %p150 = por %p148, %p149
    %p152 = scmp.ne.s32.totalorder %s135, %s151
    %p153 = scmp.eq.s32.totalorder %s17, 0
    %p154 = por %p152, %p153
    %p155 = scmp.le.s32.totalorder 1, %s11
    %p156 = scmp.lt.s32.totalorder %s11, 3
    %p157 = pnand %p155, %p156
    %p158 = pneg %p157
    // Predicated region
    $region9: #{_lambda_.9} parent=5 // pred_check
      _
    $region10: #{_lambda_.9} parent=5 // pred_check_branch
      %160 = sbr.rel (%p157) target = $region12
    $region11: #{_lambda_.9} parent=5 // pred_region
      %s161 = ssub.s32 %s11, 1
      // Predicated region
      $region13: #{_lambda_.9} parent=11 // pred_check
        %p162 = pneg %p58
      $region14: #{_lambda_.9} parent=11 // pred_check_branch
        %164 = sbr.rel (%p162) target = $region16
      $region15: #{_lambda_.9} parent=11 // pred_region
        _
      $region16: #{_lambda_.9} parent=11 // pred_fallthru
        _
      // Predicated region
      $region17: #{_lambda_.9} parent=11 // pred_check
        %p165 = pneg %p79
      $region18: #{_lambda_.9} parent=11 // pred_check_branch
        %167 = sbr.rel (%p165) target = $region20
      $region19: #{_lambda_.9} parent=11 // pred_region
        _
      $region20: #{_lambda_.9} parent=11 // pred_fallthru
        _
      // Predicated region
      $region21: #{_lambda_.9} parent=11 // pred_check
        %p168 = pneg %p100
      $region22: #{_lambda_.9} parent=11 // pred_check_branch
        %170 = sbr.rel (%p168) target = $region24
      $region23: #{_lambda_.9} parent=11 // pred_region
        _
      $region24: #{_lambda_.9} parent=11 // pred_fallthru
        _
      // Predicated region
      $region25: #{_lambda_.9} parent=11 // pred_check
        %p171 = pneg %p121
      $region26: #{_lambda_.9} parent=11 // pred_check_branch
        %173 = sbr.rel (%p171) target = $region28
      $region27: #{_lambda_.9} parent=11 // pred_region
        _
      $region28: #{_lambda_.9} parent=11 // pred_fallthru
        _
    $region12: #{_lambda_.9} parent=5 // pred_fallthru
      _
    %p174 = scmp.lt.s32.totalorder %s11, 2
    // Predicated region
    $region29: #{_lambda_.9} parent=5 // pred_check
      %p175 = pneg %p174
    $region30: #{_lambda_.9} parent=5 // pred_check_branch
      %177 = sbr.rel (%p175) target = $region32
    $region31: #{_lambda_.9} parent=5 // pred_region
      // Predicated region
      $region33: #{_lambda_.9} parent=31 // pred_check
        %p178 = pneg %p31
      $region34: #{_lambda_.9} parent=31 // pred_check_branch
        %180 = sbr.rel (%p178) target = $region36
      $region35: #{_lambda_.9} parent=31 // pred_region
        %s181 = smul.u32 32, %s11
        %p182 = scmp.lt.s32.totalorder %s181, 63
        %s183 = scalar_select %p182, %s181, 63
        %s184 = smul.addr %s183, 8
        %s185 = scalar_lea.vmem %s0, %s184
        %s186 = smul.u32 32, %s11
      $region36: #{_lambda_.9} parent=31 // pred_fallthru
        _
    $region32: #{_lambda_.9} parent=5 // pred_fallthru
      _
    %p187 = scmp.le.s32.totalorder 1, %s11
    %p188 = scmp.lt.s32.totalorder %s11, 3
    %p189 = pnand %p187, %p188
    %p190 = pneg %p189
    // Predicated region
    $region37: #{_lambda_.9} parent=5 // pred_check
      _
    $region38: #{_lambda_.9} parent=5 // pred_check_branch
      %192 = sbr.rel (%p189) target = $region40
    $region39: #{_lambda_.9} parent=5 // pred_region
      %s193 = ssub.s32 %s11, 1
      %s194 = smul.u32 32, %s16
      %p195 = scmp.lt.s32.totalorder %s194, 63
      %s196 = scalar_select %p195, %s194, 63
      %s197 = smul.addr %s196, 8
      %s198 = scalar_lea.vmem %s0, %s197
      %p199 = pneg %p37
      %p200 = pneg %p34
      %p201 = pneg %p58
      %p202 = pneg %p55
      %p203 = pneg %p79
      %p204 = pneg %p76
      %p205 = pneg %p100
      %p206 = pneg %p97
      %p207 = pneg %p121
      %p208 = pneg %p118
      %p209 = pneg %p147
      %p210 = pneg %p144
      %s211 = smul.u32 32, %s16
      %p212 = scmp.lt.s32.totalorder %s211, 63
      %s213 = scalar_select %p212, %s211, 63
      %s214 = smul.addr %s213, 8
      %s215 = scalar_lea.vmem %s5, %s214
      %s216 = smul.u32 32, %s16
      %p217 = scmp.lt.s32.totalorder %s216, 63
      %s218 = scalar_select %p217, %s216, 63
      %s219 = smul.addr %s218, 8
      %s220 = scalar_lea.vmem %s0, %s219
      %s221 = smul.u32 32, %s16
      %s222 = smul.u32 32, %s16
      %p223 = scmp.lt.s32.totalorder %s222, 63
      %s224 = scalar_select %p223, %s222, 63
      %s225 = smul.addr %s224, 8
      %s226 = scalar_lea.vmem %s5, %s225
      %s227 = smul.u32 32, %s16
      %v228 = vld [vmem:[%s220] sm:$0xff]
      %v229 = vld [vmem:[%s220 + $0x8] sm:$0xff]
      %v230 = vld [vmem:[%s220 + $0x10] sm:$0xff]
      %v231 = vld [vmem:[%s220 + $0x18] sm:$0xff]
      %v232 = vld [vmem:[%s220 + $0x20] sm:$0xff]
      %v233 = vld [vmem:[%s220 + $0x28] sm:$0xff]
      %v234 = vld [vmem:[%s220 + $0x30] sm:$0xff]
      %v235 = vld [vmem:[%s220 + $0x38] sm:$0xff]
      %v236 = vld [vmem:[%s220 + $0x40] sm:$0xff]
      %v237 = vld [vmem:[%s220 + $0x48] sm:$0xff]
      %v238 = vld [vmem:[%s220 + $0x50] sm:$0xff]
      %v239 = vld [vmem:[%s220 + $0x58] sm:$0xff]
      %v240 = vld [vmem:[%s220 + $0x60] sm:$0xff]
      %v241 = vld [vmem:[%s220 + $0x68] sm:$0xff]
      %v242 = vld [vmem:[%s220 + $0x70] sm:$0xff]
      %v243 = vld [vmem:[%s220 + $0x78] sm:$0xff]
      %v244 = vld [vmem:[%s220 + $0x80] sm:$0xff]
      %v245 = vld [vmem:[%s220 + $0x88] sm:$0xff]
      %v246 = vld [vmem:[%s220 + $0x90] sm:$0xff]
      %v247 = vld [vmem:[%s220 + $0x98] sm:$0xff]
      %v248 = vld [vmem:[%s220 + $0xa0] sm:$0xff]
      %v249 = vld [vmem:[%s220 + $0xa8] sm:$0xff]
      %v250 = vld [vmem:[%s220 + $0xb0] sm:$0xff]
      %v251 = vld [vmem:[%s220 + $0xb8] sm:$0xff]
      %v252 = vld [vmem:[%s220 + $0xc0] sm:$0xff]
      %v253 = vld [vmem:[%s220 + $0xc8] sm:$0xff]
      %v254 = vld [vmem:[%s220 + $0xd0] sm:$0xff]
      %v255 = vld [vmem:[%s220 + $0xd8] sm:$0xff]
      %v256 = vld [vmem:[%s220 + $0xe0] sm:$0xff]
      %v257 = vld [vmem:[%s220 + $0xe8] sm:$0xff]
      %v258 = vld [vmem:[%s220 + $0xf0] sm:$0xff]
      %v259 = vld [vmem:[%s220 + $0xf8] sm:$0xff]
      %vm260 = vcmask 261120
      %v261 = vsel %vm260, %v228, 0.0
      %262 = vadd.xlane.f32.xlu0 %v261
      %v263 = vpop.xlane.xlu0 %262
      %v264 = vsel %vm260, %v229, 0.0
      %265 = vadd.xlane.f32.xlu0 %v264
      %v266 = vpop.xlane.xlu0 %265
      %v267 = vsel %vm260, %v230, 0.0
      %268 = vadd.xlane.f32.xlu0 %v267
      %v269 = vpop.xlane.xlu0 %268
      %v270 = vsel %vm260, %v231, 0.0
      %271 = vadd.xlane.f32.xlu0 %v270
      %v272 = vpop.xlane.xlu0 %271
      %v273 = vsel %vm260, %v232, 0.0
      %274 = vadd.xlane.f32.xlu0 %v273
      %v275 = vpop.xlane.xlu0 %274
      %v276 = vsel %vm260, %v233, 0.0
      %277 = vadd.xlane.f32.xlu0 %v276
      %v278 = vpop.xlane.xlu0 %277
      %v279 = vsel %vm260, %v234, 0.0
      %280 = vadd.xlane.f32.xlu0 %v279
      %v281 = vpop.xlane.xlu0 %280
      %v282 = vsel %vm260, %v235, 0.0
      %283 = vadd.xlane.f32.xlu0 %v282
      %v284 = vpop.xlane.xlu0 %283
      %v285 = vsel %vm260, %v236, 0.0
      %286 = vadd.xlane.f32.xlu0 %v285
      %v287 = vpop.xlane.xlu0 %286
      %v288 = vsel %vm260, %v237, 0.0
      %289 = vadd.xlane.f32.xlu0 %v288
      %v290 = vpop.xlane.xlu0 %289
      %v291 = vsel %vm260, %v238, 0.0
      %292 = vadd.xlane.f32.xlu0 %v291
      %v293 = vpop.xlane.xlu0 %292
      %v294 = vsel %vm260, %v239, 0.0
      %295 = vadd.xlane.f32.xlu0 %v294
      %v296 = vpop.xlane.xlu0 %295
      %v297 = vsel %vm260, %v240, 0.0
      %298 = vadd.xlane.f32.xlu0 %v297
      %v299 = vpop.xlane.xlu0 %298
      %v300 = vsel %vm260, %v241, 0.0
      %301 = vadd.xlane.f32.xlu0 %v300
      %v302 = vpop.xlane.xlu0 %301
      %v303 = vsel %vm260, %v242, 0.0
      %304 = vadd.xlane.f32.xlu0 %v303
      %v305 = vpop.xlane.xlu0 %304
      %v306 = vsel %vm260, %v243, 0.0
      %307 = vadd.xlane.f32.xlu0 %v306
      %v308 = vpop.xlane.xlu0 %307
      %v309 = vsel %vm260, %v244, 0.0
      %310 = vadd.xlane.f32.xlu0 %v309
      %v311 = vpop.xlane.xlu0 %310
      %v312 = vsel %vm260, %v245, 0.0
      %313 = vadd.xlane.f32.xlu0 %v312
      %v314 = vpop.xlane.xlu0 %313
      %v315 = vsel %vm260, %v246, 0.0
      %316 = vadd.xlane.f32.xlu0 %v315
      %v317 = vpop.xlane.xlu0 %316
      %v318 = vsel %vm260, %v247, 0.0
      %319 = vadd.xlane.f32.xlu0 %v318
      %v320 = vpop.xlane.xlu0 %319
      %v321 = vsel %vm260, %v248, 0.0
      %322 = vadd.xlane.f32.xlu0 %v321
      %v323 = vpop.xlane.xlu0 %322
      %v324 = vsel %vm260, %v249, 0.0
      %325 = vadd.xlane.f32.xlu0 %v324
      %v326 = vpop.xlane.xlu0 %325
      %v327 = vsel %vm260, %v250, 0.0
      %328 = vadd.xlane.f32.xlu0 %v327
      %v329 = vpop.xlane.xlu0 %328
      %v330 = vsel %vm260, %v251, 0.0
      %331 = vadd.xlane.f32.xlu0 %v330
      %v332 = vpop.xlane.xlu0 %331
      %v333 = vsel %vm260, %v252, 0.0
      %334 = vadd.xlane.f32.xlu0 %v333
      %v335 = vpop.xlane.xlu0 %334
      %v336 = vsel %vm260, %v253, 0.0
      %337 = vadd.xlane.f32.xlu0 %v336
      %v338 = vpop.xlane.xlu0 %337
      %v339 = vsel %vm260, %v254, 0.0
      %340 = vadd.xlane.f32.xlu0 %v339
      %v341 = vpop.xlane.xlu0 %340
      %v342 = vsel %vm260, %v255, 0.0
      %343 = vadd.xlane.f32.xlu0 %v342
      %v344 = vpop.xlane.xlu0 %343
      %v345 = vsel %vm260, %v256, 0.0
      %346 = vadd.xlane.f32.xlu0 %v345
      %v347 = vpop.xlane.xlu0 %346
      %v348 = vsel %vm260, %v257, 0.0
      %349 = vadd.xlane.f32.xlu0 %v348
      %v350 = vpop.xlane.xlu0 %349
      %v351 = vsel %vm260, %v258, 0.0
      %352 = vadd.xlane.f32.xlu0 %v351
      %v353 = vpop.xlane.xlu0 %352
      %v354 = vsel %vm260, %v259, 0.0
      %355 = vadd.xlane.f32.xlu0 %v354
      %v356 = vpop.xlane.xlu0 %355
      %v357 = vrcp.pop 32.0
      %v358 = vmul.f32 32.0, %v357
      %v359 = vsub.f32 1.0, %v358
      %v360 = vmul.f32 %v357, %v359
      %v361 = vadd.f32 %v357, %v360
      %vm362 = vweird.f32 %v357
      %v363 = vsel %vm362, %v357, %v361
      %v364 = vmul.f32 %v263, %v363
      %v365 = vmul.f32 %v266, %v363
      %v366 = vmul.f32 %v269, %v363
      %v367 = vmul.f32 %v272, %v363
      %v368 = vmul.f32 %v275, %v363
      %v369 = vmul.f32 %v278, %v363
      %v370 = vmul.f32 %v281, %v363
      %v371 = vmul.f32 %v284, %v363
      %v372 = vmul.f32 %v287, %v363
      %v373 = vmul.f32 %v290, %v363
      %v374 = vmul.f32 %v293, %v363
      %v375 = vmul.f32 %v296, %v363
      %v376 = vmul.f32 %v299, %v363
      %v377 = vmul.f32 %v302, %v363
      %v378 = vmul.f32 %v305, %v363
      %v379 = vmul.f32 %v308, %v363
      %v380 = vmul.f32 %v311, %v363
      %v381 = vmul.f32 %v314, %v363
      %v382 = vmul.f32 %v317, %v363
      %v383 = vmul.f32 %v320, %v363
      %v384 = vmul.f32 %v323, %v363
      %v385 = vmul.f32 %v326, %v363
      %v386 = vmul.f32 %v329, %v363
      %v387 = vmul.f32 %v332, %v363
      %v388 = vmul.f32 %v335, %v363
      %v389 = vmul.f32 %v338, %v363
      %v390 = vmul.f32 %v341, %v363
      %v391 = vmul.f32 %v344, %v363
      %v392 = vmul.f32 %v347, %v363
      %v393 = vmul.f32 %v350, %v363
      %v394 = vmul.f32 %v353, %v363
      %v395 = vmul.f32 %v356, %v363
      %v396 = vsub.f32 %v228, %v364
      %v397 = vsub.f32 %v229, %v365
      %v398 = vsub.f32 %v230, %v366
      %v399 = vsub.f32 %v231, %v367
      %v400 = vsub.f32 %v232, %v368
      %v401 = vsub.f32 %v233, %v369
      %v402 = vsub.f32 %v234, %v370
      %v403 = vsub.f32 %v235, %v371
      %v404 = vsub.f32 %v236, %v372
      %v405 = vsub.f32 %v237, %v373
      %v406 = vsub.f32 %v238, %v374
      %v407 = vsub.f32 %v239, %v375
      %v408 = vsub.f32 %v240, %v376
      %v409 = vsub.f32 %v241, %v377
      %v410 = vsub.f32 %v242, %v378
      %v411 = vsub.f32 %v243, %v379
      %v412 = vsub.f32 %v244, %v380
      %v413 = vsub.f32 %v245, %v381
      %v414 = vsub.f32 %v246, %v382
      %v415 = vsub.f32 %v247, %v383
      %v416 = vsub.f32 %v248, %v384
      %v417 = vsub.f32 %v249, %v385
      %v418 = vsub.f32 %v250, %v386
      %v419 = vsub.f32 %v251, %v387
      %v420 = vsub.f32 %v252, %v388
      %v421 = vsub.f32 %v253, %v389
      %v422 = vsub.f32 %v254, %v390
      %v423 = vsub.f32 %v255, %v391
      %v424 = vsub.f32 %v256, %v392
      %v425 = vsub.f32 %v257, %v393
      %v426 = vsub.f32 %v258, %v394
      %v427 = vsub.f32 %v259, %v395
      %v428 = vmul.f32 %v396, %v396
      %v429 = vmul.f32 %v397, %v397
      %v430 = vmul.f32 %v398, %v398
      %v431 = vmul.f32 %v399, %v399
      %v432 = vmul.f32 %v400, %v400
      %v433 = vmul.f32 %v401, %v401
      %v434 = vmul.f32 %v402, %v402
      %v435 = vmul.f32 %v403, %v403
      %v436 = vmul.f32 %v404, %v404
      %v437 = vmul.f32 %v405, %v405
      %v438 = vmul.f32 %v406, %v406
      %v439 = vmul.f32 %v407, %v407
      %v440 = vmul.f32 %v408, %v408
      %v441 = vmul.f32 %v409, %v409
      %v442 = vmul.f32 %v410, %v410
      %v443 = vmul.f32 %v411, %v411
      %v444 = vmul.f32 %v412, %v412
      %v445 = vmul.f32 %v413, %v413
      %v446 = vmul.f32 %v414, %v414
      %v447 = vmul.f32 %v415, %v415
      %v448 = vmul.f32 %v416, %v416
      %v449 = vmul.f32 %v417, %v417
      %v450 = vmul.f32 %v418, %v418
      %v451 = vmul.f32 %v419, %v419
      %v452 = vmul.f32 %v420, %v420
      %v453 = vmul.f32 %v421, %v421
      %v454 = vmul.f32 %v422, %v422
      %v455 = vmul.f32 %v423, %v423
      %v456 = vmul.f32 %v424, %v424
      %v457 = vmul.f32 %v425, %v425
      %v458 = vmul.f32 %v426, %v426
      %v459 = vmul.f32 %v427, %v427
      %v460 = vsel %vm260, %v428, 0.0
      %461 = vadd.xlane.f32.xlu0 %v460
      %v462 = vpop.xlane.xlu0 %461
      %v463 = vsel %vm260, %v429, 0.0
      %464 = vadd.xlane.f32.xlu0 %v463
      %v465 = vpop.xlane.xlu0 %464
      %v466 = vsel %vm260, %v430, 0.0
      %467 = vadd.xlane.f32.xlu0 %v466
      %v468 = vpop.xlane.xlu0 %467
      %v469 = vsel %vm260, %v431, 0.0
      %470 = vadd.xlane.f32.xlu0 %v469
      %v471 = vpop.xlane.xlu0 %470
      %v472 = vsel %vm260, %v432, 0.0
      %473 = vadd.xlane.f32.xlu0 %v472
      %v474 = vpop.xlane.xlu0 %473
      %v475 = vsel %vm260, %v433, 0.0
      %476 = vadd.xlane.f32.xlu0 %v475
      %v477 = vpop.xlane.xlu0 %476
      %v478 = vsel %vm260, %v434, 0.0
      %479 = vadd.xlane.f32.xlu0 %v478
      %v480 = vpop.xlane.xlu0 %479
      %v481 = vsel %vm260, %v435, 0.0
      %482 = vadd.xlane.f32.xlu0 %v481
      %v483 = vpop.xlane.xlu0 %482
      %v484 = vsel %vm260, %v436, 0.0
      %485 = vadd.xlane.f32.xlu0 %v484
      %v486 = vpop.xlane.xlu0 %485
      %v487 = vsel %vm260, %v437, 0.0
      %488 = vadd.xlane.f32.xlu0 %v487
      %v489 = vpop.xlane.xlu0 %488
      %v490 = vsel %vm260, %v438, 0.0
      %491 = vadd.xlane.f32.xlu0 %v490
      %v492 = vpop.xlane.xlu0 %491
      %v493 = vsel %vm260, %v439, 0.0
      %494 = vadd.xlane.f32.xlu0 %v493
      %v495 = vpop.xlane.xlu0 %494
      %v496 = vsel %vm260, %v440, 0.0
      %497 = vadd.xlane.f32.xlu0 %v496
      %v498 = vpop.xlane.xlu0 %497
      %v499 = vsel %vm260, %v441, 0.0
      %500 = vadd.xlane.f32.xlu0 %v499
      %v501 = vpop.xlane.xlu0 %500
      %v502 = vsel %vm260, %v442, 0.0
      %503 = vadd.xlane.f32.xlu0 %v502
      %v504 = vpop.xlane.xlu0 %503
      %v505 = vsel %vm260, %v443, 0.0
      %506 = vadd.xlane.f32.xlu0 %v505
      %v507 = vpop.xlane.xlu0 %506
      %v508 = vsel %vm260, %v444, 0.0
      %509 = vadd.xlane.f32.xlu0 %v508
      %v510 = vpop.xlane.xlu0 %509
      %v511 = vsel %vm260, %v445, 0.0
      %512 = vadd.xlane.f32.xlu0 %v511
      %v513 = vpop.xlane.xlu0 %512
      %v514 = vsel %vm260, %v446, 0.0
      %515 = vadd.xlane.f32.xlu0 %v514
      %v516 = vpop.xlane.xlu0 %515
      %v517 = vsel %vm260, %v447, 0.0
      %518 = vadd.xlane.f32.xlu0 %v517
      %v519 = vpop.xlane.xlu0 %518
      %v520 = vsel %vm260, %v448, 0.0
      %521 = vadd.xlane.f32.xlu0 %v520
      %v522 = vpop.xlane.xlu0 %521
      %v523 = vsel %vm260, %v449, 0.0
      %524 = vadd.xlane.f32.xlu0 %v523
      %v525 = vpop.xlane.xlu0 %524
      %v526 = vsel %vm260, %v450, 0.0
      %527 = vadd.xlane.f32.xlu0 %v526
      %v528 = vpop.xlane.xlu0 %527
      %v529 = vsel %vm260, %v451, 0.0
      %530 = vadd.xlane.f32.xlu0 %v529
      %v531 = vpop.xlane.xlu0 %530
      %v532 = vsel %vm260, %v452, 0.0
      %533 = vadd.xlane.f32.xlu0 %v532
      %v534 = vpop.xlane.xlu0 %533
      %v535 = vsel %vm260, %v453, 0.0
      %536 = vadd.xlane.f32.xlu0 %v535
      %v537 = vpop.xlane.xlu0 %536
      %v538 = vsel %vm260, %v454, 0.0
      %539 = vadd.xlane.f32.xlu0 %v538
      %v540 = vpop.xlane.xlu0 %539
      %v541 = vsel %vm260, %v455, 0.0
      %542 = vadd.xlane.f32.xlu0 %v541
      %v543 = vpop.xlane.xlu0 %542
      %v544 = vsel %vm260, %v456, 0.0
      %545 = vadd.xlane.f32.xlu0 %v544
      %v546 = vpop.xlane.xlu0 %545
      %v547 = vsel %vm260, %v457, 0.0
      %548 = vadd.xlane.f32.xlu0 %v547
      %v549 = vpop.xlane.xlu0 %548
      %v550 = vsel %vm260, %v458, 0.0
      %551 = vadd.xlane.f32.xlu0 %v550
      %v552 = vpop.xlane.xlu0 %551
      %v553 = vsel %vm260, %v459, 0.0
      %554 = vadd.xlane.f32.xlu0 %v553
      %v555 = vpop.xlane.xlu0 %554
      %v556 = vmul.f32 %v462, %v363
      %v557 = vmul.f32 %v465, %v363
      %v558 = vmul.f32 %v468, %v363
      %v559 = vmul.f32 %v471, %v363
      %v560 = vmul.f32 %v474, %v363
      %v561 = vmul.f32 %v477, %v363
      %v562 = vmul.f32 %v480, %v363
      %v563 = vmul.f32 %v483, %v363
      %v564 = vmul.f32 %v486, %v363
      %v565 = vmul.f32 %v489, %v363
      %v566 = vmul.f32 %v492, %v363
      %v567 = vmul.f32 %v495, %v363
      %v568 = vmul.f32 %v498, %v363
      %v569 = vmul.f32 %v501, %v363
      %v570 = vmul.f32 %v504, %v363
      %v571 = vmul.f32 %v507, %v363
      %v572 = vmul.f32 %v510, %v363
      %v573 = vmul.f32 %v513, %v363
      %v574 = vmul.f32 %v516, %v363
      %v575 = vmul.f32 %v519, %v363
      %v576 = vmul.f32 %v522, %v363
      %v577 = vmul.f32 %v525, %v363
      %v578 = vmul.f32 %v528, %v363
      %v579 = vmul.f32 %v531, %v363
      %v580 = vmul.f32 %v534, %v363
      %v581 = vmul.f32 %v537, %v363
      %v582 = vmul.f32 %v540, %v363
      %v583 = vmul.f32 %v543, %v363
      %v584 = vmul.f32 %v546, %v363
      %v585 = vmul.f32 %v549, %v363
      %v586 = vmul.f32 %v552, %v363
      %v587 = vmul.f32 %v555, %v363
      %v588 = vadd.f32 %v556, 1e-05
      %v589 = vadd.f32 %v557, 1e-05
      %v590 = vadd.f32 %v558, 1e-05
      %v591 = vadd.f32 %v559, 1e-05
      %v592 = vadd.f32 %v560, 1e-05
      %v593 = vadd.f32 %v561, 1e-05
      %v594 = vadd.f32 %v562, 1e-05
      %v595 = vadd.f32 %v563, 1e-05
      %v596 = vadd.f32 %v564, 1e-05
      %v597 = vadd.f32 %v565, 1e-05
      %v598 = vadd.f32 %v566, 1e-05
      %v599 = vadd.f32 %v567, 1e-05
      %v600 = vadd.f32 %v568, 1e-05
      %v601 = vadd.f32 %v569, 1e-05
      %v602 = vadd.f32 %v570, 1e-05
      %v603 = vadd.f32 %v571, 1e-05
      %v604 = vadd.f32 %v572, 1e-05
      %v605 = vadd.f32 %v573, 1e-05
      %v606 = vadd.f32 %v574, 1e-05
      %v607 = vadd.f32 %v575, 1e-05
      %v608 = vadd.f32 %v576, 1e-05
      %v609 = vadd.f32 %v577, 1e-05
      %v610 = vadd.f32 %v578, 1e-05
      %v611 = vadd.f32 %v579, 1e-05
      %v612 = vadd.f32 %v580, 1e-05
      %v613 = vadd.f32 %v581, 1e-05
      %v614 = vadd.f32 %v582, 1e-05
      %v615 = vadd.f32 %v583, 1e-05
      %v616 = vadd.f32 %v584, 1e-05
      %v617 = vadd.f32 %v585, 1e-05
      %v618 = vadd.f32 %v586, 1e-05
      %v619 = vadd.f32 %v587, 1e-05
      %v620 = vrsqrt.pop %v588
      %v621 = vmul.f32 %v620, %v588
      %v622 = vmul.f32 %v621, %v620
      %v623 = vmul.f32 0.5, %v622
      %v624 = vsub.f32 1.5, %v623
      %v625 = vmul.f32 %v620, %v624
      %vm626 = vweird.f32 %v588
      %vm627 = vweird.f32 %v620
      %vm628 = vmor %vm626, %vm627
      %v629 = vsel %vm628, %v620, %v625
      %v630 = vrsqrt.pop %v589
      %v631 = vmul.f32 %v630, %v589
      %v632 = vmul.f32 %v631, %v630
      %v633 = vmul.f32 0.5, %v632
      %v634 = vsub.f32 1.5, %v633
      %v635 = vmul.f32 %v630, %v634
      %vm636 = vweird.f32 %v589
      %vm637 = vweird.f32 %v630
      %vm638 = vmor %vm636, %vm637
      %v639 = vsel %vm638, %v630, %v635
      %v640 = vrsqrt.pop %v590
      %v641 = vmul.f32 %v640, %v590
      %v642 = vmul.f32 %v641, %v640
      %v643 = vmul.f32 0.5, %v642
      %v644 = vsub.f32 1.5, %v643
      %v645 = vmul.f32 %v640, %v644
      %vm646 = vweird.f32 %v590
      %vm647 = vweird.f32 %v640
      %vm648 = vmor %vm646, %vm647
      %v649 = vsel %vm648, %v640, %v645
      %v650 = vrsqrt.pop %v591
      %v651 = vmul.f32 %v650, %v591
      %v652 = vmul.f32 %v651, %v650
      %v653 = vmul.f32 0.5, %v652
      %v654 = vsub.f32 1.5, %v653
      %v655 = vmul.f32 %v650, %v654
      %vm656 = vweird.f32 %v591
      %vm657 = vweird.f32 %v650
      %vm658 = vmor %vm656, %vm657
      %v659 = vsel %vm658, %v650, %v655
      %v660 = vrsqrt.pop %v592
      %v661 = vmul.f32 %v660, %v592
      %v662 = vmul.f32 %v661, %v660
      %v663 = vmul.f32 0.5, %v662
      %v664 = vsub.f32 1.5, %v663
      %v665 = vmul.f32 %v660, %v664
      %vm666 = vweird.f32 %v592
      %vm667 = vweird.f32 %v660
      %vm668 = vmor %vm666, %vm667
      %v669 = vsel %vm668, %v660, %v665
      %v670 = vrsqrt.pop %v593
      %v671 = vmul.f32 %v670, %v593
      %v672 = vmul.f32 %v671, %v670
      %v673 = vmul.f32 0.5, %v672
      %v674 = vsub.f32 1.5, %v673
      %v675 = vmul.f32 %v670, %v674
      %vm676 = vweird.f32 %v593
      %vm677 = vweird.f32 %v670
      %vm678 = vmor %vm676, %vm677
      %v679 = vsel %vm678, %v670, %v675
      %v680 = vrsqrt.pop %v594
      %v681 = vmul.f32 %v680, %v594
      %v682 = vmul.f32 %v681, %v680
      %v683 = vmul.f32 0.5, %v682
      %v684 = vsub.f32 1.5, %v683
      %v685 = vmul.f32 %v680, %v684
      %vm686 = vweird.f32 %v594
      %vm687 = vweird.f32 %v680
      %vm688 = vmor %vm686, %vm687
      %v689 = vsel %vm688, %v680, %v685
      %v690 = vrsqrt.pop %v595
      %v691 = vmul.f32 %v690, %v595
      %v692 = vmul.f32 %v691, %v690
      %v693 = vmul.f32 0.5, %v692
      %v694 = vsub.f32 1.5, %v693
      %v695 = vmul.f32 %v690, %v694
      %vm696 = vweird.f32 %v595
      %vm697 = vweird.f32 %v690
      %vm698 = vmor %vm696, %vm697
      %v699 = vsel %vm698, %v690, %v695
      %v700 = vrsqrt.pop %v596
      %v701 = vmul.f32 %v700, %v596
      %v702 = vmul.f32 %v701, %v700
      %v703 = vmul.f32 0.5, %v702
      %v704 = vsub.f32 1.5, %v703
      %v705 = vmul.f32 %v700, %v704
      %vm706 = vweird.f32 %v596
      %vm707 = vweird.f32 %v700
      %vm708 = vmor %vm706, %vm707
      %v709 = vsel %vm708, %v700, %v705
      %v710 = vrsqrt.pop %v597
      %v711 = vmul.f32 %v710, %v597
      %v712 = vmul.f32 %v711, %v710
      %v713 = vmul.f32 0.5, %v712
      %v714 = vsub.f32 1.5, %v713
      %v715 = vmul.f32 %v710, %v714
      %vm716 = vweird.f32 %v597
      %vm717 = vweird.f32 %v710
      %vm718 = vmor %vm716, %vm717
      %v719 = vsel %vm718, %v710, %v715
      %v720 = vrsqrt.pop %v598
      %v721 = vmul.f32 %v720, %v598
      %v722 = vmul.f32 %v721, %v720
      %v723 = vmul.f32 0.5, %v722
      %v724 = vsub.f32 1.5, %v723
      %v725 = vmul.f32 %v720, %v724
      %vm726 = vweird.f32 %v598
      %vm727 = vweird.f32 %v720
      %vm728 = vmor %vm726, %vm727
      %v729 = vsel %vm728, %v720, %v725
      %v730 = vrsqrt.pop %v599
      %v731 = vmul.f32 %v730, %v599
      %v732 = vmul.f32 %v731, %v730
      %v733 = vmul.f32 0.5, %v732
      %v734 = vsub.f32 1.5, %v733
      %v735 = vmul.f32 %v730, %v734
      %vm736 = vweird.f32 %v599
      %vm737 = vweird.f32 %v730
      %vm738 = vmor %vm736, %vm737
      %v739 = vsel %vm738, %v730, %v735
      %v740 = vrsqrt.pop %v600
      %v741 = vmul.f32 %v740, %v600
      %v742 = vmul.f32 %v741, %v740
      %v743 = vmul.f32 0.5, %v742
      %v744 = vsub.f32 1.5, %v743
      %v745 = vmul.f32 %v740, %v744
      %vm746 = vweird.f32 %v600
      %vm747 = vweird.f32 %v740
      %vm748 = vmor %vm746, %vm747
      %v749 = vsel %vm748, %v740, %v745
      %v750 = vrsqrt.pop %v601
      %v751 = vmul.f32 %v750, %v601
      %v752 = vmul.f32 %v751, %v750
      %v753 = vmul.f32 0.5, %v752
      %v754 = vsub.f32 1.5, %v753
      %v755 = vmul.f32 %v750, %v754
      %vm756 = vweird.f32 %v601
      %vm757 = vweird.f32 %v750
      %vm758 = vmor %vm756, %vm757
      %v759 = vsel %vm758, %v750, %v755
      %v760 = vrsqrt.pop %v602
      %v761 = vmul.f32 %v760, %v602
      %v762 = vmul.f32 %v761, %v760
      %v763 = vmul.f32 0.5, %v762
      %v764 = vsub.f32 1.5, %v763
      %v765 = vmul.f32 %v760, %v764
      %vm766 = vweird.f32 %v602
      %vm767 = vweird.f32 %v760
      %vm768 = vmor %vm766, %vm767
      %v769 = vsel %vm768, %v760, %v765
      %v770 = vrsqrt.pop %v603
      %v771 = vmul.f32 %v770, %v603
      %v772 = vmul.f32 %v771, %v770
      %v773 = vmul.f32 0.5, %v772
      %v774 = vsub.f32 1.5, %v773
      %v775 = vmul.f32 %v770, %v774
      %vm776 = vweird.f32 %v603
      %vm777 = vweird.f32 %v770
      %vm778 = vmor %vm776, %vm777
      %v779 = vsel %vm778, %v770, %v775
      %v780 = vrsqrt.pop %v604
      %v781 = vmul.f32 %v780, %v604
      %v782 = vmul.f32 %v781, %v780
      %v783 = vmul.f32 0.5, %v782
      %v784 = vsub.f32 1.5, %v783
      %v785 = vmul.f32 %v780, %v784
      %vm786 = vweird.f32 %v604
      %vm787 = vweird.f32 %v780
      %vm788 = vmor %vm786, %vm787
      %v789 = vsel %vm788, %v780, %v785
      %v790 = vrsqrt.pop %v605
      %v791 = vmul.f32 %v790, %v605
      %v792 = vmul.f32 %v791, %v790
      %v793 = vmul.f32 0.5, %v792
      %v794 = vsub.f32 1.5, %v793
      %v795 = vmul.f32 %v790, %v794
      %vm796 = vweird.f32 %v605
      %vm797 = vweird.f32 %v790
      %vm798 = vmor %vm796, %vm797
      %v799 = vsel %vm798, %v790, %v795
      %v800 = vrsqrt.pop %v606
      %v801 = vmul.f32 %v800, %v606
      %v802 = vmul.f32 %v801, %v800
      %v803 = vmul.f32 0.5, %v802
      %v804 = vsub.f32 1.5, %v803
      %v805 = vmul.f32 %v800, %v804
      %vm806 = vweird.f32 %v606
      %vm807 = vweird.f32 %v800
      %vm808 = vmor %vm806, %vm807
      %v809 = vsel %vm808, %v800, %v805
      %v810 = vrsqrt.pop %v607
      %v811 = vmul.f32 %v810, %v607
      %v812 = vmul.f32 %v811, %v810
      %v813 = vmul.f32 0.5, %v812
      %v814 = vsub.f32 1.5, %v813
      %v815 = vmul.f32 %v810, %v814
      %vm816 = vweird.f32 %v607
      %vm817 = vweird.f32 %v810
      %vm818 = vmor %vm816, %vm817
      %v819 = vsel %vm818, %v810, %v815
      %v820 = vrsqrt.pop %v608
      %v821 = vmul.f32 %v820, %v608
      %v822 = vmul.f32 %v821, %v820
      %v823 = vmul.f32 0.5, %v822
      %v824 = vsub.f32 1.5, %v823
      %v825 = vmul.f32 %v820, %v824
      %vm826 = vweird.f32 %v608
      %vm827 = vweird.f32 %v820
      %vm828 = vmor %vm826, %vm827
      %v829 = vsel %vm828, %v820, %v825
      %v830 = vrsqrt.pop %v609
      %v831 = vmul.f32 %v830, %v609
      %v832 = vmul.f32 %v831, %v830
      %v833 = vmul.f32 0.5, %v832
      %v834 = vsub.f32 1.5, %v833
      %v835 = vmul.f32 %v830, %v834
      %vm836 = vweird.f32 %v609
      %vm837 = vweird.f32 %v830
      %vm838 = vmor %vm836, %vm837
      %v839 = vsel %vm838, %v830, %v835
      %v840 = vrsqrt.pop %v610
      %v841 = vmul.f32 %v840, %v610
      %v842 = vmul.f32 %v841, %v840
      %v843 = vmul.f32 0.5, %v842
      %v844 = vsub.f32 1.5, %v843
      %v845 = vmul.f32 %v840, %v844
      %vm846 = vweird.f32 %v610
      %vm847 = vweird.f32 %v840
      %vm848 = vmor %vm846, %vm847
      %v849 = vsel %vm848, %v840, %v845
      %v850 = vrsqrt.pop %v611
      %v851 = vmul.f32 %v850, %v611
      %v852 = vmul.f32 %v851, %v850
      %v853 = vmul.f32 0.5, %v852
      %v854 = vsub.f32 1.5, %v853
      %v855 = vmul.f32 %v850, %v854
      %vm856 = vweird.f32 %v611
      %vm857 = vweird.f32 %v850
      %vm858 = vmor %vm856, %vm857
      %v859 = vsel %vm858, %v850, %v855
      %v860 = vrsqrt.pop %v612
      %v861 = vmul.f32 %v860, %v612
      %v862 = vmul.f32 %v861, %v860
      %v863 = vmul.f32 0.5, %v862
      %v864 = vsub.f32 1.5, %v863
      %v865 = vmul.f32 %v860, %v864
      %vm866 = vweird.f32 %v612
      %vm867 = vweird.f32 %v860
      %vm868 = vmor %vm866, %vm867
      %v869 = vsel %vm868, %v860, %v865
      %v870 = vrsqrt.pop %v613
      %v871 = vmul.f32 %v870, %v613
      %v872 = vmul.f32 %v871, %v870
      %v873 = vmul.f32 0.5, %v872
      %v874 = vsub.f32 1.5, %v873
      %v875 = vmul.f32 %v870, %v874
      %vm876 = vweird.f32 %v613
      %vm877 = vweird.f32 %v870
      %vm878 = vmor %vm876, %vm877
      %v879 = vsel %vm878, %v870, %v875
      %v880 = vrsqrt.pop %v614
      %v881 = vmul.f32 %v880, %v614
      %v882 = vmul.f32 %v881, %v880
      %v883 = vmul.f32 0.5, %v882
      %v884 = vsub.f32 1.5, %v883
      %v885 = vmul.f32 %v880, %v884
      %vm886 = vweird.f32 %v614
      %vm887 = vweird.f32 %v880
      %vm888 = vmor %vm886, %vm887
      %v889 = vsel %vm888, %v880, %v885
      %v890 = vrsqrt.pop %v615
      %v891 = vmul.f32 %v890, %v615
      %v892 = vmul.f32 %v891, %v890
      %v893 = vmul.f32 0.5, %v892
      %v894 = vsub.f32 1.5, %v893
      %v895 = vmul.f32 %v890, %v894
      %vm896 = vweird.f32 %v615
      %vm897 = vweird.f32 %v890
      %vm898 = vmor %vm896, %vm897
      %v899 = vsel %vm898, %v890, %v895
      %v900 = vrsqrt.pop %v616
      %v901 = vmul.f32 %v900, %v616
      %v902 = vmul.f32 %v901, %v900
      %v903 = vmul.f32 0.5, %v902
      %v904 = vsub.f32 1.5, %v903
      %v905 = vmul.f32 %v900, %v904
      %vm906 = vweird.f32 %v616
      %vm907 = vweird.f32 %v900
      %vm908 = vmor %vm906, %vm907
      %v909 = vsel %vm908, %v900, %v905
      %v910 = vrsqrt.pop %v617
      %v911 = vmul.f32 %v910, %v617
      %v912 = vmul.f32 %v911, %v910
      %v913 = vmul.f32 0.5, %v912
      %v914 = vsub.f32 1.5, %v913
      %v915 = vmul.f32 %v910, %v914
      %vm916 = vweird.f32 %v617
      %vm917 = vweird.f32 %v910
      %vm918 = vmor %vm916, %vm917
      %v919 = vsel %vm918, %v910, %v915
      %v920 = vrsqrt.pop %v618
      %v921 = vmul.f32 %v920, %v618
      %v922 = vmul.f32 %v921, %v920
      %v923 = vmul.f32 0.5, %v922
      %v924 = vsub.f32 1.5, %v923
      %v925 = vmul.f32 %v920, %v924
      %vm926 = vweird.f32 %v618
      %vm927 = vweird.f32 %v920
      %vm928 = vmor %vm926, %vm927
      %v929 = vsel %vm928, %v920, %v925
      %v930 = vrsqrt.pop %v619
      %v931 = vmul.f32 %v930, %v619
      %v932 = vmul.f32 %v931, %v930
      %v933 = vmul.f32 0.5, %v932
      %v934 = vsub.f32 1.5, %v933
      %v935 = vmul.f32 %v930, %v934
      %vm936 = vweird.f32 %v619
      %vm937 = vweird.f32 %v930
      %vm938 = vmor %vm936, %vm937
      %v939 = vsel %vm938, %v930, %v935
      %v940 = vmul.f32 %v396, %v629
      %v941 = vmul.f32 %v397, %v639
      %v942 = vmul.f32 %v398, %v649
      %v943 = vmul.f32 %v399, %v659
      %v944 = vmul.f32 %v400, %v669
      %v945 = vmul.f32 %v401, %v679
      %v946 = vmul.f32 %v402, %v689
      %v947 = vmul.f32 %v403, %v699
      %v948 = vmul.f32 %v404, %v709
      %v949 = vmul.f32 %v405, %v719
      %v950 = vmul.f32 %v406, %v729
      %v951 = vmul.f32 %v407, %v739
      %v952 = vmul.f32 %v408, %v749
      %v953 = vmul.f32 %v409, %v759
      %v954 = vmul.f32 %v410, %v769
      %v955 = vmul.f32 %v411, %v779
      %v956 = vmul.f32 %v412, %v789
      %v957 = vmul.f32 %v413, %v799
      %v958 = vmul.f32 %v414, %v809
      %v959 = vmul.f32 %v415, %v819
      %v960 = vmul.f32 %v416, %v829
      %v961 = vmul.f32 %v417, %v839
      %v962 = vmul.f32 %v418, %v849
      %v963 = vmul.f32 %v419, %v859
      %v964 = vmul.f32 %v420, %v869
      %v965 = vmul.f32 %v421, %v879
      %v966 = vmul.f32 %v422, %v889
      %v967 = vmul.f32 %v423, %v899
      %v968 = vmul.f32 %v424, %v909
      %v969 = vmul.f32 %v425, %v919
      %v970 = vmul.f32 %v426, %v929
      %v971 = vmul.f32 %v427, %v939
      %v972 = vld [vmem:[%s1] sm:$0x1]
      %v974 = vperm.slane %v972, 0
      %v976 = vmul.f32 %v940, %v974
      %v977 = vmul.f32 %v941, %v974
      %v978 = vmul.f32 %v942, %v974
      %v979 = vmul.f32 %v943, %v974
      %v980 = vmul.f32 %v944, %v974
      %v981 = vmul.f32 %v945, %v974
      %v982 = vmul.f32 %v946, %v974
      %v983 = vmul.f32 %v947, %v974
      %v984 = vmul.f32 %v948, %v974
      %v985 = vmul.f32 %v949, %v974
      %v986 = vmul.f32 %v950, %v974
      %v987 = vmul.f32 %v951, %v974
      %v988 = vmul.f32 %v952, %v974
      %v989 = vmul.f32 %v953, %v974
      %v990 = vmul.f32 %v954, %v974
      %v991 = vmul.f32 %v955, %v974
      %v992 = vmul.f32 %v956, %v974
      %v993 = vmul.f32 %v957, %v974
      %v994 = vmul.f32 %v958, %v974
      %v995 = vmul.f32 %v959, %v974
      %v996 = vmul.f32 %v960, %v974
      %v997 = vmul.f32 %v961, %v974
      %v998 = vmul.f32 %v962, %v974
      %v999 = vmul.f32 %v963, %v974
      %v1000 = vmul.f32 %v964, %v974
      %v1001 = vmul.f32 %v965, %v974
      %v1002 = vmul.f32 %v966, %v974
      %v1003 = vmul.f32 %v967, %v974
      %v1004 = vmul.f32 %v968, %v974
      %v1005 = vmul.f32 %v969, %v974
      %v1006 = vmul.f32 %v970, %v974
      %v1007 = vmul.f32 %v971, %v974
      %v1008 = vld [vmem:[%s2] sm:$0x1]
      %v1010 = vperm.slane %v1008, 0
      %v1012 = vadd.f32 %v976, %v1010
      %v1013 = vadd.f32 %v977, %v1010
      %v1014 = vadd.f32 %v978, %v1010
      %v1015 = vadd.f32 %v979, %v1010
      %v1016 = vadd.f32 %v980, %v1010
      %v1017 = vadd.f32 %v981, %v1010
      %v1018 = vadd.f32 %v982, %v1010
      %v1019 = vadd.f32 %v983, %v1010
      %v1020 = vadd.f32 %v984, %v1010
      %v1021 = vadd.f32 %v985, %v1010
      %v1022 = vadd.f32 %v986, %v1010
      %v1023 = vadd.f32 %v987, %v1010
      %v1024 = vadd.f32 %v988, %v1010
      %v1025 = vadd.f32 %v989, %v1010
      %v1026 = vadd.f32 %v990, %v1010
      %v1027 = vadd.f32 %v991, %v1010
      %v1028 = vadd.f32 %v992, %v1010
      %v1029 = vadd.f32 %v993, %v1010
      %v1030 = vadd.f32 %v994, %v1010
      %v1031 = vadd.f32 %v995, %v1010
      %v1032 = vadd.f32 %v996, %v1010
      %v1033 = vadd.f32 %v997, %v1010
      %v1034 = vadd.f32 %v998, %v1010
      %v1035 = vadd.f32 %v999, %v1010
      %v1036 = vadd.f32 %v1000, %v1010
      %v1037 = vadd.f32 %v1001, %v1010
      %v1038 = vadd.f32 %v1002, %v1010
      %v1039 = vadd.f32 %v1003, %v1010
      %v1040 = vadd.f32 %v1004, %v1010
      %v1041 = vadd.f32 %v1005, %v1010
      %v1042 = vadd.f32 %v1006, %v1010
      %v1043 = vadd.f32 %v1007, %v1010
      %v1044 = vld [vmem:[%s3] sm:$0xff]
      %v1045 = vld [vmem:[%s3 + $0x8] sm:$0xff]
      %v1046 = vld [vmem:[%s3 + $0x10] sm:$0xff]
      %v1047 = vld [vmem:[%s3 + $0x18] sm:$0xff]
      %v1048 = vld [vmem:[%s4] sm:$0x1]
      %v1050 = vperm.slane %v1048, 0
      %v1053 = vsel %vm260, %v1012, 0
      %v1056 = vsel %vm260, %v1013, 0
      %v1059 = vsel %vm260, %v1014, 0
      %v1062 = vsel %vm260, %v1015, 0
      %v1065 = vsel %vm260, %v1016, 0
      %v1068 = vsel %vm260, %v1017, 0
      %v1071 = vsel %vm260, %v1018, 0
      %v1074 = vsel %vm260, %v1019, 0
      %v1077 = vsel %vm260, %v1020, 0
      %v1080 = vsel %vm260, %v1021, 0
      %v1083 = vsel %vm260, %v1022, 0
      %v1086 = vsel %vm260, %v1023, 0
      %v1089 = vsel %vm260, %v1024, 0
      %v1092 = vsel %vm260, %v1025, 0
      %v1095 = vsel %vm260, %v1026, 0
      %v1098 = vsel %vm260, %v1027, 0
      %v1101 = vsel %vm260, %v1028, 0
      %v1104 = vsel %vm260, %v1029, 0
      %v1107 = vsel %vm260, %v1030, 0
      %v1110 = vsel %vm260, %v1031, 0
      %v1113 = vsel %vm260, %v1032, 0
      %v1116 = vsel %vm260, %v1033, 0
      %v1119 = vsel %vm260, %v1034, 0
      %v1122 = vsel %vm260, %v1035, 0
      %v1125 = vsel %vm260, %v1036, 0
      %v1128 = vsel %vm260, %v1037, 0
      %v1131 = vsel %vm260, %v1038, 0
      %v1134 = vsel %vm260, %v1039, 0
      %v1137 = vsel %vm260, %v1040, 0
      %v1140 = vsel %vm260, %v1041, 0
      %v1143 = vsel %vm260, %v1042, 0
      %v1146 = vsel %vm260, %v1043, 0
      %1148 = vmatpush.msra.mxu0 0.0
      %1149 = vmatpush.msra.mxu0 0.0
      %1150 = vmatpush.msra.mxu0 0.0
      %1151 = vmatpush.msra.mxu0 0.0
      %1152 = vmatpush.msra.mxu0 0.0
      %1153 = vmatpush.msra.mxu0 0.0
      %1154 = vmatpush.msra.mxu0 0.0
      %1155 = vmatpush.msra.mxu0 0.0
      %1156 = vmatpush.msra.mxu0 0.0
      %1157 = vmatpush.msra.mxu0 0.0
      %1158 = vmatpush.msra.mxu0 0.0
      %1159 = vmatpush.msra.mxu0 0.0
      %1160 = vmatpush.msra.mxu0 %v1047
      %1161 = vmatpush.msra.mxu0 %v1046
      %1162 = vmatpush.msra.mxu0 %v1045
      %1163 = vmatpush.msra.mxu0 %v1044
      %1164 = vmatmul.f32.gmra.mxu0 %v1053
      %v1165 = vpop.f32.mrf.mxu0
      %v1166 = vadd.f32 %v1050, %v1165
      %1167 = vmatmul.f32.gmra.mxu0 %v1056
      %v1168 = vpop.f32.mrf.mxu0
      %v1169 = vadd.f32 %v1050, %v1168
      %1170 = vmatmul.f32.gmra.mxu0 %v1059
      %v1171 = vpop.f32.mrf.mxu0
      %v1172 = vadd.f32 %v1050, %v1171
      %1173 = vmatmul.f32.gmra.mxu0 %v1062
      %v1174 = vpop.f32.mrf.mxu0
      %v1175 = vadd.f32 %v1050, %v1174
      %1176 = vmatmul.f32.gmra.mxu0 %v1065
      %v1177 = vpop.f32.mrf.mxu0
      %v1178 = vadd.f32 %v1050, %v1177
      %1179 = vmatmul.f32.gmra.mxu0 %v1068
      %v1180 = vpop.f32.mrf.mxu0
      %v1181 = vadd.f32 %v1050, %v1180
      %1182 = vmatmul.f32.gmra.mxu0 %v1071
      %v1183 = vpop.f32.mrf.mxu0
      %v1184 = vadd.f32 %v1050, %v1183
      %1185 = vmatmul.f32.gmra.mxu0 %v1074
      %v1186 = vpop.f32.mrf.mxu0
      %v1187 = vadd.f32 %v1050, %v1186
      %1188 = vmatmul.f32.gmra.mxu0 %v1077
      %v1189 = vpop.f32.mrf.mxu0
      %v1190 = vadd.f32 %v1050, %v1189
      %1191 = vmatmul.f32.gmra.mxu0 %v1080
      %v1192 = vpop.f32.mrf.mxu0
      %v1193 = vadd.f32 %v1050, %v1192
      %1194 = vmatmul.f32.gmra.mxu0 %v1083
      %v1195 = vpop.f32.mrf.mxu0
      %v1196 = vadd.f32 %v1050, %v1195
      %1197 = vmatmul.f32.gmra.mxu0 %v1086
      %v1198 = vpop.f32.mrf.mxu0
      %v1199 = vadd.f32 %v1050, %v1198
      %1200 = vmatmul.f32.gmra.mxu0 %v1089
      %v1201 = vpop.f32.mrf.mxu0
      %v1202 = vadd.f32 %v1050, %v1201
      %1203 = vmatmul.f32.gmra.mxu0 %v1092
      %v1204 = vpop.f32.mrf.mxu0
      %v1205 = vadd.f32 %v1050, %v1204
      %1206 = vmatmul.f32.gmra.mxu0 %v1095
      %v1207 = vpop.f32.mrf.mxu0
      %v1208 = vadd.f32 %v1050, %v1207
      %1209 = vmatmul.f32.gmra.mxu0 %v1098
      %v1210 = vpop.f32.mrf.mxu0
      %v1211 = vadd.f32 %v1050, %v1210
      %1212 = vmatmul.f32.gmra.mxu0 %v1101
      %v1213 = vpop.f32.mrf.mxu0
      %v1214 = vadd.f32 %v1050, %v1213
      %1215 = vmatmul.f32.gmra.mxu0 %v1104
      %v1216 = vpop.f32.mrf.mxu0
      %v1217 = vadd.f32 %v1050, %v1216
      %1218 = vmatmul.f32.gmra.mxu0 %v1107
      %v1219 = vpop.f32.mrf.mxu0
      %v1220 = vadd.f32 %v1050, %v1219
      %1221 = vmatmul.f32.gmra.mxu0 %v1110
      %v1222 = vpop.f32.mrf.mxu0
      %v1223 = vadd.f32 %v1050, %v1222
      %1224 = vmatmul.f32.gmra.mxu0 %v1113
      %v1225 = vpop.f32.mrf.mxu0
      %v1226 = vadd.f32 %v1050, %v1225
      %1227 = vmatmul.f32.gmra.mxu0 %v1116
      %v1228 = vpop.f32.mrf.mxu0
      %v1229 = vadd.f32 %v1050, %v1228
      %1230 = vmatmul.f32.gmra.mxu0 %v1119
      %v1231 = vpop.f32.mrf.mxu0
      %v1232 = vadd.f32 %v1050, %v1231
      %1233 = vmatmul.f32.gmra.mxu0 %v1122
      %v1234 = vpop.f32.mrf.mxu0
      %v1235 = vadd.f32 %v1050, %v1234
      %1236 = vmatmul.f32.gmra.mxu0 %v1125
      %v1237 = vpop.f32.mrf.mxu0
      %v1238 = vadd.f32 %v1050, %v1237
      %1239 = vmatmul.f32.gmra.mxu0 %v1128
      %v1240 = vpop.f32.mrf.mxu0
      %v1241 = vadd.f32 %v1050, %v1240
      %1242 = vmatmul.f32.gmra.mxu0 %v1131
      %v1243 = vpop.f32.mrf.mxu0
      %v1244 = vadd.f32 %v1050, %v1243
      %1245 = vmatmul.f32.gmra.mxu0 %v1134
      %v1246 = vpop.f32.mrf.mxu0
      %v1247 = vadd.f32 %v1050, %v1246
      %1248 = vmatmul.f32.gmra.mxu0 %v1137
      %v1249 = vpop.f32.mrf.mxu0
      %v1250 = vadd.f32 %v1050, %v1249
      %1251 = vmatmul.f32.gmra.mxu0 %v1140
      %v1252 = vpop.f32.mrf.mxu0
      %v1253 = vadd.f32 %v1050, %v1252
      %1254 = vmatmul.f32.gmra.mxu0 %v1143
      %v1255 = vpop.f32.mrf.mxu0
      %v1256 = vadd.f32 %v1050, %v1255
      %1257 = vmatmul.f32.gmra.mxu0 %v1146
      %v1258 = vpop.f32.mrf.mxu0
      %v1259 = vadd.f32 %v1050, %v1258
      %1260 = vdwg.mxu0
      %1261 = vst [vmem:[%s226] sm:$0xff] %v1166
      %1262 = vst [vmem:[%s226 + $0x8] sm:$0xff] %v1169
      %1263 = vst [vmem:[%s226 + $0x10] sm:$0xff] %v1172
      %1264 = vst [vmem:[%s226 + $0x18] sm:$0xff] %v1175
      %1265 = vst [vmem:[%s226 + $0x20] sm:$0xff] %v1178
      %1266 = vst [vmem:[%s226 + $0x28] sm:$0xff] %v1181
      %1267 = vst [vmem:[%s226 + $0x30] sm:$0xff] %v1184
      %1268 = vst [vmem:[%s226 + $0x38] sm:$0xff] %v1187
      %1269 = vst [vmem:[%s226 + $0x40] sm:$0xff] %v1190
      %1270 = vst [vmem:[%s226 + $0x48] sm:$0xff] %v1193
      %1271 = vst [vmem:[%s226 + $0x50] sm:$0xff] %v1196
      %1272 = vst [vmem:[%s226 + $0x58] sm:$0xff] %v1199
      %1273 = vst [vmem:[%s226 + $0x60] sm:$0xff] %v1202
      %1274 = vst [vmem:[%s226 + $0x68] sm:$0xff] %v1205
      %1275 = vst [vmem:[%s226 + $0x70] sm:$0xff] %v1208
      %1276 = vst [vmem:[%s226 + $0x78] sm:$0xff] %v1211
      %1277 = vst [vmem:[%s226 + $0x80] sm:$0xff] %v1214
      %1278 = vst [vmem:[%s226 + $0x88] sm:$0xff] %v1217
      %1279 = vst [vmem:[%s226 + $0x90] sm:$0xff] %v1220
      %1280 = vst [vmem:[%s226 + $0x98] sm:$0xff] %v1223
      %1281 = vst [vmem:[%s226 + $0xa0] sm:$0xff] %v1226
      %1282 = vst [vmem:[%s226 + $0xa8] sm:$0xff] %v1229
      %1283 = vst [vmem:[%s226 + $0xb0] sm:$0xff] %v1232
      %1284 = vst [vmem:[%s226 + $0xb8] sm:$0xff] %v1235
      %1285 = vst [vmem:[%s226 + $0xc0] sm:$0xff] %v1238
      %1286 = vst [vmem:[%s226 + $0xc8] sm:$0xff] %v1241
      %1287 = vst [vmem:[%s226 + $0xd0] sm:$0xff] %v1244
      %1288 = vst [vmem:[%s226 + $0xd8] sm:$0xff] %v1247
      %1289 = vst [vmem:[%s226 + $0xe0] sm:$0xff] %v1250
      %1290 = vst [vmem:[%s226 + $0xe8] sm:$0xff] %v1253
      %1291 = vst [vmem:[%s226 + $0xf0] sm:$0xff] %v1256
      %1292 = vst [vmem:[%s226 + $0xf8] sm:$0xff] %v1259
      %s1293 = smul.u32 32, %s16
      %p1294 = scmp.lt.s32.totalorder %s1293, 63
      %s1295 = scalar_select %p1294, %s1293, 63
      %s1296 = smul.addr %s1295, 8
      %s1297 = scalar_lea.vmem %s5, %s1296
      // Predicated region
      $region41: #{_lambda_.9} parent=39 // pred_check
        %p1298 = pneg %p144
      $region42: #{_lambda_.9} parent=39 // pred_check_branch
        %1300 = sbr.rel (%p1298) target = $region44
      $region43: #{_lambda_.9} parent=39 // pred_region
        %s1301 = smul.u32 32, %s16
      $region44: #{_lambda_.9} parent=39 // pred_fallthru
        _
    $region40: #{_lambda_.9} parent=5 // pred_fallthru
      _
    %p1302 = scmp.le.s32.totalorder 2, %s11
    // Predicated region
    $region45: #{_lambda_.9} parent=5 // pred_check
      %p1303 = pneg %p1302
    $region46: #{_lambda_.9} parent=5 // pred_check_branch
      %1305 = sbr.rel (%p1303) target = $region48
    $region47: #{_lambda_.9} parent=5 // pred_region
      %s1306 = ssub.s32 %s11, 2
      // Predicated region
      $region49: #{_lambda_.9} parent=47 // pred_check
        %p1307 = pneg %p150
      $region50: #{_lambda_.9} parent=47 // pred_check_branch
        %1309 = sbr.rel (%p1307) target = $region52
      $region51: #{_lambda_.9} parent=47 // pred_region
        %s1310 = smul.u32 32, %s17
        %p1311 = scmp.lt.s32.totalorder %s1310, 63
        %s1312 = scalar_select %p1311, %s1310, 63
        %s1313 = smul.addr %s1312, 8
        %s1314 = scalar_lea.vmem %s5, %s1313
      $region52: #{_lambda_.9} parent=47 // pred_fallthru
        _
    $region48: #{_lambda_.9} parent=5 // pred_fallthru
      _
  $region6: #{_lambda_.9} parent=0 // loop_footer
    %s15 = sadd.s32 1, %s11
  $region7: #{_lambda_.9} parent=0 // loop_footer_branch
    %10 = sbr.rel target = $region3
  $region8: #{_lambda_.9} parent=0 // loop_exit
    _

// kernel: _lambda_.11
$region0: #{_lambda_.11}
  #allocation0 [shape = 'u32[]', space=smem, size = 0x4, offset = 0x4, fixed_abs, tag = 'smem constant byte address 0x4 - core index']
  #allocation1 [shape = 'u32[72,128]{1,0:T(1,128)}', space=vmem, size = 0x9000, scoped, tag = 'internal scratch']
  %s0 = inlined_call_operand.vmem [shape: f32[512,128], index: 0, kind: input, shape index: {}]
  %s1 = inlined_call_operand.vmem [shape: f32[128,32], index: 1, kind: input, shape index: {}]
  %s2 = inlined_call_operand.vmem [shape: f32[1,32], index: 2, kind: input, shape index: {}]
  %s3 = inlined_call_operand.vmem [shape: f32[512,32], index: 3, kind: input, shape index: {}]
  %s4 = inlined_call_operand.vmem [shape: f32[512,32], index: 4, kind: output, shape index: {}]
  %s5 = sld [smem:[#allocation0]]
  $region49: #{_lambda_.11} parent=0
    _
  %s7 = ssub.s32 1, %s5
  %s8 = scalar_select 0, %s7, %s5
  loop: start=0, step=1, limit=4
  $region2: #{_lambda_.11} parent=0 // loop_pre_header
    _
  $region3: #{_lambda_.11} parent=0 // loop_header
    %s10 = sphi 0, %s14
    %p11 = scmp.ge.s32.totalorder %s10, 4
    %s20 = sphi 0, %s22
    %s23 = sphi 0, %s20
    %s24 = sphi 0, %s23
    %s40 = sphi 0, %s24
    %s44 = sphi 0, %s44
    %s46 = sphi 0, %s44
    %s47 = sphi 0, %s46
    %s61 = sphi 0, %s47
    %s65 = sphi 0, %s65
    %s67 = sphi 0, %s65
    %s68 = sphi 0, %s67
    %s82 = sphi 0, %s68
    %s88 = sphi 0, %s90
    %s91 = sphi 0, %s88
    %s92 = sphi 0, %s91
    %s108 = sphi 0, %s92
    %s114 = sphi 0, %s116
    %s117 = sphi 0, %s114
    %s118 = sphi 0, %s117
    %s134 = sphi 0, %s118
  $region4: #{_lambda_.11} parent=0 // loop_header_branch
    %13 = sbr.rel (%p11) target = $region8
  $region5: #{_lambda_.11} parent=0 // loop_body
    %s15 = ssub.s32 %s10, 1
    %s16 = ssub.s32 %s10, 2
    %s17 = sadd.s32 %s10, 1
    %s18 = ssub.s32 %s10, %s17
    %p19 = scmp.eq.s32.totalorder %s18, 0
    %s21 = sadd.s32 %s20, 1
    %s22 = scalar_select %p19, %s20, %s21
    %p25 = pneg %p19
    %p26 = scmp.eq.s32.totalorder %s10, 1
    %p27 = por %p25, %p26
    %p28 = scmp.ne.s32.totalorder %s20, %s23
    %p29 = scmp.eq.s32.totalorder %s10, 0
    %p30 = por %p28, %p29
    %p31 = scmp.ne.s32.totalorder %s20, %s23
    %p32 = scmp.eq.s32.totalorder %s15, 1
    %p33 = por %p31, %p32
    %p34 = scmp.ne.s32.totalorder %s23, %s24
    %p35 = scmp.eq.s32.totalorder %s15, 0
    %p36 = por %p34, %p35
    %p37 = scmp.ne.s32.totalorder %s23, %s24
    %p38 = scmp.eq.s32.totalorder %s16, 1
    %p39 = por %p37, %p38
    %p41 = scmp.ne.s32.totalorder %s24, %s40
    %p42 = scmp.eq.s32.totalorder %s16, 0
    %p43 = por %p41, %p42
    %s45 = sadd.s32 %s44, 1
    %p48 = scmp.eq.s32.totalorder %s10, 1
    %p49 = scmp.ne.s32.totalorder %s44, %s46
    %p50 = scmp.eq.s32.totalorder %s10, 0
    %p51 = por %p49, %p50
    %p52 = scmp.ne.s32.totalorder %s44, %s46
    %p53 = scmp.eq.s32.totalorder %s15, 1
    %p54 = por %p52, %p53
    %p55 = scmp.ne.s32.totalorder %s46, %s47
    %p56 = scmp.eq.s32.totalorder %s15, 0
    %p57 = por %p55, %p56
    %p58 = scmp.ne.s32.totalorder %s46, %s47
    %p59 = scmp.eq.s32.totalorder %s16, 1
    %p60 = por %p58, %p59
    %p62 = scmp.ne.s32.totalorder %s47, %s61
    %p63 = scmp.eq.s32.totalorder %s16, 0
    %p64 = por %p62, %p63
    %s66 = sadd.s32 %s65, 1
    %p69 = scmp.eq.s32.totalorder %s10, 1
    %p70 = scmp.ne.s32.totalorder %s65, %s67
    %p71 = scmp.eq.s32.totalorder %s10, 0
    %p72 = por %p70, %p71
    %p73 = scmp.ne.s32.totalorder %s65, %s67
    %p74 = scmp.eq.s32.totalorder %s15, 1
    %p75 = por %p73, %p74
    %p76 = scmp.ne.s32.totalorder %s67, %s68
    %p77 = scmp.eq.s32.totalorder %s15, 0
    %p78 = por %p76, %p77
    %p79 = scmp.ne.s32.totalorder %s67, %s68
    %p80 = scmp.eq.s32.totalorder %s16, 1
    %p81 = por %p79, %p80
    %p83 = scmp.ne.s32.totalorder %s68, %s82
    %p84 = scmp.eq.s32.totalorder %s16, 0
    %p85 = por %p83, %p84
    %s86 = ssub.s32 %s10, %s17
    %p87 = scmp.eq.s32.totalorder %s86, 0
    %s89 = sadd.s32 %s88, 1
    %s90 = scalar_select %p87, %s88, %s89
    %p93 = pneg %p87
    %p94 = scmp.eq.s32.totalorder %s10, 1
    %p95 = por %p93, %p94
    %p96 = scmp.ne.s32.totalorder %s88, %s91
    %p97 = scmp.eq.s32.totalorder %s10, 0
    %p98 = por %p96, %p97
    %p99 = scmp.ne.s32.totalorder %s88, %s91
    %p100 = scmp.eq.s32.totalorder %s15, 1
    %p101 = por %p99, %p100
    %p102 = scmp.ne.s32.totalorder %s91, %s92
    %p103 = scmp.eq.s32.totalorder %s15, 0
    %p104 = por %p102, %p103
    %p105 = scmp.ne.s32.totalorder %s91, %s92
    %p106 = scmp.eq.s32.totalorder %s16, 1
    %p107 = por %p105, %p106
    %p109 = scmp.ne.s32.totalorder %s92, %s108
    %p110 = scmp.eq.s32.totalorder %s16, 0
    %p111 = por %p109, %p110
    %s112 = ssub.s32 %s10, %s17
    %p113 = scmp.eq.s32.totalorder %s112, 0
    %s115 = sadd.s32 %s114, 1
    %s116 = scalar_select %p113, %s114, %s115
    %p119 = pneg %p113
    %p120 = scmp.eq.s32.totalorder %s10, 1
    %p121 = por %p119, %p120
    %p122 = scmp.ne.s32.totalorder %s114, %s117
    %p123 = scmp.eq.s32.totalorder %s10, 0
    %p124 = por %p122, %p123
    %p125 = scmp.ne.s32.totalorder %s114, %s117
    %p126 = scmp.eq.s32.totalorder %s15, 1
    %p127 = por %p125, %p126
    %p128 = scmp.ne.s32.totalorder %s117, %s118
    %p129 = scmp.eq.s32.totalorder %s15, 0
    %p130 = por %p128, %p129
    %p131 = scmp.ne.s32.totalorder %s117, %s118
    %p132 = scmp.eq.s32.totalorder %s16, 1
    %p133 = por %p131, %p132
    %p135 = scmp.ne.s32.totalorder %s118, %s134
    %p136 = scmp.eq.s32.totalorder %s16, 0
    %p137 = por %p135, %p136
    %p138 = scmp.le.s32.totalorder 1, %s10
    %p139 = scmp.lt.s32.totalorder %s10, 3
    %p140 = pnand %p138, %p139
    %p141 = pneg %p140
    // Predicated region
    $region9: #{_lambda_.11} parent=5 // pred_check
      _
    $region10: #{_lambda_.11} parent=5 // pred_check_branch
      %143 = sbr.rel (%p140) target = $region12
    $region11: #{_lambda_.11} parent=5 // pred_region
      %s144 = ssub.s32 %s10, 1
      // Predicated region
      $region13: #{_lambda_.11} parent=11 // pred_check
        %p145 = pneg %p57
      $region14: #{_lambda_.11} parent=11 // pred_check_branch
        %147 = sbr.rel (%p145) target = $region16
      $region15: #{_lambda_.11} parent=11 // pred_region
        _
      $region16: #{_lambda_.11} parent=11 // pred_fallthru
        _
      // Predicated region
      $region17: #{_lambda_.11} parent=11 // pred_check
        %p148 = pneg %p78
      $region18: #{_lambda_.11} parent=11 // pred_check_branch
        %150 = sbr.rel (%p148) target = $region20
      $region19: #{_lambda_.11} parent=11 // pred_region
        _
      $region20: #{_lambda_.11} parent=11 // pred_fallthru
        _
    $region12: #{_lambda_.11} parent=5 // pred_fallthru
      _
    %p151 = scmp.lt.s32.totalorder %s10, 2
    // Predicated region
    $region21: #{_lambda_.11} parent=5 // pred_check
      %p152 = pneg %p151
    $region22: #{_lambda_.11} parent=5 // pred_check_branch
      %154 = sbr.rel (%p152) target = $region24
    $region23: #{_lambda_.11} parent=5 // pred_region
      // Predicated region
      $region25: #{_lambda_.11} parent=23 // pred_check
        %p155 = pneg %p30
      $region26: #{_lambda_.11} parent=23 // pred_check_branch
        %157 = sbr.rel (%p155) target = $region28
      $region27: #{_lambda_.11} parent=23 // pred_region
        %s158 = smul.u32 32, %s10
        %p159 = scmp.lt.s32.totalorder %s158, 63
        %s160 = scalar_select %p159, %s158, 63
        %s161 = smul.addr %s160, 8
        %s162 = scalar_lea.vmem %s0, %s161
        %s163 = smul.u32 32, %s10
      $region28: #{_lambda_.11} parent=23 // pred_fallthru
        _
      // Predicated region
      $region29: #{_lambda_.11} parent=23 // pred_check
        %p164 = pneg %p98
      $region30: #{_lambda_.11} parent=23 // pred_check_branch
        %166 = sbr.rel (%p164) target = $region32
      $region31: #{_lambda_.11} parent=23 // pred_region
        %s167 = smul.u32 32, %s10
        %p168 = scmp.lt.s32.totalorder %s167, 63
        %s169 = scalar_select %p168, %s167, 63
        %s170 = smul.addr %s169, 8
        %s171 = scalar_lea.vmem %s3, %s170
        %s172 = smul.u32 32, %s10
      $region32: #{_lambda_.11} parent=23 // pred_fallthru
        _
    $region24: #{_lambda_.11} parent=5 // pred_fallthru
      _
    %p173 = scmp.le.s32.totalorder 1, %s10
    %p174 = scmp.lt.s32.totalorder %s10, 3
    %p175 = pnand %p173, %p174
    %p176 = pneg %p175
    // Predicated region
    $region33: #{_lambda_.11} parent=5 // pred_check
      _
    $region34: #{_lambda_.11} parent=5 // pred_check_branch
      %178 = sbr.rel (%p175) target = $region36
    $region35: #{_lambda_.11} parent=5 // pred_region
      %s179 = ssub.s32 %s10, 1
      %s180 = smul.u32 32, %s15
      %p181 = scmp.lt.s32.totalorder %s180, 63
      %s182 = scalar_select %p181, %s180, 63
      %s183 = smul.addr %s182, 8
      %s184 = scalar_lea.vmem %s0, %s183
      %p185 = pneg %p36
      %p186 = pneg %p33
      %p187 = pneg %p57
      %p188 = pneg %p54
      %p189 = pneg %p78
      %p190 = pneg %p75
      %s191 = smul.u32 32, %s15
      %p192 = scmp.lt.s32.totalorder %s191, 63
      %s193 = scalar_select %p192, %s191, 63
      %s194 = smul.addr %s193, 8
      %s195 = scalar_lea.vmem %s3, %s194
      %p196 = pneg %p104
      %p197 = pneg %p101
      %p198 = pneg %p130
      %p199 = pneg %p127
      %s200 = smul.u32 32, %s15
      %p201 = scmp.lt.s32.totalorder %s200, 63
      %s202 = scalar_select %p201, %s200, 63
      %s203 = smul.addr %s202, 8
      %s204 = scalar_lea.vmem %s4, %s203
      %s205 = smul.u32 32, %s15
      %p206 = scmp.lt.s32.totalorder %s205, 63
      %s207 = scalar_select %p206, %s205, 63
      %s208 = smul.addr %s207, 8
      %s209 = scalar_lea.vmem %s0, %s208
      %s210 = smul.u32 32, %s15
      %s211 = smul.u32 32, %s15
      %p212 = scmp.lt.s32.totalorder %s211, 63
      %s213 = scalar_select %p212, %s211, 63
      %s214 = smul.addr %s213, 8
      %s215 = scalar_lea.vmem %s3, %s214
      %s216 = smul.u32 32, %s15
      %s217 = smul.u32 32, %s15
      %p218 = scmp.lt.s32.totalorder %s217, 63
      %s219 = scalar_select %p218, %s217, 63
      %s220 = smul.addr %s219, 8
      %s221 = scalar_lea.vmem %s4, %s220
      %s222 = smul.u32 32, %s15
      %v223 = vld [vmem:[%s209] sm:$0xff]
      %v224 = vld [vmem:[%s209 + $0x8] sm:$0xff]
      %v225 = vld [vmem:[%s209 + $0x10] sm:$0xff]
      %v226 = vld [vmem:[%s209 + $0x18] sm:$0xff]
      %v227 = vld [vmem:[%s209 + $0x20] sm:$0xff]
      %v228 = vld [vmem:[%s209 + $0x28] sm:$0xff]
      %v229 = vld [vmem:[%s209 + $0x30] sm:$0xff]
      %v230 = vld [vmem:[%s209 + $0x38] sm:$0xff]
      %v231 = vld [vmem:[%s209 + $0x40] sm:$0xff]
      %v232 = vld [vmem:[%s209 + $0x48] sm:$0xff]
      %v233 = vld [vmem:[%s209 + $0x50] sm:$0xff]
      %v234 = vld [vmem:[%s209 + $0x58] sm:$0xff]
      %v235 = vld [vmem:[%s209 + $0x60] sm:$0xff]
      %v236 = vld [vmem:[%s209 + $0x68] sm:$0xff]
      %v237 = vld [vmem:[%s209 + $0x70] sm:$0xff]
      %v238 = vld [vmem:[%s209 + $0x78] sm:$0xff]
      %v239 = vld [vmem:[%s209 + $0x80] sm:$0xff]
      %v240 = vld [vmem:[%s209 + $0x88] sm:$0xff]
      %v241 = vld [vmem:[%s209 + $0x90] sm:$0xff]
      %v242 = vld [vmem:[%s209 + $0x98] sm:$0xff]
      %v243 = vld [vmem:[%s209 + $0xa0] sm:$0xff]
      %v244 = vld [vmem:[%s209 + $0xa8] sm:$0xff]
      %v245 = vld [vmem:[%s209 + $0xb0] sm:$0xff]
      %v246 = vld [vmem:[%s209 + $0xb8] sm:$0xff]
      %v247 = vld [vmem:[%s209 + $0xc0] sm:$0xff]
      %v248 = vld [vmem:[%s209 + $0xc8] sm:$0xff]
      %v249 = vld [vmem:[%s209 + $0xd0] sm:$0xff]
      %v250 = vld [vmem:[%s209 + $0xd8] sm:$0xff]
      %v251 = vld [vmem:[%s209 + $0xe0] sm:$0xff]
      %v252 = vld [vmem:[%s209 + $0xe8] sm:$0xff]
      %v253 = vld [vmem:[%s209 + $0xf0] sm:$0xff]
      %v254 = vld [vmem:[%s209 + $0xf8] sm:$0xff]
      %v255 = vld [vmem:[%s1] sm:$0xff]
      %v256 = vld [vmem:[%s1 + $0x8] sm:$0xff]
      %v257 = vld [vmem:[%s1 + $0x10] sm:$0xff]
      %v258 = vld [vmem:[%s1 + $0x18] sm:$0xff]
      %v259 = vld [vmem:[%s1 + $0x20] sm:$0xff]
      %v260 = vld [vmem:[%s1 + $0x28] sm:$0xff]
      %v261 = vld [vmem:[%s1 + $0x30] sm:$0xff]
      %v262 = vld [vmem:[%s1 + $0x38] sm:$0xff]
      %v263 = vld [vmem:[%s1 + $0x40] sm:$0xff]
      %v264 = vld [vmem:[%s1 + $0x48] sm:$0xff]
      %v265 = vld [vmem:[%s1 + $0x50] sm:$0xff]
      %v266 = vld [vmem:[%s1 + $0x58] sm:$0xff]
      %v267 = vld [vmem:[%s1 + $0x60] sm:$0xff]
      %v268 = vld [vmem:[%s1 + $0x68] sm:$0xff]
      %v269 = vld [vmem:[%s1 + $0x70] sm:$0xff]
      %v270 = vld [vmem:[%s1 + $0x78] sm:$0xff]
      %v271 = vld [vmem:[%s2] sm:$0x1]
      %v273 = vperm.slane %v271, 0
      %275 = vmatpush.msra.mxu0 %v270
      %276 = vmatpush.msra.mxu0 %v269
      %277 = vmatpush.msra.mxu0 %v268
      %278 = vmatpush.msra.mxu0 %v267
      %279 = vmatpush.msra.mxu0 %v266
      %280 = vmatpush.msra.mxu0 %v265
      %281 = vmatpush.msra.mxu0 %v264
      %282 = vmatpush.msra.mxu0 %v263
      %283 = vmatpush.msra.mxu0 %v262
      %284 = vmatpush.msra.mxu0 %v261
      %285 = vmatpush.msra.mxu0 %v260
      %286 = vmatpush.msra.mxu0 %v259
      %287 = vmatpush.msra.mxu0 %v258
      %288 = vmatpush.msra.mxu0 %v257
      %289 = vmatpush.msra.mxu0 %v256
      %290 = vmatpush.msra.mxu0 %v255
      %291 = vmatmul.f32.gmra.mxu0 %v223
      %v292 = vpop.f32.mrf.mxu0
      %v293 = vadd.f32 %v273, %v292
      %294 = vmatmul.f32.gmra.mxu0 %v224
      %v295 = vpop.f32.mrf.mxu0
      %v296 = vadd.f32 %v273, %v295
      %297 = vmatmul.f32.gmra.mxu0 %v225
      %v298 = vpop.f32.mrf.mxu0
      %v299 = vadd.f32 %v273, %v298
      %300 = vmatmul.f32.gmra.mxu0 %v226
      %v301 = vpop.f32.mrf.mxu0
      %v302 = vadd.f32 %v273, %v301
      %303 = vmatmul.f32.gmra.mxu0 %v227
      %v304 = vpop.f32.mrf.mxu0
      %v305 = vadd.f32 %v273, %v304
      %306 = vmatmul.f32.gmra.mxu0 %v228
      %v307 = vpop.f32.mrf.mxu0
      %v308 = vadd.f32 %v273, %v307
      %309 = vmatmul.f32.gmra.mxu0 %v229
      %v310 = vpop.f32.mrf.mxu0
      %v311 = vadd.f32 %v273, %v310
      %312 = vmatmul.f32.gmra.mxu0 %v230
      %v313 = vpop.f32.mrf.mxu0
      %v314 = vadd.f32 %v273, %v313
      %315 = vmatmul.f32.gmra.mxu0 %v231
      %v316 = vpop.f32.mrf.mxu0
      %v317 = vadd.f32 %v273, %v316
      %318 = vmatmul.f32.gmra.mxu0 %v232
      %v319 = vpop.f32.mrf.mxu0
      %v320 = vadd.f32 %v273, %v319
      %321 = vmatmul.f32.gmra.mxu0 %v233
      %v322 = vpop.f32.mrf.mxu0
      %v323 = vadd.f32 %v273, %v322
      %324 = vmatmul.f32.gmra.mxu0 %v234
      %v325 = vpop.f32.mrf.mxu0
      %v326 = vadd.f32 %v273, %v325
      %327 = vmatmul.f32.gmra.mxu0 %v235
      %v328 = vpop.f32.mrf.mxu0
      %v329 = vadd.f32 %v273, %v328
      %330 = vmatmul.f32.gmra.mxu0 %v236
      %v331 = vpop.f32.mrf.mxu0
      %v332 = vadd.f32 %v273, %v331
      %333 = vmatmul.f32.gmra.mxu0 %v237
      %v334 = vpop.f32.mrf.mxu0
      %v335 = vadd.f32 %v273, %v334
      %336 = vmatmul.f32.gmra.mxu0 %v238
      %v337 = vpop.f32.mrf.mxu0
      %v338 = vadd.f32 %v273, %v337
      %339 = vmatmul.f32.gmra.mxu0 %v239
      %v340 = vpop.f32.mrf.mxu0
      %v341 = vadd.f32 %v273, %v340
      %342 = vmatmul.f32.gmra.mxu0 %v240
      %v343 = vpop.f32.mrf.mxu0
      %v344 = vadd.f32 %v273, %v343
      %345 = vmatmul.f32.gmra.mxu0 %v241
      %v346 = vpop.f32.mrf.mxu0
      %v347 = vadd.f32 %v273, %v346
      %348 = vmatmul.f32.gmra.mxu0 %v242
      %v349 = vpop.f32.mrf.mxu0
      %v350 = vadd.f32 %v273, %v349
      %351 = vmatmul.f32.gmra.mxu0 %v243
      %v352 = vpop.f32.mrf.mxu0
      %v353 = vadd.f32 %v273, %v352
      %354 = vmatmul.f32.gmra.mxu0 %v244
      %v355 = vpop.f32.mrf.mxu0
      %v356 = vadd.f32 %v273, %v355
      %357 = vmatmul.f32.gmra.mxu0 %v245
      %v358 = vpop.f32.mrf.mxu0
      %v359 = vadd.f32 %v273, %v358
      %360 = vmatmul.f32.gmra.mxu0 %v246
      %v361 = vpop.f32.mrf.mxu0
      %v362 = vadd.f32 %v273, %v361
      %363 = vmatmul.f32.gmra.mxu0 %v247
      %v364 = vpop.f32.mrf.mxu0
      %v365 = vadd.f32 %v273, %v364
      %366 = vmatmul.f32.gmra.mxu0 %v248
      %v367 = vpop.f32.mrf.mxu0
      %v368 = vadd.f32 %v273, %v367
      %369 = vmatmul.f32.gmra.mxu0 %v249
      %v370 = vpop.f32.mrf.mxu0
      %v371 = vadd.f32 %v273, %v370
      %372 = vmatmul.f32.gmra.mxu0 %v250
      %v373 = vpop.f32.mrf.mxu0
      %v374 = vadd.f32 %v273, %v373
      %375 = vmatmul.f32.gmra.mxu0 %v251
      %v376 = vpop.f32.mrf.mxu0
      %v377 = vadd.f32 %v273, %v376
      %378 = vmatmul.f32.gmra.mxu0 %v252
      %v379 = vpop.f32.mrf.mxu0
      %v380 = vadd.f32 %v273, %v379
      %381 = vmatmul.f32.gmra.mxu0 %v253
      %v382 = vpop.f32.mrf.mxu0
      %v383 = vadd.f32 %v273, %v382
      %384 = vmatmul.f32.gmra.mxu0 %v254
      %v385 = vpop.f32.mrf.mxu0
      %v386 = vadd.f32 %v273, %v385
      %387 = vdwg.mxu0
      %v388 = vld [vmem:[%s215] sm:$0xff]
      %v389 = vld [vmem:[%s215 + $0x8] sm:$0xff]
      %v390 = vld [vmem:[%s215 + $0x10] sm:$0xff]
      %v391 = vld [vmem:[%s215 + $0x18] sm:$0xff]
      %v392 = vld [vmem:[%s215 + $0x20] sm:$0xff]
      %v393 = vld [vmem:[%s215 + $0x28] sm:$0xff]
      %v394 = vld [vmem:[%s215 + $0x30] sm:$0xff]
      %v395 = vld [vmem:[%s215 + $0x38] sm:$0xff]
      %v396 = vld [vmem:[%s215 + $0x40] sm:$0xff]
      %v397 = vld [vmem:[%s215 + $0x48] sm:$0xff]
      %v398 = vld [vmem:[%s215 + $0x50] sm:$0xff]
      %v399 = vld [vmem:[%s215 + $0x58] sm:$0xff]
      %v400 = vld [vmem:[%s215 + $0x60] sm:$0xff]
      %v401 = vld [vmem:[%s215 + $0x68] sm:$0xff]
      %v402 = vld [vmem:[%s215 + $0x70] sm:$0xff]
      %v403 = vld [vmem:[%s215 + $0x78] sm:$0xff]
      %v404 = vld [vmem:[%s215 + $0x80] sm:$0xff]
      %v405 = vld [vmem:[%s215 + $0x88] sm:$0xff]
      %v406 = vld [vmem:[%s215 + $0x90] sm:$0xff]
      %v407 = vld [vmem:[%s215 + $0x98] sm:$0xff]
      %v408 = vld [vmem:[%s215 + $0xa0] sm:$0xff]
      %v409 = vld [vmem:[%s215 + $0xa8] sm:$0xff]
      %v410 = vld [vmem:[%s215 + $0xb0] sm:$0xff]
      %v411 = vld [vmem:[%s215 + $0xb8] sm:$0xff]
      %v412 = vld [vmem:[%s215 + $0xc0] sm:$0xff]
      %v413 = vld [vmem:[%s215 + $0xc8] sm:$0xff]
      %v414 = vld [vmem:[%s215 + $0xd0] sm:$0xff]
      %v415 = vld [vmem:[%s215 + $0xd8] sm:$0xff]
      %v416 = vld [vmem:[%s215 + $0xe0] sm:$0xff]
      %v417 = vld [vmem:[%s215 + $0xe8] sm:$0xff]
      %v418 = vld [vmem:[%s215 + $0xf0] sm:$0xff]
      %v419 = vld [vmem:[%s215 + $0xf8] sm:$0xff]
      %v420 = vadd.f32 %v293, %v388
      %v421 = vadd.f32 %v296, %v389
      %v422 = vadd.f32 %v299, %v390
      %v423 = vadd.f32 %v302, %v391
      %v424 = vadd.f32 %v305, %v392
      %v425 = vadd.f32 %v308, %v393
      %v426 = vadd.f32 %v311, %v394
      %v427 = vadd.f32 %v314, %v395
      %v428 = vadd.f32 %v317, %v396
      %v429 = vadd.f32 %v320, %v397
      %v430 = vadd.f32 %v323, %v398
      %v431 = vadd.f32 %v326, %v399
      %v432 = vadd.f32 %v329, %v400
      %v433 = vadd.f32 %v332, %v401
      %v434 = vadd.f32 %v335, %v402
      %v435 = vadd.f32 %v338, %v403
      %v436 = vadd.f32 %v341, %v404
      %v437 = vadd.f32 %v344, %v405
      %v438 = vadd.f32 %v347, %v406
      %v439 = vadd.f32 %v350, %v407
      %v440 = vadd.f32 %v353, %v408
      %v441 = vadd.f32 %v356, %v409
      %v442 = vadd.f32 %v359, %v410
      %v443 = vadd.f32 %v362, %v411
      %v444 = vadd.f32 %v365, %v412
      %v445 = vadd.f32 %v368, %v413
      %v446 = vadd.f32 %v371, %v414
      %v447 = vadd.f32 %v374, %v415
      %v448 = vadd.f32 %v377, %v416
      %v449 = vadd.f32 %v380, %v417
      %v450 = vadd.f32 %v383, %v418
      %v451 = vadd.f32 %v386, %v419
      %vm452 = vcmask 261120
      %453 = vst.msk [vmem:[%s221] sm:$0xff] %vm452, %v420
      %454 = vst.msk [vmem:[%s221 + $0x8] sm:$0xff] %vm452, %v421
      %455 = vst.msk [vmem:[%s221 + $0x10] sm:$0xff] %vm452, %v422
      %456 = vst.msk [vmem:[%s221 + $0x18] sm:$0xff] %vm452, %v423
      %457 = vst.msk [vmem:[%s221 + $0x20] sm:$0xff] %vm452, %v424
      %458 = vst.msk [vmem:[%s221 + $0x28] sm:$0xff] %vm452, %v425
      %459 = vst.msk [vmem:[%s221 + $0x30] sm:$0xff] %vm452, %v426
      %460 = vst.msk [vmem:[%s221 + $0x38] sm:$0xff] %vm452, %v427
      %461 = vst.msk [vmem:[%s221 + $0x40] sm:$0xff] %vm452, %v428
      %462 = vst.msk [vmem:[%s221 + $0x48] sm:$0xff] %vm452, %v429
      %463 = vst.msk [vmem:[%s221 + $0x50] sm:$0xff] %vm452, %v430
      %464 = vst.msk [vmem:[%s221 + $0x58] sm:$0xff] %vm452, %v431
      %465 = vst.msk [vmem:[%s221 + $0x60] sm:$0xff] %vm452, %v432
      %466 = vst.msk [vmem:[%s221 + $0x68] sm:$0xff] %vm452, %v433
      %467 = vst.msk [vmem:[%s221 + $0x70] sm:$0xff] %vm452, %v434
      %468 = vst.msk [vmem:[%s221 + $0x78] sm:$0xff] %vm452, %v435
      %469 = vst.msk [vmem:[%s221 + $0x80] sm:$0xff] %vm452, %v436
      %470 = vst.msk [vmem:[%s221 + $0x88] sm:$0xff] %vm452, %v437
      %471 = vst.msk [vmem:[%s221 + $0x90] sm:$0xff] %vm452, %v438
      %472 = vst.msk [vmem:[%s221 + $0x98] sm:$0xff] %vm452, %v439
      %473 = vst.msk [vmem:[%s221 + $0xa0] sm:$0xff] %vm452, %v440
      %474 = vst.msk [vmem:[%s221 + $0xa8] sm:$0xff] %vm452, %v441
      %475 = vst.msk [vmem:[%s221 + $0xb0] sm:$0xff] %vm452, %v442
      %476 = vst.msk [vmem:[%s221 + $0xb8] sm:$0xff] %vm452, %v443
      %477 = vst.msk [vmem:[%s221 + $0xc0] sm:$0xff] %vm452, %v444
      %478 = vst.msk [vmem:[%s221 + $0xc8] sm:$0xff] %vm452, %v445
      %479 = vst.msk [vmem:[%s221 + $0xd0] sm:$0xff] %vm452, %v446
      %480 = vst.msk [vmem:[%s221 + $0xd8] sm:$0xff] %vm452, %v447
      %481 = vst.msk [vmem:[%s221 + $0xe0] sm:$0xff] %vm452, %v448
      %482 = vst.msk [vmem:[%s221 + $0xe8] sm:$0xff] %vm452, %v449
      %483 = vst.msk [vmem:[%s221 + $0xf0] sm:$0xff] %vm452, %v450
      %484 = vst.msk [vmem:[%s221 + $0xf8] sm:$0xff] %vm452, %v451
      %s485 = smul.u32 32, %s15
      %p486 = scmp.lt.s32.totalorder %s485, 63
      %s487 = scalar_select %p486, %s485, 63
      %s488 = smul.addr %s487, 8
      %s489 = scalar_lea.vmem %s4, %s488
      // Predicated region
      $region37: #{_lambda_.11} parent=35 // pred_check
        %p490 = pneg %p127
      $region38: #{_lambda_.11} parent=35 // pred_check_branch
        %492 = sbr.rel (%p490) target = $region40
      $region39: #{_lambda_.11} parent=35 // pred_region
        %s493 = smul.u32 32, %s15
      $region40: #{_lambda_.11} parent=35 // pred_fallthru
        _
    $region36: #{_lambda_.11} parent=5 // pred_fallthru
      _
    %p494 = scmp.le.s32.totalorder 2, %s10
    // Predicated region
    $region41: #{_lambda_.11} parent=5 // pred_check
      %p495 = pneg %p494
    $region42: #{_lambda_.11} parent=5 // pred_check_branch
      %497 = sbr.rel (%p495) target = $region44
    $region43: #{_lambda_.11} parent=5 // pred_region
      %s498 = ssub.s32 %s10, 2
      // Predicated region
      $region45: #{_lambda_.11} parent=43 // pred_check
        %p499 = pneg %p133
      $region46: #{_lambda_.11} parent=43 // pred_check_branch
        %501 = sbr.rel (%p499) target = $region48
      $region47: #{_lambda_.11} parent=43 // pred_region
        %s502 = smul.u32 32, %s16
        %p503 = scmp.lt.s32.totalorder %s502, 63
        %s504 = scalar_select %p503, %s502, 63
        %s505 = smul.addr %s504, 8
        %s506 = scalar_lea.vmem %s4, %s505
      $region48: #{_lambda_.11} parent=43 // pred_fallthru
        _
    $region44: #{_lambda_.11} parent=5 // pred_fallthru
      _
  $region6: #{_lambda_.11} parent=0 // loop_footer
    %s14 = sadd.s32 1, %s10
  $region7: #{_lambda_.11} parent=0 // loop_footer_branch
    %9 = sbr.rel target = $region3
  $region8: #{_lambda_.11} parent=0 // loop_exit
    _

// kernel: _lambda_.10
$region0: #{_lambda_.10}
  #allocation0 [shape = 'u32[]', space=smem, size = 0x4, offset = 0x4, fixed_abs, tag = 'smem constant byte address 0x4 - core index']
  #allocation1 [shape = 'u32[72,128]{1,0:T(1,128)}', space=vmem, size = 0x9000, scoped, tag = 'internal scratch']
  %s0 = inlined_call_operand.vmem [shape: f32[2,16,16,128], index: 0, kind: input, shape index: {}]
  %s1 = inlined_call_operand.vmem [shape: f32[9,128], index: 1, kind: input, shape index: {}]
  %s2 = inlined_call_operand.vmem [shape: f32[1,128], index: 2, kind: input, shape index: {}]
  %s3 = inlined_call_operand.vmem [shape: f32[2,16,16,128], index: 3, kind: output, shape index: {}]
  %s4 = sld [smem:[#allocation0]]
  $region45: #{_lambda_.10} parent=0
    _
  %s6 = ssub.s32 1, %s4
  %s7 = scalar_select 0, %s6, %s4
  loop: start=0, step=1, limit=4
  $region2: #{_lambda_.10} parent=0 // loop_pre_header
    _
  $region3: #{_lambda_.10} parent=0 // loop_header
    %s9 = sphi 0, %s13
    %p10 = scmp.ge.s32.totalorder %s9, 4
    %s16 = sphi 0, %s28
    %s17 = sphi 0, %s24
    %s18 = sphi 0, %s16
    %s19 = sphi 0, %s17
    %s20 = sphi 0, %s18
    %s21 = sphi 0, %s19
    %s33 = sphi 0, %s35
    %s36 = sphi 0, %s33
    %s37 = sphi 0, %s36
    %s53 = sphi 0, %s37
    %s59 = sphi 0, %s61
    %s62 = sphi 0, %s59
    %s63 = sphi 0, %s62
    %s79 = sphi 0, %s63
    %s85 = sphi 0, %s87
    %s88 = sphi 0, %s85
    %s89 = sphi 0, %s88
    %s105 = sphi 0, %s89
    %s113 = sphi 0, %s115
    %s116 = sphi 0, %s113
    %s117 = sphi 0, %s116
    %s133 = sphi 0, %s117
  $region4: #{_lambda_.10} parent=0 // loop_header_branch
    %12 = sbr.rel (%p10) target = $region8
  $region5: #{_lambda_.10} parent=0 // loop_body
    %s14 = ssub.s32 %s9, 1
    %s15 = ssub.s32 %s9, 2
    %s22 = sadd.s32 1, %s17
    %p23 = scmp.ge.s32.totalorder %s22, 1
    %s24 = scalar_select %p23, 0, %s22
    %s25 = sadd.s32 1, %s16
    %s26 = scalar_select %p23, %s25, %s16
    %p27 = scmp.ge.s32.totalorder %s26, 2
    %s28 = scalar_select %p27, 0, %s26
    %s29 = ssub.s32 %s16, %s28
    %s30 = ssub.s32 %s17, %s24
    %s31 = sor.u32 %s29, %s30
    %p32 = scmp.eq.s32.totalorder %s31, 0
    %s34 = sadd.s32 %s33, 1
    %s35 = scalar_select %p32, %s33, %s34
    %p38 = pneg %p32
    %p39 = scmp.eq.s32.totalorder %s9, 1
    %p40 = por %p38, %p39
    %p41 = scmp.ne.s32.totalorder %s33, %s36
    %p42 = scmp.eq.s32.totalorder %s9, 0
    %p43 = por %p41, %p42
    %p44 = scmp.ne.s32.totalorder %s33, %s36
    %p45 = scmp.eq.s32.totalorder %s14, 1
    %p46 = por %p44, %p45
    %p47 = scmp.ne.s32.totalorder %s36, %s37
    %p48 = scmp.eq.s32.totalorder %s14, 0
    %p49 = por %p47, %p48
    %p50 = scmp.ne.s32.totalorder %s36, %s37
    %p51 = scmp.eq.s32.totalorder %s15, 1
    %p52 = por %p50, %p51
    %p54 = scmp.ne.s32.totalorder %s37, %s53
    %p55 = scmp.eq.s32.totalorder %s15, 0
    %p56 = por %p54, %p55
    %s57 = ssub.s32 %s17, %s24
    %p58 = scmp.eq.s32.totalorder %s57, 0
    %s60 = sadd.s32 %s59, 1
    %s61 = scalar_select %p58, %s59, %s60
    %p64 = pneg %p58
    %p65 = scmp.eq.s32.totalorder %s9, 1
    %p66 = por %p64, %p65
    %p67 = scmp.ne.s32.totalorder %s59, %s62
    %p68 = scmp.eq.s32.totalorder %s9, 0
    %p69 = por %p67, %p68
    %p70 = scmp.ne.s32.totalorder %s59, %s62
    %p71 = scmp.eq.s32.totalorder %s14, 1
    %p72 = por %p70, %p71
    %p73 = scmp.ne.s32.totalorder %s62, %s63
    %p74 = scmp.eq.s32.totalorder %s14, 0
    %p75 = por %p73, %p74
    %p76 = scmp.ne.s32.totalorder %s62, %s63
    %p77 = scmp.eq.s32.totalorder %s15, 1
    %p78 = por %p76, %p77
    %p80 = scmp.ne.s32.totalorder %s63, %s79
    %p81 = scmp.eq.s32.totalorder %s15, 0
    %p82 = por %p80, %p81
    %s83 = ssub.s32 %s17, %s24
    %p84 = scmp.eq.s32.totalorder %s83, 0
    %s86 = sadd.s32 %s85, 1
    %s87 = scalar_select %p84, %s85, %s86
    %p90 = pneg %p84
    %p91 = scmp.eq.s32.totalorder %s9, 1
    %p92 = por %p90, %p91
    %p93 = scmp.ne.s32.totalorder %s85, %s88
    %p94 = scmp.eq.s32.totalorder %s9, 0
    %p95 = por %p93, %p94
    %p96 = scmp.ne.s32.totalorder %s85, %s88
    %p97 = scmp.eq.s32.totalorder %s14, 1
    %p98 = por %p96, %p97
    %p99 = scmp.ne.s32.totalorder %s88, %s89
    %p100 = scmp.eq.s32.totalorder %s14, 0
    %p101 = por %p99, %p100
    %p102 = scmp.ne.s32.totalorder %s88, %s89
    %p103 = scmp.eq.s32.totalorder %s15, 1
    %p104 = por %p102, %p103
    %p106 = scmp.ne.s32.totalorder %s89, %s105
    %p107 = scmp.eq.s32.totalorder %s15, 0
    %p108 = por %p106, %p107
    %s109 = ssub.s32 %s16, %s28
    %s110 = ssub.s32 %s17, %s24
    %s111 = sor.u32 %s109, %s110
    %p112 = scmp.eq.s32.totalorder %s111, 0
    %s114 = sadd.s32 %s113, 1
    %s115 = scalar_select %p112, %s113, %s114
    %p118 = pneg %p112
    %p119 = scmp.eq.s32.totalorder %s9, 1
    %p120 = por %p118, %p119
    %p121 = scmp.ne.s32.totalorder %s113, %s116
    %p122 = scmp.eq.s32.totalorder %s9, 0
    %p123 = por %p121, %p122
    %p124 = scmp.ne.s32.totalorder %s113, %s116
    %p125 = scmp.eq.s32.totalorder %s14, 1
    %p126 = por %p124, %p125
    %p127 = scmp.ne.s32.totalorder %s116, %s117
    %p128 = scmp.eq.s32.totalorder %s14, 0
    %p129 = por %p127, %p128
    %p130 = scmp.ne.s32.totalorder %s116, %s117
    %p131 = scmp.eq.s32.totalorder %s15, 1
    %p132 = por %p130, %p131
    %p134 = scmp.ne.s32.totalorder %s117, %s133
    %p135 = scmp.eq.s32.totalorder %s15, 0
    %p136 = por %p134, %p135
    %p137 = scmp.le.s32.totalorder 1, %s9
    %p138 = scmp.lt.s32.totalorder %s9, 3
    %p139 = pnand %p137, %p138
    %p140 = pneg %p139
    // Predicated region
    $region9: #{_lambda_.10} parent=5 // pred_check
      _
    $region10: #{_lambda_.10} parent=5 // pred_check_branch
      %142 = sbr.rel (%p139) target = $region12
    $region11: #{_lambda_.10} parent=5 // pred_region
      %s143 = ssub.s32 %s9, 1
      // Predicated region
      $region13: #{_lambda_.10} parent=11 // pred_check
        %p144 = pneg %p75
      $region14: #{_lambda_.10} parent=11 // pred_check_branch
        %146 = sbr.rel (%p144) target = $region16
      $region15: #{_lambda_.10} parent=11 // pred_region
        %p147 = scmp.lt.s32.totalorder %s19, 0
        %s148 = scalar_select %p147, %s19, 0
        %s149 = smul.addr %s148, 8
        %s150 = scalar_lea.vmem %s1, %s149
      $region16: #{_lambda_.10} parent=11 // pred_fallthru
        _
      // Predicated region
      $region17: #{_lambda_.10} parent=11 // pred_check
        %p151 = pneg %p101
      $region18: #{_lambda_.10} parent=11 // pred_check_branch
        %153 = sbr.rel (%p151) target = $region20
      $region19: #{_lambda_.10} parent=11 // pred_region
        %p154 = scmp.lt.s32.totalorder %s19, 0
        %s155 = scalar_select %p154, %s19, 0
        %s156 = scalar_lea.vmem %s2, %s155
      $region20: #{_lambda_.10} parent=11 // pred_fallthru
        _
    $region12: #{_lambda_.10} parent=5 // pred_fallthru
      _
    %p157 = scmp.lt.s32.totalorder %s9, 2
    // Predicated region
    $region21: #{_lambda_.10} parent=5 // pred_check
      %p158 = pneg %p157
    $region22: #{_lambda_.10} parent=5 // pred_check_branch
      %160 = sbr.rel (%p158) target = $region24
    $region23: #{_lambda_.10} parent=5 // pred_region
      // Predicated region
      $region25: #{_lambda_.10} parent=23 // pred_check
        %p161 = pneg %p43
      $region26: #{_lambda_.10} parent=23 // pred_check_branch
        %163 = sbr.rel (%p161) target = $region28
      $region27: #{_lambda_.10} parent=23 // pred_region
        %p164 = scmp.lt.s32.totalorder %s16, 1
        %s165 = scalar_select %p164, %s16, 1
        %p166 = scmp.lt.s32.totalorder %s17, 0
        %s167 = scalar_select %p166, %s17, 0
        %s168 = smul.addr %s165, 32
        %s169 = sadd.s32 %s167, %s168
        %s170 = smul.addr %s169, 8
        %s171 = scalar_lea.vmem %s0, %s170
      $region28: #{_lambda_.10} parent=23 // pred_fallthru
        _
    $region24: #{_lambda_.10} parent=5 // pred_fallthru
      _
    %p172 = scmp.le.s32.totalorder 1, %s9
    %p173 = scmp.lt.s32.totalorder %s9, 3
    %p174 = pnand %p172, %p173
    %p175 = pneg %p174
    // Predicated region
    $region29: #{_lambda_.10} parent=5 // pred_check
      _
    $region30: #{_lambda_.10} parent=5 // pred_check_branch
      %177 = sbr.rel (%p174) target = $region32
    $region31: #{_lambda_.10} parent=5 // pred_region
      %s178 = ssub.s32 %s9, 1
      %p179 = scmp.lt.s32.totalorder %s18, 1
      %s180 = scalar_select %p179, %s18, 1
      %p181 = scmp.lt.s32.totalorder %s19, 0
      %s182 = scalar_select %p181, %s19, 0
      %s183 = smul.addr %s180, 32
      %s184 = sadd.s32 %s182, %s183
      %s185 = smul.addr %s184, 8
      %s186 = scalar_lea.vmem %s0, %s185
      %p187 = pneg %p49
      %p188 = pneg %p46
      %p189 = scmp.lt.s32.totalorder %s19, 0
      %s190 = scalar_select %p189, %s19, 0
      %s191 = smul.addr %s190, 8
      %s192 = scalar_lea.vmem %s1, %s191
      %p193 = pneg %p75
      %p194 = pneg %p72
      %p195 = scmp.lt.s32.totalorder %s19, 0
      %s196 = scalar_select %p195, %s19, 0
      %s197 = scalar_lea.vmem %s2, %s196
      %p198 = pneg %p101
      %p199 = pneg %p98
      %p200 = pneg %p129
      %p201 = pneg %p126
      %p202 = scmp.lt.s32.totalorder %s18, 1
      %s203 = scalar_select %p202, %s18, 1
      %p204 = scmp.lt.s32.totalorder %s19, 0
      %s205 = scalar_select %p204, %s19, 0
      %s206 = smul.addr %s203, 32
      %s207 = sadd.s32 %s205, %s206
      %s208 = smul.addr %s207, 8
      %s209 = scalar_lea.vmem %s3, %s208
      %p210 = scmp.lt.s32.totalorder %s18, 1
      %s211 = scalar_select %p210, %s18, 1
      %p212 = scmp.lt.s32.totalorder %s19, 0
      %s213 = scalar_select %p212, %s19, 0
      %s214 = smul.addr %s211, 32
      %s215 = sadd.s32 %s213, %s214
      %s216 = smul.addr %s215, 8
      %s217 = scalar_lea.vmem %s0, %s216
      %p218 = scmp.lt.s32.totalorder %s19, 0
      %s219 = scalar_select %p218, %s19, 0
      %s220 = smul.addr %s219, 8
      %s221 = scalar_lea.vmem %s1, %s220
      %p222 = scmp.lt.s32.totalorder %s19, 0
      %s223 = scalar_select %p222, %s19, 0
      %s224 = scalar_lea.vmem %s2, %s223
      %p225 = scmp.lt.s32.totalorder %s18, 1
      %s226 = scalar_select %p225, %s18, 1
      %p227 = scmp.lt.s32.totalorder %s19, 0
      %s228 = scalar_select %p227, %s19, 0
      %s229 = smul.addr %s226, 32
      %s230 = sadd.s32 %s228, %s229
      %s231 = smul.addr %s230, 8
      %s232 = scalar_lea.vmem %s3, %s231
      %v233 = vld [vmem:[%s217] sm:$0xff]
      %v234 = vld [vmem:[%s217 + $0x8] sm:$0xff]
      %v235 = vld [vmem:[%s217 + $0x10] sm:$0xff]
      %v236 = vld [vmem:[%s217 + $0x18] sm:$0xff]
      %v237 = vld [vmem:[%s217 + $0x20] sm:$0xff]
      %v238 = vld [vmem:[%s217 + $0x28] sm:$0xff]
      %v239 = vld [vmem:[%s217 + $0x30] sm:$0xff]
      %v240 = vld [vmem:[%s217 + $0x38] sm:$0xff]
      %v241 = vld [vmem:[%s217 + $0x40] sm:$0xff]
      %v242 = vld [vmem:[%s217 + $0x48] sm:$0xff]
      %v243 = vld [vmem:[%s217 + $0x50] sm:$0xff]
      %v244 = vld [vmem:[%s217 + $0x58] sm:$0xff]
      %v245 = vld [vmem:[%s217 + $0x60] sm:$0xff]
      %v246 = vld [vmem:[%s217 + $0x68] sm:$0xff]
      %v247 = vld [vmem:[%s217 + $0x70] sm:$0xff]
      %v248 = vld [vmem:[%s217 + $0x78] sm:$0xff]
      %v249 = vld [vmem:[%s217 + $0x80] sm:$0xff]
      %v250 = vld [vmem:[%s217 + $0x88] sm:$0xff]
      %v251 = vld [vmem:[%s217 + $0x90] sm:$0xff]
      %v252 = vld [vmem:[%s217 + $0x98] sm:$0xff]
      %v253 = vld [vmem:[%s217 + $0xa0] sm:$0xff]
      %v254 = vld [vmem:[%s217 + $0xa8] sm:$0xff]
      %v255 = vld [vmem:[%s217 + $0xb0] sm:$0xff]
      %v256 = vld [vmem:[%s217 + $0xb8] sm:$0xff]
      %v257 = vld [vmem:[%s217 + $0xc0] sm:$0xff]
      %v258 = vld [vmem:[%s217 + $0xc8] sm:$0xff]
      %v259 = vld [vmem:[%s217 + $0xd0] sm:$0xff]
      %v260 = vld [vmem:[%s217 + $0xd8] sm:$0xff]
      %v261 = vld [vmem:[%s217 + $0xe0] sm:$0xff]
      %v262 = vld [vmem:[%s217 + $0xe8] sm:$0xff]
      %v263 = vld [vmem:[%s217 + $0xf0] sm:$0xff]
      %v264 = vld [vmem:[%s217 + $0xf8] sm:$0xff]
      %vm297 = vcmask 1040384
      %v298 = vrot.slane %v233, 7
      %v299 = vrot.slane %v234, 7
      %v300 = vsel %vm297, %v298, %v299
      %v301 = vrot.slane %v235, 7
      %v302 = vrot.slane %v236, 7
      %v303 = vsel %vm297, %v301, %v302
      %v304 = vrot.slane %v237, 7
      %v305 = vrot.slane %v238, 7
      %v306 = vsel %vm297, %v304, %v305
      %v307 = vrot.slane %v239, 7
      %v308 = vrot.slane %v240, 7
      %v309 = vsel %vm297, %v307, %v308
      %v310 = vrot.slane %v241, 7
      %v311 = vrot.slane %v242, 7
      %v312 = vsel %vm297, %v310, %v311
      %v313 = vrot.slane %v243, 7
      %v314 = vrot.slane %v244, 7
      %v315 = vsel %vm297, %v313, %v314
      %v316 = vrot.slane %v245, 7
      %v317 = vrot.slane %v246, 7
      %v318 = vsel %vm297, %v316, %v317
      %v319 = vrot.slane %v247, 7
      %v320 = vrot.slane %v248, 7
      %v321 = vsel %vm297, %v319, %v320
      %v322 = vrot.slane %v249, 7
      %v323 = vrot.slane %v250, 7
      %v324 = vsel %vm297, %v322, %v323
      %v325 = vrot.slane %v251, 7
      %v326 = vrot.slane %v252, 7
      %v327 = vsel %vm297, %v325, %v326
      %v328 = vrot.slane %v253, 7
      %v329 = vrot.slane %v254, 7
      %v330 = vsel %vm297, %v328, %v329
      %v331 = vrot.slane %v255, 7
      %v332 = vrot.slane %v256, 7
      %v333 = vsel %vm297, %v331, %v332
      %v334 = vrot.slane %v257, 7
      %v335 = vrot.slane %v258, 7
      %v336 = vsel %vm297, %v334, %v335
      %v337 = vrot.slane %v259, 7
      %v338 = vrot.slane %v260, 7
      %v339 = vsel %vm297, %v337, %v338
      %v340 = vrot.slane %v261, 7
      %v341 = vrot.slane %v262, 7
      %v342 = vsel %vm297, %v340, %v341
      %v343 = vrot.slane %v263, 7
      %v344 = vrot.slane %v264, 7
      %v345 = vsel %vm297, %v343, %v344
      %v378 = vsel %vm297, 0.0, %v298
      %v379 = vsel %vm297, 0.0, %v301
      %v380 = vsel %vm297, 0.0, %v304
      %v381 = vsel %vm297, 0.0, %v307
      %v382 = vsel %vm297, 0.0, %v310
      %v383 = vsel %vm297, 0.0, %v313
      %v384 = vsel %vm297, 0.0, %v316
      %v385 = vsel %vm297, 0.0, %v319
      %v386 = vsel %vm297, 0.0, %v322
      %v387 = vsel %vm297, 0.0, %v325
      %v388 = vsel %vm297, 0.0, %v328
      %v389 = vsel %vm297, 0.0, %v331
      %v390 = vsel %vm297, 0.0, %v334
      %v391 = vsel %vm297, 0.0, %v337
      %v392 = vsel %vm297, 0.0, %v340
      %v393 = vsel %vm297, 0.0, %v343
      %vm394 = vcmask 1046528
      %v395 = vrot.slane %v233, 1
      %v396 = vrot.slane %v234, 1
      %v397 = vsel %vm394, %v395, %v396
      %v398 = vrot.slane %v235, 1
      %v399 = vrot.slane %v236, 1
      %v400 = vsel %vm394, %v398, %v399
      %v401 = vrot.slane %v237, 1
      %v402 = vrot.slane %v238, 1
      %v403 = vsel %vm394, %v401, %v402
      %v404 = vrot.slane %v239, 1
      %v405 = vrot.slane %v240, 1
      %v406 = vsel %vm394, %v404, %v405
      %v407 = vrot.slane %v241, 1
      %v408 = vrot.slane %v242, 1
      %v409 = vsel %vm394, %v407, %v408
      %v410 = vrot.slane %v243, 1
      %v411 = vrot.slane %v244, 1
      %v412 = vsel %vm394, %v410, %v411
      %v413 = vrot.slane %v245, 1
      %v414 = vrot.slane %v246, 1
      %v415 = vsel %vm394, %v413, %v414
      %v416 = vrot.slane %v247, 1
      %v417 = vrot.slane %v248, 1
      %v418 = vsel %vm394, %v416, %v417
      %v419 = vrot.slane %v249, 1
      %v420 = vrot.slane %v250, 1
      %v421 = vsel %vm394, %v419, %v420
      %v422 = vrot.slane %v251, 1
      %v423 = vrot.slane %v252, 1
      %v424 = vsel %vm394, %v422, %v423
      %v425 = vrot.slane %v253, 1
      %v426 = vrot.slane %v254, 1
      %v427 = vsel %vm394, %v425, %v426
      %v428 = vrot.slane %v255, 1
      %v429 = vrot.slane %v256, 1
      %v430 = vsel %vm394, %v428, %v429
      %v431 = vrot.slane %v257, 1
      %v432 = vrot.slane %v258, 1
      %v433 = vsel %vm394, %v431, %v432
      %v434 = vrot.slane %v259, 1
      %v435 = vrot.slane %v260, 1
      %v436 = vsel %vm394, %v434, %v435
      %v437 = vrot.slane %v261, 1
      %v438 = vrot.slane %v262, 1
      %v439 = vsel %vm394, %v437, %v438
      %v440 = vrot.slane %v263, 1
      %v441 = vrot.slane %v264, 1
      %v442 = vsel %vm394, %v440, %v441
      %v475 = vsel %vm394, %v396, 0.0
      %v476 = vsel %vm394, %v399, 0.0
      %v477 = vsel %vm394, %v402, 0.0
      %v478 = vsel %vm394, %v405, 0.0
      %v479 = vsel %vm394, %v408, 0.0
      %v480 = vsel %vm394, %v411, 0.0
      %v481 = vsel %vm394, %v414, 0.0
      %v482 = vsel %vm394, %v417, 0.0
      %v483 = vsel %vm394, %v420, 0.0
      %v484 = vsel %vm394, %v423, 0.0
      %v485 = vsel %vm394, %v426, 0.0
      %v486 = vsel %vm394, %v429, 0.0
      %v487 = vsel %vm394, %v432, 0.0
      %v488 = vsel %vm394, %v435, 0.0
      %v489 = vsel %vm394, %v438, 0.0
      %v490 = vsel %vm394, %v441, 0.0
      %v491 = vld [vmem:[%s221] sm:$0x1]
      %v492 = vld [vmem:[%s221 + $0x1] sm:$0x1]
      %v493 = vld [vmem:[%s221 + $0x2] sm:$0x1]
      %v494 = vperm.slane %v491, 0
      %v495 = vmul.f32 %v378, %v494
      %v496 = vmul.f32 %v300, %v494
      %v497 = vmul.f32 %v379, %v494
      %v498 = vmul.f32 %v303, %v494
      %v499 = vmul.f32 %v380, %v494
      %v500 = vmul.f32 %v306, %v494
      %v501 = vmul.f32 %v381, %v494
      %v502 = vmul.f32 %v309, %v494
      %v503 = vmul.f32 %v382, %v494
      %v504 = vmul.f32 %v312, %v494
      %v505 = vmul.f32 %v383, %v494
      %v506 = vmul.f32 %v315, %v494
      %v507 = vmul.f32 %v384, %v494
      %v508 = vmul.f32 %v318, %v494
      %v509 = vmul.f32 %v385, %v494
      %v510 = vmul.f32 %v321, %v494
      %v511 = vmul.f32 %v386, %v494
      %v512 = vmul.f32 %v324, %v494
      %v513 = vmul.f32 %v387, %v494
      %v514 = vmul.f32 %v327, %v494
      %v515 = vmul.f32 %v388, %v494
      %v516 = vmul.f32 %v330, %v494
      %v517 = vmul.f32 %v389, %v494
      %v518 = vmul.f32 %v333, %v494
      %v519 = vmul.f32 %v390, %v494
      %v520 = vmul.f32 %v336, %v494
      %v521 = vmul.f32 %v391, %v494
      %v522 = vmul.f32 %v339, %v494
      %v523 = vmul.f32 %v392, %v494
      %v524 = vmul.f32 %v342, %v494
      %v525 = vperm.slane %v492, 0
      %v526 = vmul.f32 %v233, %v525
      %v527 = vmul.f32 %v234, %v525
      %v528 = vmul.f32 %v235, %v525
      %v529 = vmul.f32 %v236, %v525
      %v530 = vmul.f32 %v237, %v525
      %v531 = vmul.f32 %v238, %v525
      %v532 = vmul.f32 %v239, %v525
      %v533 = vmul.f32 %v240, %v525
      %v534 = vmul.f32 %v241, %v525
      %v535 = vmul.f32 %v242, %v525
      %v536 = vmul.f32 %v243, %v525
      %v537 = vmul.f32 %v244, %v525
      %v538 = vmul.f32 %v245, %v525
      %v539 = vmul.f32 %v246, %v525
      %v540 = vmul.f32 %v247, %v525
      %v541 = vmul.f32 %v248, %v525
      %v542 = vmul.f32 %v249, %v525
      %v543 = vmul.f32 %v250, %v525
      %v544 = vmul.f32 %v251, %v525
      %v545 = vmul.f32 %v252, %v525
      %v546 = vmul.f32 %v253, %v525
      %v547 = vmul.f32 %v254, %v525
      %v548 = vmul.f32 %v255, %v525
      %v549 = vmul.f32 %v256, %v525
      %v550 = vmul.f32 %v257, %v525
      %v551 = vmul.f32 %v258, %v525
      %v552 = vmul.f32 %v259, %v525
      %v553 = vmul.f32 %v260, %v525
      %v554 = vmul.f32 %v261, %v525
      %v555 = vmul.f32 %v262, %v525
      %v556 = vadd.f32 %v495, %v526
      %v557 = vadd.f32 %v496, %v527
      %v558 = vadd.f32 %v497, %v528
      %v559 = vadd.f32 %v498, %v529
      %v560 = vadd.f32 %v499, %v530
      %v561 = vadd.f32 %v500, %v531
      %v562 = vadd.f32 %v501, %v532
      %v563 = vadd.f32 %v502, %v533
      %v564 = vadd.f32 %v503, %v534
      %v565 = vadd.f32 %v504, %v535
      %v566 = vadd.f32 %v505, %v536
      %v567 = vadd.f32 %v506, %v537
      %v568 = vadd.f32 %v507, %v538
      %v569 = vadd.f32 %v508, %v539
      %v570 = vadd.f32 %v509, %v540
      %v571 = vadd.f32 %v510, %v541
      %v572 = vadd.f32 %v511, %v542
      %v573 = vadd.f32 %v512, %v543
      %v574 = vadd.f32 %v513, %v544
      %v575 = vadd.f32 %v514, %v545
      %v576 = vadd.f32 %v515, %v546
      %v577 = vadd.f32 %v516, %v547
      %v578 = vadd.f32 %v517, %v548
      %v579 = vadd.f32 %v518, %v549
      %v580 = vadd.f32 %v519, %v550
      %v581 = vadd.f32 %v520, %v551
      %v582 = vadd.f32 %v521, %v552
      %v583 = vadd.f32 %v522, %v553
      %v584 = vadd.f32 %v523, %v554
      %v585 = vadd.f32 %v524, %v555
      %v586 = vperm.slane %v493, 0
      %v587 = vmul.f32 %v397, %v586
      %v588 = vmul.f32 %v475, %v586
      %v589 = vmul.f32 %v400, %v586
      %v590 = vmul.f32 %v476, %v586
      %v591 = vmul.f32 %v403, %v586
      %v592 = vmul.f32 %v477, %v586
      %v593 = vmul.f32 %v406, %v586
      %v594 = vmul.f32 %v478, %v586
      %v595 = vmul.f32 %v409, %v586
      %v596 = vmul.f32 %v479, %v586
      %v597 = vmul.f32 %v412, %v586
      %v598 = vmul.f32 %v480, %v586
      %v599 = vmul.f32 %v415, %v586
      %v600 = vmul.f32 %v481, %v586
      %v601 = vmul.f32 %v418, %v586
      %v602 = vmul.f32 %v482, %v586
      %v603 = vmul.f32 %v421, %v586
      %v604 = vmul.f32 %v483, %v586
      %v605 = vmul.f32 %v424, %v586
      %v606 = vmul.f32 %v484, %v586
      %v607 = vmul.f32 %v427, %v586
      %v608 = vmul.f32 %v485, %v586
      %v609 = vmul.f32 %v430, %v586
      %v610 = vmul.f32 %v486, %v586
      %v611 = vmul.f32 %v433, %v586
      %v612 = vmul.f32 %v487, %v586
      %v613 = vmul.f32 %v436, %v586
      %v614 = vmul.f32 %v488, %v586
      %v615 = vmul.f32 %v439, %v586
      %v616 = vmul.f32 %v489, %v586
      %v617 = vadd.f32 %v556, %v587
      %v618 = vadd.f32 %v557, %v588
      %v619 = vadd.f32 %v558, %v589
      %v620 = vadd.f32 %v559, %v590
      %v621 = vadd.f32 %v560, %v591
      %v622 = vadd.f32 %v561, %v592
      %v623 = vadd.f32 %v562, %v593
      %v624 = vadd.f32 %v563, %v594
      %v625 = vadd.f32 %v564, %v595
      %v626 = vadd.f32 %v565, %v596
      %v627 = vadd.f32 %v566, %v597
      %v628 = vadd.f32 %v567, %v598
      %v629 = vadd.f32 %v568, %v599
      %v630 = vadd.f32 %v569, %v600
      %v631 = vadd.f32 %v570, %v601
      %v632 = vadd.f32 %v571, %v602
      %v633 = vadd.f32 %v572, %v603
      %v634 = vadd.f32 %v573, %v604
      %v635 = vadd.f32 %v574, %v605
      %v636 = vadd.f32 %v575, %v606
      %v637 = vadd.f32 %v576, %v607
      %v638 = vadd.f32 %v577, %v608
      %v639 = vadd.f32 %v578, %v609
      %v640 = vadd.f32 %v579, %v610
      %v641 = vadd.f32 %v580, %v611
      %v642 = vadd.f32 %v581, %v612
      %v643 = vadd.f32 %v582, %v613
      %v644 = vadd.f32 %v583, %v614
      %v645 = vadd.f32 %v584, %v615
      %v646 = vadd.f32 %v585, %v616
      %v647 = vld [vmem:[%s221 + $0x3] sm:$0x1]
      %v648 = vld [vmem:[%s221 + $0x4] sm:$0x1]
      %v649 = vld [vmem:[%s221 + $0x5] sm:$0x1]
      %v650 = vperm.slane %v647, 0
      %v651 = vmul.f32 %v378, %v650
      %v652 = vmul.f32 %v300, %v650
      %v653 = vmul.f32 %v379, %v650
      %v654 = vmul.f32 %v303, %v650
      %v655 = vmul.f32 %v380, %v650
      %v656 = vmul.f32 %v306, %v650
      %v657 = vmul.f32 %v381, %v650
      %v658 = vmul.f32 %v309, %v650
      %v659 = vmul.f32 %v382, %v650
      %v660 = vmul.f32 %v312, %v650
      %v661 = vmul.f32 %v383, %v650
      %v662 = vmul.f32 %v315, %v650
      %v663 = vmul.f32 %v384, %v650
      %v664 = vmul.f32 %v318, %v650
      %v665 = vmul.f32 %v385, %v650
      %v666 = vmul.f32 %v321, %v650
      %v667 = vmul.f32 %v386, %v650
      %v668 = vmul.f32 %v324, %v650
      %v669 = vmul.f32 %v387, %v650
      %v670 = vmul.f32 %v327, %v650
      %v671 = vmul.f32 %v388, %v650
      %v672 = vmul.f32 %v330, %v650
      %v673 = vmul.f32 %v389, %v650
      %v674 = vmul.f32 %v333, %v650
      %v675 = vmul.f32 %v390, %v650
      %v676 = vmul.f32 %v336, %v650
      %v677 = vmul.f32 %v391, %v650
      %v678 = vmul.f32 %v339, %v650
      %v679 = vmul.f32 %v392, %v650
      %v680 = vmul.f32 %v342, %v650
      %v681 = vmul.f32 %v393, %v650
      %v682 = vmul.f32 %v345, %v650
      %v683 = vperm.slane %v648, 0
      %v684 = vmul.f32 %v233, %v683
      %v685 = vmul.f32 %v234, %v683
      %v686 = vmul.f32 %v235, %v683
      %v687 = vmul.f32 %v236, %v683
      %v688 = vmul.f32 %v237, %v683
      %v689 = vmul.f32 %v238, %v683
      %v690 = vmul.f32 %v239, %v683
      %v691 = vmul.f32 %v240, %v683
      %v692 = vmul.f32 %v241, %v683
      %v693 = vmul.f32 %v242, %v683
      %v694 = vmul.f32 %v243, %v683
      %v695 = vmul.f32 %v244, %v683
      %v696 = vmul.f32 %v245, %v683
      %v697 = vmul.f32 %v246, %v683
      %v698 = vmul.f32 %v247, %v683
      %v699 = vmul.f32 %v248, %v683
      %v700 = vmul.f32 %v249, %v683
      %v701 = vmul.f32 %v250, %v683
      %v702 = vmul.f32 %v251, %v683
      %v703 = vmul.f32 %v252, %v683
      %v704 = vmul.f32 %v253, %v683
      %v705 = vmul.f32 %v254, %v683
      %v706 = vmul.f32 %v255, %v683
      %v707 = vmul.f32 %v256, %v683
      %v708 = vmul.f32 %v257, %v683
      %v709 = vmul.f32 %v258, %v683
      %v710 = vmul.f32 %v259, %v683
      %v711 = vmul.f32 %v260, %v683
      %v712 = vmul.f32 %v261, %v683
      %v713 = vmul.f32 %v262, %v683
      %v714 = vmul.f32 %v263, %v683
      %v715 = vmul.f32 %v264, %v683
      %v716 = vadd.f32 %v651, %v684
      %v717 = vadd.f32 %v652, %v685
      %v718 = vadd.f32 %v653, %v686
      %v719 = vadd.f32 %v654, %v687
      %v720 = vadd.f32 %v655, %v688
      %v721 = vadd.f32 %v656, %v689
      %v722 = vadd.f32 %v657, %v690
      %v723 = vadd.f32 %v658, %v691
      %v724 = vadd.f32 %v659, %v692
      %v725 = vadd.f32 %v660, %v693
      %v726 = vadd.f32 %v661, %v694
      %v727 = vadd.f32 %v662, %v695
      %v728 = vadd.f32 %v663, %v696
      %v729 = vadd.f32 %v664, %v697
      %v730 = vadd.f32 %v665, %v698
      %v731 = vadd.f32 %v666, %v699
      %v732 = vadd.f32 %v667, %v700
      %v733 = vadd.f32 %v668, %v701
      %v734 = vadd.f32 %v669, %v702
      %v735 = vadd.f32 %v670, %v703
      %v736 = vadd.f32 %v671, %v704
      %v737 = vadd.f32 %v672, %v705
      %v738 = vadd.f32 %v673, %v706
      %v739 = vadd.f32 %v674, %v707
      %v740 = vadd.f32 %v675, %v708
      %v741 = vadd.f32 %v676, %v709
      %v742 = vadd.f32 %v677, %v710
      %v743 = vadd.f32 %v678, %v711
      %v744 = vadd.f32 %v679, %v712
      %v745 = vadd.f32 %v680, %v713
      %v746 = vadd.f32 %v681, %v714
      %v747 = vadd.f32 %v682, %v715
      %v748 = vperm.slane %v649, 0
      %v749 = vmul.f32 %v397, %v748
      %v750 = vmul.f32 %v475, %v748
      %v751 = vmul.f32 %v400, %v748
      %v752 = vmul.f32 %v476, %v748
      %v753 = vmul.f32 %v403, %v748
      %v754 = vmul.f32 %v477, %v748
      %v755 = vmul.f32 %v406, %v748
      %v756 = vmul.f32 %v478, %v748
      %v757 = vmul.f32 %v409, %v748
      %v758 = vmul.f32 %v479, %v748
      %v759 = vmul.f32 %v412, %v748
      %v760 = vmul.f32 %v480, %v748
      %v761 = vmul.f32 %v415, %v748
      %v762 = vmul.f32 %v481, %v748
      %v763 = vmul.f32 %v418, %v748
      %v764 = vmul.f32 %v482, %v748
      %v765 = vmul.f32 %v421, %v748
      %v766 = vmul.f32 %v483, %v748
      %v767 = vmul.f32 %v424, %v748
      %v768 = vmul.f32 %v484, %v748
      %v769 = vmul.f32 %v427, %v748
      %v770 = vmul.f32 %v485, %v748
      %v771 = vmul.f32 %v430, %v748
      %v772 = vmul.f32 %v486, %v748
      %v773 = vmul.f32 %v433, %v748
      %v774 = vmul.f32 %v487, %v748
      %v775 = vmul.f32 %v436, %v748
      %v776 = vmul.f32 %v488, %v748
      %v777 = vmul.f32 %v439, %v748
      %v778 = vmul.f32 %v489, %v748
      %v779 = vmul.f32 %v442, %v748
      %v780 = vmul.f32 %v490, %v748
      %v781 = vadd.f32 %v716, %v749
      %v782 = vadd.f32 %v717, %v750
      %v783 = vadd.f32 %v718, %v751
      %v784 = vadd.f32 %v719, %v752
      %v785 = vadd.f32 %v720, %v753
      %v786 = vadd.f32 %v721, %v754
      %v787 = vadd.f32 %v722, %v755
      %v788 = vadd.f32 %v723, %v756
      %v789 = vadd.f32 %v724, %v757
      %v790 = vadd.f32 %v725, %v758
      %v791 = vadd.f32 %v726, %v759
      %v792 = vadd.f32 %v727, %v760
      %v793 = vadd.f32 %v728, %v761
      %v794 = vadd.f32 %v729, %v762
      %v795 = vadd.f32 %v730, %v763
      %v796 = vadd.f32 %v731, %v764
      %v797 = vadd.f32 %v732, %v765
      %v798 = vadd.f32 %v733, %v766
      %v799 = vadd.f32 %v734, %v767
      %v800 = vadd.f32 %v735, %v768
      %v801 = vadd.f32 %v736, %v769
      %v802 = vadd.f32 %v737, %v770
      %v803 = vadd.f32 %v738, %v771
      %v804 = vadd.f32 %v739, %v772
      %v805 = vadd.f32 %v740, %v773
      %v806 = vadd.f32 %v741, %v774
      %v807 = vadd.f32 %v742, %v775
      %v808 = vadd.f32 %v743, %v776
      %v809 = vadd.f32 %v744, %v777
      %v810 = vadd.f32 %v745, %v778
      %v811 = vadd.f32 %v746, %v779
      %v812 = vadd.f32 %v747, %v780
      %v813 = vld [vmem:[%s221 + $0x6] sm:$0x1]
      %v814 = vld [vmem:[%s221 + $0x7] sm:$0x1]
      %v815 = vld [vmem:[%s221 + $0x8] sm:$0x1]
      %v816 = vperm.slane %v813, 0
      %v817 = vmul.f32 %v379, %v816
      %v818 = vmul.f32 %v303, %v816
      %v819 = vmul.f32 %v380, %v816
      %v820 = vmul.f32 %v306, %v816
      %v821 = vmul.f32 %v381, %v816
      %v822 = vmul.f32 %v309, %v816
      %v823 = vmul.f32 %v382, %v816
      %v824 = vmul.f32 %v312, %v816
      %v825 = vmul.f32 %v383, %v816
      %v826 = vmul.f32 %v315, %v816
      %v827 = vmul.f32 %v384, %v816
      %v828 = vmul.f32 %v318, %v816
      %v829 = vmul.f32 %v385, %v816
      %v830 = vmul.f32 %v321, %v816
      %v831 = vmul.f32 %v386, %v816
      %v832 = vmul.f32 %v324, %v816
      %v833 = vmul.f32 %v387, %v816
      %v834 = vmul.f32 %v327, %v816
      %v835 = vmul.f32 %v388, %v816
      %v836 = vmul.f32 %v330, %v816
      %v837 = vmul.f32 %v389, %v816
      %v838 = vmul.f32 %v333, %v816
      %v839 = vmul.f32 %v390, %v816
      %v840 = vmul.f32 %v336, %v816
      %v841 = vmul.f32 %v391, %v816
      %v842 = vmul.f32 %v339, %v816
      %v843 = vmul.f32 %v392, %v816
      %v844 = vmul.f32 %v342, %v816
      %v845 = vmul.f32 %v393, %v816
      %v846 = vmul.f32 %v345, %v816
      %v847 = vperm.slane %v814, 0
      %v848 = vmul.f32 %v235, %v847
      %v849 = vmul.f32 %v236, %v847
      %v850 = vmul.f32 %v237, %v847
      %v851 = vmul.f32 %v238, %v847
      %v852 = vmul.f32 %v239, %v847
      %v853 = vmul.f32 %v240, %v847
      %v854 = vmul.f32 %v241, %v847
      %v855 = vmul.f32 %v242, %v847
      %v856 = vmul.f32 %v243, %v847
      %v857 = vmul.f32 %v244, %v847
      %v858 = vmul.f32 %v245, %v847
      %v859 = vmul.f32 %v246, %v847
      %v860 = vmul.f32 %v247, %v847
      %v861 = vmul.f32 %v248, %v847
      %v862 = vmul.f32 %v249, %v847
      %v863 = vmul.f32 %v250, %v847
      %v864 = vmul.f32 %v251, %v847
      %v865 = vmul.f32 %v252, %v847
      %v866 = vmul.f32 %v253, %v847
      %v867 = vmul.f32 %v254, %v847
      %v868 = vmul.f32 %v255, %v847
      %v869 = vmul.f32 %v256, %v847
      %v870 = vmul.f32 %v257, %v847
      %v871 = vmul.f32 %v258, %v847
      %v872 = vmul.f32 %v259, %v847
      %v873 = vmul.f32 %v260, %v847
      %v874 = vmul.f32 %v261, %v847
      %v875 = vmul.f32 %v262, %v847
      %v876 = vmul.f32 %v263, %v847
      %v877 = vmul.f32 %v264, %v847
      %v878 = vadd.f32 %v817, %v848
      %v879 = vadd.f32 %v818, %v849
      %v880 = vadd.f32 %v819, %v850
      %v881 = vadd.f32 %v820, %v851
      %v882 = vadd.f32 %v821, %v852
      %v883 = vadd.f32 %v822, %v853
      %v884 = vadd.f32 %v823, %v854
      %v885 = vadd.f32 %v824, %v855
      %v886 = vadd.f32 %v825, %v856
      %v887 = vadd.f32 %v826, %v857
      %v888 = vadd.f32 %v827, %v858
      %v889 = vadd.f32 %v828, %v859
      %v890 = vadd.f32 %v829, %v860
      %v891 = vadd.f32 %v830, %v861
      %v892 = vadd.f32 %v831, %v862
      %v893 = vadd.f32 %v832, %v863
      %v894 = vadd.f32 %v833, %v864
      %v895 = vadd.f32 %v834, %v865
      %v896 = vadd.f32 %v835, %v866
      %v897 = vadd.f32 %v836, %v867
      %v898 = vadd.f32 %v837, %v868
      %v899 = vadd.f32 %v838, %v869
      %v900 = vadd.f32 %v839, %v870
      %v901 = vadd.f32 %v840, %v871
      %v902 = vadd.f32 %v841, %v872
      %v903 = vadd.f32 %v842, %v873
      %v904 = vadd.f32 %v843, %v874
      %v905 = vadd.f32 %v844, %v875
      %v906 = vadd.f32 %v845, %v876
      %v907 = vadd.f32 %v846, %v877
      %v908 = vperm.slane %v815, 0
      %v909 = vmul.f32 %v400, %v908
      %v910 = vmul.f32 %v476, %v908
      %v911 = vmul.f32 %v403, %v908
      %v912 = vmul.f32 %v477, %v908
      %v913 = vmul.f32 %v406, %v908
      %v914 = vmul.f32 %v478, %v908
      %v915 = vmul.f32 %v409, %v908
      %v916 = vmul.f32 %v479, %v908
      %v917 = vmul.f32 %v412, %v908
      %v918 = vmul.f32 %v480, %v908
      %v919 = vmul.f32 %v415, %v908
      %v920 = vmul.f32 %v481, %v908
      %v921 = vmul.f32 %v418, %v908
      %v922 = vmul.f32 %v482, %v908
      %v923 = vmul.f32 %v421, %v908
      %v924 = vmul.f32 %v483, %v908
      %v925 = vmul.f32 %v424, %v908
      %v926 = vmul.f32 %v484, %v908
      %v927 = vmul.f32 %v427, %v908
      %v928 = vmul.f32 %v485, %v908
      %v929 = vmul.f32 %v430, %v908
      %v930 = vmul.f32 %v486, %v908
      %v931 = vmul.f32 %v433, %v908
      %v932 = vmul.f32 %v487, %v908
      %v933 = vmul.f32 %v436, %v908
      %v934 = vmul.f32 %v488, %v908
      %v935 = vmul.f32 %v439, %v908
      %v936 = vmul.f32 %v489, %v908
      %v937 = vmul.f32 %v442, %v908
      %v938 = vmul.f32 %v490, %v908
      %v939 = vadd.f32 %v878, %v909
      %v940 = vadd.f32 %v879, %v910
      %v941 = vadd.f32 %v880, %v911
      %v942 = vadd.f32 %v881, %v912
      %v943 = vadd.f32 %v882, %v913
      %v944 = vadd.f32 %v883, %v914
      %v945 = vadd.f32 %v884, %v915
      %v946 = vadd.f32 %v885, %v916
      %v947 = vadd.f32 %v886, %v917
      %v948 = vadd.f32 %v887, %v918
      %v949 = vadd.f32 %v888, %v919
      %v950 = vadd.f32 %v889, %v920
      %v951 = vadd.f32 %v890, %v921
      %v952 = vadd.f32 %v891, %v922
      %v953 = vadd.f32 %v892, %v923
      %v954 = vadd.f32 %v893, %v924
      %v955 = vadd.f32 %v894, %v925
      %v956 = vadd.f32 %v895, %v926
      %v957 = vadd.f32 %v896, %v927
      %v958 = vadd.f32 %v897, %v928
      %v959 = vadd.f32 %v898, %v929
      %v960 = vadd.f32 %v899, %v930
      %v961 = vadd.f32 %v900, %v931
      %v962 = vadd.f32 %v901, %v932
      %v963 = vadd.f32 %v902, %v933
      %v964 = vadd.f32 %v903, %v934
      %v965 = vadd.f32 %v904, %v935
      %v966 = vadd.f32 %v905, %v936
      %v967 = vadd.f32 %v906, %v937
      %v968 = vadd.f32 %v907, %v938
      %v969 = vadd.f32 %v781, 0.0
      %v970 = vadd.f32 %v782, 0.0
      %v971 = vadd.f32 %v783, %v617
      %v972 = vadd.f32 %v784, %v618
      %v973 = vadd.f32 %v785, %v619
      %v974 = vadd.f32 %v786, %v620
      %v975 = vadd.f32 %v787, %v621
      %v976 = vadd.f32 %v788, %v622
      %v977 = vadd.f32 %v789, %v623
      %v978 = vadd.f32 %v790, %v624
      %v979 = vadd.f32 %v791, %v625
      %v980 = vadd.f32 %v792, %v626
      %v981 = vadd.f32 %v793, %v627
      %v982 = vadd.f32 %v794, %v628
      %v983 = vadd.f32 %v795, %v629
      %v984 = vadd.f32 %v796, %v630
      %v985 = vadd.f32 %v797, %v631
      %v986 = vadd.f32 %v798, %v632
      %v987 = vadd.f32 %v799, %v633
      %v988 = vadd.f32 %v800, %v634
      %v989 = vadd.f32 %v801, %v635
      %v990 = vadd.f32 %v802, %v636
      %v991 = vadd.f32 %v803, %v637
      %v992 = vadd.f32 %v804, %v638
      %v993 = vadd.f32 %v805, %v639
      %v994 = vadd.f32 %v806, %v640
      %v995 = vadd.f32 %v807, %v641
      %v996 = vadd.f32 %v808, %v642
      %v997 = vadd.f32 %v809, %v643
      %v998 = vadd.f32 %v810, %v644
      %v999 = vadd.f32 %v811, %v645
      %v1000 = vadd.f32 %v812, %v646
      %v1001 = vadd.f32 %v969, %v939
      %v1002 = vadd.f32 %v970, %v940
      %v1003 = vadd.f32 %v971, %v941
      %v1004 = vadd.f32 %v972, %v942
      %v1005 = vadd.f32 %v973, %v943
      %v1006 = vadd.f32 %v974, %v944
      %v1007 = vadd.f32 %v975, %v945
      %v1008 = vadd.f32 %v976, %v946
      %v1009 = vadd.f32 %v977, %v947
      %v1010 = vadd.f32 %v978, %v948
      %v1011 = vadd.f32 %v979, %v949
      %v1012 = vadd.f32 %v980, %v950
      %v1013 = vadd.f32 %v981, %v951
      %v1014 = vadd.f32 %v982, %v952
      %v1015 = vadd.f32 %v983, %v953
      %v1016 = vadd.f32 %v984, %v954
      %v1017 = vadd.f32 %v985, %v955
      %v1018 = vadd.f32 %v986, %v956
      %v1019 = vadd.f32 %v987, %v957
      %v1020 = vadd.f32 %v988, %v958
      %v1021 = vadd.f32 %v989, %v959
      %v1022 = vadd.f32 %v990, %v960
      %v1023 = vadd.f32 %v991, %v961
      %v1024 = vadd.f32 %v992, %v962
      %v1025 = vadd.f32 %v993, %v963
      %v1026 = vadd.f32 %v994, %v964
      %v1027 = vadd.f32 %v995, %v965
      %v1028 = vadd.f32 %v996, %v966
      %v1029 = vadd.f32 %v997, %v967
      %v1030 = vadd.f32 %v998, %v968
      %v1031 = vadd.f32 %v999, 0.0
      %v1032 = vadd.f32 %v1000, 0.0
      %v1033 = vld [vmem:[%s224] sm:$0x1]
      %v1035 = vperm.slane %v1033, 0
      %v1037 = vadd.f32 %v1001, %v1035
      %v1038 = vadd.f32 %v1002, %v1035
      %v1039 = vadd.f32 %v1003, %v1035
      %v1040 = vadd.f32 %v1004, %v1035
      %v1041 = vadd.f32 %v1005, %v1035
      %v1042 = vadd.f32 %v1006, %v1035
      %v1043 = vadd.f32 %v1007, %v1035
      %v1044 = vadd.f32 %v1008, %v1035
      %v1045 = vadd.f32 %v1009, %v1035
      %v1046 = vadd.f32 %v1010, %v1035
      %v1047 = vadd.f32 %v1011, %v1035
      %v1048 = vadd.f32 %v1012, %v1035
      %v1049 = vadd.f32 %v1013, %v1035
      %v1050 = vadd.f32 %v1014, %v1035
      %v1051 = vadd.f32 %v1015, %v1035
      %v1052 = vadd.f32 %v1016, %v1035
      %v1053 = vadd.f32 %v1017, %v1035
      %v1054 = vadd.f32 %v1018, %v1035
      %v1055 = vadd.f32 %v1019, %v1035
      %v1056 = vadd.f32 %v1020, %v1035
      %v1057 = vadd.f32 %v1021, %v1035
      %v1058 = vadd.f32 %v1022, %v1035
      %v1059 = vadd.f32 %v1023, %v1035
      %v1060 = vadd.f32 %v1024, %v1035
      %v1061 = vadd.f32 %v1025, %v1035
      %v1062 = vadd.f32 %v1026, %v1035
      %v1063 = vadd.f32 %v1027, %v1035
      %v1064 = vadd.f32 %v1028, %v1035
      %v1065 = vadd.f32 %v1029, %v1035
      %v1066 = vadd.f32 %v1030, %v1035
      %v1067 = vadd.f32 %v1031, %v1035
      %v1068 = vadd.f32 %v1032, %v1035
      %v1069 = vmul.f32 %v1037, 0.5
      %v1070 = vmul.f32 %v1038, 0.5
      %v1071 = vmul.f32 %v1039, 0.5
      %v1072 = vmul.f32 %v1040, 0.5
      %v1073 = vmul.f32 %v1041, 0.5
      %v1074 = vmul.f32 %v1042, 0.5
      %v1075 = vmul.f32 %v1043, 0.5
      %v1076 = vmul.f32 %v1044, 0.5
      %v1077 = vmul.f32 %v1045, 0.5
      %v1078 = vmul.f32 %v1046, 0.5
      %v1079 = vmul.f32 %v1047, 0.5
      %v1080 = vmul.f32 %v1048, 0.5
      %v1081 = vmul.f32 %v1049, 0.5
      %v1082 = vmul.f32 %v1050, 0.5
      %v1083 = vmul.f32 %v1051, 0.5
      %v1084 = vmul.f32 %v1052, 0.5
      %v1085 = vmul.f32 %v1053, 0.5
      %v1086 = vmul.f32 %v1054, 0.5
      %v1087 = vmul.f32 %v1055, 0.5
      %v1088 = vmul.f32 %v1056, 0.5
      %v1089 = vmul.f32 %v1057, 0.5
      %v1090 = vmul.f32 %v1058, 0.5
      %v1091 = vmul.f32 %v1059, 0.5
      %v1092 = vmul.f32 %v1060, 0.5
      %v1093 = vmul.f32 %v1061, 0.5
      %v1094 = vmul.f32 %v1062, 0.5
      %v1095 = vmul.f32 %v1063, 0.5
      %v1096 = vmul.f32 %v1064, 0.5
      %v1097 = vmul.f32 %v1065, 0.5
      %v1098 = vmul.f32 %v1066, 0.5
      %v1099 = vmul.f32 %v1067, 0.5
      %v1100 = vmul.f32 %v1068, 0.5
      %v1101 = vmul.f32 %v1037, 0.70710677
      %v1102 = vmul.f32 %v1038, 0.70710677
      %v1103 = vmul.f32 %v1039, 0.70710677
      %v1104 = vmul.f32 %v1040, 0.70710677
      %v1105 = vmul.f32 %v1041, 0.70710677
      %v1106 = vmul.f32 %v1042, 0.70710677
      %v1107 = vmul.f32 %v1043, 0.70710677
      %v1108 = vmul.f32 %v1044, 0.70710677
      %v1109 = vmul.f32 %v1045, 0.70710677
      %v1110 = vmul.f32 %v1046, 0.70710677
      %v1111 = vmul.f32 %v1047, 0.70710677
      %v1112 = vmul.f32 %v1048, 0.70710677
      %v1113 = vmul.f32 %v1049, 0.70710677
      %v1114 = vmul.f32 %v1050, 0.70710677
      %v1115 = vmul.f32 %v1051, 0.70710677
      %v1116 = vmul.f32 %v1052, 0.70710677
      %v1117 = vmul.f32 %v1053, 0.70710677
      %v1118 = vmul.f32 %v1054, 0.70710677
      %v1119 = vmul.f32 %v1055, 0.70710677
      %v1120 = vmul.f32 %v1056, 0.70710677
      %v1121 = vmul.f32 %v1057, 0.70710677
      %v1122 = vmul.f32 %v1058, 0.70710677
      %v1123 = vmul.f32 %v1059, 0.70710677
      %v1124 = vmul.f32 %v1060, 0.70710677
      %v1125 = vmul.f32 %v1061, 0.70710677
      %v1126 = vmul.f32 %v1062, 0.70710677
      %v1127 = vmul.f32 %v1063, 0.70710677
      %v1128 = vmul.f32 %v1064, 0.70710677
      %v1129 = vmul.f32 %v1065, 0.70710677
      %v1130 = vmul.f32 %v1066, 0.70710677
      %v1131 = vmul.f32 %v1067, 0.70710677
      %v1132 = vmul.f32 %v1068, 0.70710677
      %v1133 = vmul.f32 %v1101, %v1101
      %v1134 = vmin.f32 16.0, %v1133
      %v1135 = vmul.f32 %v1134, 2.1237322e-06
      %v1136 = vadd.f32 %v1135, 0.00028619796
      %v1137 = vmul.f32 %v1134, %v1136
      %v1138 = vadd.f32 %v1137, 0.0036580483
      %v1139 = vmul.f32 %v1134, %v1138
      %v1140 = vadd.f32 %v1139, 0.05243302
      %v1141 = vmul.f32 %v1134, %v1140
      %v1142 = vadd.f32 %v1141, 0.18741608
      %v1143 = vmul.f32 %v1134, %v1142
      %v1144 = vadd.f32 %v1143, 1.1283791
      %v1145 = vmul.f32 %v1101, %v1144
      %v1146 = vmul.f32 %v1134, 3.8918573e-05
      %v1147 = vadd.f32 %v1146, 0.001143296
      %v1148 = vmul.f32 %v1134, %v1147
      %v1149 = vadd.f32 %v1148, 0.014752088
      %v1150 = vmul.f32 %v1134, %v1149
      %v1151 = vadd.f32 %v1150, 0.112945676
      %v1152 = vmul.f32 %v1134, %v1151
      %v1153 = vadd.f32 %v1152, 0.4994258
      %v1154 = vmul.f32 %v1134, %v1153
      %v1155 = vadd.f32 %v1154, 1.0
      %v1156 = vrcp.pop %v1155
      %v1157 = vmul.f32 %v1155, %v1156
      %v1158 = vsub.f32 1.0, %v1157
      %v1159 = vmul.f32 %v1156, %v1158
      %v1160 = vadd.f32 %v1156, %v1159
      %vm1161 = vweird.f32 %v1155
      %vm1162 = vweird.f32 %v1156
      %vm1163 = vmor %vm1161, %vm1162
      %v1164 = vsel %vm1163, %v1156, %v1160
      %v1165 = vand.u32 2147483647, %v1155
      %vm1166 = vcmp.eq.f32.partialorder %v1165, 8.507059e+37
      %v1167 = vand.u32 %v1155, 2147483648
      %v1168 = vor.u32 1.1754944e-38, %v1167
      %v1169 = vsel %vm1166, %v1168, %v1164
      %v1170 = vmul.f32 %v1145, %v1169
      %v1171 = vmin.f32 %v1170, 1.0
      %v1172 = vmax.f32 %v1171, -1.0
      %v1173 = vmul.f32 %v1102, %v1102
      %v1174 = vmin.f32 16.0, %v1173
      %v1175 = vmul.f32 %v1174, 2.1237322e-06
      %v1176 = vadd.f32 %v1175, 0.00028619796
      %v1177 = vmul.f32 %v1174, %v1176
      %v1178 = vadd.f32 %v1177, 0.0036580483
      %v1179 = vmul.f32 %v1174, %v1178
      %v1180 = vadd.f32 %v1179, 0.05243302
      %v1181 = vmul.f32 %v1174, %v1180
      %v1182 = vadd.f32 %v1181, 0.18741608
      %v1183 = vmul.f32 %v1174, %v1182
      %v1184 = vadd.f32 %v1183, 1.1283791
      %v1185 = vmul.f32 %v1102, %v1184
      %v1186 = vmul.f32 %v1174, 3.8918573e-05
      %v1187 = vadd.f32 %v1186, 0.001143296
      %v1188 = vmul.f32 %v1174, %v1187
      %v1189 = vadd.f32 %v1188, 0.014752088
      %v1190 = vmul.f32 %v1174, %v1189
      %v1191 = vadd.f32 %v1190, 0.112945676
      %v1192 = vmul.f32 %v1174, %v1191
      %v1193 = vadd.f32 %v1192, 0.4994258
      %v1194 = vmul.f32 %v1174, %v1193
      %v1195 = vadd.f32 %v1194, 1.0
      %v1196 = vrcp.pop %v1195
      %v1197 = vmul.f32 %v1195, %v1196
      %v1198 = vsub.f32 1.0, %v1197
      %v1199 = vmul.f32 %v1196, %v1198
      %v1200 = vadd.f32 %v1196, %v1199
      %vm1201 = vweird.f32 %v1195
      %vm1202 = vweird.f32 %v1196
      %vm1203 = vmor %vm1201, %vm1202
      %v1204 = vsel %vm1203, %v1196, %v1200
      %v1205 = vand.u32 2147483647, %v1195
      %vm1206 = vcmp.eq.f32.partialorder %v1205, 8.507059e+37
      %v1207 = vand.u32 %v1195, 2147483648
      %v1208 = vor.u32 1.1754944e-38, %v1207
      %v1209 = vsel %vm1206, %v1208, %v1204
      %v1210 = vmul.f32 %v1185, %v1209
      %v1211 = vmin.f32 %v1210, 1.0
      %v1212 = vmax.f32 %v1211, -1.0
      %v1213 = vmul.f32 %v1103, %v1103
      %v1214 = vmin.f32 16.0, %v1213
      %v1215 = vmul.f32 %v1214, 2.1237322e-06
      %v1216 = vadd.f32 %v1215, 0.00028619796
      %v1217 = vmul.f32 %v1214, %v1216
      %v1218 = vadd.f32 %v1217, 0.0036580483
      %v1219 = vmul.f32 %v1214, %v1218
      %v1220 = vadd.f32 %v1219, 0.05243302
      %v1221 = vmul.f32 %v1214, %v1220
      %v1222 = vadd.f32 %v1221, 0.18741608
      %v1223 = vmul.f32 %v1214, %v1222
      %v1224 = vadd.f32 %v1223, 1.1283791
      %v1225 = vmul.f32 %v1103, %v1224
      %v1226 = vmul.f32 %v1214, 3.8918573e-05
      %v1227 = vadd.f32 %v1226, 0.001143296
      %v1228 = vmul.f32 %v1214, %v1227
      %v1229 = vadd.f32 %v1228, 0.014752088
      %v1230 = vmul.f32 %v1214, %v1229
      %v1231 = vadd.f32 %v1230, 0.112945676
      %v1232 = vmul.f32 %v1214, %v1231
      %v1233 = vadd.f32 %v1232, 0.4994258
      %v1234 = vmul.f32 %v1214, %v1233
      %v1235 = vadd.f32 %v1234, 1.0
      %v1236 = vrcp.pop %v1235
      %v1237 = vmul.f32 %v1235, %v1236
      %v1238 = vsub.f32 1.0, %v1237
      %v1239 = vmul.f32 %v1236, %v1238
      %v1240 = vadd.f32 %v1236, %v1239
      %vm1241 = vweird.f32 %v1235
      %vm1242 = vweird.f32 %v1236
      %vm1243 = vmor %vm1241, %vm1242
      %v1244 = vsel %vm1243, %v1236, %v1240
      %v1245 = vand.u32 2147483647, %v1235
      %vm1246 = vcmp.eq.f32.partialorder %v1245, 8.507059e+37
      %v1247 = vand.u32 %v1235, 2147483648
      %v1248 = vor.u32 1.1754944e-38, %v1247
      %v1249 = vsel %vm1246, %v1248, %v1244
      %v1250 = vmul.f32 %v1225, %v1249
      %v1251 = vmin.f32 %v1250, 1.0
      %v1252 = vmax.f32 %v1251, -1.0
      %v1253 = vmul.f32 %v1104, %v1104
      %v1254 = vmin.f32 16.0, %v1253
      %v1255 = vmul.f32 %v1254, 2.1237322e-06
      %v1256 = vadd.f32 %v1255, 0.00028619796
      %v1257 = vmul.f32 %v1254, %v1256
      %v1258 = vadd.f32 %v1257, 0.0036580483
      %v1259 = vmul.f32 %v1254, %v1258
      %v1260 = vadd.f32 %v1259, 0.05243302
      %v1261 = vmul.f32 %v1254, %v1260
      %v1262 = vadd.f32 %v1261, 0.18741608
      %v1263 = vmul.f32 %v1254, %v1262
      %v1264 = vadd.f32 %v1263, 1.1283791
      %v1265 = vmul.f32 %v1104, %v1264
      %v1266 = vmul.f32 %v1254, 3.8918573e-05
      %v1267 = vadd.f32 %v1266, 0.001143296
      %v1268 = vmul.f32 %v1254, %v1267
      %v1269 = vadd.f32 %v1268, 0.014752088
      %v1270 = vmul.f32 %v1254, %v1269
      %v1271 = vadd.f32 %v1270, 0.112945676
      %v1272 = vmul.f32 %v1254, %v1271
      %v1273 = vadd.f32 %v1272, 0.4994258
      %v1274 = vmul.f32 %v1254, %v1273
      %v1275 = vadd.f32 %v1274, 1.0
      %v1276 = vrcp.pop %v1275
      %v1277 = vmul.f32 %v1275, %v1276
      %v1278 = vsub.f32 1.0, %v1277
      %v1279 = vmul.f32 %v1276, %v1278
      %v1280 = vadd.f32 %v1276, %v1279
      %vm1281 = vweird.f32 %v1275
      %vm1282 = vweird.f32 %v1276
      %vm1283 = vmor %vm1281, %vm1282
      %v1284 = vsel %vm1283, %v1276, %v1280
      %v1285 = vand.u32 2147483647, %v1275
      %vm1286 = vcmp.eq.f32.partialorder %v1285, 8.507059e+37
      %v1287 = vand.u32 %v1275, 2147483648
      %v1288 = vor.u32 1.1754944e-38, %v1287
      %v1289 = vsel %vm1286, %v1288, %v1284
      %v1290 = vmul.f32 %v1265, %v1289
      %v1291 = vmin.f32 %v1290, 1.0
      %v1292 = vmax.f32 %v1291, -1.0
      %v1293 = vmul.f32 %v1105, %v1105
      %v1294 = vmin.f32 16.0, %v1293
      %v1295 = vmul.f32 %v1294, 2.1237322e-06
      %v1296 = vadd.f32 %v1295, 0.00028619796
      %v1297 = vmul.f32 %v1294, %v1296
      %v1298 = vadd.f32 %v1297, 0.0036580483
      %v1299 = vmul.f32 %v1294, %v1298
      %v1300 = vadd.f32 %v1299, 0.05243302
      %v1301 = vmul.f32 %v1294, %v1300
      %v1302 = vadd.f32 %v1301, 0.18741608
      %v1303 = vmul.f32 %v1294, %v1302
      %v1304 = vadd.f32 %v1303, 1.1283791
      %v1305 = vmul.f32 %v1105, %v1304
      %v1306 = vmul.f32 %v1294, 3.8918573e-05
      %v1307 = vadd.f32 %v1306, 0.001143296
      %v1308 = vmul.f32 %v1294, %v1307
      %v1309 = vadd.f32 %v1308, 0.014752088
      %v1310 = vmul.f32 %v1294, %v1309
      %v1311 = vadd.f32 %v1310, 0.112945676
      %v1312 = vmul.f32 %v1294, %v1311
      %v1313 = vadd.f32 %v1312, 0.4994258
      %v1314 = vmul.f32 %v1294, %v1313
      %v1315 = vadd.f32 %v1314, 1.0
      %v1316 = vrcp.pop %v1315
      %v1317 = vmul.f32 %v1315, %v1316
      %v1318 = vsub.f32 1.0, %v1317
      %v1319 = vmul.f32 %v1316, %v1318
      %v1320 = vadd.f32 %v1316, %v1319
      %vm1321 = vweird.f32 %v1315
      %vm1322 = vweird.f32 %v1316
      %vm1323 = vmor %vm1321, %vm1322
      %v1324 = vsel %vm1323, %v1316, %v1320
      %v1325 = vand.u32 2147483647, %v1315
      %vm1326 = vcmp.eq.f32.partialorder %v1325, 8.507059e+37
      %v1327 = vand.u32 %v1315, 2147483648
      %v1328 = vor.u32 1.1754944e-38, %v1327
      %v1329 = vsel %vm1326, %v1328, %v1324
      %v1330 = vmul.f32 %v1305, %v1329
      %v1331 = vmin.f32 %v1330, 1.0
      %v1332 = vmax.f32 %v1331, -1.0
      %v1333 = vmul.f32 %v1106, %v1106
      %v1334 = vmin.f32 16.0, %v1333
      %v1335 = vmul.f32 %v1334, 2.1237322e-06
      %v1336 = vadd.f32 %v1335, 0.00028619796
      %v1337 = vmul.f32 %v1334, %v1336
      %v1338 = vadd.f32 %v1337, 0.0036580483
      %v1339 = vmul.f32 %v1334, %v1338
      %v1340 = vadd.f32 %v1339, 0.05243302
      %v1341 = vmul.f32 %v1334, %v1340
      %v1342 = vadd.f32 %v1341, 0.18741608
      %v1343 = vmul.f32 %v1334, %v1342
      %v1344 = vadd.f32 %v1343, 1.1283791
      %v1345 = vmul.f32 %v1106, %v1344
      %v1346 = vmul.f32 %v1334, 3.8918573e-05
      %v1347 = vadd.f32 %v1346, 0.001143296
      %v1348 = vmul.f32 %v1334, %v1347
      %v1349 = vadd.f32 %v1348, 0.014752088
      %v1350 = vmul.f32 %v1334, %v1349
      %v1351 = vadd.f32 %v1350, 0.112945676
      %v1352 = vmul.f32 %v1334, %v1351
      %v1353 = vadd.f32 %v1352, 0.4994258
      %v1354 = vmul.f32 %v1334, %v1353
      %v1355 = vadd.f32 %v1354, 1.0
      %v1356 = vrcp.pop %v1355
      %v1357 = vmul.f32 %v1355, %v1356
      %v1358 = vsub.f32 1.0, %v1357
      %v1359 = vmul.f32 %v1356, %v1358
      %v1360 = vadd.f32 %v1356, %v1359
      %vm1361 = vweird.f32 %v1355
      %vm1362 = vweird.f32 %v1356
      %vm1363 = vmor %vm1361, %vm1362
      %v1364 = vsel %vm1363, %v1356, %v1360
      %v1365 = vand.u32 2147483647, %v1355
      %vm1366 = vcmp.eq.f32.partialorder %v1365, 8.507059e+37
      %v1367 = vand.u32 %v1355, 2147483648
      %v1368 = vor.u32 1.1754944e-38, %v1367
      %v1369 = vsel %vm1366, %v1368, %v1364
      %v1370 = vmul.f32 %v1345, %v1369
      %v1371 = vmin.f32 %v1370, 1.0
      %v1372 = vmax.f32 %v1371, -1.0
      %v1373 = vmul.f32 %v1107, %v1107
      %v1374 = vmin.f32 16.0, %v1373
      %v1375 = vmul.f32 %v1374, 2.1237322e-06
      %v1376 = vadd.f32 %v1375, 0.00028619796
      %v1377 = vmul.f32 %v1374, %v1376
      %v1378 = vadd.f32 %v1377, 0.0036580483
      %v1379 = vmul.f32 %v1374, %v1378
      %v1380 = vadd.f32 %v1379, 0.05243302
      %v1381 = vmul.f32 %v1374, %v1380
      %v1382 = vadd.f32 %v1381, 0.18741608
      %v1383 = vmul.f32 %v1374, %v1382
      %v1384 = vadd.f32 %v1383, 1.1283791
      %v1385 = vmul.f32 %v1107, %v1384
      %v1386 = vmul.f32 %v1374, 3.8918573e-05
      %v1387 = vadd.f32 %v1386, 0.001143296
      %v1388 = vmul.f32 %v1374, %v1387
      %v1389 = vadd.f32 %v1388, 0.014752088
      %v1390 = vmul.f32 %v1374, %v1389
      %v1391 = vadd.f32 %v1390, 0.112945676
      %v1392 = vmul.f32 %v1374, %v1391
      %v1393 = vadd.f32 %v1392, 0.4994258
      %v1394 = vmul.f32 %v1374, %v1393
      %v1395 = vadd.f32 %v1394, 1.0
      %v1396 = vrcp.pop %v1395
      %v1397 = vmul.f32 %v1395, %v1396
      %v1398 = vsub.f32 1.0, %v1397
      %v1399 = vmul.f32 %v1396, %v1398
      %v1400 = vadd.f32 %v1396, %v1399
      %vm1401 = vweird.f32 %v1395
      %vm1402 = vweird.f32 %v1396
      %vm1403 = vmor %vm1401, %vm1402
      %v1404 = vsel %vm1403, %v1396, %v1400
      %v1405 = vand.u32 2147483647, %v1395
      %vm1406 = vcmp.eq.f32.partialorder %v1405, 8.507059e+37
      %v1407 = vand.u32 %v1395, 2147483648
      %v1408 = vor.u32 1.1754944e-38, %v1407
      %v1409 = vsel %vm1406, %v1408, %v1404
      %v1410 = vmul.f32 %v1385, %v1409
      %v1411 = vmin.f32 %v1410, 1.0
      %v1412 = vmax.f32 %v1411, -1.0
      %v1413 = vmul.f32 %v1108, %v1108
      %v1414 = vmin.f32 16.0, %v1413
      %v1415 = vmul.f32 %v1414, 2.1237322e-06
      %v1416 = vadd.f32 %v1415, 0.00028619796
      %v1417 = vmul.f32 %v1414, %v1416
      %v1418 = vadd.f32 %v1417, 0.0036580483
      %v1419 = vmul.f32 %v1414, %v1418
      %v1420 = vadd.f32 %v1419, 0.05243302
      %v1421 = vmul.f32 %v1414, %v1420
      %v1422 = vadd.f32 %v1421, 0.18741608
      %v1423 = vmul.f32 %v1414, %v1422
      %v1424 = vadd.f32 %v1423, 1.1283791
      %v1425 = vmul.f32 %v1108, %v1424
      %v1426 = vmul.f32 %v1414, 3.8918573e-05
      %v1427 = vadd.f32 %v1426, 0.001143296
      %v1428 = vmul.f32 %v1414, %v1427
      %v1429 = vadd.f32 %v1428, 0.014752088
      %v1430 = vmul.f32 %v1414, %v1429
      %v1431 = vadd.f32 %v1430, 0.112945676
      %v1432 = vmul.f32 %v1414, %v1431
      %v1433 = vadd.f32 %v1432, 0.4994258
      %v1434 = vmul.f32 %v1414, %v1433
      %v1435 = vadd.f32 %v1434, 1.0
      %v1436 = vrcp.pop %v1435
      %v1437 = vmul.f32 %v1435, %v1436
      %v1438 = vsub.f32 1.0, %v1437
      %v1439 = vmul.f32 %v1436, %v1438
      %v1440 = vadd.f32 %v1436, %v1439
      %vm1441 = vweird.f32 %v1435
      %vm1442 = vweird.f32 %v1436
      %vm1443 = vmor %vm1441, %vm1442
      %v1444 = vsel %vm1443, %v1436, %v1440
      %v1445 = vand.u32 2147483647, %v1435
      %vm1446 = vcmp.eq.f32.partialorder %v1445, 8.507059e+37
      %v1447 = vand.u32 %v1435, 2147483648
      %v1448 = vor.u32 1.1754944e-38, %v1447
      %v1449 = vsel %vm1446, %v1448, %v1444
      %v1450 = vmul.f32 %v1425, %v1449
      %v1451 = vmin.f32 %v1450, 1.0
      %v1452 = vmax.f32 %v1451, -1.0
      %v1453 = vmul.f32 %v1109, %v1109
      %v1454 = vmin.f32 16.0, %v1453
      %v1455 = vmul.f32 %v1454, 2.1237322e-06
      %v1456 = vadd.f32 %v1455, 0.00028619796
      %v1457 = vmul.f32 %v1454, %v1456
      %v1458 = vadd.f32 %v1457, 0.0036580483
      %v1459 = vmul.f32 %v1454, %v1458
      %v1460 = vadd.f32 %v1459, 0.05243302
      %v1461 = vmul.f32 %v1454, %v1460
      %v1462 = vadd.f32 %v1461, 0.18741608
      %v1463 = vmul.f32 %v1454, %v1462
      %v1464 = vadd.f32 %v1463, 1.1283791
      %v1465 = vmul.f32 %v1109, %v1464
      %v1466 = vmul.f32 %v1454, 3.8918573e-05
      %v1467 = vadd.f32 %v1466, 0.001143296
      %v1468 = vmul.f32 %v1454, %v1467
      %v1469 = vadd.f32 %v1468, 0.014752088
      %v1470 = vmul.f32 %v1454, %v1469
      %v1471 = vadd.f32 %v1470, 0.112945676
      %v1472 = vmul.f32 %v1454, %v1471
      %v1473 = vadd.f32 %v1472, 0.4994258
      %v1474 = vmul.f32 %v1454, %v1473
      %v1475 = vadd.f32 %v1474, 1.0
      %v1476 = vrcp.pop %v1475
      %v1477 = vmul.f32 %v1475, %v1476
      %v1478 = vsub.f32 1.0, %v1477
      %v1479 = vmul.f32 %v1476, %v1478
      %v1480 = vadd.f32 %v1476, %v1479
      %vm1481 = vweird.f32 %v1475
      %vm1482 = vweird.f32 %v1476
      %vm1483 = vmor %vm1481, %vm1482
      %v1484 = vsel %vm1483, %v1476, %v1480
      %v1485 = vand.u32 2147483647, %v1475
      %vm1486 = vcmp.eq.f32.partialorder %v1485, 8.507059e+37
      %v1487 = vand.u32 %v1475, 2147483648
      %v1488 = vor.u32 1.1754944e-38, %v1487
      %v1489 = vsel %vm1486, %v1488, %v1484
      %v1490 = vmul.f32 %v1465, %v1489
      %v1491 = vmin.f32 %v1490, 1.0
      %v1492 = vmax.f32 %v1491, -1.0
      %v1493 = vmul.f32 %v1110, %v1110
      %v1494 = vmin.f32 16.0, %v1493
      %v1495 = vmul.f32 %v1494, 2.1237322e-06
      %v1496 = vadd.f32 %v1495, 0.00028619796
      %v1497 = vmul.f32 %v1494, %v1496
      %v1498 = vadd.f32 %v1497, 0.0036580483
      %v1499 = vmul.f32 %v1494, %v1498
      %v1500 = vadd.f32 %v1499, 0.05243302
      %v1501 = vmul.f32 %v1494, %v1500
      %v1502 = vadd.f32 %v1501, 0.18741608
      %v1503 = vmul.f32 %v1494, %v1502
      %v1504 = vadd.f32 %v1503, 1.1283791
      %v1505 = vmul.f32 %v1110, %v1504
      %v1506 = vmul.f32 %v1494, 3.8918573e-05
      %v1507 = vadd.f32 %v1506, 0.001143296
      %v1508 = vmul.f32 %v1494, %v1507
      %v1509 = vadd.f32 %v1508, 0.014752088
      %v1510 = vmul.f32 %v1494, %v1509
      %v1511 = vadd.f32 %v1510, 0.112945676
      %v1512 = vmul.f32 %v1494, %v1511
      %v1513 = vadd.f32 %v1512, 0.4994258
      %v1514 = vmul.f32 %v1494, %v1513
      %v1515 = vadd.f32 %v1514, 1.0
      %v1516 = vrcp.pop %v1515
      %v1517 = vmul.f32 %v1515, %v1516
      %v1518 = vsub.f32 1.0, %v1517
      %v1519 = vmul.f32 %v1516, %v1518
      %v1520 = vadd.f32 %v1516, %v1519
      %vm1521 = vweird.f32 %v1515
      %vm1522 = vweird.f32 %v1516
      %vm1523 = vmor %vm1521, %vm1522
      %v1524 = vsel %vm1523, %v1516, %v1520
      %v1525 = vand.u32 2147483647, %v1515
      %vm1526 = vcmp.eq.f32.partialorder %v1525, 8.507059e+37
      %v1527 = vand.u32 %v1515, 2147483648
      %v1528 = vor.u32 1.1754944e-38, %v1527
      %v1529 = vsel %vm1526, %v1528, %v1524
      %v1530 = vmul.f32 %v1505, %v1529
      %v1531 = vmin.f32 %v1530, 1.0
      %v1532 = vmax.f32 %v1531, -1.0
      %v1533 = vmul.f32 %v1111, %v1111
      %v1534 = vmin.f32 16.0, %v1533
      %v1535 = vmul.f32 %v1534, 2.1237322e-06
      %v1536 = vadd.f32 %v1535, 0.00028619796
      %v1537 = vmul.f32 %v1534, %v1536
      %v1538 = vadd.f32 %v1537, 0.0036580483
      %v1539 = vmul.f32 %v1534, %v1538
      %v1540 = vadd.f32 %v1539, 0.05243302
      %v1541 = vmul.f32 %v1534, %v1540
      %v1542 = vadd.f32 %v1541, 0.18741608
      %v1543 = vmul.f32 %v1534, %v1542
      %v1544 = vadd.f32 %v1543, 1.1283791
      %v1545 = vmul.f32 %v1111, %v1544
      %v1546 = vmul.f32 %v1534, 3.8918573e-05
      %v1547 = vadd.f32 %v1546, 0.001143296
      %v1548 = vmul.f32 %v1534, %v1547
      %v1549 = vadd.f32 %v1548, 0.014752088
      %v1550 = vmul.f32 %v1534, %v1549
      %v1551 = vadd.f32 %v1550, 0.112945676
      %v1552 = vmul.f32 %v1534, %v1551
      %v1553 = vadd.f32 %v1552, 0.4994258
      %v1554 = vmul.f32 %v1534, %v1553
      %v1555 = vadd.f32 %v1554, 1.0
      %v1556 = vrcp.pop %v1555
      %v1557 = vmul.f32 %v1555, %v1556
      %v1558 = vsub.f32 1.0, %v1557
      %v1559 = vmul.f32 %v1556, %v1558
      %v1560 = vadd.f32 %v1556, %v1559
      %vm1561 = vweird.f32 %v1555
      %vm1562 = vweird.f32 %v1556
      %vm1563 = vmor %vm1561, %vm1562
      %v1564 = vsel %vm1563, %v1556, %v1560
      %v1565 = vand.u32 2147483647, %v1555
      %vm1566 = vcmp.eq.f32.partialorder %v1565, 8.507059e+37
      %v1567 = vand.u32 %v1555, 2147483648
      %v1568 = vor.u32 1.1754944e-38, %v1567
      %v1569 = vsel %vm1566, %v1568, %v1564
      %v1570 = vmul.f32 %v1545, %v1569
      %v1571 = vmin.f32 %v1570, 1.0
      %v1572 = vmax.f32 %v1571, -1.0
      %v1573 = vmul.f32 %v1112, %v1112
      %v1574 = vmin.f32 16.0, %v1573
      %v1575 = vmul.f32 %v1574, 2.1237322e-06
      %v1576 = vadd.f32 %v1575, 0.00028619796
      %v1577 = vmul.f32 %v1574, %v1576
      %v1578 = vadd.f32 %v1577, 0.0036580483
      %v1579 = vmul.f32 %v1574, %v1578
      %v1580 = vadd.f32 %v1579, 0.05243302
      %v1581 = vmul.f32 %v1574, %v1580
      %v1582 = vadd.f32 %v1581, 0.18741608
      %v1583 = vmul.f32 %v1574, %v1582
      %v1584 = vadd.f32 %v1583, 1.1283791
      %v1585 = vmul.f32 %v1112, %v1584
      %v1586 = vmul.f32 %v1574, 3.8918573e-05
      %v1587 = vadd.f32 %v1586, 0.001143296
      %v1588 = vmul.f32 %v1574, %v1587
      %v1589 = vadd.f32 %v1588, 0.014752088
      %v1590 = vmul.f32 %v1574, %v1589
      %v1591 = vadd.f32 %v1590, 0.112945676
      %v1592 = vmul.f32 %v1574, %v1591
      %v1593 = vadd.f32 %v1592, 0.4994258
      %v1594 = vmul.f32 %v1574, %v1593
      %v1595 = vadd.f32 %v1594, 1.0
      %v1596 = vrcp.pop %v1595
      %v1597 = vmul.f32 %v1595, %v1596
      %v1598 = vsub.f32 1.0, %v1597
      %v1599 = vmul.f32 %v1596, %v1598
      %v1600 = vadd.f32 %v1596, %v1599
      %vm1601 = vweird.f32 %v1595
      %vm1602 = vweird.f32 %v1596
      %vm1603 = vmor %vm1601, %vm1602
      %v1604 = vsel %vm1603, %v1596, %v1600
      %v1605 = vand.u32 2147483647, %v1595
      %vm1606 = vcmp.eq.f32.partialorder %v1605, 8.507059e+37
      %v1607 = vand.u32 %v1595, 2147483648
      %v1608 = vor.u32 1.1754944e-38, %v1607
      %v1609 = vsel %vm1606, %v1608, %v1604
      %v1610 = vmul.f32 %v1585, %v1609
      %v1611 = vmin.f32 %v1610, 1.0
      %v1612 = vmax.f32 %v1611, -1.0
      %v1613 = vmul.f32 %v1113, %v1113
      %v1614 = vmin.f32 16.0, %v1613
      %v1615 = vmul.f32 %v1614, 2.1237322e-06
      %v1616 = vadd.f32 %v1615, 0.00028619796
      %v1617 = vmul.f32 %v1614, %v1616
      %v1618 = vadd.f32 %v1617, 0.0036580483
      %v1619 = vmul.f32 %v1614, %v1618
      %v1620 = vadd.f32 %v1619, 0.05243302
      %v1621 = vmul.f32 %v1614, %v1620
      %v1622 = vadd.f32 %v1621, 0.18741608
      %v1623 = vmul.f32 %v1614, %v1622
      %v1624 = vadd.f32 %v1623, 1.1283791
      %v1625 = vmul.f32 %v1113, %v1624
      %v1626 = vmul.f32 %v1614, 3.8918573e-05
      %v1627 = vadd.f32 %v1626, 0.001143296
      %v1628 = vmul.f32 %v1614, %v1627
      %v1629 = vadd.f32 %v1628, 0.014752088
      %v1630 = vmul.f32 %v1614, %v1629
      %v1631 = vadd.f32 %v1630, 0.112945676
      %v1632 = vmul.f32 %v1614, %v1631
      %v1633 = vadd.f32 %v1632, 0.4994258
      %v1634 = vmul.f32 %v1614, %v1633
      %v1635 = vadd.f32 %v1634, 1.0
      %v1636 = vrcp.pop %v1635
      %v1637 = vmul.f32 %v1635, %v1636
      %v1638 = vsub.f32 1.0, %v1637
      %v1639 = vmul.f32 %v1636, %v1638
      %v1640 = vadd.f32 %v1636, %v1639
      %vm1641 = vweird.f32 %v1635
      %vm1642 = vweird.f32 %v1636
      %vm1643 = vmor %vm1641, %vm1642
      %v1644 = vsel %vm1643, %v1636, %v1640
      %v1645 = vand.u32 2147483647, %v1635
      %vm1646 = vcmp.eq.f32.partialorder %v1645, 8.507059e+37
      %v1647 = vand.u32 %v1635, 2147483648
      %v1648 = vor.u32 1.1754944e-38, %v1647
      %v1649 = vsel %vm1646, %v1648, %v1644
      %v1650 = vmul.f32 %v1625, %v1649
      %v1651 = vmin.f32 %v1650, 1.0
      %v1652 = vmax.f32 %v1651, -1.0
      %v1653 = vmul.f32 %v1114, %v1114
      %v1654 = vmin.f32 16.0, %v1653
      %v1655 = vmul.f32 %v1654, 2.1237322e-06
      %v1656 = vadd.f32 %v1655, 0.00028619796
      %v1657 = vmul.f32 %v1654, %v1656
      %v1658 = vadd.f32 %v1657, 0.0036580483
      %v1659 = vmul.f32 %v1654, %v1658
      %v1660 = vadd.f32 %v1659, 0.05243302
      %v1661 = vmul.f32 %v1654, %v1660
      %v1662 = vadd.f32 %v1661, 0.18741608
      %v1663 = vmul.f32 %v1654, %v1662
      %v1664 = vadd.f32 %v1663, 1.1283791
      %v1665 = vmul.f32 %v1114, %v1664
      %v1666 = vmul.f32 %v1654, 3.8918573e-05
      %v1667 = vadd.f32 %v1666, 0.001143296
      %v1668 = vmul.f32 %v1654, %v1667
      %v1669 = vadd.f32 %v1668, 0.014752088
      %v1670 = vmul.f32 %v1654, %v1669
      %v1671 = vadd.f32 %v1670, 0.112945676
      %v1672 = vmul.f32 %v1654, %v1671
      %v1673 = vadd.f32 %v1672, 0.4994258
      %v1674 = vmul.f32 %v1654, %v1673
      %v1675 = vadd.f32 %v1674, 1.0
      %v1676 = vrcp.pop %v1675
      %v1677 = vmul.f32 %v1675, %v1676
      %v1678 = vsub.f32 1.0, %v1677
      %v1679 = vmul.f32 %v1676, %v1678
      %v1680 = vadd.f32 %v1676, %v1679
      %vm1681 = vweird.f32 %v1675
      %vm1682 = vweird.f32 %v1676
      %vm1683 = vmor %vm1681, %vm1682
      %v1684 = vsel %vm1683, %v1676, %v1680
      %v1685 = vand.u32 2147483647, %v1675
      %vm1686 = vcmp.eq.f32.partialorder %v1685, 8.507059e+37
      %v1687 = vand.u32 %v1675, 2147483648
      %v1688 = vor.u32 1.1754944e-38, %v1687
      %v1689 = vsel %vm1686, %v1688, %v1684
      %v1690 = vmul.f32 %v1665, %v1689
      %v1691 = vmin.f32 %v1690, 1.0
      %v1692 = vmax.f32 %v1691, -1.0
      %v1693 = vmul.f32 %v1115, %v1115
      %v1694 = vmin.f32 16.0, %v1693
      %v1695 = vmul.f32 %v1694, 2.1237322e-06
      %v1696 = vadd.f32 %v1695, 0.00028619796
      %v1697 = vmul.f32 %v1694, %v1696
      %v1698 = vadd.f32 %v1697, 0.0036580483
      %v1699 = vmul.f32 %v1694, %v1698
      %v1700 = vadd.f32 %v1699, 0.05243302
      %v1701 = vmul.f32 %v1694, %v1700
      %v1702 = vadd.f32 %v1701, 0.18741608
      %v1703 = vmul.f32 %v1694, %v1702
      %v1704 = vadd.f32 %v1703, 1.1283791
      %v1705 = vmul.f32 %v1115, %v1704
      %v1706 = vmul.f32 %v1694, 3.8918573e-05
      %v1707 = vadd.f32 %v1706, 0.001143296
      %v1708 = vmul.f32 %v1694, %v1707
      %v1709 = vadd.f32 %v1708, 0.014752088
      %v1710 = vmul.f32 %v1694, %v1709
      %v1711 = vadd.f32 %v1710, 0.112945676
      %v1712 = vmul.f32 %v1694, %v1711
      %v1713 = vadd.f32 %v1712, 0.4994258
      %v1714 = vmul.f32 %v1694, %v1713
      %v1715 = vadd.f32 %v1714, 1.0
      %v1716 = vrcp.pop %v1715
      %v1717 = vmul.f32 %v1715, %v1716
      %v1718 = vsub.f32 1.0, %v1717
      %v1719 = vmul.f32 %v1716, %v1718
      %v1720 = vadd.f32 %v1716, %v1719
      %vm1721 = vweird.f32 %v1715
      %vm1722 = vweird.f32 %v1716
      %vm1723 = vmor %vm1721, %vm1722
      %v1724 = vsel %vm1723, %v1716, %v1720
      %v1725 = vand.u32 2147483647, %v1715
      %vm1726 = vcmp.eq.f32.partialorder %v1725, 8.507059e+37
      %v1727 = vand.u32 %v1715, 2147483648
      %v1728 = vor.u32 1.1754944e-38, %v1727
      %v1729 = vsel %vm1726, %v1728, %v1724
      %v1730 = vmul.f32 %v1705, %v1729
      %v1731 = vmin.f32 %v1730, 1.0
      %v1732 = vmax.f32 %v1731, -1.0
      %v1733 = vmul.f32 %v1116, %v1116
      %v1734 = vmin.f32 16.0, %v1733
      %v1735 = vmul.f32 %v1734, 2.1237322e-06
      %v1736 = vadd.f32 %v1735, 0.00028619796
      %v1737 = vmul.f32 %v1734, %v1736
      %v1738 = vadd.f32 %v1737, 0.0036580483
      %v1739 = vmul.f32 %v1734, %v1738
      %v1740 = vadd.f32 %v1739, 0.05243302
      %v1741 = vmul.f32 %v1734, %v1740
      %v1742 = vadd.f32 %v1741, 0.18741608
      %v1743 = vmul.f32 %v1734, %v1742
      %v1744 = vadd.f32 %v1743, 1.1283791
      %v1745 = vmul.f32 %v1116, %v1744
      %v1746 = vmul.f32 %v1734, 3.8918573e-05
      %v1747 = vadd.f32 %v1746, 0.001143296
      %v1748 = vmul.f32 %v1734, %v1747
      %v1749 = vadd.f32 %v1748, 0.014752088
      %v1750 = vmul.f32 %v1734, %v1749
      %v1751 = vadd.f32 %v1750, 0.112945676
      %v1752 = vmul.f32 %v1734, %v1751
      %v1753 = vadd.f32 %v1752, 0.4994258
      %v1754 = vmul.f32 %v1734, %v1753
      %v1755 = vadd.f32 %v1754, 1.0
      %v1756 = vrcp.pop %v1755
      %v1757 = vmul.f32 %v1755, %v1756
      %v1758 = vsub.f32 1.0, %v1757
      %v1759 = vmul.f32 %v1756, %v1758
      %v1760 = vadd.f32 %v1756, %v1759
      %vm1761 = vweird.f32 %v1755
      %vm1762 = vweird.f32 %v1756
      %vm1763 = vmor %vm1761, %vm1762
      %v1764 = vsel %vm1763, %v1756, %v1760
      %v1765 = vand.u32 2147483647, %v1755
      %vm1766 = vcmp.eq.f32.partialorder %v1765, 8.507059e+37
      %v1767 = vand.u32 %v1755, 2147483648
      %v1768 = vor.u32 1.1754944e-38, %v1767
      %v1769 = vsel %vm1766, %v1768, %v1764
      %v1770 = vmul.f32 %v1745, %v1769
      %v1771 = vmin.f32 %v1770, 1.0
      %v1772 = vmax.f32 %v1771, -1.0
      %v1773 = vmul.f32 %v1117, %v1117
      %v1774 = vmin.f32 16.0, %v1773
      %v1775 = vmul.f32 %v1774, 2.1237322e-06
      %v1776 = vadd.f32 %v1775, 0.00028619796
      %v1777 = vmul.f32 %v1774, %v1776
      %v1778 = vadd.f32 %v1777, 0.0036580483
      %v1779 = vmul.f32 %v1774, %v1778
      %v1780 = vadd.f32 %v1779, 0.05243302
      %v1781 = vmul.f32 %v1774, %v1780
      %v1782 = vadd.f32 %v1781, 0.18741608
      %v1783 = vmul.f32 %v1774, %v1782
      %v1784 = vadd.f32 %v1783, 1.1283791
      %v1785 = vmul.f32 %v1117, %v1784
      %v1786 = vmul.f32 %v1774, 3.8918573e-05
      %v1787 = vadd.f32 %v1786, 0.001143296
      %v1788 = vmul.f32 %v1774, %v1787
      %v1789 = vadd.f32 %v1788, 0.014752088
      %v1790 = vmul.f32 %v1774, %v1789
      %v1791 = vadd.f32 %v1790, 0.112945676
      %v1792 = vmul.f32 %v1774, %v1791
      %v1793 = vadd.f32 %v1792, 0.4994258
      %v1794 = vmul.f32 %v1774, %v1793
      %v1795 = vadd.f32 %v1794, 1.0
      %v1796 = vrcp.pop %v1795
      %v1797 = vmul.f32 %v1795, %v1796
      %v1798 = vsub.f32 1.0, %v1797
      %v1799 = vmul.f32 %v1796, %v1798
      %v1800 = vadd.f32 %v1796, %v1799
      %vm1801 = vweird.f32 %v1795
      %vm1802 = vweird.f32 %v1796
      %vm1803 = vmor %vm1801, %vm1802
      %v1804 = vsel %vm1803, %v1796, %v1800
      %v1805 = vand.u32 2147483647, %v1795
      %vm1806 = vcmp.eq.f32.partialorder %v1805, 8.507059e+37
      %v1807 = vand.u32 %v1795, 2147483648
      %v1808 = vor.u32 1.1754944e-38, %v1807
      %v1809 = vsel %vm1806, %v1808, %v1804
      %v1810 = vmul.f32 %v1785, %v1809
      %v1811 = vmin.f32 %v1810, 1.0
      %v1812 = vmax.f32 %v1811, -1.0
      %v1813 = vmul.f32 %v1118, %v1118
      %v1814 = vmin.f32 16.0, %v1813
      %v1815 = vmul.f32 %v1814, 2.1237322e-06
      %v1816 = vadd.f32 %v1815, 0.00028619796
      %v1817 = vmul.f32 %v1814, %v1816
      %v1818 = vadd.f32 %v1817, 0.0036580483
      %v1819 = vmul.f32 %v1814, %v1818
      %v1820 = vadd.f32 %v1819, 0.05243302
      %v1821 = vmul.f32 %v1814, %v1820
      %v1822 = vadd.f32 %v1821, 0.18741608
      %v1823 = vmul.f32 %v1814, %v1822
      %v1824 = vadd.f32 %v1823, 1.1283791
      %v1825 = vmul.f32 %v1118, %v1824
      %v1826 = vmul.f32 %v1814, 3.8918573e-05
      %v1827 = vadd.f32 %v1826, 0.001143296
      %v1828 = vmul.f32 %v1814, %v1827
      %v1829 = vadd.f32 %v1828, 0.014752088
      %v1830 = vmul.f32 %v1814, %v1829
      %v1831 = vadd.f32 %v1830, 0.112945676
      %v1832 = vmul.f32 %v1814, %v1831
      %v1833 = vadd.f32 %v1832, 0.4994258
      %v1834 = vmul.f32 %v1814, %v1833
      %v1835 = vadd.f32 %v1834, 1.0
      %v1836 = vrcp.pop %v1835
      %v1837 = vmul.f32 %v1835, %v1836
      %v1838 = vsub.f32 1.0, %v1837
      %v1839 = vmul.f32 %v1836, %v1838
      %v1840 = vadd.f32 %v1836, %v1839
      %vm1841 = vweird.f32 %v1835
      %vm1842 = vweird.f32 %v1836
      %vm1843 = vmor %vm1841, %vm1842
      %v1844 = vsel %vm1843, %v1836, %v1840
      %v1845 = vand.u32 2147483647, %v1835
      %vm1846 = vcmp.eq.f32.partialorder %v1845, 8.507059e+37
      %v1847 = vand.u32 %v1835, 2147483648
      %v1848 = vor.u32 1.1754944e-38, %v1847
      %v1849 = vsel %vm1846, %v1848, %v1844
      %v1850 = vmul.f32 %v1825, %v1849
      %v1851 = vmin.f32 %v1850, 1.0
      %v1852 = vmax.f32 %v1851, -1.0
      %v1853 = vmul.f32 %v1119, %v1119
      %v1854 = vmin.f32 16.0, %v1853
      %v1855 = vmul.f32 %v1854, 2.1237322e-06
      %v1856 = vadd.f32 %v1855, 0.00028619796
      %v1857 = vmul.f32 %v1854, %v1856
      %v1858 = vadd.f32 %v1857, 0.0036580483
      %v1859 = vmul.f32 %v1854, %v1858
      %v1860 = vadd.f32 %v1859, 0.05243302
      %v1861 = vmul.f32 %v1854, %v1860
      %v1862 = vadd.f32 %v1861, 0.18741608
      %v1863 = vmul.f32 %v1854, %v1862
      %v1864 = vadd.f32 %v1863, 1.1283791
      %v1865 = vmul.f32 %v1119, %v1864
      %v1866 = vmul.f32 %v1854, 3.8918573e-05
      %v1867 = vadd.f32 %v1866, 0.001143296
      %v1868 = vmul.f32 %v1854, %v1867
      %v1869 = vadd.f32 %v1868, 0.014752088
      %v1870 = vmul.f32 %v1854, %v1869
      %v1871 = vadd.f32 %v1870, 0.112945676
      %v1872 = vmul.f32 %v1854, %v1871
      %v1873 = vadd.f32 %v1872, 0.4994258
      %v1874 = vmul.f32 %v1854, %v1873
      %v1875 = vadd.f32 %v1874, 1.0
      %v1876 = vrcp.pop %v1875
      %v1877 = vmul.f32 %v1875, %v1876
      %v1878 = vsub.f32 1.0, %v1877
      %v1879 = vmul.f32 %v1876, %v1878
      %v1880 = vadd.f32 %v1876, %v1879
      %vm1881 = vweird.f32 %v1875
      %vm1882 = vweird.f32 %v1876
      %vm1883 = vmor %vm1881, %vm1882
      %v1884 = vsel %vm1883, %v1876, %v1880
      %v1885 = vand.u32 2147483647, %v1875
      %vm1886 = vcmp.eq.f32.partialorder %v1885, 8.507059e+37
      %v1887 = vand.u32 %v1875, 2147483648
      %v1888 = vor.u32 1.1754944e-38, %v1887
      %v1889 = vsel %vm1886, %v1888, %v1884
      %v1890 = vmul.f32 %v1865, %v1889
      %v1891 = vmin.f32 %v1890, 1.0
      %v1892 = vmax.f32 %v1891, -1.0
      %v1893 = vmul.f32 %v1120, %v1120
      %v1894 = vmin.f32 16.0, %v1893
      %v1895 = vmul.f32 %v1894, 2.1237322e-06
      %v1896 = vadd.f32 %v1895, 0.00028619796
      %v1897 = vmul.f32 %v1894, %v1896
      %v1898 = vadd.f32 %v1897, 0.0036580483
      %v1899 = vmul.f32 %v1894, %v1898
      %v1900 = vadd.f32 %v1899, 0.05243302
      %v1901 = vmul.f32 %v1894, %v1900
      %v1902 = vadd.f32 %v1901, 0.18741608
      %v1903 = vmul.f32 %v1894, %v1902
      %v1904 = vadd.f32 %v1903, 1.1283791
      %v1905 = vmul.f32 %v1120, %v1904
      %v1906 = vmul.f32 %v1894, 3.8918573e-05
      %v1907 = vadd.f32 %v1906, 0.001143296
      %v1908 = vmul.f32 %v1894, %v1907
      %v1909 = vadd.f32 %v1908, 0.014752088
      %v1910 = vmul.f32 %v1894, %v1909
      %v1911 = vadd.f32 %v1910, 0.112945676
      %v1912 = vmul.f32 %v1894, %v1911
      %v1913 = vadd.f32 %v1912, 0.4994258
      %v1914 = vmul.f32 %v1894, %v1913
      %v1915 = vadd.f32 %v1914, 1.0
      %v1916 = vrcp.pop %v1915
      %v1917 = vmul.f32 %v1915, %v1916
      %v1918 = vsub.f32 1.0, %v1917
      %v1919 = vmul.f32 %v1916, %v1918
      %v1920 = vadd.f32 %v1916, %v1919
      %vm1921 = vweird.f32 %v1915
      %vm1922 = vweird.f32 %v1916
      %vm1923 = vmor %vm1921, %vm1922
      %v1924 = vsel %vm1923, %v1916, %v1920
      %v1925 = vand.u32 2147483647, %v1915
      %vm1926 = vcmp.eq.f32.partialorder %v1925, 8.507059e+37
      %v1927 = vand.u32 %v1915, 2147483648
      %v1928 = vor.u32 1.1754944e-38, %v1927
      %v1929 = vsel %vm1926, %v1928, %v1924
      %v1930 = vmul.f32 %v1905, %v1929
      %v1931 = vmin.f32 %v1930, 1.0
      %v1932 = vmax.f32 %v1931, -1.0
      %v1933 = vmul.f32 %v1121, %v1121
      %v1934 = vmin.f32 16.0, %v1933
      %v1935 = vmul.f32 %v1934, 2.1237322e-06
      %v1936 = vadd.f32 %v1935, 0.00028619796
      %v1937 = vmul.f32 %v1934, %v1936
      %v1938 = vadd.f32 %v1937, 0.0036580483
      %v1939 = vmul.f32 %v1934, %v1938
      %v1940 = vadd.f32 %v1939, 0.05243302
      %v1941 = vmul.f32 %v1934, %v1940
      %v1942 = vadd.f32 %v1941, 0.18741608
      %v1943 = vmul.f32 %v1934, %v1942
      %v1944 = vadd.f32 %v1943, 1.1283791
      %v1945 = vmul.f32 %v1121, %v1944
      %v1946 = vmul.f32 %v1934, 3.8918573e-05
      %v1947 = vadd.f32 %v1946, 0.001143296
      %v1948 = vmul.f32 %v1934, %v1947
      %v1949 = vadd.f32 %v1948, 0.014752088
      %v1950 = vmul.f32 %v1934, %v1949
      %v1951 = vadd.f32 %v1950, 0.112945676
      %v1952 = vmul.f32 %v1934, %v1951
      %v1953 = vadd.f32 %v1952, 0.4994258
      %v1954 = vmul.f32 %v1934, %v1953
      %v1955 = vadd.f32 %v1954, 1.0
      %v1956 = vrcp.pop %v1955
      %v1957 = vmul.f32 %v1955, %v1956
      %v1958 = vsub.f32 1.0, %v1957
      %v1959 = vmul.f32 %v1956, %v1958
      %v1960 = vadd.f32 %v1956, %v1959
      %vm1961 = vweird.f32 %v1955
      %vm1962 = vweird.f32 %v1956
      %vm1963 = vmor %vm1961, %vm1962
      %v1964 = vsel %vm1963, %v1956, %v1960
      %v1965 = vand.u32 2147483647, %v1955
      %vm1966 = vcmp.eq.f32.partialorder %v1965, 8.507059e+37
      %v1967 = vand.u32 %v1955, 2147483648
      %v1968 = vor.u32 1.1754944e-38, %v1967
      %v1969 = vsel %vm1966, %v1968, %v1964
      %v1970 = vmul.f32 %v1945, %v1969
      %v1971 = vmin.f32 %v1970, 1.0
      %v1972 = vmax.f32 %v1971, -1.0
      %v1973 = vmul.f32 %v1122, %v1122
      %v1974 = vmin.f32 16.0, %v1973
      %v1975 = vmul.f32 %v1974, 2.1237322e-06
      %v1976 = vadd.f32 %v1975, 0.00028619796
      %v1977 = vmul.f32 %v1974, %v1976
      %v1978 = vadd.f32 %v1977, 0.0036580483
      %v1979 = vmul.f32 %v1974, %v1978
      %v1980 = vadd.f32 %v1979, 0.05243302
      %v1981 = vmul.f32 %v1974, %v1980
      %v1982 = vadd.f32 %v1981, 0.18741608
      %v1983 = vmul.f32 %v1974, %v1982
      %v1984 = vadd.f32 %v1983, 1.1283791
      %v1985 = vmul.f32 %v1122, %v1984
      %v1986 = vmul.f32 %v1974, 3.8918573e-05
      %v1987 = vadd.f32 %v1986, 0.001143296
      %v1988 = vmul.f32 %v1974, %v1987
      %v1989 = vadd.f32 %v1988, 0.014752088
      %v1990 = vmul.f32 %v1974, %v1989
      %v1991 = vadd.f32 %v1990, 0.112945676
      %v1992 = vmul.f32 %v1974, %v1991
      %v1993 = vadd.f32 %v1992, 0.4994258
      %v1994 = vmul.f32 %v1974, %v1993
      %v1995 = vadd.f32 %v1994, 1.0
      %v1996 = vrcp.pop %v1995
      %v1997 = vmul.f32 %v1995, %v1996
      %v1998 = vsub.f32 1.0, %v1997
      %v1999 = vmul.f32 %v1996, %v1998
      %v2000 = vadd.f32 %v1996, %v1999
      %vm2001 = vweird.f32 %v1995
      %vm2002 = vweird.f32 %v1996
      %vm2003 = vmor %vm2001, %vm2002
      %v2004 = vsel %vm2003, %v1996, %v2000
      %v2005 = vand.u32 2147483647, %v1995
      %vm2006 = vcmp.eq.f32.partialorder %v2005, 8.507059e+37
      %v2007 = vand.u32 %v1995, 2147483648
      %v2008 = vor.u32 1.1754944e-38, %v2007
      %v2009 = vsel %vm2006, %v2008, %v2004
      %v2010 = vmul.f32 %v1985, %v2009
      %v2011 = vmin.f32 %v2010, 1.0
      %v2012 = vmax.f32 %v2011, -1.0
      %v2013 = vmul.f32 %v1123, %v1123
      %v2014 = vmin.f32 16.0, %v2013
      %v2015 = vmul.f32 %v2014, 2.1237322e-06
      %v2016 = vadd.f32 %v2015, 0.00028619796
      %v2017 = vmul.f32 %v2014, %v2016
      %v2018 = vadd.f32 %v2017, 0.0036580483
      %v2019 = vmul.f32 %v2014, %v2018
      %v2020 = vadd.f32 %v2019, 0.05243302
      %v2021 = vmul.f32 %v2014, %v2020
      %v2022 = vadd.f32 %v2021, 0.18741608
      %v2023 = vmul.f32 %v2014, %v2022
      %v2024 = vadd.f32 %v2023, 1.1283791
      %v2025 = vmul.f32 %v1123, %v2024
      %v2026 = vmul.f32 %v2014, 3.8918573e-05
      %v2027 = vadd.f32 %v2026, 0.001143296
      %v2028 = vmul.f32 %v2014, %v2027
      %v2029 = vadd.f32 %v2028, 0.014752088
      %v2030 = vmul.f32 %v2014, %v2029
      %v2031 = vadd.f32 %v2030, 0.112945676
      %v2032 = vmul.f32 %v2014, %v2031
      %v2033 = vadd.f32 %v2032, 0.4994258
      %v2034 = vmul.f32 %v2014, %v2033
      %v2035 = vadd.f32 %v2034, 1.0
      %v2036 = vrcp.pop %v2035
      %v2037 = vmul.f32 %v2035, %v2036
      %v2038 = vsub.f32 1.0, %v2037
      %v2039 = vmul.f32 %v2036, %v2038
      %v2040 = vadd.f32 %v2036, %v2039
      %vm2041 = vweird.f32 %v2035
      %vm2042 = vweird.f32 %v2036
      %vm2043 = vmor %vm2041, %vm2042
      %v2044 = vsel %vm2043, %v2036, %v2040
      %v2045 = vand.u32 2147483647, %v2035
      %vm2046 = vcmp.eq.f32.partialorder %v2045, 8.507059e+37
      %v2047 = vand.u32 %v2035, 2147483648
      %v2048 = vor.u32 1.1754944e-38, %v2047
      %v2049 = vsel %vm2046, %v2048, %v2044
      %v2050 = vmul.f32 %v2025, %v2049
      %v2051 = vmin.f32 %v2050, 1.0
      %v2052 = vmax.f32 %v2051, -1.0
      %v2053 = vmul.f32 %v1124, %v1124
      %v2054 = vmin.f32 16.0, %v2053
      %v2055 = vmul.f32 %v2054, 2.1237322e-06
      %v2056 = vadd.f32 %v2055, 0.00028619796
      %v2057 = vmul.f32 %v2054, %v2056
      %v2058 = vadd.f32 %v2057, 0.0036580483
      %v2059 = vmul.f32 %v2054, %v2058
      %v2060 = vadd.f32 %v2059, 0.05243302
      %v2061 = vmul.f32 %v2054, %v2060
      %v2062 = vadd.f32 %v2061, 0.18741608
      %v2063 = vmul.f32 %v2054, %v2062
      %v2064 = vadd.f32 %v2063, 1.1283791
      %v2065 = vmul.f32 %v1124, %v2064
      %v2066 = vmul.f32 %v2054, 3.8918573e-05
      %v2067 = vadd.f32 %v2066, 0.001143296
      %v2068 = vmul.f32 %v2054, %v2067
      %v2069 = vadd.f32 %v2068, 0.014752088
      %v2070 = vmul.f32 %v2054, %v2069
      %v2071 = vadd.f32 %v2070, 0.112945676
      %v2072 = vmul.f32 %v2054, %v2071
      %v2073 = vadd.f32 %v2072, 0.4994258
      %v2074 = vmul.f32 %v2054, %v2073
      %v2075 = vadd.f32 %v2074, 1.0
      %v2076 = vrcp.pop %v2075
      %v2077 = vmul.f32 %v2075, %v2076
      %v2078 = vsub.f32 1.0, %v2077
      %v2079 = vmul.f32 %v2076, %v2078
      %v2080 = vadd.f32 %v2076, %v2079
      %vm2081 = vweird.f32 %v2075
      %vm2082 = vweird.f32 %v2076
      %vm2083 = vmor %vm2081, %vm2082
      %v2084 = vsel %vm2083, %v2076, %v2080
      %v2085 = vand.u32 2147483647, %v2075
      %vm2086 = vcmp.eq.f32.partialorder %v2085, 8.507059e+37
      %v2087 = vand.u32 %v2075, 2147483648
      %v2088 = vor.u32 1.1754944e-38, %v2087
      %v2089 = vsel %vm2086, %v2088, %v2084
      %v2090 = vmul.f32 %v2065, %v2089
      %v2091 = vmin.f32 %v2090, 1.0
      %v2092 = vmax.f32 %v2091, -1.0
      %v2093 = vmul.f32 %v1125, %v1125
      %v2094 = vmin.f32 16.0, %v2093
      %v2095 = vmul.f32 %v2094, 2.1237322e-06
      %v2096 = vadd.f32 %v2095, 0.00028619796
      %v2097 = vmul.f32 %v2094, %v2096
      %v2098 = vadd.f32 %v2097, 0.0036580483
      %v2099 = vmul.f32 %v2094, %v2098
      %v2100 = vadd.f32 %v2099, 0.05243302
      %v2101 = vmul.f32 %v2094, %v2100
      %v2102 = vadd.f32 %v2101, 0.18741608
      %v2103 = vmul.f32 %v2094, %v2102
      %v2104 = vadd.f32 %v2103, 1.1283791
      %v2105 = vmul.f32 %v1125, %v2104
      %v2106 = vmul.f32 %v2094, 3.8918573e-05
      %v2107 = vadd.f32 %v2106, 0.001143296
      %v2108 = vmul.f32 %v2094, %v2107
      %v2109 = vadd.f32 %v2108, 0.014752088
      %v2110 = vmul.f32 %v2094, %v2109
      %v2111 = vadd.f32 %v2110, 0.112945676
      %v2112 = vmul.f32 %v2094, %v2111
      %v2113 = vadd.f32 %v2112, 0.4994258
      %v2114 = vmul.f32 %v2094, %v2113
      %v2115 = vadd.f32 %v2114, 1.0
      %v2116 = vrcp.pop %v2115
      %v2117 = vmul.f32 %v2115, %v2116
      %v2118 = vsub.f32 1.0, %v2117
      %v2119 = vmul.f32 %v2116, %v2118
      %v2120 = vadd.f32 %v2116, %v2119
      %vm2121 = vweird.f32 %v2115
      %vm2122 = vweird.f32 %v2116
      %vm2123 = vmor %vm2121, %vm2122
      %v2124 = vsel %vm2123, %v2116, %v2120
      %v2125 = vand.u32 2147483647, %v2115
      %vm2126 = vcmp.eq.f32.partialorder %v2125, 8.507059e+37
      %v2127 = vand.u32 %v2115, 2147483648
      %v2128 = vor.u32 1.1754944e-38, %v2127
      %v2129 = vsel %vm2126, %v2128, %v2124
      %v2130 = vmul.f32 %v2105, %v2129
      %v2131 = vmin.f32 %v2130, 1.0
      %v2132 = vmax.f32 %v2131, -1.0
      %v2133 = vmul.f32 %v1126, %v1126
      %v2134 = vmin.f32 16.0, %v2133
      %v2135 = vmul.f32 %v2134, 2.1237322e-06
      %v2136 = vadd.f32 %v2135, 0.00028619796
      %v2137 = vmul.f32 %v2134, %v2136
      %v2138 = vadd.f32 %v2137, 0.0036580483
      %v2139 = vmul.f32 %v2134, %v2138
      %v2140 = vadd.f32 %v2139, 0.05243302
      %v2141 = vmul.f32 %v2134, %v2140
      %v2142 = vadd.f32 %v2141, 0.18741608
      %v2143 = vmul.f32 %v2134, %v2142
      %v2144 = vadd.f32 %v2143, 1.1283791
      %v2145 = vmul.f32 %v1126, %v2144
      %v2146 = vmul.f32 %v2134, 3.8918573e-05
      %v2147 = vadd.f32 %v2146, 0.001143296
      %v2148 = vmul.f32 %v2134, %v2147
      %v2149 = vadd.f32 %v2148, 0.014752088
      %v2150 = vmul.f32 %v2134, %v2149
      %v2151 = vadd.f32 %v2150, 0.112945676
      %v2152 = vmul.f32 %v2134, %v2151
      %v2153 = vadd.f32 %v2152, 0.4994258
      %v2154 = vmul.f32 %v2134, %v2153
      %v2155 = vadd.f32 %v2154, 1.0
      %v2156 = vrcp.pop %v2155
      %v2157 = vmul.f32 %v2155, %v2156
      %v2158 = vsub.f32 1.0, %v2157
      %v2159 = vmul.f32 %v2156, %v2158
      %v2160 = vadd.f32 %v2156, %v2159
      %vm2161 = vweird.f32 %v2155
      %vm2162 = vweird.f32 %v2156
      %vm2163 = vmor %vm2161, %vm2162
      %v2164 = vsel %vm2163, %v2156, %v2160
      %v2165 = vand.u32 2147483647, %v2155
      %vm2166 = vcmp.eq.f32.partialorder %v2165, 8.507059e+37
      %v2167 = vand.u32 %v2155, 2147483648
      %v2168 = vor.u32 1.1754944e-38, %v2167
      %v2169 = vsel %vm2166, %v2168, %v2164
      %v2170 = vmul.f32 %v2145, %v2169
      %v2171 = vmin.f32 %v2170, 1.0
      %v2172 = vmax.f32 %v2171, -1.0
      %v2173 = vmul.f32 %v1127, %v1127
      %v2174 = vmin.f32 16.0, %v2173
      %v2175 = vmul.f32 %v2174, 2.1237322e-06
      %v2176 = vadd.f32 %v2175, 0.00028619796
      %v2177 = vmul.f32 %v2174, %v2176
      %v2178 = vadd.f32 %v2177, 0.0036580483
      %v2179 = vmul.f32 %v2174, %v2178
      %v2180 = vadd.f32 %v2179, 0.05243302
      %v2181 = vmul.f32 %v2174, %v2180
      %v2182 = vadd.f32 %v2181, 0.18741608
      %v2183 = vmul.f32 %v2174, %v2182
      %v2184 = vadd.f32 %v2183, 1.1283791
      %v2185 = vmul.f32 %v1127, %v2184
      %v2186 = vmul.f32 %v2174, 3.8918573e-05
      %v2187 = vadd.f32 %v2186, 0.001143296
      %v2188 = vmul.f32 %v2174, %v2187
      %v2189 = vadd.f32 %v2188, 0.014752088
      %v2190 = vmul.f32 %v2174, %v2189
      %v2191 = vadd.f32 %v2190, 0.112945676
      %v2192 = vmul.f32 %v2174, %v2191
      %v2193 = vadd.f32 %v2192, 0.4994258
      %v2194 = vmul.f32 %v2174, %v2193
      %v2195 = vadd.f32 %v2194, 1.0
      %v2196 = vrcp.pop %v2195
      %v2197 = vmul.f32 %v2195, %v2196
      %v2198 = vsub.f32 1.0, %v2197
      %v2199 = vmul.f32 %v2196, %v2198
      %v2200 = vadd.f32 %v2196, %v2199
      %vm2201 = vweird.f32 %v2195
      %vm2202 = vweird.f32 %v2196
      %vm2203 = vmor %vm2201, %vm2202
      %v2204 = vsel %vm2203, %v2196, %v2200
      %v2205 = vand.u32 2147483647, %v2195
      %vm2206 = vcmp.eq.f32.partialorder %v2205, 8.507059e+37
      %v2207 = vand.u32 %v2195, 2147483648
      %v2208 = vor.u32 1.1754944e-38, %v2207
      %v2209 = vsel %vm2206, %v2208, %v2204
      %v2210 = vmul.f32 %v2185, %v2209
      %v2211 = vmin.f32 %v2210, 1.0
      %v2212 = vmax.f32 %v2211, -1.0
      %v2213 = vmul.f32 %v1128, %v1128
      %v2214 = vmin.f32 16.0, %v2213
      %v2215 = vmul.f32 %v2214, 2.1237322e-06
      %v2216 = vadd.f32 %v2215, 0.00028619796
      %v2217 = vmul.f32 %v2214, %v2216
      %v2218 = vadd.f32 %v2217, 0.0036580483
      %v2219 = vmul.f32 %v2214, %v2218
      %v2220 = vadd.f32 %v2219, 0.05243302
      %v2221 = vmul.f32 %v2214, %v2220
      %v2222 = vadd.f32 %v2221, 0.18741608
      %v2223 = vmul.f32 %v2214, %v2222
      %v2224 = vadd.f32 %v2223, 1.1283791
      %v2225 = vmul.f32 %v1128, %v2224
      %v2226 = vmul.f32 %v2214, 3.8918573e-05
      %v2227 = vadd.f32 %v2226, 0.001143296
      %v2228 = vmul.f32 %v2214, %v2227
      %v2229 = vadd.f32 %v2228, 0.014752088
      %v2230 = vmul.f32 %v2214, %v2229
      %v2231 = vadd.f32 %v2230, 0.112945676
      %v2232 = vmul.f32 %v2214, %v2231
      %v2233 = vadd.f32 %v2232, 0.4994258
      %v2234 = vmul.f32 %v2214, %v2233
      %v2235 = vadd.f32 %v2234, 1.0
      %v2236 = vrcp.pop %v2235
      %v2237 = vmul.f32 %v2235, %v2236
      %v2238 = vsub.f32 1.0, %v2237
      %v2239 = vmul.f32 %v2236, %v2238
      %v2240 = vadd.f32 %v2236, %v2239
      %vm2241 = vweird.f32 %v2235
      %vm2242 = vweird.f32 %v2236
      %vm2243 = vmor %vm2241, %vm2242
      %v2244 = vsel %vm2243, %v2236, %v2240
      %v2245 = vand.u32 2147483647, %v2235
      %vm2246 = vcmp.eq.f32.partialorder %v2245, 8.507059e+37
      %v2247 = vand.u32 %v2235, 2147483648
      %v2248 = vor.u32 1.1754944e-38, %v2247
      %v2249 = vsel %vm2246, %v2248, %v2244
      %v2250 = vmul.f32 %v2225, %v2249
      %v2251 = vmin.f32 %v2250, 1.0
      %v2252 = vmax.f32 %v2251, -1.0
      %v2253 = vmul.f32 %v1129, %v1129
      %v2254 = vmin.f32 16.0, %v2253
      %v2255 = vmul.f32 %v2254, 2.1237322e-06
      %v2256 = vadd.f32 %v2255, 0.00028619796
      %v2257 = vmul.f32 %v2254, %v2256
      %v2258 = vadd.f32 %v2257, 0.0036580483
      %v2259 = vmul.f32 %v2254, %v2258
      %v2260 = vadd.f32 %v2259, 0.05243302
      %v2261 = vmul.f32 %v2254, %v2260
      %v2262 = vadd.f32 %v2261, 0.18741608
      %v2263 = vmul.f32 %v2254, %v2262
      %v2264 = vadd.f32 %v2263, 1.1283791
      %v2265 = vmul.f32 %v1129, %v2264
      %v2266 = vmul.f32 %v2254, 3.8918573e-05
      %v2267 = vadd.f32 %v2266, 0.001143296
      %v2268 = vmul.f32 %v2254, %v2267
      %v2269 = vadd.f32 %v2268, 0.014752088
      %v2270 = vmul.f32 %v2254, %v2269
      %v2271 = vadd.f32 %v2270, 0.112945676
      %v2272 = vmul.f32 %v2254, %v2271
      %v2273 = vadd.f32 %v2272, 0.4994258
      %v2274 = vmul.f32 %v2254, %v2273
      %v2275 = vadd.f32 %v2274, 1.0
      %v2276 = vrcp.pop %v2275
      %v2277 = vmul.f32 %v2275, %v2276
      %v2278 = vsub.f32 1.0, %v2277
      %v2279 = vmul.f32 %v2276, %v2278
      %v2280 = vadd.f32 %v2276, %v2279
      %vm2281 = vweird.f32 %v2275
      %vm2282 = vweird.f32 %v2276
      %vm2283 = vmor %vm2281, %vm2282
      %v2284 = vsel %vm2283, %v2276, %v2280
      %v2285 = vand.u32 2147483647, %v2275
      %vm2286 = vcmp.eq.f32.partialorder %v2285, 8.507059e+37
      %v2287 = vand.u32 %v2275, 2147483648
      %v2288 = vor.u32 1.1754944e-38, %v2287
      %v2289 = vsel %vm2286, %v2288, %v2284
      %v2290 = vmul.f32 %v2265, %v2289
      %v2291 = vmin.f32 %v2290, 1.0
      %v2292 = vmax.f32 %v2291, -1.0
      %v2293 = vmul.f32 %v1130, %v1130
      %v2294 = vmin.f32 16.0, %v2293
      %v2295 = vmul.f32 %v2294, 2.1237322e-06
      %v2296 = vadd.f32 %v2295, 0.00028619796
      %v2297 = vmul.f32 %v2294, %v2296
      %v2298 = vadd.f32 %v2297, 0.0036580483
      %v2299 = vmul.f32 %v2294, %v2298
      %v2300 = vadd.f32 %v2299, 0.05243302
      %v2301 = vmul.f32 %v2294, %v2300
      %v2302 = vadd.f32 %v2301, 0.18741608
      %v2303 = vmul.f32 %v2294, %v2302
      %v2304 = vadd.f32 %v2303, 1.1283791
      %v2305 = vmul.f32 %v1130, %v2304
      %v2306 = vmul.f32 %v2294, 3.8918573e-05
      %v2307 = vadd.f32 %v2306, 0.001143296
      %v2308 = vmul.f32 %v2294, %v2307
      %v2309 = vadd.f32 %v2308, 0.014752088
      %v2310 = vmul.f32 %v2294, %v2309
      %v2311 = vadd.f32 %v2310, 0.112945676
      %v2312 = vmul.f32 %v2294, %v2311
      %v2313 = vadd.f32 %v2312, 0.4994258
      %v2314 = vmul.f32 %v2294, %v2313
      %v2315 = vadd.f32 %v2314, 1.0
      %v2316 = vrcp.pop %v2315
      %v2317 = vmul.f32 %v2315, %v2316
      %v2318 = vsub.f32 1.0, %v2317
      %v2319 = vmul.f32 %v2316, %v2318
      %v2320 = vadd.f32 %v2316, %v2319
      %vm2321 = vweird.f32 %v2315
      %vm2322 = vweird.f32 %v2316
      %vm2323 = vmor %vm2321, %vm2322
      %v2324 = vsel %vm2323, %v2316, %v2320
      %v2325 = vand.u32 2147483647, %v2315
      %vm2326 = vcmp.eq.f32.partialorder %v2325, 8.507059e+37
      %v2327 = vand.u32 %v2315, 2147483648
      %v2328 = vor.u32 1.1754944e-38, %v2327
      %v2329 = vsel %vm2326, %v2328, %v2324
      %v2330 = vmul.f32 %v2305, %v2329
      %v2331 = vmin.f32 %v2330, 1.0
      %v2332 = vmax.f32 %v2331, -1.0
      %v2333 = vmul.f32 %v1131, %v1131
      %v2334 = vmin.f32 16.0, %v2333
      %v2335 = vmul.f32 %v2334, 2.1237322e-06
      %v2336 = vadd.f32 %v2335, 0.00028619796
      %v2337 = vmul.f32 %v2334, %v2336
      %v2338 = vadd.f32 %v2337, 0.0036580483
      %v2339 = vmul.f32 %v2334, %v2338
      %v2340 = vadd.f32 %v2339, 0.05243302
      %v2341 = vmul.f32 %v2334, %v2340
      %v2342 = vadd.f32 %v2341, 0.18741608
      %v2343 = vmul.f32 %v2334, %v2342
      %v2344 = vadd.f32 %v2343, 1.1283791
      %v2345 = vmul.f32 %v1131, %v2344
      %v2346 = vmul.f32 %v2334, 3.8918573e-05
      %v2347 = vadd.f32 %v2346, 0.001143296
      %v2348 = vmul.f32 %v2334, %v2347
      %v2349 = vadd.f32 %v2348, 0.014752088
      %v2350 = vmul.f32 %v2334, %v2349
      %v2351 = vadd.f32 %v2350, 0.112945676
      %v2352 = vmul.f32 %v2334, %v2351
      %v2353 = vadd.f32 %v2352, 0.4994258
      %v2354 = vmul.f32 %v2334, %v2353
      %v2355 = vadd.f32 %v2354, 1.0
      %v2356 = vrcp.pop %v2355
      %v2357 = vmul.f32 %v2355, %v2356
      %v2358 = vsub.f32 1.0, %v2357
      %v2359 = vmul.f32 %v2356, %v2358
      %v2360 = vadd.f32 %v2356, %v2359
      %vm2361 = vweird.f32 %v2355
      %vm2362 = vweird.f32 %v2356
      %vm2363 = vmor %vm2361, %vm2362
      %v2364 = vsel %vm2363, %v2356, %v2360
      %v2365 = vand.u32 2147483647, %v2355
      %vm2366 = vcmp.eq.f32.partialorder %v2365, 8.507059e+37
      %v2367 = vand.u32 %v2355, 2147483648
      %v2368 = vor.u32 1.1754944e-38, %v2367
      %v2369 = vsel %vm2366, %v2368, %v2364
      %v2370 = vmul.f32 %v2345, %v2369
      %v2371 = vmin.f32 %v2370, 1.0
      %v2372 = vmax.f32 %v2371, -1.0
      %v2373 = vmul.f32 %v1132, %v1132
      %v2374 = vmin.f32 16.0, %v2373
      %v2375 = vmul.f32 %v2374, 2.1237322e-06
      %v2376 = vadd.f32 %v2375, 0.00028619796
      %v2377 = vmul.f32 %v2374, %v2376
      %v2378 = vadd.f32 %v2377, 0.0036580483
      %v2379 = vmul.f32 %v2374, %v2378
      %v2380 = vadd.f32 %v2379, 0.05243302
      %v2381 = vmul.f32 %v2374, %v2380
      %v2382 = vadd.f32 %v2381, 0.18741608
      %v2383 = vmul.f32 %v2374, %v2382
      %v2384 = vadd.f32 %v2383, 1.1283791
      %v2385 = vmul.f32 %v1132, %v2384
      %v2386 = vmul.f32 %v2374, 3.8918573e-05
      %v2387 = vadd.f32 %v2386, 0.001143296
      %v2388 = vmul.f32 %v2374, %v2387
      %v2389 = vadd.f32 %v2388, 0.014752088
      %v2390 = vmul.f32 %v2374, %v2389
      %v2391 = vadd.f32 %v2390, 0.112945676
      %v2392 = vmul.f32 %v2374, %v2391
      %v2393 = vadd.f32 %v2392, 0.4994258
      %v2394 = vmul.f32 %v2374, %v2393
      %v2395 = vadd.f32 %v2394, 1.0
      %v2396 = vrcp.pop %v2395
      %v2397 = vmul.f32 %v2395, %v2396
      %v2398 = vsub.f32 1.0, %v2397
      %v2399 = vmul.f32 %v2396, %v2398
      %v2400 = vadd.f32 %v2396, %v2399
      %vm2401 = vweird.f32 %v2395
      %vm2402 = vweird.f32 %v2396
      %vm2403 = vmor %vm2401, %vm2402
      %v2404 = vsel %vm2403, %v2396, %v2400
      %v2405 = vand.u32 2147483647, %v2395
      %vm2406 = vcmp.eq.f32.partialorder %v2405, 8.507059e+37
      %v2407 = vand.u32 %v2395, 2147483648
      %v2408 = vor.u32 1.1754944e-38, %v2407
      %v2409 = vsel %vm2406, %v2408, %v2404
      %v2410 = vmul.f32 %v2385, %v2409
      %v2411 = vmin.f32 %v2410, 1.0
      %v2412 = vmax.f32 %v2411, -1.0
      %v2413 = vadd.f32 %v1172, 1.0
      %v2414 = vadd.f32 %v1212, 1.0
      %v2415 = vadd.f32 %v1252, 1.0
      %v2416 = vadd.f32 %v1292, 1.0
      %v2417 = vadd.f32 %v1332, 1.0
      %v2418 = vadd.f32 %v1372, 1.0
      %v2419 = vadd.f32 %v1412, 1.0
      %v2420 = vadd.f32 %v1452, 1.0
      %v2421 = vadd.f32 %v1492, 1.0
      %v2422 = vadd.f32 %v1532, 1.0
      %v2423 = vadd.f32 %v1572, 1.0
      %v2424 = vadd.f32 %v1612, 1.0
      %v2425 = vadd.f32 %v1652, 1.0
      %v2426 = vadd.f32 %v1692, 1.0
      %v2427 = vadd.f32 %v1732, 1.0
      %v2428 = vadd.f32 %v1772, 1.0
      %v2429 = vadd.f32 %v1812, 1.0
      %v2430 = vadd.f32 %v1852, 1.0
      %v2431 = vadd.f32 %v1892, 1.0
      %v2432 = vadd.f32 %v1932, 1.0
      %v2433 = vadd.f32 %v1972, 1.0
      %v2434 = vadd.f32 %v2012, 1.0
      %v2435 = vadd.f32 %v2052, 1.0
      %v2436 = vadd.f32 %v2092, 1.0
      %v2437 = vadd.f32 %v2132, 1.0
      %v2438 = vadd.f32 %v2172, 1.0
      %v2439 = vadd.f32 %v2212, 1.0
      %v2440 = vadd.f32 %v2252, 1.0
      %v2441 = vadd.f32 %v2292, 1.0
      %v2442 = vadd.f32 %v2332, 1.0
      %v2443 = vadd.f32 %v2372, 1.0
      %v2444 = vadd.f32 %v2412, 1.0
      %v2445 = vmul.f32 %v1069, %v2413
      %v2446 = vmul.f32 %v1070, %v2414
      %v2447 = vmul.f32 %v1071, %v2415
      %v2448 = vmul.f32 %v1072, %v2416
      %v2449 = vmul.f32 %v1073, %v2417
      %v2450 = vmul.f32 %v1074, %v2418
      %v2451 = vmul.f32 %v1075, %v2419
      %v2452 = vmul.f32 %v1076, %v2420
      %v2453 = vmul.f32 %v1077, %v2421
      %v2454 = vmul.f32 %v1078, %v2422
      %v2455 = vmul.f32 %v1079, %v2423
      %v2456 = vmul.f32 %v1080, %v2424
      %v2457 = vmul.f32 %v1081, %v2425
      %v2458 = vmul.f32 %v1082, %v2426
      %v2459 = vmul.f32 %v1083, %v2427
      %v2460 = vmul.f32 %v1084, %v2428
      %v2461 = vmul.f32 %v1085, %v2429
      %v2462 = vmul.f32 %v1086, %v2430
      %v2463 = vmul.f32 %v1087, %v2431
      %v2464 = vmul.f32 %v1088, %v2432
      %v2465 = vmul.f32 %v1089, %v2433
      %v2466 = vmul.f32 %v1090, %v2434
      %v2467 = vmul.f32 %v1091, %v2435
      %v2468 = vmul.f32 %v1092, %v2436
      %v2469 = vmul.f32 %v1093, %v2437
      %v2470 = vmul.f32 %v1094, %v2438
      %v2471 = vmul.f32 %v1095, %v2439
      %v2472 = vmul.f32 %v1096, %v2440
      %v2473 = vmul.f32 %v1097, %v2441
      %v2474 = vmul.f32 %v1098, %v2442
      %v2475 = vmul.f32 %v1099, %v2443
      %v2476 = vmul.f32 %v1100, %v2444
      %2477 = vst [vmem:[%s232] sm:$0xff] %v2445
      %2478 = vst [vmem:[%s232 + $0x8] sm:$0xff] %v2446
      %2479 = vst [vmem:[%s232 + $0x10] sm:$0xff] %v2447
      %2480 = vst [vmem:[%s232 + $0x18] sm:$0xff] %v2448
      %2481 = vst [vmem:[%s232 + $0x20] sm:$0xff] %v2449
      %2482 = vst [vmem:[%s232 + $0x28] sm:$0xff] %v2450
      %2483 = vst [vmem:[%s232 + $0x30] sm:$0xff] %v2451
      %2484 = vst [vmem:[%s232 + $0x38] sm:$0xff] %v2452
      %2485 = vst [vmem:[%s232 + $0x40] sm:$0xff] %v2453
      %2486 = vst [vmem:[%s232 + $0x48] sm:$0xff] %v2454
      %2487 = vst [vmem:[%s232 + $0x50] sm:$0xff] %v2455
      %2488 = vst [vmem:[%s232 + $0x58] sm:$0xff] %v2456
      %2489 = vst [vmem:[%s232 + $0x60] sm:$0xff] %v2457
      %2490 = vst [vmem:[%s232 + $0x68] sm:$0xff] %v2458
      %2491 = vst [vmem:[%s232 + $0x70] sm:$0xff] %v2459
      %2492 = vst [vmem:[%s232 + $0x78] sm:$0xff] %v2460
      %2493 = vst [vmem:[%s232 + $0x80] sm:$0xff] %v2461
      %2494 = vst [vmem:[%s232 + $0x88] sm:$0xff] %v2462
      %2495 = vst [vmem:[%s232 + $0x90] sm:$0xff] %v2463
      %2496 = vst [vmem:[%s232 + $0x98] sm:$0xff] %v2464
      %2497 = vst [vmem:[%s232 + $0xa0] sm:$0xff] %v2465
      %2498 = vst [vmem:[%s232 + $0xa8] sm:$0xff] %v2466
      %2499 = vst [vmem:[%s232 + $0xb0] sm:$0xff] %v2467
      %2500 = vst [vmem:[%s232 + $0xb8] sm:$0xff] %v2468
      %2501 = vst [vmem:[%s232 + $0xc0] sm:$0xff] %v2469
      %2502 = vst [vmem:[%s232 + $0xc8] sm:$0xff] %v2470
      %2503 = vst [vmem:[%s232 + $0xd0] sm:$0xff] %v2471
      %2504 = vst [vmem:[%s232 + $0xd8] sm:$0xff] %v2472
      %2505 = vst [vmem:[%s232 + $0xe0] sm:$0xff] %v2473
      %2506 = vst [vmem:[%s232 + $0xe8] sm:$0xff] %v2474
      %2507 = vst [vmem:[%s232 + $0xf0] sm:$0xff] %v2475
      %2508 = vst [vmem:[%s232 + $0xf8] sm:$0xff] %v2476
      %p2509 = scmp.lt.s32.totalorder %s18, 1
      %s2510 = scalar_select %p2509, %s18, 1
      %p2511 = scmp.lt.s32.totalorder %s19, 0
      %s2512 = scalar_select %p2511, %s19, 0
      %s2513 = smul.addr %s2510, 32
      %s2514 = sadd.s32 %s2512, %s2513
      %s2515 = smul.addr %s2514, 8
      %s2516 = scalar_lea.vmem %s3, %s2515
      // Predicated region
      $region33: #{_lambda_.10} parent=31 // pred_check
        %p2517 = pneg %p126
      $region34: #{_lambda_.10} parent=31 // pred_check_branch
        %2519 = sbr.rel (%p2517) target = $region36
      $region35: #{_lambda_.10} parent=31 // pred_region
        _
      $region36: #{_lambda_.10} parent=31 // pred_fallthru
        _
    $region32: #{_lambda_.10} parent=5 // pred_fallthru
      _
    %p2520 = scmp.le.s32.totalorder 2, %s9
    // Predicated region
    $region37: #{_lambda_.10} parent=5 // pred_check
      %p2521 = pneg %p2520
    $region38: #{_lambda_.10} parent=5 // pred_check_branch
      %2523 = sbr.rel (%p2521) target = $region40
    $region39: #{_lambda_.10} parent=5 // pred_region
      %s2524 = ssub.s32 %s9, 2
      // Predicated region
      $region41: #{_lambda_.10} parent=39 // pred_check
        %p2525 = pneg %p132
      $region42: #{_lambda_.10} parent=39 // pred_check_branch
        %2527 = sbr.rel (%p2525) target = $region44
      $region43: #{_lambda_.10} parent=39 // pred_region
        %p2528 = scmp.lt.s32.totalorder %s20, 1
        %s2529 = scalar_select %p2528, %s20, 1
        %p2530 = scmp.lt.s32.totalorder %s21, 0
        %s2531 = scalar_select %p2530, %s21, 0
        %s2532 = smul.addr %s2529, 32
        %s2533 = sadd.s32 %s2531, %s2532
        %s2534 = smul.addr %s2533, 8
        %s2535 = scalar_lea.vmem %s3, %s2534
      $region44: #{_lambda_.10} parent=39 // pred_fallthru
        _
    $region40: #{_lambda_.10} parent=5 // pred_fallthru
      _
  $region6: #{_lambda_.10} parent=0 // loop_footer
    %s13 = sadd.s32 1, %s9
  $region7: #{_lambda_.10} parent=0 // loop_footer_branch
    %8 = sbr.rel target = $region3
  $region8: #{_lambda_.10} parent=0 // loop_exit
    _

</llo_original>
